<compile_context>
chip_gen: v7x
topology: tpu7x:2x2x1
jax: 0.10.0
libtpu: 0.0.40
codegen_flags: <defaults>
</compile_context>

<pallas_src>
import functools

import numpy as np
import jax
import jax.numpy as jnp
from jax.experimental import pallas as pl
from jax.experimental.pallas import tpu as pltpu


# ----------------------------------------------------------------------------
# One-time preprocessing: dense truncated-rDFT bases + kernel-ready weight layouts
# (depends only on N / modes / width -- NOT on the batch size).
# ----------------------------------------------------------------------------
def build_bases(n, modes):
    """Dense truncated real-DFT bases (built in f64, cast to f32).

    fct (N, M):  cos(2*pi*n*k/N)          -> Re(rfft)
    fst (N, M): -sin(2*pi*n*k/N)          -> Im(rfft)
    icr (M, N):  c_k*cos(2*pi*k*n/N)/N    -> irfft contribution of Re coeffs
    ici (M, N): -c_k*sin(2*pi*k*n/N)/N    -> irfft contribution of Im coeffs
    c_k = 1 for k==0 (and Nyquist), else 2 (Hermitian-symmetry weight).
    """
    nn_ = np.arange(n, dtype=np.float64)[:, None]          # (N, 1)
    kk = np.arange(modes, dtype=np.float64)[None, :]        # (1, M)
    ang = 2.0 * np.pi * nn_ * kk / n                         # (N, M)
    k_idx = np.arange(modes)
    c = np.where((k_idx == 0) | ((k_idx == n // 2) & (n % 2 == 0)), 1.0, 2.0)
    fct = np.cos(ang)                                        # (N, M)
    fst = -np.sin(ang)                                       # (N, M)
    icr = (c[None, :] * np.cos(ang)).T / n                   # (M, N)
    ici = (-c[None, :] * np.sin(ang)).T / n                  # (M, N)
    return (jnp.asarray(fct, jnp.float32), jnp.asarray(fst, jnp.float32),
            jnp.asarray(icr, jnp.float32), jnp.asarray(ici, jnp.float32))


def preprocess_params(params, *, n, modes, width, n_layers=4):
    """Pack all weights into kernel-ready layouts (run once, not per forward)."""
    del width  # shapes are taken from the params themselves
    fct, fst, icr, ici = build_bases(n, modes)
    # SpectralConv1d weights are (in, out, modes); store as (out, in, modes) so the mix
    # contracts over the in-channel (sublane) axis of the (C_in, M) spectra.
    wr = jnp.stack([jnp.transpose(params[f"sc{l}_wr"], (1, 0, 2)) for l in range(n_layers)])
    wi = jnp.stack([jnp.transpose(params[f"sc{l}_wi"], (1, 0, 2)) for l in range(n_layers)])
    prep = {
        "fct": fct, "fst": fst,                               # (N, M)
        "icr": icr, "ici": ici,                               # (M, N)
        "w0": params["fc0_w"],                                # (C, 2)   (out, in)
        "b0": params["fc0_b"].reshape(-1, 1),                 # (C, 1)
        "wr": wr, "wi": wi,                                   # (L, C, C, M)
        "w1": jnp.stack([params[f"w{l}_w"] for l in range(n_layers)]),               # (L, C, C)
        "b1": jnp.stack([params[f"w{l}_b"].reshape(-1, 1) for l in range(n_layers)]),  # (L, C, 1)
        "wf1": params["fc1_w"],                               # (128, C)
        "bf1": params["fc1_b"].reshape(-1, 1),                # (128, 1)
        "wf2": params["fc2_w"],                               # (1, 128)
        "bf2": params["fc2_b"].reshape(-1, 1),                # (1, 1)
    }
    return prep


# ----------------------------------------------------------------------------
# Fused Pallas kernel (one grid step == one batch element), (C, N) layout throughout:
#   fc0 -> 4x (SpectralConv1d + 1x1 Conv [+ReLU]) -> fc1(+ReLU) -> fc2
# ----------------------------------------------------------------------------
def _fno1d_kernel(x_ref, w0_ref, b0_ref, fct_ref, fst_ref, icr_ref, ici_ref,
                  wr_ref, wi_ref, w1_ref, b1_ref, wf1_ref, bf1_ref, wf2_ref, bf2_ref,
                  o_ref, *, n_layers):
    f32 = jnp.float32
    x_t = x_ref[0]                                                         # (2, N) lane-dense

    # fc0: (C, 2) @ (2, N) + (C, 1)  ->  (C, N)   (channels in sublanes, N in lanes)
    h = jnp.dot(w0_ref[...], x_t, preferred_element_type=f32) + b0_ref[...]

    fct = fct_ref[...]; fst = fst_ref[...]                                 # (N, M)
    icr = icr_ref[...]; ici = ici_ref[...]                                 # (M, N)

    for l in range(n_layers):
        # --- truncated rfft along the spatial (lane) axis: two MXU matmuls ----------
        xr = jnp.dot(h, fct, preferred_element_type=f32)                   # (C, M) Re
        xi = jnp.dot(h, fst, preferred_element_type=f32)                   # (C, M) Im

        # --- per-mode complex channel mix: broadcast-multiply + sublane reduce ------
        #     y[o, k] = sum_i W[o, i, k] * x[i, k]   (no per-mode loops / lane shuffles)
        wr = wr_ref[l]                                                     # (C, C, M)
        wi = wi_ref[l]
        yr = jnp.sum(wr * xr[None, :, :] - wi * xi[None, :, :], axis=1)    # (C, M)
        yi = jnp.sum(wi * xr[None, :, :] + wr * xi[None, :, :], axis=1)    # (C, M)

        # --- irfft of the zero-padded truncated spectrum: two MXU matmuls -----------
        spec = (jnp.dot(yr, icr, preferred_element_type=f32)
                + jnp.dot(yi, ici, preferred_element_type=f32))            # (C, N)

        # --- 1x1 conv (channel matmul) + bias, residual add -------------------------
        local = jnp.dot(w1_ref[l], h, preferred_element_type=f32) + b1_ref[l]
        h = spec + local
        if l < n_layers - 1:
            h = jnp.maximum(h, 0.0)

    # fc1 + ReLU fused with fc2; everything stays lane-dense (N in lanes) and the
    # output is a single (1, N) row store (no masked width-1 column stores).
    h1 = jnp.maximum(jnp.dot(wf1_ref[...], h, preferred_element_type=f32) + bf1_ref[...], 0.0)
    o_ref[0] = jnp.dot(wf2_ref[...], h1, preferred_element_type=f32) + bf2_ref[...]


@functools.partial(jax.jit, static_argnames=("n_layers",))
def fno1d_forward(x, prep, *, n_layers=4):
    b, n, _ = x.shape
    x_t = jnp.transpose(x, (0, 2, 1))                                      # (B, 2, N) lane-dense
    vmem = pl.BlockSpec(memory_space=pltpu.MemorySpace.VMEM)               # resident params
    out = pl.pallas_call(
        functools.partial(_fno1d_kernel, n_layers=n_layers),
        out_shape=jax.ShapeDtypeStruct((b, 1, n), jnp.float32),
        grid=(b,),
        in_specs=[pl.BlockSpec((1, 2, n), lambda i: (i, 0, 0))] + [vmem] * 14,
        out_specs=pl.BlockSpec((1, 1, n), lambda i: (i, 0, 0)),
        compiler_params=pltpu.CompilerParams(
            dimension_semantics=("parallel",),          # v7x: split batch across 2 TCs
            vmem_limit_bytes=48 * 1024 * 1024),
    )(x_t, prep["w0"], prep["b0"], prep["fct"], prep["fst"], prep["icr"], prep["ici"],
      prep["wr"], prep["wi"], prep["w1"], prep["b1"],
      prep["wf1"], prep["bf1"], prep["wf2"], prep["bf2"])
    return out.reshape(b, n, 1)


# ----------------------------------------------------------------------------
# Pure-JAX reference (uses real FFTs) for validation
# ----------------------------------------------------------------------------
def reference_forward(x, params, *, modes):
    b, n, _ = x.shape
    width = params["fc0_w"].shape[0]
    h = x @ params["fc0_w"].T + params["fc0_b"]                 # (B, N, W)
    h = jnp.transpose(h, (0, 2, 1))                             # (B, W, N)  (PyTorch layout)
    for l in range(4):
        xft = jnp.fft.rfft(h, axis=-1)                          # (B, W, N//2+1) complex64
        wc = (params[f"sc{l}_wr"] + 1j * params[f"sc{l}_wi"]).astype(jnp.complex64)
        out_ft = jnp.zeros((b, width, n // 2 + 1), dtype=jnp.complex64)
        out_ft = out_ft.at[:, :, :modes].set(
            jnp.einsum("bix,iox->box", xft[:, :, :modes], wc))
        x1 = jnp.fft.irfft(out_ft, n=n, axis=-1)
        x2 = jnp.einsum("oi,bin->bon", params[f"w{l}_w"], h) + params[f"w{l}_b"][None, :, None]
        h = x1 + x2
        if l < 3:
            h = jax.nn.relu(h)
    h = jnp.transpose(h, (0, 2, 1))
    h = jax.nn.relu(h @ params["fc1_w"].T + params["fc1_b"])
    return h @ params["fc2_w"].T + params["fc2_b"]


# ----------------------------------------------------------------------------
# Deterministic parameter init (shapes follow the PyTorch module)
# ----------------------------------------------------------------------------
def init_params(key, modes, width):
    ks = jax.random.split(key, 24)

    def uni(k, shape, bound):
        return jax.random.uniform(k, shape, jnp.float32, -bound, bound)

    p = {}
    p["fc0_w"] = uni(ks[0], (width, 2), 1.0 / np.sqrt(2.0))
    p["fc0_b"] = uni(ks[1], (width,), 1.0 / np.sqrt(2.0))
    scale = 1.0 / (width * width)
    for l in range(4):
        p[f"sc{l}_wr"] = scale * jax.random.uniform(ks[2 + 2 * l], (width, width, modes), jnp.float32)
        p[f"sc{l}_wi"] = scale * jax.random.uniform(ks[3 + 2 * l], (width, width, modes), jnp.float32)
        bnd = 1.0 / np.sqrt(width)
        p[f"w{l}_w"] = uni(ks[10 + 2 * l], (width, width), bnd)     # Conv1d weight (out,in,1) squeezed
        p[f"w{l}_b"] = uni(ks[11 + 2 * l], (width,), bnd)
    p["fc1_w"] = uni(ks[18], (128, width), 1.0 / np.sqrt(width))
    p["fc1_b"] = uni(ks[19], (128,), 1.0 / np.sqrt(width))
    p["fc2_w"] = uni(ks[20], (1, 128), 1.0 / np.sqrt(128.0))
    p["fc2_b"] = uni(ks[21], (1,), 1.0 / np.sqrt(128.0))
    return p


if __name__ == "__main__":
    B, N, MODES, WIDTH = 2, 16, 8, 32

    key = jax.random.PRNGKey(0)
    pkey, xkey = jax.random.split(key)
    params = init_params(pkey, MODES, WIDTH)
    x = jax.random.normal(xkey, (B, N, 2), jnp.float32)

    # One-time preprocessing (dense bases + packed weights), then the fused kernel.
    prep = preprocess_params(params, n=N, modes=MODES, width=WIDTH)
    y = fno1d_forward(x, prep)
    y = jax.block_until_ready(y)
    assert y.shape == (B, N, 1)

    with jax.default_matmul_precision("float32"):
        y_ref = jax.block_until_ready(reference_forward(x, params, modes=MODES))
    np.testing.assert_allclose(np.asarray(y), np.asarray(y_ref), rtol=2e-2, atol=2e-2)

    print("KERNEL_OK")
</pallas_src>

<mosaic_0001>
module attributes {stable_mosaic.version = 11 : i64} {
  func.func @_fno1d_kernel(%arg0: i32, %arg1: memref<1x2x16xf32, #tpu.memory_space<vmem>>, %arg2: memref<32x2xf32, #tpu.memory_space<vmem>>, %arg3: memref<32x1xf32, #tpu.memory_space<vmem>>, %arg4: memref<16x8xf32, #tpu.memory_space<vmem>>, %arg5: memref<16x8xf32, #tpu.memory_space<vmem>>, %arg6: memref<8x16xf32, #tpu.memory_space<vmem>>, %arg7: memref<8x16xf32, #tpu.memory_space<vmem>>, %arg8: memref<4x32x32x8xf32, #tpu.memory_space<vmem>>, %arg9: memref<4x32x32x8xf32, #tpu.memory_space<vmem>>, %arg10: memref<4x32x32xf32, #tpu.memory_space<vmem>>, %arg11: memref<4x32x1xf32, #tpu.memory_space<vmem>>, %arg12: memref<128x32xf32, #tpu.memory_space<vmem>>, %arg13: memref<128x1xf32, #tpu.memory_space<vmem>>, %arg14: memref<1x128xf32, #tpu.memory_space<vmem>>, %arg15: memref<1x1xf32, #tpu.memory_space<vmem>>, %arg16: memref<1x1x16xf32, #tpu.memory_space<vmem>>) attributes {dimension_semantics = [#tpu.dimension_semantics<parallel>], iteration_bounds = array<i64: 2>, scalar_prefetch = 0 : i64, scratch_operands = 0 : i64, tpu.core_type = #tpu.core_type<tc>, window_params = [{transform_indices = @transform_0, window_bounds = array<i64: 1, 2, 16>}, {pipeline_mode = #tpu.pipeline_mode<synchronous>, transform_indices = @transform_1, window_bounds = array<i64: 32, 2>}, {pipeline_mode = #tpu.pipeline_mode<synchronous>, transform_indices = @transform_2, window_bounds = array<i64: 32, 1>}, {pipeline_mode = #tpu.pipeline_mode<synchronous>, transform_indices = @transform_3, window_bounds = array<i64: 16, 8>}, {pipeline_mode = #tpu.pipeline_mode<synchronous>, transform_indices = @transform_4, window_bounds = array<i64: 16, 8>}, {pipeline_mode = #tpu.pipeline_mode<synchronous>, transform_indices = @transform_5, window_bounds = array<i64: 8, 16>}, {pipeline_mode = #tpu.pipeline_mode<synchronous>, transform_indices = @transform_6, window_bounds = array<i64: 8, 16>}, {pipeline_mode = #tpu.pipeline_mode<synchronous>, transform_indices = @transform_7, window_bounds = array<i64: 4, 32, 32, 8>}, {pipeline_mode = #tpu.pipeline_mode<synchronous>, transform_indices = @transform_8, window_bounds = array<i64: 4, 32, 32, 8>}, {pipeline_mode = #tpu.pipeline_mode<synchronous>, transform_indices = @transform_9, window_bounds = array<i64: 4, 32, 32>}, {pipeline_mode = #tpu.pipeline_mode<synchronous>, transform_indices = @transform_10, window_bounds = array<i64: 4, 32, 1>}, {pipeline_mode = #tpu.pipeline_mode<synchronous>, transform_indices = @transform_11, window_bounds = array<i64: 128, 32>}, {pipeline_mode = #tpu.pipeline_mode<synchronous>, transform_indices = @transform_12, window_bounds = array<i64: 128, 1>}, {pipeline_mode = #tpu.pipeline_mode<synchronous>, transform_indices = @transform_13, window_bounds = array<i64: 1, 128>}, {pipeline_mode = #tpu.pipeline_mode<synchronous>, transform_indices = @transform_14, window_bounds = array<i64: 1, 1>}, {transform_indices = @transform_15, window_bounds = array<i64: 1, 1, 16>}]} {
    %c0 = arith.constant 0 : index
    %c0_0 = arith.constant 0 : index
    %c0_1 = arith.constant 0 : index
    %0 = vector.load %arg1[%c0, %c0_0, %c0_1] : memref<1x2x16xf32, #tpu.memory_space<vmem>>, vector<1x2x16xf32>
    %1 = vector.shape_cast %0 : vector<1x2x16xf32> to vector<2x16xf32>
    %c0_2 = arith.constant 0 : index
    %c0_3 = arith.constant 0 : index
    %2 = vector.load %arg2[%c0_2, %c0_3] : memref<32x2xf32, #tpu.memory_space<vmem>>, vector<32x2xf32>
    %cst = arith.constant dense<0.000000e+00> : vector<32x16xf32>
    %3 = tpu.matmul %2, %1, %cst {dimension_numbers = #tpu.dot_dimension_numbers<[1], [0], [0], [1], [0, 0, 1, 1], [], []>} : vector<32x2xf32>, vector<2x16xf32>, vector<32x16xf32> -> vector<32x16xf32>
    %c0_4 = arith.constant 0 : index
    %c0_5 = arith.constant 0 : index
    %4 = vector.load %arg3[%c0_4, %c0_5] : memref<32x1xf32, #tpu.memory_space<vmem>>, vector<32x1xf32>
    %5 = vector.broadcast %4 : vector<32x1xf32> to vector<32x16xf32>
    %6 = arith.addf %3, %5 : vector<32x16xf32>
    %c0_6 = arith.constant 0 : index
    %c0_7 = arith.constant 0 : index
    %7 = vector.load %arg4[%c0_6, %c0_7] : memref<16x8xf32, #tpu.memory_space<vmem>>, vector<16x8xf32>
    %c0_8 = arith.constant 0 : index
    %c0_9 = arith.constant 0 : index
    %8 = vector.load %arg5[%c0_8, %c0_9] : memref<16x8xf32, #tpu.memory_space<vmem>>, vector<16x8xf32>
    %c0_10 = arith.constant 0 : index
    %c0_11 = arith.constant 0 : index
    %9 = vector.load %arg6[%c0_10, %c0_11] : memref<8x16xf32, #tpu.memory_space<vmem>>, vector<8x16xf32>
    %c0_12 = arith.constant 0 : index
    %c0_13 = arith.constant 0 : index
    %10 = vector.load %arg7[%c0_12, %c0_13] : memref<8x16xf32, #tpu.memory_space<vmem>>, vector<8x16xf32>
    %cst_14 = arith.constant dense<0.000000e+00> : vector<32x8xf32>
    %11 = tpu.matmul %6, %7, %cst_14 {dimension_numbers = #tpu.dot_dimension_numbers<[1], [0], [0], [1], [0, 0, 1, 1], [], []>} : vector<32x16xf32>, vector<16x8xf32>, vector<32x8xf32> -> vector<32x8xf32>
    %cst_15 = arith.constant dense<0.000000e+00> : vector<32x8xf32>
    %12 = tpu.matmul %6, %8, %cst_15 {dimension_numbers = #tpu.dot_dimension_numbers<[1], [0], [0], [1], [0, 0, 1, 1], [], []>} : vector<32x16xf32>, vector<16x8xf32>, vector<32x8xf32> -> vector<32x8xf32>
    %c0_16 = arith.constant 0 : index
    %c0_17 = arith.constant 0 : index
    %c0_18 = arith.constant 0 : index
    %c0_19 = arith.constant 0 : index
    %13 = vector.load %arg8[%c0_16, %c0_17, %c0_18, %c0_19] : memref<4x32x32x8xf32, #tpu.memory_space<vmem>>, vector<1x32x32x8xf32>
    %14 = vector.shape_cast %13 : vector<1x32x32x8xf32> to vector<32x32x8xf32>
    %c0_20 = arith.constant 0 : index
    %c0_21 = arith.constant 0 : index
    %c0_22 = arith.constant 0 : index
    %c0_23 = arith.constant 0 : index
    %15 = vector.load %arg9[%c0_20, %c0_21, %c0_22, %c0_23] : memref<4x32x32x8xf32, #tpu.memory_space<vmem>>, vector<1x32x32x8xf32>
    %16 = vector.shape_cast %15 : vector<1x32x32x8xf32> to vector<32x32x8xf32>
    %17 = vector.shape_cast %11 : vector<32x8xf32> to vector<1x32x8xf32>
    %18 = vector.broadcast %17 : vector<1x32x8xf32> to vector<32x32x8xf32>
    %19 = arith.mulf %14, %18 : vector<32x32x8xf32>
    %20 = vector.shape_cast %12 : vector<32x8xf32> to vector<1x32x8xf32>
    %21 = vector.broadcast %20 : vector<1x32x8xf32> to vector<32x32x8xf32>
    %22 = arith.mulf %16, %21 : vector<32x32x8xf32>
    %23 = arith.subf %19, %22 : vector<32x32x8xf32>
    %cst_24 = arith.constant dense<0.000000e+00> : vector<32x8xf32>
    %24 = vector.multi_reduction <add>, %23, %cst_24 [1] : vector<32x32x8xf32> to vector<32x8xf32>
    %25 = vector.shape_cast %11 : vector<32x8xf32> to vector<1x32x8xf32>
    %26 = vector.broadcast %25 : vector<1x32x8xf32> to vector<32x32x8xf32>
    %27 = arith.mulf %16, %26 : vector<32x32x8xf32>
    %28 = vector.shape_cast %12 : vector<32x8xf32> to vector<1x32x8xf32>
    %29 = vector.broadcast %28 : vector<1x32x8xf32> to vector<32x32x8xf32>
    %30 = arith.mulf %14, %29 : vector<32x32x8xf32>
    %31 = arith.addf %27, %30 : vector<32x32x8xf32>
    %cst_25 = arith.constant dense<0.000000e+00> : vector<32x8xf32>
    %32 = vector.multi_reduction <add>, %31, %cst_25 [1] : vector<32x32x8xf32> to vector<32x8xf32>
    %cst_26 = arith.constant dense<0.000000e+00> : vector<32x16xf32>
    %33 = tpu.matmul %24, %9, %cst_26 {dimension_numbers = #tpu.dot_dimension_numbers<[1], [0], [0], [1], [0, 0, 1, 1], [], []>} : vector<32x8xf32>, vector<8x16xf32>, vector<32x16xf32> -> vector<32x16xf32>
    %cst_27 = arith.constant dense<0.000000e+00> : vector<32x16xf32>
    %34 = tpu.matmul %32, %10, %cst_27 {dimension_numbers = #tpu.dot_dimension_numbers<[1], [0], [0], [1], [0, 0, 1, 1], [], []>} : vector<32x8xf32>, vector<8x16xf32>, vector<32x16xf32> -> vector<32x16xf32>
    %35 = arith.addf %33, %34 : vector<32x16xf32>
    %c0_28 = arith.constant 0 : index
    %c0_29 = arith.constant 0 : index
    %c0_30 = arith.constant 0 : index
    %36 = vector.load %arg10[%c0_28, %c0_29, %c0_30] : memref<4x32x32xf32, #tpu.memory_space<vmem>>, vector<1x32x32xf32>
    %37 = vector.shape_cast %36 : vector<1x32x32xf32> to vector<32x32xf32>
    %cst_31 = arith.constant dense<0.000000e+00> : vector<32x16xf32>
    %38 = tpu.matmul %37, %6, %cst_31 {dimension_numbers = #tpu.dot_dimension_numbers<[1], [0], [0], [1], [0, 0, 1, 1], [], []>} : vector<32x32xf32>, vector<32x16xf32>, vector<32x16xf32> -> vector<32x16xf32>
    %c0_32 = arith.constant 0 : index
    %c0_33 = arith.constant 0 : index
    %c0_34 = arith.constant 0 : index
    %39 = vector.load %arg11[%c0_32, %c0_33, %c0_34] : memref<4x32x1xf32, #tpu.memory_space<vmem>>, vector<1x32x1xf32>
    %40 = vector.shape_cast %39 : vector<1x32x1xf32> to vector<32x1xf32>
    %41 = vector.broadcast %40 : vector<32x1xf32> to vector<32x16xf32>
    %42 = arith.addf %38, %41 : vector<32x16xf32>
    %43 = arith.addf %35, %42 : vector<32x16xf32>
    %cst_35 = arith.constant 0.000000e+00 : f32
    %44 = vector.broadcast %cst_35 : f32 to vector<32x16xf32>
    %45 = arith.maximumf %43, %44 : vector<32x16xf32>
    %cst_36 = arith.constant dense<0.000000e+00> : vector<32x8xf32>
    %46 = tpu.matmul %45, %7, %cst_36 {dimension_numbers = #tpu.dot_dimension_numbers<[1], [0], [0], [1], [0, 0, 1, 1], [], []>} : vector<32x16xf32>, vector<16x8xf32>, vector<32x8xf32> -> vector<32x8xf32>
    %cst_37 = arith.constant dense<0.000000e+00> : vector<32x8xf32>
    %47 = tpu.matmul %45, %8, %cst_37 {dimension_numbers = #tpu.dot_dimension_numbers<[1], [0], [0], [1], [0, 0, 1, 1], [], []>} : vector<32x16xf32>, vector<16x8xf32>, vector<32x8xf32> -> vector<32x8xf32>
    %c1 = arith.constant 1 : index
    %c0_38 = arith.constant 0 : index
    %c0_39 = arith.constant 0 : index
    %c0_40 = arith.constant 0 : index
    %48 = vector.load %arg8[%c1, %c0_38, %c0_39, %c0_40] : memref<4x32x32x8xf32, #tpu.memory_space<vmem>>, vector<1x32x32x8xf32>
    %49 = vector.shape_cast %48 : vector<1x32x32x8xf32> to vector<32x32x8xf32>
    %c1_41 = arith.constant 1 : index
    %c0_42 = arith.constant 0 : index
    %c0_43 = arith.constant 0 : index
    %c0_44 = arith.constant 0 : index
    %50 = vector.load %arg9[%c1_41, %c0_42, %c0_43, %c0_44] : memref<4x32x32x8xf32, #tpu.memory_space<vmem>>, vector<1x32x32x8xf32>
    %51 = vector.shape_cast %50 : vector<1x32x32x8xf32> to vector<32x32x8xf32>
    %52 = vector.shape_cast %46 : vector<32x8xf32> to vector<1x32x8xf32>
    %53 = vector.broadcast %52 : vector<1x32x8xf32> to vector<32x32x8xf32>
    %54 = arith.mulf %49, %53 : vector<32x32x8xf32>
    %55 = vector.shape_cast %47 : vector<32x8xf32> to vector<1x32x8xf32>
    %56 = vector.broadcast %55 : vector<1x32x8xf32> to vector<32x32x8xf32>
    %57 = arith.mulf %51, %56 : vector<32x32x8xf32>
    %58 = arith.subf %54, %57 : vector<32x32x8xf32>
    %cst_45 = arith.constant dense<0.000000e+00> : vector<32x8xf32>
    %59 = vector.multi_reduction <add>, %58, %cst_45 [1] : vector<32x32x8xf32> to vector<32x8xf32>
    %60 = vector.shape_cast %46 : vector<32x8xf32> to vector<1x32x8xf32>
    %61 = vector.broadcast %60 : vector<1x32x8xf32> to vector<32x32x8xf32>
    %62 = arith.mulf %51, %61 : vector<32x32x8xf32>
    %63 = vector.shape_cast %47 : vector<32x8xf32> to vector<1x32x8xf32>
    %64 = vector.broadcast %63 : vector<1x32x8xf32> to vector<32x32x8xf32>
    %65 = arith.mulf %49, %64 : vector<32x32x8xf32>
    %66 = arith.addf %62, %65 : vector<32x32x8xf32>
    %cst_46 = arith.constant dense<0.000000e+00> : vector<32x8xf32>
    %67 = vector.multi_reduction <add>, %66, %cst_46 [1] : vector<32x32x8xf32> to vector<32x8xf32>
    %cst_47 = arith.constant dense<0.000000e+00> : vector<32x16xf32>
    %68 = tpu.matmul %59, %9, %cst_47 {dimension_numbers = #tpu.dot_dimension_numbers<[1], [0], [0], [1], [0, 0, 1, 1], [], []>} : vector<32x8xf32>, vector<8x16xf32>, vector<32x16xf32> -> vector<32x16xf32>
    %cst_48 = arith.constant dense<0.000000e+00> : vector<32x16xf32>
    %69 = tpu.matmul %67, %10, %cst_48 {dimension_numbers = #tpu.dot_dimension_numbers<[1], [0], [0], [1], [0, 0, 1, 1], [], []>} : vector<32x8xf32>, vector<8x16xf32>, vector<32x16xf32> -> vector<32x16xf32>
    %70 = arith.addf %68, %69 : vector<32x16xf32>
    %c1_49 = arith.constant 1 : index
    %c0_50 = arith.constant 0 : index
    %c0_51 = arith.constant 0 : index
    %71 = vector.load %arg10[%c1_49, %c0_50, %c0_51] : memref<4x32x32xf32, #tpu.memory_space<vmem>>, vector<1x32x32xf32>
    %72 = vector.shape_cast %71 : vector<1x32x32xf32> to vector<32x32xf32>
    %cst_52 = arith.constant dense<0.000000e+00> : vector<32x16xf32>
    %73 = tpu.matmul %72, %45, %cst_52 {dimension_numbers = #tpu.dot_dimension_numbers<[1], [0], [0], [1], [0, 0, 1, 1], [], []>} : vector<32x32xf32>, vector<32x16xf32>, vector<32x16xf32> -> vector<32x16xf32>
    %c1_53 = arith.constant 1 : index
    %c0_54 = arith.constant 0 : index
    %c0_55 = arith.constant 0 : index
    %74 = vector.load %arg11[%c1_53, %c0_54, %c0_55] : memref<4x32x1xf32, #tpu.memory_space<vmem>>, vector<1x32x1xf32>
    %75 = vector.shape_cast %74 : vector<1x32x1xf32> to vector<32x1xf32>
    %76 = vector.broadcast %75 : vector<32x1xf32> to vector<32x16xf32>
    %77 = arith.addf %73, %76 : vector<32x16xf32>
    %78 = arith.addf %70, %77 : vector<32x16xf32>
    %cst_56 = arith.constant 0.000000e+00 : f32
    %79 = vector.broadcast %cst_56 : f32 to vector<32x16xf32>
    %80 = arith.maximumf %78, %79 : vector<32x16xf32>
    %cst_57 = arith.constant dense<0.000000e+00> : vector<32x8xf32>
    %81 = tpu.matmul %80, %7, %cst_57 {dimension_numbers = #tpu.dot_dimension_numbers<[1], [0], [0], [1], [0, 0, 1, 1], [], []>} : vector<32x16xf32>, vector<16x8xf32>, vector<32x8xf32> -> vector<32x8xf32>
    %cst_58 = arith.constant dense<0.000000e+00> : vector<32x8xf32>
    %82 = tpu.matmul %80, %8, %cst_58 {dimension_numbers = #tpu.dot_dimension_numbers<[1], [0], [0], [1], [0, 0, 1, 1], [], []>} : vector<32x16xf32>, vector<16x8xf32>, vector<32x8xf32> -> vector<32x8xf32>
    %c2 = arith.constant 2 : index
    %c0_59 = arith.constant 0 : index
    %c0_60 = arith.constant 0 : index
    %c0_61 = arith.constant 0 : index
    %83 = vector.load %arg8[%c2, %c0_59, %c0_60, %c0_61] : memref<4x32x32x8xf32, #tpu.memory_space<vmem>>, vector<1x32x32x8xf32>
    %84 = vector.shape_cast %83 : vector<1x32x32x8xf32> to vector<32x32x8xf32>
    %c2_62 = arith.constant 2 : index
    %c0_63 = arith.constant 0 : index
    %c0_64 = arith.constant 0 : index
    %c0_65 = arith.constant 0 : index
    %85 = vector.load %arg9[%c2_62, %c0_63, %c0_64, %c0_65] : memref<4x32x32x8xf32, #tpu.memory_space<vmem>>, vector<1x32x32x8xf32>
    %86 = vector.shape_cast %85 : vector<1x32x32x8xf32> to vector<32x32x8xf32>
    %87 = vector.shape_cast %81 : vector<32x8xf32> to vector<1x32x8xf32>
    %88 = vector.broadcast %87 : vector<1x32x8xf32> to vector<32x32x8xf32>
    %89 = arith.mulf %84, %88 : vector<32x32x8xf32>
    %90 = vector.shape_cast %82 : vector<32x8xf32> to vector<1x32x8xf32>
    %91 = vector.broadcast %90 : vector<1x32x8xf32> to vector<32x32x8xf32>
    %92 = arith.mulf %86, %91 : vector<32x32x8xf32>
    %93 = arith.subf %89, %92 : vector<32x32x8xf32>
    %cst_66 = arith.constant dense<0.000000e+00> : vector<32x8xf32>
    %94 = vector.multi_reduction <add>, %93, %cst_66 [1] : vector<32x32x8xf32> to vector<32x8xf32>
    %95 = vector.shape_cast %81 : vector<32x8xf32> to vector<1x32x8xf32>
    %96 = vector.broadcast %95 : vector<1x32x8xf32> to vector<32x32x8xf32>
    %97 = arith.mulf %86, %96 : vector<32x32x8xf32>
    %98 = vector.shape_cast %82 : vector<32x8xf32> to vector<1x32x8xf32>
    %99 = vector.broadcast %98 : vector<1x32x8xf32> to vector<32x32x8xf32>
    %100 = arith.mulf %84, %99 : vector<32x32x8xf32>
    %101 = arith.addf %97, %100 : vector<32x32x8xf32>
    %cst_67 = arith.constant dense<0.000000e+00> : vector<32x8xf32>
    %102 = vector.multi_reduction <add>, %101, %cst_67 [1] : vector<32x32x8xf32> to vector<32x8xf32>
    %cst_68 = arith.constant dense<0.000000e+00> : vector<32x16xf32>
    %103 = tpu.matmul %94, %9, %cst_68 {dimension_numbers = #tpu.dot_dimension_numbers<[1], [0], [0], [1], [0, 0, 1, 1], [], []>} : vector<32x8xf32>, vector<8x16xf32>, vector<32x16xf32> -> vector<32x16xf32>
    %cst_69 = arith.constant dense<0.000000e+00> : vector<32x16xf32>
    %104 = tpu.matmul %102, %10, %cst_69 {dimension_numbers = #tpu.dot_dimension_numbers<[1], [0], [0], [1], [0, 0, 1, 1], [], []>} : vector<32x8xf32>, vector<8x16xf32>, vector<32x16xf32> -> vector<32x16xf32>
    %105 = arith.addf %103, %104 : vector<32x16xf32>
    %c2_70 = arith.constant 2 : index
    %c0_71 = arith.constant 0 : index
    %c0_72 = arith.constant 0 : index
    %106 = vector.load %arg10[%c2_70, %c0_71, %c0_72] : memref<4x32x32xf32, #tpu.memory_space<vmem>>, vector<1x32x32xf32>
    %107 = vector.shape_cast %106 : vector<1x32x32xf32> to vector<32x32xf32>
    %cst_73 = arith.constant dense<0.000000e+00> : vector<32x16xf32>
    %108 = tpu.matmul %107, %80, %cst_73 {dimension_numbers = #tpu.dot_dimension_numbers<[1], [0], [0], [1], [0, 0, 1, 1], [], []>} : vector<32x32xf32>, vector<32x16xf32>, vector<32x16xf32> -> vector<32x16xf32>
    %c2_74 = arith.constant 2 : index
    %c0_75 = arith.constant 0 : index
    %c0_76 = arith.constant 0 : index
    %109 = vector.load %arg11[%c2_74, %c0_75, %c0_76] : memref<4x32x1xf32, #tpu.memory_space<vmem>>, vector<1x32x1xf32>
    %110 = vector.shape_cast %109 : vector<1x32x1xf32> to vector<32x1xf32>
    %111 = vector.broadcast %110 : vector<32x1xf32> to vector<32x16xf32>
    %112 = arith.addf %108, %111 : vector<32x16xf32>
    %113 = arith.addf %105, %112 : vector<32x16xf32>
    %cst_77 = arith.constant 0.000000e+00 : f32
    %114 = vector.broadcast %cst_77 : f32 to vector<32x16xf32>
    %115 = arith.maximumf %113, %114 : vector<32x16xf32>
    %cst_78 = arith.constant dense<0.000000e+00> : vector<32x8xf32>
    %116 = tpu.matmul %115, %7, %cst_78 {dimension_numbers = #tpu.dot_dimension_numbers<[1], [0], [0], [1], [0, 0, 1, 1], [], []>} : vector<32x16xf32>, vector<16x8xf32>, vector<32x8xf32> -> vector<32x8xf32>
    %cst_79 = arith.constant dense<0.000000e+00> : vector<32x8xf32>
    %117 = tpu.matmul %115, %8, %cst_79 {dimension_numbers = #tpu.dot_dimension_numbers<[1], [0], [0], [1], [0, 0, 1, 1], [], []>} : vector<32x16xf32>, vector<16x8xf32>, vector<32x8xf32> -> vector<32x8xf32>
    %c3 = arith.constant 3 : index
    %c0_80 = arith.constant 0 : index
    %c0_81 = arith.constant 0 : index
    %c0_82 = arith.constant 0 : index
    %118 = vector.load %arg8[%c3, %c0_80, %c0_81, %c0_82] : memref<4x32x32x8xf32, #tpu.memory_space<vmem>>, vector<1x32x32x8xf32>
    %119 = vector.shape_cast %118 : vector<1x32x32x8xf32> to vector<32x32x8xf32>
    %c3_83 = arith.constant 3 : index
    %c0_84 = arith.constant 0 : index
    %c0_85 = arith.constant 0 : index
    %c0_86 = arith.constant 0 : index
    %120 = vector.load %arg9[%c3_83, %c0_84, %c0_85, %c0_86] : memref<4x32x32x8xf32, #tpu.memory_space<vmem>>, vector<1x32x32x8xf32>
    %121 = vector.shape_cast %120 : vector<1x32x32x8xf32> to vector<32x32x8xf32>
    %122 = vector.shape_cast %116 : vector<32x8xf32> to vector<1x32x8xf32>
    %123 = vector.broadcast %122 : vector<1x32x8xf32> to vector<32x32x8xf32>
    %124 = arith.mulf %119, %123 : vector<32x32x8xf32>
    %125 = vector.shape_cast %117 : vector<32x8xf32> to vector<1x32x8xf32>
    %126 = vector.broadcast %125 : vector<1x32x8xf32> to vector<32x32x8xf32>
    %127 = arith.mulf %121, %126 : vector<32x32x8xf32>
    %128 = arith.subf %124, %127 : vector<32x32x8xf32>
    %cst_87 = arith.constant dense<0.000000e+00> : vector<32x8xf32>
    %129 = vector.multi_reduction <add>, %128, %cst_87 [1] : vector<32x32x8xf32> to vector<32x8xf32>
    %130 = vector.shape_cast %116 : vector<32x8xf32> to vector<1x32x8xf32>
    %131 = vector.broadcast %130 : vector<1x32x8xf32> to vector<32x32x8xf32>
    %132 = arith.mulf %121, %131 : vector<32x32x8xf32>
    %133 = vector.shape_cast %117 : vector<32x8xf32> to vector<1x32x8xf32>
    %134 = vector.broadcast %133 : vector<1x32x8xf32> to vector<32x32x8xf32>
    %135 = arith.mulf %119, %134 : vector<32x32x8xf32>
    %136 = arith.addf %132, %135 : vector<32x32x8xf32>
    %cst_88 = arith.constant dense<0.000000e+00> : vector<32x8xf32>
    %137 = vector.multi_reduction <add>, %136, %cst_88 [1] : vector<32x32x8xf32> to vector<32x8xf32>
    %cst_89 = arith.constant dense<0.000000e+00> : vector<32x16xf32>
    %138 = tpu.matmul %129, %9, %cst_89 {dimension_numbers = #tpu.dot_dimension_numbers<[1], [0], [0], [1], [0, 0, 1, 1], [], []>} : vector<32x8xf32>, vector<8x16xf32>, vector<32x16xf32> -> vector<32x16xf32>
    %cst_90 = arith.constant dense<0.000000e+00> : vector<32x16xf32>
    %139 = tpu.matmul %137, %10, %cst_90 {dimension_numbers = #tpu.dot_dimension_numbers<[1], [0], [0], [1], [0, 0, 1, 1], [], []>} : vector<32x8xf32>, vector<8x16xf32>, vector<32x16xf32> -> vector<32x16xf32>
    %140 = arith.addf %138, %139 : vector<32x16xf32>
    %c3_91 = arith.constant 3 : index
    %c0_92 = arith.constant 0 : index
    %c0_93 = arith.constant 0 : index
    %141 = vector.load %arg10[%c3_91, %c0_92, %c0_93] : memref<4x32x32xf32, #tpu.memory_space<vmem>>, vector<1x32x32xf32>
    %142 = vector.shape_cast %141 : vector<1x32x32xf32> to vector<32x32xf32>
    %cst_94 = arith.constant dense<0.000000e+00> : vector<32x16xf32>
    %143 = tpu.matmul %142, %115, %cst_94 {dimension_numbers = #tpu.dot_dimension_numbers<[1], [0], [0], [1], [0, 0, 1, 1], [], []>} : vector<32x32xf32>, vector<32x16xf32>, vector<32x16xf32> -> vector<32x16xf32>
    %c3_95 = arith.constant 3 : index
    %c0_96 = arith.constant 0 : index
    %c0_97 = arith.constant 0 : index
    %144 = vector.load %arg11[%c3_95, %c0_96, %c0_97] : memref<4x32x1xf32, #tpu.memory_space<vmem>>, vector<1x32x1xf32>
    %145 = vector.shape_cast %144 : vector<1x32x1xf32> to vector<32x1xf32>
    %146 = vector.broadcast %145 : vector<32x1xf32> to vector<32x16xf32>
    %147 = arith.addf %143, %146 : vector<32x16xf32>
    %148 = arith.addf %140, %147 : vector<32x16xf32>
    %c0_98 = arith.constant 0 : index
    %c0_99 = arith.constant 0 : index
    %149 = vector.load %arg12[%c0_98, %c0_99] : memref<128x32xf32, #tpu.memory_space<vmem>>, vector<128x32xf32>
    %cst_100 = arith.constant dense<0.000000e+00> : vector<128x16xf32>
    %150 = tpu.matmul %149, %148, %cst_100 {dimension_numbers = #tpu.dot_dimension_numbers<[1], [0], [0], [1], [0, 0, 1, 1], [], []>} : vector<128x32xf32>, vector<32x16xf32>, vector<128x16xf32> -> vector<128x16xf32>
    %c0_101 = arith.constant 0 : index
    %c0_102 = arith.constant 0 : index
    %151 = vector.load %arg13[%c0_101, %c0_102] : memref<128x1xf32, #tpu.memory_space<vmem>>, vector<128x1xf32>
    %152 = vector.broadcast %151 : vector<128x1xf32> to vector<128x16xf32>
    %153 = arith.addf %150, %152 : vector<128x16xf32>
    %cst_103 = arith.constant 0.000000e+00 : f32
    %154 = vector.broadcast %cst_103 : f32 to vector<128x16xf32>
    %155 = arith.maximumf %153, %154 : vector<128x16xf32>
    %c0_104 = arith.constant 0 : index
    %c0_105 = arith.constant 0 : index
    %156 = vector.load %arg14[%c0_104, %c0_105] : memref<1x128xf32, #tpu.memory_space<vmem>>, vector<1x128xf32>
    %cst_106 = arith.constant dense<0.000000e+00> : vector<1x16xf32>
    %157 = tpu.matmul %156, %155, %cst_106 {dimension_numbers = #tpu.dot_dimension_numbers<[1], [0], [0], [1], [0, 0, 1, 1], [], []>} : vector<1x128xf32>, vector<128x16xf32>, vector<1x16xf32> -> vector<1x16xf32>
    %c0_107 = arith.constant 0 : index
    %c0_108 = arith.constant 0 : index
    %158 = vector.load %arg15[%c0_107, %c0_108] : memref<1x1xf32, #tpu.memory_space<vmem>>, vector<1x1xf32>
    %159 = vector.broadcast %158 : vector<1x1xf32> to vector<1x16xf32>
    %160 = arith.addf %157, %159 : vector<1x16xf32>
    %c0_109 = arith.constant 0 : index
    %c0_110 = arith.constant 0 : index
    %c0_111 = arith.constant 0 : index
    %161 = vector.load %arg16[%c0_109, %c0_110, %c0_111] : memref<1x1x16xf32, #tpu.memory_space<vmem>>, vector<1x1x16xf32>
    %162 = vector.shape_cast %161 : vector<1x1x16xf32> to vector<1x16xf32>
    %163 = vector.shape_cast %160 : vector<1x16xf32> to vector<1x1x16xf32>
    tpu.vector_store %arg16[%c0_109, %c0_110, %c0_111], %163 {strides = array<i32>} : memref<1x1x16xf32, #tpu.memory_space<vmem>>, vector<1x1x16xf32>,
    return
  }
  func.func @transform_0(%arg0: i32) -> (i32, i32, i32) {
    %c0_i32 = arith.constant 0 : i32
    %c0_i32_0 = arith.constant 0 : i32
    %c0_i32_1 = arith.constant 0 : i32
    return %arg0, %c0_i32, %c0_i32_0 : i32, i32, i32
  }
  func.func @transform_1(%arg0: i32) -> (i32, i32) {
    %c0_i32 = arith.constant 0 : i32
    %c0_i32_0 = arith.constant 0 : i32
    %c0_i32_1 = arith.constant 0 : i32
    return %c0_i32, %c0_i32_0 : i32, i32
  }
  func.func @transform_2(%arg0: i32) -> (i32, i32) {
    %c0_i32 = arith.constant 0 : i32
    %c0_i32_0 = arith.constant 0 : i32
    %c0_i32_1 = arith.constant 0 : i32
    return %c0_i32, %c0_i32_0 : i32, i32
  }
  func.func @transform_3(%arg0: i32) -> (i32, i32) {
    %c0_i32 = arith.constant 0 : i32
    %c0_i32_0 = arith.constant 0 : i32
    %c0_i32_1 = arith.constant 0 : i32
    return %c0_i32, %c0_i32_0 : i32, i32
  }
  func.func @transform_4(%arg0: i32) -> (i32, i32) {
    %c0_i32 = arith.constant 0 : i32
    %c0_i32_0 = arith.constant 0 : i32
    %c0_i32_1 = arith.constant 0 : i32
    return %c0_i32, %c0_i32_0 : i32, i32
  }
  func.func @transform_5(%arg0: i32) -> (i32, i32) {
    %c0_i32 = arith.constant 0 : i32
    %c0_i32_0 = arith.constant 0 : i32
    %c0_i32_1 = arith.constant 0 : i32
    return %c0_i32, %c0_i32_0 : i32, i32
  }
  func.func @transform_6(%arg0: i32) -> (i32, i32) {
    %c0_i32 = arith.constant 0 : i32
    %c0_i32_0 = arith.constant 0 : i32
    %c0_i32_1 = arith.constant 0 : i32
    return %c0_i32, %c0_i32_0 : i32, i32
  }
  func.func @transform_7(%arg0: i32) -> (i32, i32, i32, i32) {
    %c0_i32 = arith.constant 0 : i32
    %c0_i32_0 = arith.constant 0 : i32
    %c0_i32_1 = arith.constant 0 : i32
    %c0_i32_2 = arith.constant 0 : i32
    %c0_i32_3 = arith.constant 0 : i32
    return %c0_i32, %c0_i32_0, %c0_i32_1, %c0_i32_2 : i32, i32, i32, i32
  }
  func.func @transform_8(%arg0: i32) -> (i32, i32, i32, i32) {
    %c0_i32 = arith.constant 0 : i32
    %c0_i32_0 = arith.constant 0 : i32
    %c0_i32_1 = arith.constant 0 : i32
    %c0_i32_2 = arith.constant 0 : i32
    %c0_i32_3 = arith.constant 0 : i32
    return %c0_i32, %c0_i32_0, %c0_i32_1, %c0_i32_2 : i32, i32, i32, i32
  }
  func.func @transform_9(%arg0: i32) -> (i32, i32, i32) {
    %c0_i32 = arith.constant 0 : i32
    %c0_i32_0 = arith.constant 0 : i32
    %c0_i32_1 = arith.constant 0 : i32
    %c0_i32_2 = arith.constant 0 : i32
    return %c0_i32, %c0_i32_0, %c0_i32_1 : i32, i32, i32
  }
  func.func @transform_10(%arg0: i32) -> (i32, i32, i32) {
    %c0_i32 = arith.constant 0 : i32
    %c0_i32_0 = arith.constant 0 : i32
    %c0_i32_1 = arith.constant 0 : i32
    %c0_i32_2 = arith.constant 0 : i32
    return %c0_i32, %c0_i32_0, %c0_i32_1 : i32, i32, i32
  }
  func.func @transform_11(%arg0: i32) -> (i32, i32) {
    %c0_i32 = arith.constant 0 : i32
    %c0_i32_0 = arith.constant 0 : i32
    %c0_i32_1 = arith.constant 0 : i32
    return %c0_i32, %c0_i32_0 : i32, i32
  }
  func.func @transform_12(%arg0: i32) -> (i32, i32) {
    %c0_i32 = arith.constant 0 : i32
    %c0_i32_0 = arith.constant 0 : i32
    %c0_i32_1 = arith.constant 0 : i32
    return %c0_i32, %c0_i32_0 : i32, i32
  }
  func.func @transform_13(%arg0: i32) -> (i32, i32) {
    %c0_i32 = arith.constant 0 : i32
    %c0_i32_0 = arith.constant 0 : i32
    %c0_i32_1 = arith.constant 0 : i32
    return %c0_i32, %c0_i32_0 : i32, i32
  }
  func.func @transform_14(%arg0: i32) -> (i32, i32) {
    %c0_i32 = arith.constant 0 : i32
    %c0_i32_0 = arith.constant 0 : i32
    %c0_i32_1 = arith.constant 0 : i32
    return %c0_i32, %c0_i32_0 : i32, i32
  }
  func.func @transform_15(%arg0: i32) -> (i32, i32, i32) {
    %c0_i32 = arith.constant 0 : i32
    %c0_i32_0 = arith.constant 0 : i32
    %c0_i32_1 = arith.constant 0 : i32
    return %arg0, %c0_i32, %c0_i32_0 : i32, i32, i32
  }
}

</mosaic_0001>

<llo_original>
// kernel: fno1d_forward.1
$region0: #{fno1d_forward.1}
  #allocation0 [shape = 'u32[]', space=smem, size = 0x4, offset = 0x4, fixed_abs, tag = 'smem constant byte address 0x4 - core index']
  #allocation1 [shape = 'u32[144,128]{1,0:T(1,128)}', space=vmem, size = 0x12000, scoped, tag = 'internal scratch']
  #allocation2 [shape = 'f32[1,1]{1,0:T(1,128)S(1)}', space=vmem, size = 0x200, scoped, tag = 'scoped memory for fno1d_forward.1']
  %s0 = inlined_call_operand.vmem [shape: f32[2,2,16], index: 0, kind: input, shape index: {}]
  %s1 = inlined_call_operand.vmem [shape: f32[32,2], index: 1, kind: input, shape index: {}]
  %s2 = inlined_call_operand.vmem [shape: f32[32,1], index: 2, kind: input, shape index: {}]
  %s3 = inlined_call_operand.vmem [shape: f32[16,8], index: 3, kind: input, shape index: {}]
  %s4 = inlined_call_operand.vmem [shape: f32[16,8], index: 4, kind: input, shape index: {}]
  %s5 = inlined_call_operand.vmem [shape: f32[8,16], index: 5, kind: input, shape index: {}]
  %s6 = inlined_call_operand.vmem [shape: f32[8,16], index: 6, kind: input, shape index: {}]
  %s7 = inlined_call_operand.vmem [shape: f32[4,32,32,8], index: 7, kind: input, shape index: {}]
  %s8 = inlined_call_operand.vmem [shape: f32[4,32,32,8], index: 8, kind: input, shape index: {}]
  %s9 = inlined_call_operand.vmem [shape: f32[4,32,32], index: 9, kind: input, shape index: {}]
  %s10 = inlined_call_operand.vmem [shape: f32[4,32,1], index: 10, kind: input, shape index: {}]
  %s11 = inlined_call_operand.vmem [shape: f32[128,32], index: 11, kind: input, shape index: {}]
  %s12 = inlined_call_operand.vmem [shape: f32[128,1], index: 12, kind: input, shape index: {}]
  %s13 = inlined_call_operand.vmem [shape: f32[1,128], index: 13, kind: input, shape index: {}]
  %s14 = inlined_call_operand.<no memory space> [shape: f32[1,1], index: 14, kind: input, shape index: {}]
  %s15 = inlined_call_operand.hbm [shape: f32[2,1,16], index: 15, kind: output, shape index: {}]
  %s16 = sld [smem:[#allocation0]]
  $region93: #{fno1d_forward.1} parent=0
    _
  %s18 = ssub.s32 1, %s16
  %s19 = scalar_select 0, %s18, %s16
  %v20 = vstv %s14
  %21 = vst [vmem:[#allocation2] sm:$0x1] %v20
  $region1: #{fno1d_forward.1} parent=0
    #allocation3 [shape = 'u8[1024]{0}', space=vmem, size = 0x400, scoped, tag = 'output window, operand 0']
    #allocation4 [shape = 's32[2]{0}', space=sflag, size = 0x8, scoped, tag = 'scoped memory for fno1d_forward.1']
    %22 = vsyncpa [#allocation4], 0
    %s23 = scalar_lea.sflag [#allocation4], 1
    %24 = vsyncpa %s23, 0
    loop: start=0, step=1, limit=4
    $region2: #{fno1d_forward.1} parent=1 // loop_pre_header
      _
    $region3: #{fno1d_forward.1} parent=1 // loop_header
      %s26 = sphi 0, %s30
      %p27 = scmp.ge.s32.totalorder %s26, 4
      %s36 = sphi 0, %s38
      %s39 = sphi 0, %s36
      %s40 = sphi 0, %s39
      %s56 = sphi 0, %s40
      %s60 = sphi 0, %s60
      %s62 = sphi 0, %s60
      %s63 = sphi 0, %s62
      %s77 = sphi 0, %s63
      %s81 = sphi 0, %s81
      %s83 = sphi 0, %s81
      %s84 = sphi 0, %s83
      %s98 = sphi 0, %s84
      %s102 = sphi 0, %s102
      %s104 = sphi 0, %s102
      %s105 = sphi 0, %s104
      %s119 = sphi 0, %s105
      %s123 = sphi 0, %s123
      %s125 = sphi 0, %s123
      %s126 = sphi 0, %s125
      %s140 = sphi 0, %s126
      %s144 = sphi 0, %s144
      %s146 = sphi 0, %s144
      %s147 = sphi 0, %s146
      %s161 = sphi 0, %s147
      %s165 = sphi 0, %s165
      %s167 = sphi 0, %s165
      %s168 = sphi 0, %s167
      %s182 = sphi 0, %s168
      %s186 = sphi 0, %s186
      %s188 = sphi 0, %s186
      %s189 = sphi 0, %s188
      %s203 = sphi 0, %s189
      %s207 = sphi 0, %s207
      %s209 = sphi 0, %s207
      %s210 = sphi 0, %s209
      %s224 = sphi 0, %s210
      %s228 = sphi 0, %s228
      %s230 = sphi 0, %s228
      %s231 = sphi 0, %s230
      %s245 = sphi 0, %s231
      %s249 = sphi 0, %s249
      %s251 = sphi 0, %s249
      %s252 = sphi 0, %s251
      %s266 = sphi 0, %s252
      %s270 = sphi 0, %s270
      %s272 = sphi 0, %s270
      %s273 = sphi 0, %s272
      %s287 = sphi 0, %s273
      %s291 = sphi 0, %s291
      %s293 = sphi 0, %s291
      %s294 = sphi 0, %s293
      %s308 = sphi 0, %s294
      %s312 = sphi 0, %s312
      %s314 = sphi 0, %s312
      %s315 = sphi 0, %s314
      %s329 = sphi 0, %s315
      %s333 = sphi 0, %s333
      %s335 = sphi 0, %s333
      %s336 = sphi 0, %s335
      %s350 = sphi 0, %s336
      %s356 = sphi 0, %s358
      %s359 = sphi 0, %s356
      %s360 = sphi 0, %s359
      %s376 = sphi 0, %s360
    $region4: #{fno1d_forward.1} parent=1 // loop_header_branch
      %29 = sbr.rel (%p27) target = $region8
    $region5: #{fno1d_forward.1} parent=1 // loop_body
      %s31 = ssub.s32 %s26, 1
      %s32 = ssub.s32 %s26, 2
      %s33 = sadd.s32 %s26, 1
      %s34 = ssub.s32 %s26, %s33
      %p35 = scmp.eq.s32.totalorder %s34, 0
      %s37 = sadd.s32 %s36, 1
      %s38 = scalar_select %p35, %s36, %s37
      %p41 = pneg %p35
      %p42 = scmp.eq.s32.totalorder %s26, 1
      %p43 = por %p41, %p42
      %p44 = scmp.ne.s32.totalorder %s36, %s39
      %p45 = scmp.eq.s32.totalorder %s26, 0
      %p46 = por %p44, %p45
      %p47 = scmp.ne.s32.totalorder %s36, %s39
      %p48 = scmp.eq.s32.totalorder %s31, 1
      %p49 = por %p47, %p48
      %p50 = scmp.ne.s32.totalorder %s39, %s40
      %p51 = scmp.eq.s32.totalorder %s31, 0
      %p52 = por %p50, %p51
      %p53 = scmp.ne.s32.totalorder %s39, %s40
      %p54 = scmp.eq.s32.totalorder %s32, 1
      %p55 = por %p53, %p54
      %p57 = scmp.ne.s32.totalorder %s40, %s56
      %p58 = scmp.eq.s32.totalorder %s32, 0
      %p59 = por %p57, %p58
      %s61 = sadd.s32 %s60, 1
      %p64 = scmp.eq.s32.totalorder %s26, 1
      %p65 = scmp.ne.s32.totalorder %s60, %s62
      %p66 = scmp.eq.s32.totalorder %s26, 0
      %p67 = por %p65, %p66
      %p68 = scmp.ne.s32.totalorder %s60, %s62
      %p69 = scmp.eq.s32.totalorder %s31, 1
      %p70 = por %p68, %p69
      %p71 = scmp.ne.s32.totalorder %s62, %s63
      %p72 = scmp.eq.s32.totalorder %s31, 0
      %p73 = por %p71, %p72
      %p74 = scmp.ne.s32.totalorder %s62, %s63
      %p75 = scmp.eq.s32.totalorder %s32, 1
      %p76 = por %p74, %p75
      %p78 = scmp.ne.s32.totalorder %s63, %s77
      %p79 = scmp.eq.s32.totalorder %s32, 0
      %p80 = por %p78, %p79
      %s82 = sadd.s32 %s81, 1
      %p85 = scmp.eq.s32.totalorder %s26, 1
      %p86 = scmp.ne.s32.totalorder %s81, %s83
      %p87 = scmp.eq.s32.totalorder %s26, 0
      %p88 = por %p86, %p87
      %p89 = scmp.ne.s32.totalorder %s81, %s83
      %p90 = scmp.eq.s32.totalorder %s31, 1
      %p91 = por %p89, %p90
      %p92 = scmp.ne.s32.totalorder %s83, %s84
      %p93 = scmp.eq.s32.totalorder %s31, 0
      %p94 = por %p92, %p93
      %p95 = scmp.ne.s32.totalorder %s83, %s84
      %p96 = scmp.eq.s32.totalorder %s32, 1
      %p97 = por %p95, %p96
      %p99 = scmp.ne.s32.totalorder %s84, %s98
      %p100 = scmp.eq.s32.totalorder %s32, 0
      %p101 = por %p99, %p100
      %s103 = sadd.s32 %s102, 1
      %p106 = scmp.eq.s32.totalorder %s26, 1
      %p107 = scmp.ne.s32.totalorder %s102, %s104
      %p108 = scmp.eq.s32.totalorder %s26, 0
      %p109 = por %p107, %p108
      %p110 = scmp.ne.s32.totalorder %s102, %s104
      %p111 = scmp.eq.s32.totalorder %s31, 1
      %p112 = por %p110, %p111
      %p113 = scmp.ne.s32.totalorder %s104, %s105
      %p114 = scmp.eq.s32.totalorder %s31, 0
      %p115 = por %p113, %p114
      %p116 = scmp.ne.s32.totalorder %s104, %s105
      %p117 = scmp.eq.s32.totalorder %s32, 1
      %p118 = por %p116, %p117
      %p120 = scmp.ne.s32.totalorder %s105, %s119
      %p121 = scmp.eq.s32.totalorder %s32, 0
      %p122 = por %p120, %p121
      %s124 = sadd.s32 %s123, 1
      %p127 = scmp.eq.s32.totalorder %s26, 1
      %p128 = scmp.ne.s32.totalorder %s123, %s125
      %p129 = scmp.eq.s32.totalorder %s26, 0
      %p130 = por %p128, %p129
      %p131 = scmp.ne.s32.totalorder %s123, %s125
      %p132 = scmp.eq.s32.totalorder %s31, 1
      %p133 = por %p131, %p132
      %p134 = scmp.ne.s32.totalorder %s125, %s126
      %p135 = scmp.eq.s32.totalorder %s31, 0
      %p136 = por %p134, %p135
      %p137 = scmp.ne.s32.totalorder %s125, %s126
      %p138 = scmp.eq.s32.totalorder %s32, 1
      %p139 = por %p137, %p138
      %p141 = scmp.ne.s32.totalorder %s126, %s140
      %p142 = scmp.eq.s32.totalorder %s32, 0
      %p143 = por %p141, %p142
      %s145 = sadd.s32 %s144, 1
      %p148 = scmp.eq.s32.totalorder %s26, 1
      %p149 = scmp.ne.s32.totalorder %s144, %s146
      %p150 = scmp.eq.s32.totalorder %s26, 0
      %p151 = por %p149, %p150
      %p152 = scmp.ne.s32.totalorder %s144, %s146
      %p153 = scmp.eq.s32.totalorder %s31, 1
      %p154 = por %p152, %p153
      %p155 = scmp.ne.s32.totalorder %s146, %s147
      %p156 = scmp.eq.s32.totalorder %s31, 0
      %p157 = por %p155, %p156
      %p158 = scmp.ne.s32.totalorder %s146, %s147
      %p159 = scmp.eq.s32.totalorder %s32, 1
      %p160 = por %p158, %p159
      %p162 = scmp.ne.s32.totalorder %s147, %s161
      %p163 = scmp.eq.s32.totalorder %s32, 0
      %p164 = por %p162, %p163
      %s166 = sadd.s32 %s165, 1
      %p169 = scmp.eq.s32.totalorder %s26, 1
      %p170 = scmp.ne.s32.totalorder %s165, %s167
      %p171 = scmp.eq.s32.totalorder %s26, 0
      %p172 = por %p170, %p171
      %p173 = scmp.ne.s32.totalorder %s165, %s167
      %p174 = scmp.eq.s32.totalorder %s31, 1
      %p175 = por %p173, %p174
      %p176 = scmp.ne.s32.totalorder %s167, %s168
      %p177 = scmp.eq.s32.totalorder %s31, 0
      %p178 = por %p176, %p177
      %p179 = scmp.ne.s32.totalorder %s167, %s168
      %p180 = scmp.eq.s32.totalorder %s32, 1
      %p181 = por %p179, %p180
      %p183 = scmp.ne.s32.totalorder %s168, %s182
      %p184 = scmp.eq.s32.totalorder %s32, 0
      %p185 = por %p183, %p184
      %s187 = sadd.s32 %s186, 1
      %p190 = scmp.eq.s32.totalorder %s26, 1
      %p191 = scmp.ne.s32.totalorder %s186, %s188
      %p192 = scmp.eq.s32.totalorder %s26, 0
      %p193 = por %p191, %p192
      %p194 = scmp.ne.s32.totalorder %s186, %s188
      %p195 = scmp.eq.s32.totalorder %s31, 1
      %p196 = por %p194, %p195
      %p197 = scmp.ne.s32.totalorder %s188, %s189
      %p198 = scmp.eq.s32.totalorder %s31, 0
      %p199 = por %p197, %p198
      %p200 = scmp.ne.s32.totalorder %s188, %s189
      %p201 = scmp.eq.s32.totalorder %s32, 1
      %p202 = por %p200, %p201
      %p204 = scmp.ne.s32.totalorder %s189, %s203
      %p205 = scmp.eq.s32.totalorder %s32, 0
      %p206 = por %p204, %p205
      %s208 = sadd.s32 %s207, 1
      %p211 = scmp.eq.s32.totalorder %s26, 1
      %p212 = scmp.ne.s32.totalorder %s207, %s209
      %p213 = scmp.eq.s32.totalorder %s26, 0
      %p214 = por %p212, %p213
      %p215 = scmp.ne.s32.totalorder %s207, %s209
      %p216 = scmp.eq.s32.totalorder %s31, 1
      %p217 = por %p215, %p216
      %p218 = scmp.ne.s32.totalorder %s209, %s210
      %p219 = scmp.eq.s32.totalorder %s31, 0
      %p220 = por %p218, %p219
      %p221 = scmp.ne.s32.totalorder %s209, %s210
      %p222 = scmp.eq.s32.totalorder %s32, 1
      %p223 = por %p221, %p222
      %p225 = scmp.ne.s32.totalorder %s210, %s224
      %p226 = scmp.eq.s32.totalorder %s32, 0
      %p227 = por %p225, %p226
      %s229 = sadd.s32 %s228, 1
      %p232 = scmp.eq.s32.totalorder %s26, 1
      %p233 = scmp.ne.s32.totalorder %s228, %s230
      %p234 = scmp.eq.s32.totalorder %s26, 0
      %p235 = por %p233, %p234
      %p236 = scmp.ne.s32.totalorder %s228, %s230
      %p237 = scmp.eq.s32.totalorder %s31, 1
      %p238 = por %p236, %p237
      %p239 = scmp.ne.s32.totalorder %s230, %s231
      %p240 = scmp.eq.s32.totalorder %s31, 0
      %p241 = por %p239, %p240
      %p242 = scmp.ne.s32.totalorder %s230, %s231
      %p243 = scmp.eq.s32.totalorder %s32, 1
      %p244 = por %p242, %p243
      %p246 = scmp.ne.s32.totalorder %s231, %s245
      %p247 = scmp.eq.s32.totalorder %s32, 0
      %p248 = por %p246, %p247
      %s250 = sadd.s32 %s249, 1
      %p253 = scmp.eq.s32.totalorder %s26, 1
      %p254 = scmp.ne.s32.totalorder %s249, %s251
      %p255 = scmp.eq.s32.totalorder %s26, 0
      %p256 = por %p254, %p255
      %p257 = scmp.ne.s32.totalorder %s249, %s251
      %p258 = scmp.eq.s32.totalorder %s31, 1
      %p259 = por %p257, %p258
      %p260 = scmp.ne.s32.totalorder %s251, %s252
      %p261 = scmp.eq.s32.totalorder %s31, 0
      %p262 = por %p260, %p261
      %p263 = scmp.ne.s32.totalorder %s251, %s252
      %p264 = scmp.eq.s32.totalorder %s32, 1
      %p265 = por %p263, %p264
      %p267 = scmp.ne.s32.totalorder %s252, %s266
      %p268 = scmp.eq.s32.totalorder %s32, 0
      %p269 = por %p267, %p268
      %s271 = sadd.s32 %s270, 1
      %p274 = scmp.eq.s32.totalorder %s26, 1
      %p275 = scmp.ne.s32.totalorder %s270, %s272
      %p276 = scmp.eq.s32.totalorder %s26, 0
      %p277 = por %p275, %p276
      %p278 = scmp.ne.s32.totalorder %s270, %s272
      %p279 = scmp.eq.s32.totalorder %s31, 1
      %p280 = por %p278, %p279
      %p281 = scmp.ne.s32.totalorder %s272, %s273
      %p282 = scmp.eq.s32.totalorder %s31, 0
      %p283 = por %p281, %p282
      %p284 = scmp.ne.s32.totalorder %s272, %s273
      %p285 = scmp.eq.s32.totalorder %s32, 1
      %p286 = por %p284, %p285
      %p288 = scmp.ne.s32.totalorder %s273, %s287
      %p289 = scmp.eq.s32.totalorder %s32, 0
      %p290 = por %p288, %p289
      %s292 = sadd.s32 %s291, 1
      %p295 = scmp.eq.s32.totalorder %s26, 1
      %p296 = scmp.ne.s32.totalorder %s291, %s293
      %p297 = scmp.eq.s32.totalorder %s26, 0
      %p298 = por %p296, %p297
      %p299 = scmp.ne.s32.totalorder %s291, %s293
      %p300 = scmp.eq.s32.totalorder %s31, 1
      %p301 = por %p299, %p300
      %p302 = scmp.ne.s32.totalorder %s293, %s294
      %p303 = scmp.eq.s32.totalorder %s31, 0
      %p304 = por %p302, %p303
      %p305 = scmp.ne.s32.totalorder %s293, %s294
      %p306 = scmp.eq.s32.totalorder %s32, 1
      %p307 = por %p305, %p306
      %p309 = scmp.ne.s32.totalorder %s294, %s308
      %p310 = scmp.eq.s32.totalorder %s32, 0
      %p311 = por %p309, %p310
      %s313 = sadd.s32 %s312, 1
      %p316 = scmp.eq.s32.totalorder %s26, 1
      %p317 = scmp.ne.s32.totalorder %s312, %s314
      %p318 = scmp.eq.s32.totalorder %s26, 0
      %p319 = por %p317, %p318
      %p320 = scmp.ne.s32.totalorder %s312, %s314
      %p321 = scmp.eq.s32.totalorder %s31, 1
      %p322 = por %p320, %p321
      %p323 = scmp.ne.s32.totalorder %s314, %s315
      %p324 = scmp.eq.s32.totalorder %s31, 0
      %p325 = por %p323, %p324
      %p326 = scmp.ne.s32.totalorder %s314, %s315
      %p327 = scmp.eq.s32.totalorder %s32, 1
      %p328 = por %p326, %p327
      %p330 = scmp.ne.s32.totalorder %s315, %s329
      %p331 = scmp.eq.s32.totalorder %s32, 0
      %p332 = por %p330, %p331
      %s334 = sadd.s32 %s333, 1
      %p337 = scmp.eq.s32.totalorder %s26, 1
      %p338 = scmp.ne.s32.totalorder %s333, %s335
      %p339 = scmp.eq.s32.totalorder %s26, 0
      %p340 = por %p338, %p339
      %p341 = scmp.ne.s32.totalorder %s333, %s335
      %p342 = scmp.eq.s32.totalorder %s31, 1
      %p343 = por %p341, %p342
      %p344 = scmp.ne.s32.totalorder %s335, %s336
      %p345 = scmp.eq.s32.totalorder %s31, 0
      %p346 = por %p344, %p345
      %p347 = scmp.ne.s32.totalorder %s335, %s336
      %p348 = scmp.eq.s32.totalorder %s32, 1
      %p349 = por %p347, %p348
      %p351 = scmp.ne.s32.totalorder %s336, %s350
      %p352 = scmp.eq.s32.totalorder %s32, 0
      %p353 = por %p351, %p352
      %s354 = ssub.s32 %s26, %s33
      %p355 = scmp.eq.s32.totalorder %s354, 0
      %s357 = sadd.s32 %s356, 1
      %s358 = scalar_select %p355, %s356, %s357
      %p361 = pneg %p355
      %p362 = scmp.eq.s32.totalorder %s26, 1
      %p363 = por %p361, %p362
      %p364 = scmp.ne.s32.totalorder %s356, %s359
      %p365 = scmp.eq.s32.totalorder %s26, 0
      %p366 = por %p364, %p365
      %p367 = scmp.ne.s32.totalorder %s356, %s359
      %p368 = scmp.eq.s32.totalorder %s31, 1
      %p369 = por %p367, %p368
      %p370 = scmp.ne.s32.totalorder %s359, %s360
      %p371 = scmp.eq.s32.totalorder %s31, 0
      %p372 = por %p370, %p371
      %p373 = scmp.ne.s32.totalorder %s359, %s360
      %p374 = scmp.eq.s32.totalorder %s32, 1
      %p375 = por %p373, %p374
      %p377 = scmp.ne.s32.totalorder %s360, %s376
      %p378 = scmp.eq.s32.totalorder %s32, 0
      %p379 = por %p377, %p378
      %p380 = scmp.le.s32.totalorder 1, %s26
      %p381 = scmp.lt.s32.totalorder %s26, 3
      %p382 = pnand %p380, %p381
      %p383 = pneg %p382
      // Predicated region
      $region9: #{fno1d_forward.1} parent=5 // pred_check
        _
      $region10: #{fno1d_forward.1} parent=5 // pred_check_branch
        %385 = sbr.rel (%p382) target = $region12
      $region11: #{fno1d_forward.1} parent=5 // pred_region
        %s386 = ssub.s32 %s26, 1
        // Predicated region
        $region13: #{fno1d_forward.1} parent=11 // pred_check
          %p387 = pneg %p73
        $region14: #{fno1d_forward.1} parent=11 // pred_check_branch
          %389 = sbr.rel (%p387) target = $region16
        $region15: #{fno1d_forward.1} parent=11 // pred_region
          _
        $region16: #{fno1d_forward.1} parent=11 // pred_fallthru
          _
        // Predicated region
        $region17: #{fno1d_forward.1} parent=11 // pred_check
          %p390 = pneg %p94
        $region18: #{fno1d_forward.1} parent=11 // pred_check_branch
          %392 = sbr.rel (%p390) target = $region20
        $region19: #{fno1d_forward.1} parent=11 // pred_region
          _
        $region20: #{fno1d_forward.1} parent=11 // pred_fallthru
          _
        // Predicated region
        $region21: #{fno1d_forward.1} parent=11 // pred_check
          %p393 = pneg %p115
        $region22: #{fno1d_forward.1} parent=11 // pred_check_branch
          %395 = sbr.rel (%p393) target = $region24
        $region23: #{fno1d_forward.1} parent=11 // pred_region
          _
        $region24: #{fno1d_forward.1} parent=11 // pred_fallthru
          _
        // Predicated region
        $region25: #{fno1d_forward.1} parent=11 // pred_check
          %p396 = pneg %p136
        $region26: #{fno1d_forward.1} parent=11 // pred_check_branch
          %398 = sbr.rel (%p396) target = $region28
        $region27: #{fno1d_forward.1} parent=11 // pred_region
          _
        $region28: #{fno1d_forward.1} parent=11 // pred_fallthru
          _
        // Predicated region
        $region29: #{fno1d_forward.1} parent=11 // pred_check
          %p399 = pneg %p157
        $region30: #{fno1d_forward.1} parent=11 // pred_check_branch
          %401 = sbr.rel (%p399) target = $region32
        $region31: #{fno1d_forward.1} parent=11 // pred_region
          _
        $region32: #{fno1d_forward.1} parent=11 // pred_fallthru
          _
        // Predicated region
        $region33: #{fno1d_forward.1} parent=11 // pred_check
          %p402 = pneg %p178
        $region34: #{fno1d_forward.1} parent=11 // pred_check_branch
          %404 = sbr.rel (%p402) target = $region36
        $region35: #{fno1d_forward.1} parent=11 // pred_region
          _
        $region36: #{fno1d_forward.1} parent=11 // pred_fallthru
          _
        // Predicated region
        $region37: #{fno1d_forward.1} parent=11 // pred_check
          %p405 = pneg %p199
        $region38: #{fno1d_forward.1} parent=11 // pred_check_branch
          %407 = sbr.rel (%p405) target = $region40
        $region39: #{fno1d_forward.1} parent=11 // pred_region
          _
        $region40: #{fno1d_forward.1} parent=11 // pred_fallthru
          _
        // Predicated region
        $region41: #{fno1d_forward.1} parent=11 // pred_check
          %p408 = pneg %p220
        $region42: #{fno1d_forward.1} parent=11 // pred_check_branch
          %410 = sbr.rel (%p408) target = $region44
        $region43: #{fno1d_forward.1} parent=11 // pred_region
          _
        $region44: #{fno1d_forward.1} parent=11 // pred_fallthru
          _
        // Predicated region
        $region45: #{fno1d_forward.1} parent=11 // pred_check
          %p411 = pneg %p241
        $region46: #{fno1d_forward.1} parent=11 // pred_check_branch
          %413 = sbr.rel (%p411) target = $region48
        $region47: #{fno1d_forward.1} parent=11 // pred_region
          _
        $region48: #{fno1d_forward.1} parent=11 // pred_fallthru
          _
        // Predicated region
        $region49: #{fno1d_forward.1} parent=11 // pred_check
          %p414 = pneg %p262
        $region50: #{fno1d_forward.1} parent=11 // pred_check_branch
          %416 = sbr.rel (%p414) target = $region52
        $region51: #{fno1d_forward.1} parent=11 // pred_region
          _
        $region52: #{fno1d_forward.1} parent=11 // pred_fallthru
          _
        // Predicated region
        $region53: #{fno1d_forward.1} parent=11 // pred_check
          %p417 = pneg %p283
        $region54: #{fno1d_forward.1} parent=11 // pred_check_branch
          %419 = sbr.rel (%p417) target = $region56
        $region55: #{fno1d_forward.1} parent=11 // pred_region
          _
        $region56: #{fno1d_forward.1} parent=11 // pred_fallthru
          _
        // Predicated region
        $region57: #{fno1d_forward.1} parent=11 // pred_check
          %p420 = pneg %p304
        $region58: #{fno1d_forward.1} parent=11 // pred_check_branch
          %422 = sbr.rel (%p420) target = $region60
        $region59: #{fno1d_forward.1} parent=11 // pred_region
          _
        $region60: #{fno1d_forward.1} parent=11 // pred_fallthru
          _
        // Predicated region
        $region61: #{fno1d_forward.1} parent=11 // pred_check
          %p423 = pneg %p325
        $region62: #{fno1d_forward.1} parent=11 // pred_check_branch
          %425 = sbr.rel (%p423) target = $region64
        $region63: #{fno1d_forward.1} parent=11 // pred_region
          _
        $region64: #{fno1d_forward.1} parent=11 // pred_fallthru
          _
        // Predicated region
        $region65: #{fno1d_forward.1} parent=11 // pred_check
          %p426 = pneg %p346
        $region66: #{fno1d_forward.1} parent=11 // pred_check_branch
          %428 = sbr.rel (%p426) target = $region68
        $region67: #{fno1d_forward.1} parent=11 // pred_region
          _
        $region68: #{fno1d_forward.1} parent=11 // pred_fallthru
          _
      $region12: #{fno1d_forward.1} parent=5 // pred_fallthru
        _
      %p429 = scmp.lt.s32.totalorder %s26, 2
      // Predicated region
      $region69: #{fno1d_forward.1} parent=5 // pred_check
        %p430 = pneg %p429
      $region70: #{fno1d_forward.1} parent=5 // pred_check_branch
        %432 = sbr.rel (%p430) target = $region72
      $region71: #{fno1d_forward.1} parent=5 // pred_region
        // Predicated region
        $region73: #{fno1d_forward.1} parent=71 // pred_check
          %p433 = pneg %p46
        $region74: #{fno1d_forward.1} parent=71 // pred_check_branch
          %435 = sbr.rel (%p433) target = $region76
        $region75: #{fno1d_forward.1} parent=71 // pred_region
          %p436 = scmp.lt.s32.totalorder %s26, 1
          %s437 = scalar_select %p436, %s26, 1
          %s438 = smul.addr %s437, 2
          %s439 = scalar_lea.vmem %s0, %s438
        $region76: #{fno1d_forward.1} parent=71 // pred_fallthru
          _
      $region72: #{fno1d_forward.1} parent=5 // pred_fallthru
        _
      %p440 = scmp.le.s32.totalorder 1, %s26
      %p441 = scmp.lt.s32.totalorder %s26, 3
      %p442 = pnand %p440, %p441
      %p443 = pneg %p442
      // Predicated region
      $region77: #{fno1d_forward.1} parent=5 // pred_check
        _
      $region78: #{fno1d_forward.1} parent=5 // pred_check_branch
        %445 = sbr.rel (%p442) target = $region80
      $region79: #{fno1d_forward.1} parent=5 // pred_region
        %s446 = ssub.s32 %s26, 1
        %p447 = scmp.lt.s32.totalorder %s31, 1
        %s448 = scalar_select %p447, %s31, 1
        %s449 = smul.addr %s448, 2
        %s450 = scalar_lea.vmem %s0, %s449
        %p451 = pneg %p52
        %p452 = pneg %p49
        %p453 = pneg %p73
        %p454 = pneg %p70
        %p455 = pneg %p94
        %p456 = pneg %p91
        %p457 = pneg %p115
        %p458 = pneg %p112
        %p459 = pneg %p136
        %p460 = pneg %p133
        %p461 = pneg %p157
        %p462 = pneg %p154
        %p463 = pneg %p178
        %p464 = pneg %p175
        %p465 = pneg %p199
        %p466 = pneg %p196
        %p467 = pneg %p220
        %p468 = pneg %p217
        %p469 = pneg %p241
        %p470 = pneg %p238
        %p471 = pneg %p262
        %p472 = pneg %p259
        %p473 = pneg %p283
        %p474 = pneg %p280
        %p475 = pneg %p304
        %p476 = pneg %p301
        %p477 = pneg %p325
        %p478 = pneg %p322
        %p479 = pneg %p346
        %p480 = pneg %p343
        %p481 = pneg %p372
        %p482 = pneg %p369
        %s483 = sand.u32 %s359, 1
        %s484 = scalar_lea.sflag [#allocation4], %s483
        %s485 = sand.u32 %s359, 1
        %s486 = scalar_lea.vmem [#allocation3], %s485
        %p487 = scmp.lt.s32.totalorder %s31, 1
        %s488 = scalar_select %p487, %s31, 1
        %s489 = smul.addr %s488, 2
        %s490 = scalar_lea.vmem %s0, %s489
        %v491 = vld [vmem:[%s490] sm:$0x3]
        %v492 = vld [vmem:[%s1] sm:$0xff]
        %v493 = vld [vmem:[%s1 + $0x8] sm:$0xff]
        %v494 = vld [vmem:[%s1 + $0x10] sm:$0xff]
        %v495 = vld [vmem:[%s1 + $0x18] sm:$0xff]
        %v496 = vld [vmem:[%s2] sm:$0xff]
        %v497 = vld [vmem:[%s2 + $0x8] sm:$0xff]
        %v498 = vld [vmem:[%s2 + $0x10] sm:$0xff]
        %v499 = vld [vmem:[%s2 + $0x18] sm:$0xff]
        %501 = vset.pattern.permute.xlu0 0
        %502 = vperm.xlu0 %501, %v496
        %v503 = vpop.permute.xlu0 %502
        %506 = vset.pattern.permute.xlu0 0
        %507 = vperm.xlu0 %506, %v497
        %v508 = vpop.permute.xlu0 %507
        %511 = vset.pattern.permute.xlu0 0
        %512 = vperm.xlu0 %511, %v498
        %v513 = vpop.permute.xlu0 %512
        %516 = vset.pattern.permute.xlu0 0
        %517 = vperm.xlu0 %516, %v499
        %v518 = vpop.permute.xlu0 %517
        %vm520 = vcmask 15360
        %v522 = vsel %vm520, %v492, 0
        %v525 = vsel %vm520, %v493, 0
        %v528 = vsel %vm520, %v494, 0
        %v531 = vsel %vm520, %v495, 0
        %vm533 = vcmask 1041408
        %v535 = vsel %vm533, %v491, 0
        %537 = vmatprep.subr.mxu0 0.0
        %538 = vmatpush1.msra.mxu0 %v535
        %539 = vmatprep.subr.mxu0 0.0
        %540 = vmatpush1.msra.mxu0 0.0
        %541 = vmatprep.subr.mxu0 0.0
        %542 = vmatpush1.msra.mxu0 0.0
        %543 = vmatprep.subr.mxu0 0.0
        %544 = vmatpush1.msra.mxu0 0.0
        %545 = vmatprep.subr.mxu0 0.0
        %546 = vmatpush1.msra.mxu0 0.0
        %547 = vmatprep.subr.mxu0 0.0
        %548 = vmatpush1.msra.mxu0 0.0
        %549 = vmatprep.subr.mxu0 0.0
        %550 = vmatpush1.msra.mxu0 0.0
        %551 = vmatprep.subr.mxu0 0.0
        %552 = vmatpush1.msra.mxu0 0.0
        %553 = vmatprep.subr.mxu0 0.0
        %554 = vmatpush1.msra.mxu0 0.0
        %555 = vmatprep.subr.mxu0 0.0
        %556 = vmatpush1.msra.mxu0 0.0
        %557 = vmatprep.subr.mxu0 0.0
        %558 = vmatpush1.msra.mxu0 0.0
        %559 = vmatprep.subr.mxu0 0.0
        %560 = vmatpush1.msra.mxu0 0.0
        %561 = vmatprep.subr.mxu0 0.0
        %562 = vmatpush1.msra.mxu0 0.0
        %563 = vmatprep.subr.mxu0 0.0
        %564 = vmatpush1.msra.mxu0 0.0
        %565 = vmatprep.subr.mxu0 0.0
        %566 = vmatpush1.msra.mxu0 0.0
        %567 = vmatprep.subr.mxu0 0.0
        %568 = vmatpush1.msra.mxu0 0.0
        %569 = vmatprep.subr.mxu0 0.0
        %570 = vmatpush1.msra.mxu0 0.0
        %571 = vmatprep.subr.mxu0 0.0
        %572 = vmatpush1.msra.mxu0 0.0
        %573 = vmatprep.subr.mxu0 0.0
        %574 = vmatpush1.msra.mxu0 0.0
        %575 = vmatprep.subr.mxu0 0.0
        %576 = vmatpush1.msra.mxu0 0.0
        %577 = vmatprep.subr.mxu0 0.0
        %578 = vmatpush1.msra.mxu0 0.0
        %579 = vmatprep.subr.mxu0 0.0
        %580 = vmatpush1.msra.mxu0 0.0
        %581 = vmatprep.subr.mxu0 0.0
        %582 = vmatpush1.msra.mxu0 0.0
        %583 = vmatprep.subr.mxu0 0.0
        %584 = vmatpush1.msra.mxu0 0.0
        %585 = vmatprep.subr.mxu0 0.0
        %586 = vmatpush1.msra.mxu0 0.0
        %587 = vmatprep.subr.mxu0 0.0
        %588 = vmatpush1.msra.mxu0 0.0
        %589 = vmatprep.subr.mxu0 0.0
        %590 = vmatpush1.msra.mxu0 0.0
        %591 = vmatprep.subr.mxu0 0.0
        %592 = vmatpush1.msra.mxu0 0.0
        %593 = vmatprep.subr.mxu0 0.0
        %594 = vmatpush1.msra.mxu0 0.0
        %595 = vmatprep.subr.mxu0 0.0
        %596 = vmatpush1.msra.mxu0 0.0
        %597 = vmatprep.subr.mxu0 0.0
        %598 = vmatpush1.msra.mxu0 0.0
        %599 = vmatprep.subr.mxu0 0.0
        %600 = vmatpush1.msra.mxu0 0.0
        %601 = vmatprep.mubr.f32.mxu0 0.0
        %602 = vmatmul.mubr.f32.gmra.mrb[0].mxu0 %v522
        %v603 = vpop.f32.mrb[0].mxu0
        %v604 = vadd.f32 %v503, %v603
        %v605 = vpop.f32.mrb[0].mxu0
        %606 = vmatprep.mubr.f32.mxu0 0.0
        %607 = vmatmul.mubr.f32.gmra.mrb[0].mxu0 %v525
        %v608 = vpop.f32.mrb[0].mxu0
        %v609 = vadd.f32 %v508, %v608
        %v610 = vpop.f32.mrb[0].mxu0
        %611 = vmatprep.mubr.f32.mxu0 0.0
        %612 = vmatmul.mubr.f32.gmra.mrb[0].mxu0 %v528
        %v613 = vpop.f32.mrb[0].mxu0
        %v614 = vadd.f32 %v513, %v613
        %v615 = vpop.f32.mrb[0].mxu0
        %616 = vmatprep.mubr.f32.mxu0 0.0
        %617 = vmatmul.mubr.f32.gmra.mrb[0].mxu0 %v531
        %v618 = vpop.f32.mrb[0].mxu0
        %v619 = vadd.f32 %v518, %v618
        %v620 = vpop.f32.mrb[0].mxu0
        %621 = vdwg.mxu0
        %v622 = vld [vmem:[%s3] sm:$0xff]
        %v623 = vld [vmem:[%s3 + $0x8] sm:$0xff]
        %v624 = vld [vmem:[%s4] sm:$0xff]
        %v625 = vld [vmem:[%s4 + $0x8] sm:$0xff]
        %v626 = vld [vmem:[%s5] sm:$0xff]
        %v627 = vld [vmem:[%s6] sm:$0xff]
        %vm628 = vcmask 130048
        %v630 = vsel %vm628, %v604, 0
        %v633 = vsel %vm628, %v609, 0
        %v636 = vsel %vm628, %v614, 0
        %v639 = vsel %vm628, %v619, 0
        %641 = vmatprep.subr.mxu0 0.0
        %642 = vmatpush1.msra.mxu0 %v622
        %643 = vmatprep.subr.mxu0 0.0
        %644 = vmatpush1.msra.mxu0 %v623
        %645 = vmatprep.subr.mxu0 0.0
        %646 = vmatpush1.msra.mxu0 0.0
        %647 = vmatprep.subr.mxu0 0.0
        %648 = vmatpush1.msra.mxu0 0.0
        %649 = vmatprep.subr.mxu0 0.0
        %650 = vmatpush1.msra.mxu0 0.0
        %651 = vmatprep.subr.mxu0 0.0
        %652 = vmatpush1.msra.mxu0 0.0
        %653 = vmatprep.subr.mxu0 0.0
        %654 = vmatpush1.msra.mxu0 0.0
        %655 = vmatprep.subr.mxu0 0.0
        %656 = vmatpush1.msra.mxu0 0.0
        %657 = vmatprep.subr.mxu0 0.0
        %658 = vmatpush1.msra.mxu0 0.0
        %659 = vmatprep.subr.mxu0 0.0
        %660 = vmatpush1.msra.mxu0 0.0
        %661 = vmatprep.subr.mxu0 0.0
        %662 = vmatpush1.msra.mxu0 0.0
        %663 = vmatprep.subr.mxu0 0.0
        %664 = vmatpush1.msra.mxu0 0.0
        %665 = vmatprep.subr.mxu0 0.0
        %666 = vmatpush1.msra.mxu0 0.0
        %667 = vmatprep.subr.mxu0 0.0
        %668 = vmatpush1.msra.mxu0 0.0
        %669 = vmatprep.subr.mxu0 0.0
        %670 = vmatpush1.msra.mxu0 0.0
        %671 = vmatprep.subr.mxu0 0.0
        %672 = vmatpush1.msra.mxu0 0.0
        %673 = vmatprep.subr.mxu0 0.0
        %674 = vmatpush1.msra.mxu0 0.0
        %675 = vmatprep.subr.mxu0 0.0
        %676 = vmatpush1.msra.mxu0 0.0
        %677 = vmatprep.subr.mxu0 0.0
        %678 = vmatpush1.msra.mxu0 0.0
        %679 = vmatprep.subr.mxu0 0.0
        %680 = vmatpush1.msra.mxu0 0.0
        %681 = vmatprep.subr.mxu0 0.0
        %682 = vmatpush1.msra.mxu0 0.0
        %683 = vmatprep.subr.mxu0 0.0
        %684 = vmatpush1.msra.mxu0 0.0
        %685 = vmatprep.subr.mxu0 0.0
        %686 = vmatpush1.msra.mxu0 0.0
        %687 = vmatprep.subr.mxu0 0.0
        %688 = vmatpush1.msra.mxu0 0.0
        %689 = vmatprep.subr.mxu0 0.0
        %690 = vmatpush1.msra.mxu0 0.0
        %691 = vmatprep.subr.mxu0 0.0
        %692 = vmatpush1.msra.mxu0 0.0
        %693 = vmatprep.subr.mxu0 0.0
        %694 = vmatpush1.msra.mxu0 0.0
        %695 = vmatprep.subr.mxu0 0.0
        %696 = vmatpush1.msra.mxu0 0.0
        %697 = vmatprep.subr.mxu0 0.0
        %698 = vmatpush1.msra.mxu0 0.0
        %699 = vmatprep.subr.mxu0 0.0
        %700 = vmatpush1.msra.mxu0 0.0
        %701 = vmatprep.subr.mxu0 0.0
        %702 = vmatpush1.msra.mxu0 0.0
        %703 = vmatprep.subr.mxu0 0.0
        %704 = vmatpush1.msra.mxu0 0.0
        %705 = vmatprep.mubr.f32.mxu0 0.0
        %706 = vmatmul.mubr.f32.gmra.mrb[0].mxu0 %v630
        %v707 = vpop.f32.mrb[0].mxu0
        %v708 = vadd.f32 0.0, %v707
        %v709 = vpop.f32.mrb[0].mxu0
        %710 = vmatprep.mubr.f32.mxu0 0.0
        %711 = vmatmul.mubr.f32.gmra.mrb[0].mxu0 %v633
        %v712 = vpop.f32.mrb[0].mxu0
        %v713 = vadd.f32 0.0, %v712
        %v714 = vpop.f32.mrb[0].mxu0
        %715 = vmatprep.mubr.f32.mxu0 0.0
        %716 = vmatmul.mubr.f32.gmra.mrb[0].mxu0 %v636
        %v717 = vpop.f32.mrb[0].mxu0
        %v718 = vadd.f32 0.0, %v717
        %v719 = vpop.f32.mrb[0].mxu0
        %720 = vmatprep.mubr.f32.mxu0 0.0
        %721 = vmatmul.mubr.f32.gmra.mrb[0].mxu0 %v639
        %v722 = vpop.f32.mrb[0].mxu0
        %v723 = vadd.f32 0.0, %v722
        %v724 = vpop.f32.mrb[0].mxu0
        %725 = vdwg.mxu0
        %726 = vmatprep.subr.mxu0 0.0
        %727 = vmatpush1.msra.mxu0 %v624
        %728 = vmatprep.subr.mxu0 0.0
        %729 = vmatpush1.msra.mxu0 %v625
        %730 = vmatprep.subr.mxu0 0.0
        %731 = vmatpush1.msra.mxu0 0.0
        %732 = vmatprep.subr.mxu0 0.0
        %733 = vmatpush1.msra.mxu0 0.0
        %734 = vmatprep.subr.mxu0 0.0
        %735 = vmatpush1.msra.mxu0 0.0
        %736 = vmatprep.subr.mxu0 0.0
        %737 = vmatpush1.msra.mxu0 0.0
        %738 = vmatprep.subr.mxu0 0.0
        %739 = vmatpush1.msra.mxu0 0.0
        %740 = vmatprep.subr.mxu0 0.0
        %741 = vmatpush1.msra.mxu0 0.0
        %742 = vmatprep.subr.mxu0 0.0
        %743 = vmatpush1.msra.mxu0 0.0
        %744 = vmatprep.subr.mxu0 0.0
        %745 = vmatpush1.msra.mxu0 0.0
        %746 = vmatprep.subr.mxu0 0.0
        %747 = vmatpush1.msra.mxu0 0.0
        %748 = vmatprep.subr.mxu0 0.0
        %749 = vmatpush1.msra.mxu0 0.0
        %750 = vmatprep.subr.mxu0 0.0
        %751 = vmatpush1.msra.mxu0 0.0
        %752 = vmatprep.subr.mxu0 0.0
        %753 = vmatpush1.msra.mxu0 0.0
        %754 = vmatprep.subr.mxu0 0.0
        %755 = vmatpush1.msra.mxu0 0.0
        %756 = vmatprep.subr.mxu0 0.0
        %757 = vmatpush1.msra.mxu0 0.0
        %758 = vmatprep.subr.mxu0 0.0
        %759 = vmatpush1.msra.mxu0 0.0
        %760 = vmatprep.subr.mxu0 0.0
        %761 = vmatpush1.msra.mxu0 0.0
        %762 = vmatprep.subr.mxu0 0.0
        %763 = vmatpush1.msra.mxu0 0.0
        %764 = vmatprep.subr.mxu0 0.0
        %765 = vmatpush1.msra.mxu0 0.0
        %766 = vmatprep.subr.mxu0 0.0
        %767 = vmatpush1.msra.mxu0 0.0
        %768 = vmatprep.subr.mxu0 0.0
        %769 = vmatpush1.msra.mxu0 0.0
        %770 = vmatprep.subr.mxu0 0.0
        %771 = vmatpush1.msra.mxu0 0.0
        %772 = vmatprep.subr.mxu0 0.0
        %773 = vmatpush1.msra.mxu0 0.0
        %774 = vmatprep.subr.mxu0 0.0
        %775 = vmatpush1.msra.mxu0 0.0
        %776 = vmatprep.subr.mxu0 0.0
        %777 = vmatpush1.msra.mxu0 0.0
        %778 = vmatprep.subr.mxu0 0.0
        %779 = vmatpush1.msra.mxu0 0.0
        %780 = vmatprep.subr.mxu0 0.0
        %781 = vmatpush1.msra.mxu0 0.0
        %782 = vmatprep.subr.mxu0 0.0
        %783 = vmatpush1.msra.mxu0 0.0
        %784 = vmatprep.subr.mxu0 0.0
        %785 = vmatpush1.msra.mxu0 0.0
        %786 = vmatprep.subr.mxu0 0.0
        %787 = vmatpush1.msra.mxu0 0.0
        %788 = vmatprep.subr.mxu0 0.0
        %789 = vmatpush1.msra.mxu0 0.0
        %790 = vmatprep.mubr.f32.mxu0 0.0
        %791 = vmatmul.mubr.f32.gmra.mrb[0].mxu0 %v630
        %v792 = vpop.f32.mrb[0].mxu0
        %v793 = vadd.f32 0.0, %v792
        %v794 = vpop.f32.mrb[0].mxu0
        %795 = vmatprep.mubr.f32.mxu0 0.0
        %796 = vmatmul.mubr.f32.gmra.mrb[0].mxu0 %v633
        %v797 = vpop.f32.mrb[0].mxu0
        %v798 = vadd.f32 0.0, %v797
        %v799 = vpop.f32.mrb[0].mxu0
        %800 = vmatprep.mubr.f32.mxu0 0.0
        %801 = vmatmul.mubr.f32.gmra.mrb[0].mxu0 %v636
        %v802 = vpop.f32.mrb[0].mxu0
        %v803 = vadd.f32 0.0, %v802
        %v804 = vpop.f32.mrb[0].mxu0
        %805 = vmatprep.mubr.f32.mxu0 0.0
        %806 = vmatmul.mubr.f32.gmra.mrb[0].mxu0 %v639
        %v807 = vpop.f32.mrb[0].mxu0
        %v808 = vadd.f32 0.0, %v807
        %v809 = vpop.f32.mrb[0].mxu0
        %810 = vdwg.mxu0
        %v811 = vld [vmem:[%s7] sm:$0xff]
        %v812 = vld [vmem:[%s7 + $0x8] sm:$0xff]
        %v813 = vld [vmem:[%s7 + $0x10] sm:$0xff]
        %v814 = vld [vmem:[%s7 + $0x18] sm:$0xff]
        %v815 = vld [vmem:[%s7 + $0x20] sm:$0xff]
        %v816 = vld [vmem:[%s7 + $0x28] sm:$0xff]
        %v817 = vld [vmem:[%s7 + $0x30] sm:$0xff]
        %v818 = vld [vmem:[%s7 + $0x38] sm:$0xff]
        %v819 = vld [vmem:[%s7 + $0x40] sm:$0xff]
        %v820 = vld [vmem:[%s7 + $0x48] sm:$0xff]
        %v821 = vld [vmem:[%s7 + $0x50] sm:$0xff]
        %v822 = vld [vmem:[%s7 + $0x58] sm:$0xff]
        %v823 = vld [vmem:[%s7 + $0x60] sm:$0xff]
        %v824 = vld [vmem:[%s7 + $0x68] sm:$0xff]
        %v825 = vld [vmem:[%s7 + $0x70] sm:$0xff]
        %v826 = vld [vmem:[%s7 + $0x78] sm:$0xff]
        %v827 = vld [vmem:[%s7 + $0x80] sm:$0xff]
        %v828 = vld [vmem:[%s7 + $0x88] sm:$0xff]
        %v829 = vld [vmem:[%s7 + $0x90] sm:$0xff]
        %v830 = vld [vmem:[%s7 + $0x98] sm:$0xff]
        %v831 = vld [vmem:[%s7 + $0xa0] sm:$0xff]
        %v832 = vld [vmem:[%s7 + $0xa8] sm:$0xff]
        %v833 = vld [vmem:[%s7 + $0xb0] sm:$0xff]
        %v834 = vld [vmem:[%s7 + $0xb8] sm:$0xff]
        %v835 = vld [vmem:[%s7 + $0xc0] sm:$0xff]
        %v836 = vld [vmem:[%s7 + $0xc8] sm:$0xff]
        %v837 = vld [vmem:[%s7 + $0xd0] sm:$0xff]
        %v838 = vld [vmem:[%s7 + $0xd8] sm:$0xff]
        %v839 = vld [vmem:[%s7 + $0xe0] sm:$0xff]
        %v840 = vld [vmem:[%s7 + $0xe8] sm:$0xff]
        %v841 = vld [vmem:[%s7 + $0xf0] sm:$0xff]
        %v842 = vld [vmem:[%s7 + $0xf8] sm:$0xff]
        %v843 = vld [vmem:[%s7 + $0x100] sm:$0xff]
        %v844 = vld [vmem:[%s7 + $0x108] sm:$0xff]
        %v845 = vld [vmem:[%s7 + $0x110] sm:$0xff]
        %v846 = vld [vmem:[%s7 + $0x118] sm:$0xff]
        %v847 = vld [vmem:[%s7 + $0x120] sm:$0xff]
        %v848 = vld [vmem:[%s7 + $0x128] sm:$0xff]
        %v849 = vld [vmem:[%s7 + $0x130] sm:$0xff]
        %v850 = vld [vmem:[%s7 + $0x138] sm:$0xff]
        %v851 = vld [vmem:[%s7 + $0x140] sm:$0xff]
        %v852 = vld [vmem:[%s7 + $0x148] sm:$0xff]
        %v853 = vld [vmem:[%s7 + $0x150] sm:$0xff]
        %v854 = vld [vmem:[%s7 + $0x158] sm:$0xff]
        %v855 = vld [vmem:[%s7 + $0x160] sm:$0xff]
        %v856 = vld [vmem:[%s7 + $0x168] sm:$0xff]
        %v857 = vld [vmem:[%s7 + $0x170] sm:$0xff]
        %v858 = vld [vmem:[%s7 + $0x178] sm:$0xff]
        %v859 = vld [vmem:[%s7 + $0x180] sm:$0xff]
        %v860 = vld [vmem:[%s7 + $0x188] sm:$0xff]
        %v861 = vld [vmem:[%s7 + $0x190] sm:$0xff]
        %v862 = vld [vmem:[%s7 + $0x198] sm:$0xff]
        %v863 = vld [vmem:[%s7 + $0x1a0] sm:$0xff]
        %v864 = vld [vmem:[%s7 + $0x1a8] sm:$0xff]
        %v865 = vld [vmem:[%s7 + $0x1b0] sm:$0xff]
        %v866 = vld [vmem:[%s7 + $0x1b8] sm:$0xff]
        %v867 = vld [vmem:[%s7 + $0x1c0] sm:$0xff]
        %v868 = vld [vmem:[%s7 + $0x1c8] sm:$0xff]
        %v869 = vld [vmem:[%s7 + $0x1d0] sm:$0xff]
        %v870 = vld [vmem:[%s7 + $0x1d8] sm:$0xff]
        %v871 = vld [vmem:[%s7 + $0x1e0] sm:$0xff]
        %v872 = vld [vmem:[%s7 + $0x1e8] sm:$0xff]
        %v873 = vld [vmem:[%s7 + $0x1f0] sm:$0xff]
        %v874 = vld [vmem:[%s7 + $0x1f8] sm:$0xff]
        %v875 = vld [vmem:[%s7 + $0x200] sm:$0xff]
        %v876 = vld [vmem:[%s7 + $0x208] sm:$0xff]
        %v877 = vld [vmem:[%s7 + $0x210] sm:$0xff]
        %v878 = vld [vmem:[%s7 + $0x218] sm:$0xff]
        %v879 = vld [vmem:[%s7 + $0x220] sm:$0xff]
        %v880 = vld [vmem:[%s7 + $0x228] sm:$0xff]
        %v881 = vld [vmem:[%s7 + $0x230] sm:$0xff]
        %v882 = vld [vmem:[%s7 + $0x238] sm:$0xff]
        %v883 = vld [vmem:[%s7 + $0x240] sm:$0xff]
        %v884 = vld [vmem:[%s7 + $0x248] sm:$0xff]
        %v885 = vld [vmem:[%s7 + $0x250] sm:$0xff]
        %v886 = vld [vmem:[%s7 + $0x258] sm:$0xff]
        %v887 = vld [vmem:[%s7 + $0x260] sm:$0xff]
        %v888 = vld [vmem:[%s7 + $0x268] sm:$0xff]
        %v889 = vld [vmem:[%s7 + $0x270] sm:$0xff]
        %v890 = vld [vmem:[%s7 + $0x278] sm:$0xff]
        %v891 = vld [vmem:[%s7 + $0x280] sm:$0xff]
        %v892 = vld [vmem:[%s7 + $0x288] sm:$0xff]
        %v893 = vld [vmem:[%s7 + $0x290] sm:$0xff]
        %v894 = vld [vmem:[%s7 + $0x298] sm:$0xff]
        %v895 = vld [vmem:[%s7 + $0x2a0] sm:$0xff]
        %v896 = vld [vmem:[%s7 + $0x2a8] sm:$0xff]
        %v897 = vld [vmem:[%s7 + $0x2b0] sm:$0xff]
        %v898 = vld [vmem:[%s7 + $0x2b8] sm:$0xff]
        %v899 = vld [vmem:[%s7 + $0x2c0] sm:$0xff]
        %v900 = vld [vmem:[%s7 + $0x2c8] sm:$0xff]
        %v901 = vld [vmem:[%s7 + $0x2d0] sm:$0xff]
        %v902 = vld [vmem:[%s7 + $0x2d8] sm:$0xff]
        %v903 = vld [vmem:[%s7 + $0x2e0] sm:$0xff]
        %v904 = vld [vmem:[%s7 + $0x2e8] sm:$0xff]
        %v905 = vld [vmem:[%s7 + $0x2f0] sm:$0xff]
        %v906 = vld [vmem:[%s7 + $0x2f8] sm:$0xff]
        %v907 = vld [vmem:[%s7 + $0x300] sm:$0xff]
        %v908 = vld [vmem:[%s7 + $0x308] sm:$0xff]
        %v909 = vld [vmem:[%s7 + $0x310] sm:$0xff]
        %v910 = vld [vmem:[%s7 + $0x318] sm:$0xff]
        %v911 = vld [vmem:[%s7 + $0x320] sm:$0xff]
        %v912 = vld [vmem:[%s7 + $0x328] sm:$0xff]
        %v913 = vld [vmem:[%s7 + $0x330] sm:$0xff]
        %v914 = vld [vmem:[%s7 + $0x338] sm:$0xff]
        %v915 = vld [vmem:[%s7 + $0x340] sm:$0xff]
        %v916 = vld [vmem:[%s7 + $0x348] sm:$0xff]
        %v917 = vld [vmem:[%s7 + $0x350] sm:$0xff]
        %v918 = vld [vmem:[%s7 + $0x358] sm:$0xff]
        %v919 = vld [vmem:[%s7 + $0x360] sm:$0xff]
        %v920 = vld [vmem:[%s7 + $0x368] sm:$0xff]
        %v921 = vld [vmem:[%s7 + $0x370] sm:$0xff]
        %v922 = vld [vmem:[%s7 + $0x378] sm:$0xff]
        %v923 = vld [vmem:[%s7 + $0x380] sm:$0xff]
        %v924 = vld [vmem:[%s7 + $0x388] sm:$0xff]
        %v925 = vld [vmem:[%s7 + $0x390] sm:$0xff]
        %v926 = vld [vmem:[%s7 + $0x398] sm:$0xff]
        %v927 = vld [vmem:[%s7 + $0x3a0] sm:$0xff]
        %v928 = vld [vmem:[%s7 + $0x3a8] sm:$0xff]
        %v929 = vld [vmem:[%s7 + $0x3b0] sm:$0xff]
        %v930 = vld [vmem:[%s7 + $0x3b8] sm:$0xff]
        %v931 = vld [vmem:[%s7 + $0x3c0] sm:$0xff]
        %v932 = vld [vmem:[%s7 + $0x3c8] sm:$0xff]
        %v933 = vld [vmem:[%s7 + $0x3d0] sm:$0xff]
        %v934 = vld [vmem:[%s7 + $0x3d8] sm:$0xff]
        %v935 = vld [vmem:[%s7 + $0x3e0] sm:$0xff]
        %v936 = vld [vmem:[%s7 + $0x3e8] sm:$0xff]
        %v937 = vld [vmem:[%s7 + $0x3f0] sm:$0xff]
        %v938 = vld [vmem:[%s7 + $0x3f8] sm:$0xff]
        %v939 = vld [vmem:[%s8] sm:$0xff]
        %v940 = vld [vmem:[%s8 + $0x8] sm:$0xff]
        %v941 = vld [vmem:[%s8 + $0x10] sm:$0xff]
        %v942 = vld [vmem:[%s8 + $0x18] sm:$0xff]
        %v943 = vld [vmem:[%s8 + $0x20] sm:$0xff]
        %v944 = vld [vmem:[%s8 + $0x28] sm:$0xff]
        %v945 = vld [vmem:[%s8 + $0x30] sm:$0xff]
        %v946 = vld [vmem:[%s8 + $0x38] sm:$0xff]
        %v947 = vld [vmem:[%s8 + $0x40] sm:$0xff]
        %v948 = vld [vmem:[%s8 + $0x48] sm:$0xff]
        %v949 = vld [vmem:[%s8 + $0x50] sm:$0xff]
        %v950 = vld [vmem:[%s8 + $0x58] sm:$0xff]
        %v951 = vld [vmem:[%s8 + $0x60] sm:$0xff]
        %v952 = vld [vmem:[%s8 + $0x68] sm:$0xff]
        %v953 = vld [vmem:[%s8 + $0x70] sm:$0xff]
        %v954 = vld [vmem:[%s8 + $0x78] sm:$0xff]
        %v955 = vld [vmem:[%s8 + $0x80] sm:$0xff]
        %v956 = vld [vmem:[%s8 + $0x88] sm:$0xff]
        %v957 = vld [vmem:[%s8 + $0x90] sm:$0xff]
        %v958 = vld [vmem:[%s8 + $0x98] sm:$0xff]
        %v959 = vld [vmem:[%s8 + $0xa0] sm:$0xff]
        %v960 = vld [vmem:[%s8 + $0xa8] sm:$0xff]
        %v961 = vld [vmem:[%s8 + $0xb0] sm:$0xff]
        %v962 = vld [vmem:[%s8 + $0xb8] sm:$0xff]
        %v963 = vld [vmem:[%s8 + $0xc0] sm:$0xff]
        %v964 = vld [vmem:[%s8 + $0xc8] sm:$0xff]
        %v965 = vld [vmem:[%s8 + $0xd0] sm:$0xff]
        %v966 = vld [vmem:[%s8 + $0xd8] sm:$0xff]
        %v967 = vld [vmem:[%s8 + $0xe0] sm:$0xff]
        %v968 = vld [vmem:[%s8 + $0xe8] sm:$0xff]
        %v969 = vld [vmem:[%s8 + $0xf0] sm:$0xff]
        %v970 = vld [vmem:[%s8 + $0xf8] sm:$0xff]
        %v971 = vld [vmem:[%s8 + $0x100] sm:$0xff]
        %v972 = vld [vmem:[%s8 + $0x108] sm:$0xff]
        %v973 = vld [vmem:[%s8 + $0x110] sm:$0xff]
        %v974 = vld [vmem:[%s8 + $0x118] sm:$0xff]
        %v975 = vld [vmem:[%s8 + $0x120] sm:$0xff]
        %v976 = vld [vmem:[%s8 + $0x128] sm:$0xff]
        %v977 = vld [vmem:[%s8 + $0x130] sm:$0xff]
        %v978 = vld [vmem:[%s8 + $0x138] sm:$0xff]
        %v979 = vld [vmem:[%s8 + $0x140] sm:$0xff]
        %v980 = vld [vmem:[%s8 + $0x148] sm:$0xff]
        %v981 = vld [vmem:[%s8 + $0x150] sm:$0xff]
        %v982 = vld [vmem:[%s8 + $0x158] sm:$0xff]
        %v983 = vld [vmem:[%s8 + $0x160] sm:$0xff]
        %v984 = vld [vmem:[%s8 + $0x168] sm:$0xff]
        %v985 = vld [vmem:[%s8 + $0x170] sm:$0xff]
        %v986 = vld [vmem:[%s8 + $0x178] sm:$0xff]
        %v987 = vld [vmem:[%s8 + $0x180] sm:$0xff]
        %v988 = vld [vmem:[%s8 + $0x188] sm:$0xff]
        %v989 = vld [vmem:[%s8 + $0x190] sm:$0xff]
        %v990 = vld [vmem:[%s8 + $0x198] sm:$0xff]
        %v991 = vld [vmem:[%s8 + $0x1a0] sm:$0xff]
        %v992 = vld [vmem:[%s8 + $0x1a8] sm:$0xff]
        %v993 = vld [vmem:[%s8 + $0x1b0] sm:$0xff]
        %v994 = vld [vmem:[%s8 + $0x1b8] sm:$0xff]
        %v995 = vld [vmem:[%s8 + $0x1c0] sm:$0xff]
        %v996 = vld [vmem:[%s8 + $0x1c8] sm:$0xff]
        %v997 = vld [vmem:[%s8 + $0x1d0] sm:$0xff]
        %v998 = vld [vmem:[%s8 + $0x1d8] sm:$0xff]
        %v999 = vld [vmem:[%s8 + $0x1e0] sm:$0xff]
        %v1000 = vld [vmem:[%s8 + $0x1e8] sm:$0xff]
        %v1001 = vld [vmem:[%s8 + $0x1f0] sm:$0xff]
        %v1002 = vld [vmem:[%s8 + $0x1f8] sm:$0xff]
        %v1003 = vld [vmem:[%s8 + $0x200] sm:$0xff]
        %v1004 = vld [vmem:[%s8 + $0x208] sm:$0xff]
        %v1005 = vld [vmem:[%s8 + $0x210] sm:$0xff]
        %v1006 = vld [vmem:[%s8 + $0x218] sm:$0xff]
        %v1007 = vld [vmem:[%s8 + $0x220] sm:$0xff]
        %v1008 = vld [vmem:[%s8 + $0x228] sm:$0xff]
        %v1009 = vld [vmem:[%s8 + $0x230] sm:$0xff]
        %v1010 = vld [vmem:[%s8 + $0x238] sm:$0xff]
        %v1011 = vld [vmem:[%s8 + $0x240] sm:$0xff]
        %v1012 = vld [vmem:[%s8 + $0x248] sm:$0xff]
        %v1013 = vld [vmem:[%s8 + $0x250] sm:$0xff]
        %v1014 = vld [vmem:[%s8 + $0x258] sm:$0xff]
        %v1015 = vld [vmem:[%s8 + $0x260] sm:$0xff]
        %v1016 = vld [vmem:[%s8 + $0x268] sm:$0xff]
        %v1017 = vld [vmem:[%s8 + $0x270] sm:$0xff]
        %v1018 = vld [vmem:[%s8 + $0x278] sm:$0xff]
        %v1019 = vld [vmem:[%s8 + $0x280] sm:$0xff]
        %v1020 = vld [vmem:[%s8 + $0x288] sm:$0xff]
        %v1021 = vld [vmem:[%s8 + $0x290] sm:$0xff]
        %v1022 = vld [vmem:[%s8 + $0x298] sm:$0xff]
        %v1023 = vld [vmem:[%s8 + $0x2a0] sm:$0xff]
        %v1024 = vld [vmem:[%s8 + $0x2a8] sm:$0xff]
        %v1025 = vld [vmem:[%s8 + $0x2b0] sm:$0xff]
        %v1026 = vld [vmem:[%s8 + $0x2b8] sm:$0xff]
        %v1027 = vld [vmem:[%s8 + $0x2c0] sm:$0xff]
        %v1028 = vld [vmem:[%s8 + $0x2c8] sm:$0xff]
        %v1029 = vld [vmem:[%s8 + $0x2d0] sm:$0xff]
        %v1030 = vld [vmem:[%s8 + $0x2d8] sm:$0xff]
        %v1031 = vld [vmem:[%s8 + $0x2e0] sm:$0xff]
        %v1032 = vld [vmem:[%s8 + $0x2e8] sm:$0xff]
        %v1033 = vld [vmem:[%s8 + $0x2f0] sm:$0xff]
        %v1034 = vld [vmem:[%s8 + $0x2f8] sm:$0xff]
        %v1035 = vld [vmem:[%s8 + $0x300] sm:$0xff]
        %v1036 = vld [vmem:[%s8 + $0x308] sm:$0xff]
        %v1037 = vld [vmem:[%s8 + $0x310] sm:$0xff]
        %v1038 = vld [vmem:[%s8 + $0x318] sm:$0xff]
        %v1039 = vld [vmem:[%s8 + $0x320] sm:$0xff]
        %v1040 = vld [vmem:[%s8 + $0x328] sm:$0xff]
        %v1041 = vld [vmem:[%s8 + $0x330] sm:$0xff]
        %v1042 = vld [vmem:[%s8 + $0x338] sm:$0xff]
        %v1043 = vld [vmem:[%s8 + $0x340] sm:$0xff]
        %v1044 = vld [vmem:[%s8 + $0x348] sm:$0xff]
        %v1045 = vld [vmem:[%s8 + $0x350] sm:$0xff]
        %v1046 = vld [vmem:[%s8 + $0x358] sm:$0xff]
        %v1047 = vld [vmem:[%s8 + $0x360] sm:$0xff]
        %v1048 = vld [vmem:[%s8 + $0x368] sm:$0xff]
        %v1049 = vld [vmem:[%s8 + $0x370] sm:$0xff]
        %v1050 = vld [vmem:[%s8 + $0x378] sm:$0xff]
        %v1051 = vld [vmem:[%s8 + $0x380] sm:$0xff]
        %v1052 = vld [vmem:[%s8 + $0x388] sm:$0xff]
        %v1053 = vld [vmem:[%s8 + $0x390] sm:$0xff]
        %v1054 = vld [vmem:[%s8 + $0x398] sm:$0xff]
        %v1055 = vld [vmem:[%s8 + $0x3a0] sm:$0xff]
        %v1056 = vld [vmem:[%s8 + $0x3a8] sm:$0xff]
        %v1057 = vld [vmem:[%s8 + $0x3b0] sm:$0xff]
        %v1058 = vld [vmem:[%s8 + $0x3b8] sm:$0xff]
        %v1059 = vld [vmem:[%s8 + $0x3c0] sm:$0xff]
        %v1060 = vld [vmem:[%s8 + $0x3c8] sm:$0xff]
        %v1061 = vld [vmem:[%s8 + $0x3d0] sm:$0xff]
        %v1062 = vld [vmem:[%s8 + $0x3d8] sm:$0xff]
        %v1063 = vld [vmem:[%s8 + $0x3e0] sm:$0xff]
        %v1064 = vld [vmem:[%s8 + $0x3e8] sm:$0xff]
        %v1065 = vld [vmem:[%s8 + $0x3f0] sm:$0xff]
        %v1066 = vld [vmem:[%s8 + $0x3f8] sm:$0xff]
        %v1067 = vmul.f32 %v811, %v708
        %v1068 = vmul.f32 %v812, %v713
        %v1069 = vmul.f32 %v813, %v718
        %v1070 = vmul.f32 %v814, %v723
        %v1071 = vmul.f32 %v815, %v708
        %v1072 = vmul.f32 %v816, %v713
        %v1073 = vmul.f32 %v817, %v718
        %v1074 = vmul.f32 %v818, %v723
        %v1075 = vmul.f32 %v819, %v708
        %v1076 = vmul.f32 %v820, %v713
        %v1077 = vmul.f32 %v821, %v718
        %v1078 = vmul.f32 %v822, %v723
        %v1079 = vmul.f32 %v823, %v708
        %v1080 = vmul.f32 %v824, %v713
        %v1081 = vmul.f32 %v825, %v718
        %v1082 = vmul.f32 %v826, %v723
        %v1083 = vmul.f32 %v827, %v708
        %v1084 = vmul.f32 %v828, %v713
        %v1085 = vmul.f32 %v829, %v718
        %v1086 = vmul.f32 %v830, %v723
        %v1087 = vmul.f32 %v831, %v708
        %v1088 = vmul.f32 %v832, %v713
        %v1089 = vmul.f32 %v833, %v718
        %v1090 = vmul.f32 %v834, %v723
        %v1091 = vmul.f32 %v835, %v708
        %v1092 = vmul.f32 %v836, %v713
        %v1093 = vmul.f32 %v837, %v718
        %v1094 = vmul.f32 %v838, %v723
        %v1095 = vmul.f32 %v839, %v708
        %v1096 = vmul.f32 %v840, %v713
        %v1097 = vmul.f32 %v841, %v718
        %v1098 = vmul.f32 %v842, %v723
        %v1099 = vmul.f32 %v843, %v708
        %v1100 = vmul.f32 %v844, %v713
        %v1101 = vmul.f32 %v845, %v718
        %v1102 = vmul.f32 %v846, %v723
        %v1103 = vmul.f32 %v847, %v708
        %v1104 = vmul.f32 %v848, %v713
        %v1105 = vmul.f32 %v849, %v718
        %v1106 = vmul.f32 %v850, %v723
        %v1107 = vmul.f32 %v851, %v708
        %v1108 = vmul.f32 %v852, %v713
        %v1109 = vmul.f32 %v853, %v718
        %v1110 = vmul.f32 %v854, %v723
        %v1111 = vmul.f32 %v855, %v708
        %v1112 = vmul.f32 %v856, %v713
        %v1113 = vmul.f32 %v857, %v718
        %v1114 = vmul.f32 %v858, %v723
        %v1115 = vmul.f32 %v859, %v708
        %v1116 = vmul.f32 %v860, %v713
        %v1117 = vmul.f32 %v861, %v718
        %v1118 = vmul.f32 %v862, %v723
        %v1119 = vmul.f32 %v863, %v708
        %v1120 = vmul.f32 %v864, %v713
        %v1121 = vmul.f32 %v865, %v718
        %v1122 = vmul.f32 %v866, %v723
        %v1123 = vmul.f32 %v867, %v708
        %v1124 = vmul.f32 %v868, %v713
        %v1125 = vmul.f32 %v869, %v718
        %v1126 = vmul.f32 %v870, %v723
        %v1127 = vmul.f32 %v871, %v708
        %v1128 = vmul.f32 %v872, %v713
        %v1129 = vmul.f32 %v873, %v718
        %v1130 = vmul.f32 %v874, %v723
        %v1131 = vmul.f32 %v875, %v708
        %v1132 = vmul.f32 %v876, %v713
        %v1133 = vmul.f32 %v877, %v718
        %v1134 = vmul.f32 %v878, %v723
        %v1135 = vmul.f32 %v879, %v708
        %v1136 = vmul.f32 %v880, %v713
        %v1137 = vmul.f32 %v881, %v718
        %v1138 = vmul.f32 %v882, %v723
        %v1139 = vmul.f32 %v883, %v708
        %v1140 = vmul.f32 %v884, %v713
        %v1141 = vmul.f32 %v885, %v718
        %v1142 = vmul.f32 %v886, %v723
        %v1143 = vmul.f32 %v887, %v708
        %v1144 = vmul.f32 %v888, %v713
        %v1145 = vmul.f32 %v889, %v718
        %v1146 = vmul.f32 %v890, %v723
        %v1147 = vmul.f32 %v891, %v708
        %v1148 = vmul.f32 %v892, %v713
        %v1149 = vmul.f32 %v893, %v718
        %v1150 = vmul.f32 %v894, %v723
        %v1151 = vmul.f32 %v895, %v708
        %v1152 = vmul.f32 %v896, %v713
        %v1153 = vmul.f32 %v897, %v718
        %v1154 = vmul.f32 %v898, %v723
        %v1155 = vmul.f32 %v899, %v708
        %v1156 = vmul.f32 %v900, %v713
        %v1157 = vmul.f32 %v901, %v718
        %v1158 = vmul.f32 %v902, %v723
        %v1159 = vmul.f32 %v903, %v708
        %v1160 = vmul.f32 %v904, %v713
        %v1161 = vmul.f32 %v905, %v718
        %v1162 = vmul.f32 %v906, %v723
        %v1163 = vmul.f32 %v907, %v708
        %v1164 = vmul.f32 %v908, %v713
        %v1165 = vmul.f32 %v909, %v718
        %v1166 = vmul.f32 %v910, %v723
        %v1167 = vmul.f32 %v911, %v708
        %v1168 = vmul.f32 %v912, %v713
        %v1169 = vmul.f32 %v913, %v718
        %v1170 = vmul.f32 %v914, %v723
        %v1171 = vmul.f32 %v915, %v708
        %v1172 = vmul.f32 %v916, %v713
        %v1173 = vmul.f32 %v917, %v718
        %v1174 = vmul.f32 %v918, %v723
        %v1175 = vmul.f32 %v919, %v708
        %v1176 = vmul.f32 %v920, %v713
        %v1177 = vmul.f32 %v921, %v718
        %v1178 = vmul.f32 %v922, %v723
        %v1179 = vmul.f32 %v923, %v708
        %v1180 = vmul.f32 %v924, %v713
        %v1181 = vmul.f32 %v925, %v718
        %v1182 = vmul.f32 %v926, %v723
        %v1183 = vmul.f32 %v927, %v708
        %v1184 = vmul.f32 %v928, %v713
        %v1185 = vmul.f32 %v929, %v718
        %v1186 = vmul.f32 %v930, %v723
        %v1187 = vmul.f32 %v931, %v708
        %v1188 = vmul.f32 %v932, %v713
        %v1189 = vmul.f32 %v933, %v718
        %v1190 = vmul.f32 %v934, %v723
        %v1191 = vmul.f32 %v935, %v708
        %v1192 = vmul.f32 %v936, %v713
        %v1193 = vmul.f32 %v937, %v718
        %v1194 = vmul.f32 %v938, %v723
        %v1195 = vmul.f32 %v939, %v793
        %v1196 = vmul.f32 %v940, %v798
        %v1197 = vmul.f32 %v941, %v803
        %v1198 = vmul.f32 %v942, %v808
        %v1199 = vmul.f32 %v943, %v793
        %v1200 = vmul.f32 %v944, %v798
        %v1201 = vmul.f32 %v945, %v803
        %v1202 = vmul.f32 %v946, %v808
        %v1203 = vmul.f32 %v947, %v793
        %v1204 = vmul.f32 %v948, %v798
        %v1205 = vmul.f32 %v949, %v803
        %v1206 = vmul.f32 %v950, %v808
        %v1207 = vmul.f32 %v951, %v793
        %v1208 = vmul.f32 %v952, %v798
        %v1209 = vmul.f32 %v953, %v803
        %v1210 = vmul.f32 %v954, %v808
        %v1211 = vmul.f32 %v955, %v793
        %v1212 = vmul.f32 %v956, %v798
        %v1213 = vmul.f32 %v957, %v803
        %v1214 = vmul.f32 %v958, %v808
        %v1215 = vmul.f32 %v959, %v793
        %v1216 = vmul.f32 %v960, %v798
        %v1217 = vmul.f32 %v961, %v803
        %v1218 = vmul.f32 %v962, %v808
        %v1219 = vmul.f32 %v963, %v793
        %v1220 = vmul.f32 %v964, %v798
        %v1221 = vmul.f32 %v965, %v803
        %v1222 = vmul.f32 %v966, %v808
        %v1223 = vmul.f32 %v967, %v793
        %v1224 = vmul.f32 %v968, %v798
        %v1225 = vmul.f32 %v969, %v803
        %v1226 = vmul.f32 %v970, %v808
        %v1227 = vmul.f32 %v971, %v793
        %v1228 = vmul.f32 %v972, %v798
        %v1229 = vmul.f32 %v973, %v803
        %v1230 = vmul.f32 %v974, %v808
        %v1231 = vmul.f32 %v975, %v793
        %v1232 = vmul.f32 %v976, %v798
        %v1233 = vmul.f32 %v977, %v803
        %v1234 = vmul.f32 %v978, %v808
        %v1235 = vmul.f32 %v979, %v793
        %v1236 = vmul.f32 %v980, %v798
        %v1237 = vmul.f32 %v981, %v803
        %v1238 = vmul.f32 %v982, %v808
        %v1239 = vmul.f32 %v983, %v793
        %v1240 = vmul.f32 %v984, %v798
        %v1241 = vmul.f32 %v985, %v803
        %v1242 = vmul.f32 %v986, %v808
        %v1243 = vmul.f32 %v987, %v793
        %v1244 = vmul.f32 %v988, %v798
        %v1245 = vmul.f32 %v989, %v803
        %v1246 = vmul.f32 %v990, %v808
        %v1247 = vmul.f32 %v991, %v793
        %v1248 = vmul.f32 %v992, %v798
        %v1249 = vmul.f32 %v993, %v803
        %v1250 = vmul.f32 %v994, %v808
        %v1251 = vmul.f32 %v995, %v793
        %v1252 = vmul.f32 %v996, %v798
        %v1253 = vmul.f32 %v997, %v803
        %v1254 = vmul.f32 %v998, %v808
        %v1255 = vmul.f32 %v999, %v793
        %v1256 = vmul.f32 %v1000, %v798
        %v1257 = vmul.f32 %v1001, %v803
        %v1258 = vmul.f32 %v1002, %v808
        %v1259 = vmul.f32 %v1003, %v793
        %v1260 = vmul.f32 %v1004, %v798
        %v1261 = vmul.f32 %v1005, %v803
        %v1262 = vmul.f32 %v1006, %v808
        %v1263 = vmul.f32 %v1007, %v793
        %v1264 = vmul.f32 %v1008, %v798
        %v1265 = vmul.f32 %v1009, %v803
        %v1266 = vmul.f32 %v1010, %v808
        %v1267 = vmul.f32 %v1011, %v793
        %v1268 = vmul.f32 %v1012, %v798
        %v1269 = vmul.f32 %v1013, %v803
        %v1270 = vmul.f32 %v1014, %v808
        %v1271 = vmul.f32 %v1015, %v793
        %v1272 = vmul.f32 %v1016, %v798
        %v1273 = vmul.f32 %v1017, %v803
        %v1274 = vmul.f32 %v1018, %v808
        %v1275 = vmul.f32 %v1019, %v793
        %v1276 = vmul.f32 %v1020, %v798
        %v1277 = vmul.f32 %v1021, %v803
        %v1278 = vmul.f32 %v1022, %v808
        %v1279 = vmul.f32 %v1023, %v793
        %v1280 = vmul.f32 %v1024, %v798
        %v1281 = vmul.f32 %v1025, %v803
        %v1282 = vmul.f32 %v1026, %v808
        %v1283 = vmul.f32 %v1027, %v793
        %v1284 = vmul.f32 %v1028, %v798
        %v1285 = vmul.f32 %v1029, %v803
        %v1286 = vmul.f32 %v1030, %v808
        %v1287 = vmul.f32 %v1031, %v793
        %v1288 = vmul.f32 %v1032, %v798
        %v1289 = vmul.f32 %v1033, %v803
        %v1290 = vmul.f32 %v1034, %v808
        %v1291 = vmul.f32 %v1035, %v793
        %v1292 = vmul.f32 %v1036, %v798
        %v1293 = vmul.f32 %v1037, %v803
        %v1294 = vmul.f32 %v1038, %v808
        %v1295 = vmul.f32 %v1039, %v793
        %v1296 = vmul.f32 %v1040, %v798
        %v1297 = vmul.f32 %v1041, %v803
        %v1298 = vmul.f32 %v1042, %v808
        %v1299 = vmul.f32 %v1043, %v793
        %v1300 = vmul.f32 %v1044, %v798
        %v1301 = vmul.f32 %v1045, %v803
        %v1302 = vmul.f32 %v1046, %v808
        %v1303 = vmul.f32 %v1047, %v793
        %v1304 = vmul.f32 %v1048, %v798
        %v1305 = vmul.f32 %v1049, %v803
        %v1306 = vmul.f32 %v1050, %v808
        %v1307 = vmul.f32 %v1051, %v793
        %v1308 = vmul.f32 %v1052, %v798
        %v1309 = vmul.f32 %v1053, %v803
        %v1310 = vmul.f32 %v1054, %v808
        %v1311 = vmul.f32 %v1055, %v793
        %v1312 = vmul.f32 %v1056, %v798
        %v1313 = vmul.f32 %v1057, %v803
        %v1314 = vmul.f32 %v1058, %v808
        %v1315 = vmul.f32 %v1059, %v793
        %v1316 = vmul.f32 %v1060, %v798
        %v1317 = vmul.f32 %v1061, %v803
        %v1318 = vmul.f32 %v1062, %v808
        %v1319 = vmul.f32 %v1063, %v793
        %v1320 = vmul.f32 %v1064, %v798
        %v1321 = vmul.f32 %v1065, %v803
        %v1322 = vmul.f32 %v1066, %v808
        %v1323 = vsub.f32 %v1067, %v1195
        %v1324 = vsub.f32 %v1068, %v1196
        %v1325 = vsub.f32 %v1069, %v1197
        %v1326 = vsub.f32 %v1070, %v1198
        %v1327 = vsub.f32 %v1071, %v1199
        %v1328 = vsub.f32 %v1072, %v1200
        %v1329 = vsub.f32 %v1073, %v1201
        %v1330 = vsub.f32 %v1074, %v1202
        %v1331 = vsub.f32 %v1075, %v1203
        %v1332 = vsub.f32 %v1076, %v1204
        %v1333 = vsub.f32 %v1077, %v1205
        %v1334 = vsub.f32 %v1078, %v1206
        %v1335 = vsub.f32 %v1079, %v1207
        %v1336 = vsub.f32 %v1080, %v1208
        %v1337 = vsub.f32 %v1081, %v1209
        %v1338 = vsub.f32 %v1082, %v1210
        %v1339 = vsub.f32 %v1083, %v1211
        %v1340 = vsub.f32 %v1084, %v1212
        %v1341 = vsub.f32 %v1085, %v1213
        %v1342 = vsub.f32 %v1086, %v1214
        %v1343 = vsub.f32 %v1087, %v1215
        %v1344 = vsub.f32 %v1088, %v1216
        %v1345 = vsub.f32 %v1089, %v1217
        %v1346 = vsub.f32 %v1090, %v1218
        %v1347 = vsub.f32 %v1091, %v1219
        %v1348 = vsub.f32 %v1092, %v1220
        %v1349 = vsub.f32 %v1093, %v1221
        %v1350 = vsub.f32 %v1094, %v1222
        %v1351 = vsub.f32 %v1095, %v1223
        %v1352 = vsub.f32 %v1096, %v1224
        %v1353 = vsub.f32 %v1097, %v1225
        %v1354 = vsub.f32 %v1098, %v1226
        %v1355 = vsub.f32 %v1099, %v1227
        %v1356 = vsub.f32 %v1100, %v1228
        %v1357 = vsub.f32 %v1101, %v1229
        %v1358 = vsub.f32 %v1102, %v1230
        %v1359 = vsub.f32 %v1103, %v1231
        %v1360 = vsub.f32 %v1104, %v1232
        %v1361 = vsub.f32 %v1105, %v1233
        %v1362 = vsub.f32 %v1106, %v1234
        %v1363 = vsub.f32 %v1107, %v1235
        %v1364 = vsub.f32 %v1108, %v1236
        %v1365 = vsub.f32 %v1109, %v1237
        %v1366 = vsub.f32 %v1110, %v1238
        %v1367 = vsub.f32 %v1111, %v1239
        %v1368 = vsub.f32 %v1112, %v1240
        %v1369 = vsub.f32 %v1113, %v1241
        %v1370 = vsub.f32 %v1114, %v1242
        %v1371 = vsub.f32 %v1115, %v1243
        %v1372 = vsub.f32 %v1116, %v1244
        %v1373 = vsub.f32 %v1117, %v1245
        %v1374 = vsub.f32 %v1118, %v1246
        %v1375 = vsub.f32 %v1119, %v1247
        %v1376 = vsub.f32 %v1120, %v1248
        %v1377 = vsub.f32 %v1121, %v1249
        %v1378 = vsub.f32 %v1122, %v1250
        %v1379 = vsub.f32 %v1123, %v1251
        %v1380 = vsub.f32 %v1124, %v1252
        %v1381 = vsub.f32 %v1125, %v1253
        %v1382 = vsub.f32 %v1126, %v1254
        %v1383 = vsub.f32 %v1127, %v1255
        %v1384 = vsub.f32 %v1128, %v1256
        %v1385 = vsub.f32 %v1129, %v1257
        %v1386 = vsub.f32 %v1130, %v1258
        %v1387 = vsub.f32 %v1131, %v1259
        %v1388 = vsub.f32 %v1132, %v1260
        %v1389 = vsub.f32 %v1133, %v1261
        %v1390 = vsub.f32 %v1134, %v1262
        %v1391 = vsub.f32 %v1135, %v1263
        %v1392 = vsub.f32 %v1136, %v1264
        %v1393 = vsub.f32 %v1137, %v1265
        %v1394 = vsub.f32 %v1138, %v1266
        %v1395 = vsub.f32 %v1139, %v1267
        %v1396 = vsub.f32 %v1140, %v1268
        %v1397 = vsub.f32 %v1141, %v1269
        %v1398 = vsub.f32 %v1142, %v1270
        %v1399 = vsub.f32 %v1143, %v1271
        %v1400 = vsub.f32 %v1144, %v1272
        %v1401 = vsub.f32 %v1145, %v1273
        %v1402 = vsub.f32 %v1146, %v1274
        %v1403 = vsub.f32 %v1147, %v1275
        %v1404 = vsub.f32 %v1148, %v1276
        %v1405 = vsub.f32 %v1149, %v1277
        %v1406 = vsub.f32 %v1150, %v1278
        %v1407 = vsub.f32 %v1151, %v1279
        %v1408 = vsub.f32 %v1152, %v1280
        %v1409 = vsub.f32 %v1153, %v1281
        %v1410 = vsub.f32 %v1154, %v1282
        %v1411 = vsub.f32 %v1155, %v1283
        %v1412 = vsub.f32 %v1156, %v1284
        %v1413 = vsub.f32 %v1157, %v1285
        %v1414 = vsub.f32 %v1158, %v1286
        %v1415 = vsub.f32 %v1159, %v1287
        %v1416 = vsub.f32 %v1160, %v1288
        %v1417 = vsub.f32 %v1161, %v1289
        %v1418 = vsub.f32 %v1162, %v1290
        %v1419 = vsub.f32 %v1163, %v1291
        %v1420 = vsub.f32 %v1164, %v1292
        %v1421 = vsub.f32 %v1165, %v1293
        %v1422 = vsub.f32 %v1166, %v1294
        %v1423 = vsub.f32 %v1167, %v1295
        %v1424 = vsub.f32 %v1168, %v1296
        %v1425 = vsub.f32 %v1169, %v1297
        %v1426 = vsub.f32 %v1170, %v1298
        %v1427 = vsub.f32 %v1171, %v1299
        %v1428 = vsub.f32 %v1172, %v1300
        %v1429 = vsub.f32 %v1173, %v1301
        %v1430 = vsub.f32 %v1174, %v1302
        %v1431 = vsub.f32 %v1175, %v1303
        %v1432 = vsub.f32 %v1176, %v1304
        %v1433 = vsub.f32 %v1177, %v1305
        %v1434 = vsub.f32 %v1178, %v1306
        %v1435 = vsub.f32 %v1179, %v1307
        %v1436 = vsub.f32 %v1180, %v1308
        %v1437 = vsub.f32 %v1181, %v1309
        %v1438 = vsub.f32 %v1182, %v1310
        %v1439 = vsub.f32 %v1183, %v1311
        %v1440 = vsub.f32 %v1184, %v1312
        %v1441 = vsub.f32 %v1185, %v1313
        %v1442 = vsub.f32 %v1186, %v1314
        %v1443 = vsub.f32 %v1187, %v1315
        %v1444 = vsub.f32 %v1188, %v1316
        %v1445 = vsub.f32 %v1189, %v1317
        %v1446 = vsub.f32 %v1190, %v1318
        %v1447 = vsub.f32 %v1191, %v1319
        %v1448 = vsub.f32 %v1192, %v1320
        %v1449 = vsub.f32 %v1193, %v1321
        %v1450 = vsub.f32 %v1194, %v1322
        %vm1451 = vcmask 64512
        %v1452 = vsel %vm1451, %v1323, 0.0
        %v1453 = vsel %vm1451, %v1324, 0.0
        %v1454 = vadd.f32 %v1452, %v1453
        %v1455 = vsel %vm1451, %v1325, 0.0
        %v1456 = vadd.f32 %v1454, %v1455
        %v1457 = vsel %vm1451, %v1326, 0.0
        %v1458 = vadd.f32 %v1456, %v1457
        %v1459 = vrot.slane %v1458, 4
        %v1460 = vadd.f32 %v1458, %v1459
        %v1461 = vrot.slane %v1460, 2
        %v1462 = vadd.f32 %v1460, %v1461
        %v1463 = vrot.slane %v1462, 1
        %v1464 = vadd.f32 %v1462, %v1463
        %v1465 = vsel %vm1451, %v1327, 0.0
        %v1466 = vsel %vm1451, %v1328, 0.0
        %v1467 = vadd.f32 %v1465, %v1466
        %v1468 = vsel %vm1451, %v1329, 0.0
        %v1469 = vadd.f32 %v1467, %v1468
        %v1470 = vsel %vm1451, %v1330, 0.0
        %v1471 = vadd.f32 %v1469, %v1470
        %v1472 = vrot.slane %v1471, 4
        %v1473 = vadd.f32 %v1471, %v1472
        %v1474 = vrot.slane %v1473, 2
        %v1475 = vadd.f32 %v1473, %v1474
        %v1476 = vrot.slane %v1475, 1
        %v1477 = vadd.f32 %v1475, %v1476
        %v1478 = vsel %vm1451, %v1331, 0.0
        %v1479 = vsel %vm1451, %v1332, 0.0
        %v1480 = vadd.f32 %v1478, %v1479
        %v1481 = vsel %vm1451, %v1333, 0.0
        %v1482 = vadd.f32 %v1480, %v1481
        %v1483 = vsel %vm1451, %v1334, 0.0
        %v1484 = vadd.f32 %v1482, %v1483
        %v1485 = vrot.slane %v1484, 4
        %v1486 = vadd.f32 %v1484, %v1485
        %v1487 = vrot.slane %v1486, 2
        %v1488 = vadd.f32 %v1486, %v1487
        %v1489 = vrot.slane %v1488, 1
        %v1490 = vadd.f32 %v1488, %v1489
        %v1491 = vsel %vm1451, %v1335, 0.0
        %v1492 = vsel %vm1451, %v1336, 0.0
        %v1493 = vadd.f32 %v1491, %v1492
        %v1494 = vsel %vm1451, %v1337, 0.0
        %v1495 = vadd.f32 %v1493, %v1494
        %v1496 = vsel %vm1451, %v1338, 0.0
        %v1497 = vadd.f32 %v1495, %v1496
        %v1498 = vrot.slane %v1497, 4
        %v1499 = vadd.f32 %v1497, %v1498
        %v1500 = vrot.slane %v1499, 2
        %v1501 = vadd.f32 %v1499, %v1500
        %v1502 = vrot.slane %v1501, 1
        %v1503 = vadd.f32 %v1501, %v1502
        %v1504 = vsel %vm1451, %v1339, 0.0
        %v1505 = vsel %vm1451, %v1340, 0.0
        %v1506 = vadd.f32 %v1504, %v1505
        %v1507 = vsel %vm1451, %v1341, 0.0
        %v1508 = vadd.f32 %v1506, %v1507
        %v1509 = vsel %vm1451, %v1342, 0.0
        %v1510 = vadd.f32 %v1508, %v1509
        %v1511 = vrot.slane %v1510, 4
        %v1512 = vadd.f32 %v1510, %v1511
        %v1513 = vrot.slane %v1512, 2
        %v1514 = vadd.f32 %v1512, %v1513
        %v1515 = vrot.slane %v1514, 1
        %v1516 = vadd.f32 %v1514, %v1515
        %v1517 = vsel %vm1451, %v1343, 0.0
        %v1518 = vsel %vm1451, %v1344, 0.0
        %v1519 = vadd.f32 %v1517, %v1518
        %v1520 = vsel %vm1451, %v1345, 0.0
        %v1521 = vadd.f32 %v1519, %v1520
        %v1522 = vsel %vm1451, %v1346, 0.0
        %v1523 = vadd.f32 %v1521, %v1522
        %v1524 = vrot.slane %v1523, 4
        %v1525 = vadd.f32 %v1523, %v1524
        %v1526 = vrot.slane %v1525, 2
        %v1527 = vadd.f32 %v1525, %v1526
        %v1528 = vrot.slane %v1527, 1
        %v1529 = vadd.f32 %v1527, %v1528
        %v1530 = vsel %vm1451, %v1347, 0.0
        %v1531 = vsel %vm1451, %v1348, 0.0
        %v1532 = vadd.f32 %v1530, %v1531
        %v1533 = vsel %vm1451, %v1349, 0.0
        %v1534 = vadd.f32 %v1532, %v1533
        %v1535 = vsel %vm1451, %v1350, 0.0
        %v1536 = vadd.f32 %v1534, %v1535
        %v1537 = vrot.slane %v1536, 4
        %v1538 = vadd.f32 %v1536, %v1537
        %v1539 = vrot.slane %v1538, 2
        %v1540 = vadd.f32 %v1538, %v1539
        %v1541 = vrot.slane %v1540, 1
        %v1542 = vadd.f32 %v1540, %v1541
        %v1543 = vsel %vm1451, %v1351, 0.0
        %v1544 = vsel %vm1451, %v1352, 0.0
        %v1545 = vadd.f32 %v1543, %v1544
        %v1546 = vsel %vm1451, %v1353, 0.0
        %v1547 = vadd.f32 %v1545, %v1546
        %v1548 = vsel %vm1451, %v1354, 0.0
        %v1549 = vadd.f32 %v1547, %v1548
        %v1550 = vrot.slane %v1549, 4
        %v1551 = vadd.f32 %v1549, %v1550
        %v1552 = vrot.slane %v1551, 2
        %v1553 = vadd.f32 %v1551, %v1552
        %v1554 = vrot.slane %v1553, 1
        %v1555 = vadd.f32 %v1553, %v1554
        %v1556 = vsel %vm1451, %v1355, 0.0
        %v1557 = vsel %vm1451, %v1356, 0.0
        %v1558 = vadd.f32 %v1556, %v1557
        %v1559 = vsel %vm1451, %v1357, 0.0
        %v1560 = vadd.f32 %v1558, %v1559
        %v1561 = vsel %vm1451, %v1358, 0.0
        %v1562 = vadd.f32 %v1560, %v1561
        %v1563 = vrot.slane %v1562, 4
        %v1564 = vadd.f32 %v1562, %v1563
        %v1565 = vrot.slane %v1564, 2
        %v1566 = vadd.f32 %v1564, %v1565
        %v1567 = vrot.slane %v1566, 1
        %v1568 = vadd.f32 %v1566, %v1567
        %v1569 = vsel %vm1451, %v1359, 0.0
        %v1570 = vsel %vm1451, %v1360, 0.0
        %v1571 = vadd.f32 %v1569, %v1570
        %v1572 = vsel %vm1451, %v1361, 0.0
        %v1573 = vadd.f32 %v1571, %v1572
        %v1574 = vsel %vm1451, %v1362, 0.0
        %v1575 = vadd.f32 %v1573, %v1574
        %v1576 = vrot.slane %v1575, 4
        %v1577 = vadd.f32 %v1575, %v1576
        %v1578 = vrot.slane %v1577, 2
        %v1579 = vadd.f32 %v1577, %v1578
        %v1580 = vrot.slane %v1579, 1
        %v1581 = vadd.f32 %v1579, %v1580
        %v1582 = vsel %vm1451, %v1363, 0.0
        %v1583 = vsel %vm1451, %v1364, 0.0
        %v1584 = vadd.f32 %v1582, %v1583
        %v1585 = vsel %vm1451, %v1365, 0.0
        %v1586 = vadd.f32 %v1584, %v1585
        %v1587 = vsel %vm1451, %v1366, 0.0
        %v1588 = vadd.f32 %v1586, %v1587
        %v1589 = vrot.slane %v1588, 4
        %v1590 = vadd.f32 %v1588, %v1589
        %v1591 = vrot.slane %v1590, 2
        %v1592 = vadd.f32 %v1590, %v1591
        %v1593 = vrot.slane %v1592, 1
        %v1594 = vadd.f32 %v1592, %v1593
        %v1595 = vsel %vm1451, %v1367, 0.0
        %v1596 = vsel %vm1451, %v1368, 0.0
        %v1597 = vadd.f32 %v1595, %v1596
        %v1598 = vsel %vm1451, %v1369, 0.0
        %v1599 = vadd.f32 %v1597, %v1598
        %v1600 = vsel %vm1451, %v1370, 0.0
        %v1601 = vadd.f32 %v1599, %v1600
        %v1602 = vrot.slane %v1601, 4
        %v1603 = vadd.f32 %v1601, %v1602
        %v1604 = vrot.slane %v1603, 2
        %v1605 = vadd.f32 %v1603, %v1604
        %v1606 = vrot.slane %v1605, 1
        %v1607 = vadd.f32 %v1605, %v1606
        %v1608 = vsel %vm1451, %v1371, 0.0
        %v1609 = vsel %vm1451, %v1372, 0.0
        %v1610 = vadd.f32 %v1608, %v1609
        %v1611 = vsel %vm1451, %v1373, 0.0
        %v1612 = vadd.f32 %v1610, %v1611
        %v1613 = vsel %vm1451, %v1374, 0.0
        %v1614 = vadd.f32 %v1612, %v1613
        %v1615 = vrot.slane %v1614, 4
        %v1616 = vadd.f32 %v1614, %v1615
        %v1617 = vrot.slane %v1616, 2
        %v1618 = vadd.f32 %v1616, %v1617
        %v1619 = vrot.slane %v1618, 1
        %v1620 = vadd.f32 %v1618, %v1619
        %v1621 = vsel %vm1451, %v1375, 0.0
        %v1622 = vsel %vm1451, %v1376, 0.0
        %v1623 = vadd.f32 %v1621, %v1622
        %v1624 = vsel %vm1451, %v1377, 0.0
        %v1625 = vadd.f32 %v1623, %v1624
        %v1626 = vsel %vm1451, %v1378, 0.0
        %v1627 = vadd.f32 %v1625, %v1626
        %v1628 = vrot.slane %v1627, 4
        %v1629 = vadd.f32 %v1627, %v1628
        %v1630 = vrot.slane %v1629, 2
        %v1631 = vadd.f32 %v1629, %v1630
        %v1632 = vrot.slane %v1631, 1
        %v1633 = vadd.f32 %v1631, %v1632
        %v1634 = vsel %vm1451, %v1379, 0.0
        %v1635 = vsel %vm1451, %v1380, 0.0
        %v1636 = vadd.f32 %v1634, %v1635
        %v1637 = vsel %vm1451, %v1381, 0.0
        %v1638 = vadd.f32 %v1636, %v1637
        %v1639 = vsel %vm1451, %v1382, 0.0
        %v1640 = vadd.f32 %v1638, %v1639
        %v1641 = vrot.slane %v1640, 4
        %v1642 = vadd.f32 %v1640, %v1641
        %v1643 = vrot.slane %v1642, 2
        %v1644 = vadd.f32 %v1642, %v1643
        %v1645 = vrot.slane %v1644, 1
        %v1646 = vadd.f32 %v1644, %v1645
        %v1647 = vsel %vm1451, %v1383, 0.0
        %v1648 = vsel %vm1451, %v1384, 0.0
        %v1649 = vadd.f32 %v1647, %v1648
        %v1650 = vsel %vm1451, %v1385, 0.0
        %v1651 = vadd.f32 %v1649, %v1650
        %v1652 = vsel %vm1451, %v1386, 0.0
        %v1653 = vadd.f32 %v1651, %v1652
        %v1654 = vrot.slane %v1653, 4
        %v1655 = vadd.f32 %v1653, %v1654
        %v1656 = vrot.slane %v1655, 2
        %v1657 = vadd.f32 %v1655, %v1656
        %v1658 = vrot.slane %v1657, 1
        %v1659 = vadd.f32 %v1657, %v1658
        %v1660 = vsel %vm1451, %v1387, 0.0
        %v1661 = vsel %vm1451, %v1388, 0.0
        %v1662 = vadd.f32 %v1660, %v1661
        %v1663 = vsel %vm1451, %v1389, 0.0
        %v1664 = vadd.f32 %v1662, %v1663
        %v1665 = vsel %vm1451, %v1390, 0.0
        %v1666 = vadd.f32 %v1664, %v1665
        %v1667 = vrot.slane %v1666, 4
        %v1668 = vadd.f32 %v1666, %v1667
        %v1669 = vrot.slane %v1668, 2
        %v1670 = vadd.f32 %v1668, %v1669
        %v1671 = vrot.slane %v1670, 1
        %v1672 = vadd.f32 %v1670, %v1671
        %v1673 = vsel %vm1451, %v1391, 0.0
        %v1674 = vsel %vm1451, %v1392, 0.0
        %v1675 = vadd.f32 %v1673, %v1674
        %v1676 = vsel %vm1451, %v1393, 0.0
        %v1677 = vadd.f32 %v1675, %v1676
        %v1678 = vsel %vm1451, %v1394, 0.0
        %v1679 = vadd.f32 %v1677, %v1678
        %v1680 = vrot.slane %v1679, 4
        %v1681 = vadd.f32 %v1679, %v1680
        %v1682 = vrot.slane %v1681, 2
        %v1683 = vadd.f32 %v1681, %v1682
        %v1684 = vrot.slane %v1683, 1
        %v1685 = vadd.f32 %v1683, %v1684
        %v1686 = vsel %vm1451, %v1395, 0.0
        %v1687 = vsel %vm1451, %v1396, 0.0
        %v1688 = vadd.f32 %v1686, %v1687
        %v1689 = vsel %vm1451, %v1397, 0.0
        %v1690 = vadd.f32 %v1688, %v1689
        %v1691 = vsel %vm1451, %v1398, 0.0
        %v1692 = vadd.f32 %v1690, %v1691
        %v1693 = vrot.slane %v1692, 4
        %v1694 = vadd.f32 %v1692, %v1693
        %v1695 = vrot.slane %v1694, 2
        %v1696 = vadd.f32 %v1694, %v1695
        %v1697 = vrot.slane %v1696, 1
        %v1698 = vadd.f32 %v1696, %v1697
        %v1699 = vsel %vm1451, %v1399, 0.0
        %v1700 = vsel %vm1451, %v1400, 0.0
        %v1701 = vadd.f32 %v1699, %v1700
        %v1702 = vsel %vm1451, %v1401, 0.0
        %v1703 = vadd.f32 %v1701, %v1702
        %v1704 = vsel %vm1451, %v1402, 0.0
        %v1705 = vadd.f32 %v1703, %v1704
        %v1706 = vrot.slane %v1705, 4
        %v1707 = vadd.f32 %v1705, %v1706
        %v1708 = vrot.slane %v1707, 2
        %v1709 = vadd.f32 %v1707, %v1708
        %v1710 = vrot.slane %v1709, 1
        %v1711 = vadd.f32 %v1709, %v1710
        %v1712 = vsel %vm1451, %v1403, 0.0
        %v1713 = vsel %vm1451, %v1404, 0.0
        %v1714 = vadd.f32 %v1712, %v1713
        %v1715 = vsel %vm1451, %v1405, 0.0
        %v1716 = vadd.f32 %v1714, %v1715
        %v1717 = vsel %vm1451, %v1406, 0.0
        %v1718 = vadd.f32 %v1716, %v1717
        %v1719 = vrot.slane %v1718, 4
        %v1720 = vadd.f32 %v1718, %v1719
        %v1721 = vrot.slane %v1720, 2
        %v1722 = vadd.f32 %v1720, %v1721
        %v1723 = vrot.slane %v1722, 1
        %v1724 = vadd.f32 %v1722, %v1723
        %v1725 = vsel %vm1451, %v1407, 0.0
        %v1726 = vsel %vm1451, %v1408, 0.0
        %v1727 = vadd.f32 %v1725, %v1726
        %v1728 = vsel %vm1451, %v1409, 0.0
        %v1729 = vadd.f32 %v1727, %v1728
        %v1730 = vsel %vm1451, %v1410, 0.0
        %v1731 = vadd.f32 %v1729, %v1730
        %v1732 = vrot.slane %v1731, 4
        %v1733 = vadd.f32 %v1731, %v1732
        %v1734 = vrot.slane %v1733, 2
        %v1735 = vadd.f32 %v1733, %v1734
        %v1736 = vrot.slane %v1735, 1
        %v1737 = vadd.f32 %v1735, %v1736
        %v1738 = vsel %vm1451, %v1411, 0.0
        %v1739 = vsel %vm1451, %v1412, 0.0
        %v1740 = vadd.f32 %v1738, %v1739
        %v1741 = vsel %vm1451, %v1413, 0.0
        %v1742 = vadd.f32 %v1740, %v1741
        %v1743 = vsel %vm1451, %v1414, 0.0
        %v1744 = vadd.f32 %v1742, %v1743
        %v1745 = vrot.slane %v1744, 4
        %v1746 = vadd.f32 %v1744, %v1745
        %v1747 = vrot.slane %v1746, 2
        %v1748 = vadd.f32 %v1746, %v1747
        %v1749 = vrot.slane %v1748, 1
        %v1750 = vadd.f32 %v1748, %v1749
        %v1751 = vsel %vm1451, %v1415, 0.0
        %v1752 = vsel %vm1451, %v1416, 0.0
        %v1753 = vadd.f32 %v1751, %v1752
        %v1754 = vsel %vm1451, %v1417, 0.0
        %v1755 = vadd.f32 %v1753, %v1754
        %v1756 = vsel %vm1451, %v1418, 0.0
        %v1757 = vadd.f32 %v1755, %v1756
        %v1758 = vrot.slane %v1757, 4
        %v1759 = vadd.f32 %v1757, %v1758
        %v1760 = vrot.slane %v1759, 2
        %v1761 = vadd.f32 %v1759, %v1760
        %v1762 = vrot.slane %v1761, 1
        %v1763 = vadd.f32 %v1761, %v1762
        %v1764 = vsel %vm1451, %v1419, 0.0
        %v1765 = vsel %vm1451, %v1420, 0.0
        %v1766 = vadd.f32 %v1764, %v1765
        %v1767 = vsel %vm1451, %v1421, 0.0
        %v1768 = vadd.f32 %v1766, %v1767
        %v1769 = vsel %vm1451, %v1422, 0.0
        %v1770 = vadd.f32 %v1768, %v1769
        %v1771 = vrot.slane %v1770, 4
        %v1772 = vadd.f32 %v1770, %v1771
        %v1773 = vrot.slane %v1772, 2
        %v1774 = vadd.f32 %v1772, %v1773
        %v1775 = vrot.slane %v1774, 1
        %v1776 = vadd.f32 %v1774, %v1775
        %v1777 = vsel %vm1451, %v1423, 0.0
        %v1778 = vsel %vm1451, %v1424, 0.0
        %v1779 = vadd.f32 %v1777, %v1778
        %v1780 = vsel %vm1451, %v1425, 0.0
        %v1781 = vadd.f32 %v1779, %v1780
        %v1782 = vsel %vm1451, %v1426, 0.0
        %v1783 = vadd.f32 %v1781, %v1782
        %v1784 = vrot.slane %v1783, 4
        %v1785 = vadd.f32 %v1783, %v1784
        %v1786 = vrot.slane %v1785, 2
        %v1787 = vadd.f32 %v1785, %v1786
        %v1788 = vrot.slane %v1787, 1
        %v1789 = vadd.f32 %v1787, %v1788
        %v1790 = vsel %vm1451, %v1427, 0.0
        %v1791 = vsel %vm1451, %v1428, 0.0
        %v1792 = vadd.f32 %v1790, %v1791
        %v1793 = vsel %vm1451, %v1429, 0.0
        %v1794 = vadd.f32 %v1792, %v1793
        %v1795 = vsel %vm1451, %v1430, 0.0
        %v1796 = vadd.f32 %v1794, %v1795
        %v1797 = vrot.slane %v1796, 4
        %v1798 = vadd.f32 %v1796, %v1797
        %v1799 = vrot.slane %v1798, 2
        %v1800 = vadd.f32 %v1798, %v1799
        %v1801 = vrot.slane %v1800, 1
        %v1802 = vadd.f32 %v1800, %v1801
        %v1803 = vsel %vm1451, %v1431, 0.0
        %v1804 = vsel %vm1451, %v1432, 0.0
        %v1805 = vadd.f32 %v1803, %v1804
        %v1806 = vsel %vm1451, %v1433, 0.0
        %v1807 = vadd.f32 %v1805, %v1806
        %v1808 = vsel %vm1451, %v1434, 0.0
        %v1809 = vadd.f32 %v1807, %v1808
        %v1810 = vrot.slane %v1809, 4
        %v1811 = vadd.f32 %v1809, %v1810
        %v1812 = vrot.slane %v1811, 2
        %v1813 = vadd.f32 %v1811, %v1812
        %v1814 = vrot.slane %v1813, 1
        %v1815 = vadd.f32 %v1813, %v1814
        %v1816 = vsel %vm1451, %v1435, 0.0
        %v1817 = vsel %vm1451, %v1436, 0.0
        %v1818 = vadd.f32 %v1816, %v1817
        %v1819 = vsel %vm1451, %v1437, 0.0
        %v1820 = vadd.f32 %v1818, %v1819
        %v1821 = vsel %vm1451, %v1438, 0.0
        %v1822 = vadd.f32 %v1820, %v1821
        %v1823 = vrot.slane %v1822, 4
        %v1824 = vadd.f32 %v1822, %v1823
        %v1825 = vrot.slane %v1824, 2
        %v1826 = vadd.f32 %v1824, %v1825
        %v1827 = vrot.slane %v1826, 1
        %v1828 = vadd.f32 %v1826, %v1827
        %v1829 = vsel %vm1451, %v1439, 0.0
        %v1830 = vsel %vm1451, %v1440, 0.0
        %v1831 = vadd.f32 %v1829, %v1830
        %v1832 = vsel %vm1451, %v1441, 0.0
        %v1833 = vadd.f32 %v1831, %v1832
        %v1834 = vsel %vm1451, %v1442, 0.0
        %v1835 = vadd.f32 %v1833, %v1834
        %v1836 = vrot.slane %v1835, 4
        %v1837 = vadd.f32 %v1835, %v1836
        %v1838 = vrot.slane %v1837, 2
        %v1839 = vadd.f32 %v1837, %v1838
        %v1840 = vrot.slane %v1839, 1
        %v1841 = vadd.f32 %v1839, %v1840
        %v1842 = vsel %vm1451, %v1443, 0.0
        %v1843 = vsel %vm1451, %v1444, 0.0
        %v1844 = vadd.f32 %v1842, %v1843
        %v1845 = vsel %vm1451, %v1445, 0.0
        %v1846 = vadd.f32 %v1844, %v1845
        %v1847 = vsel %vm1451, %v1446, 0.0
        %v1848 = vadd.f32 %v1846, %v1847
        %v1849 = vrot.slane %v1848, 4
        %v1850 = vadd.f32 %v1848, %v1849
        %v1851 = vrot.slane %v1850, 2
        %v1852 = vadd.f32 %v1850, %v1851
        %v1853 = vrot.slane %v1852, 1
        %v1854 = vadd.f32 %v1852, %v1853
        %v1855 = vsel %vm1451, %v1447, 0.0
        %v1856 = vsel %vm1451, %v1448, 0.0
        %v1857 = vadd.f32 %v1855, %v1856
        %v1858 = vsel %vm1451, %v1449, 0.0
        %v1859 = vadd.f32 %v1857, %v1858
        %v1860 = vsel %vm1451, %v1450, 0.0
        %v1861 = vadd.f32 %v1859, %v1860
        %v1862 = vrot.slane %v1861, 4
        %v1863 = vadd.f32 %v1861, %v1862
        %v1864 = vrot.slane %v1863, 2
        %v1865 = vadd.f32 %v1863, %v1864
        %v1866 = vrot.slane %v1865, 1
        %v1867 = vadd.f32 %v1865, %v1866
        %v1868 = vmul.f32 %v939, %v708
        %v1869 = vmul.f32 %v940, %v713
        %v1870 = vmul.f32 %v941, %v718
        %v1871 = vmul.f32 %v942, %v723
        %v1872 = vmul.f32 %v943, %v708
        %v1873 = vmul.f32 %v944, %v713
        %v1874 = vmul.f32 %v945, %v718
        %v1875 = vmul.f32 %v946, %v723
        %v1876 = vmul.f32 %v947, %v708
        %v1877 = vmul.f32 %v948, %v713
        %v1878 = vmul.f32 %v949, %v718
        %v1879 = vmul.f32 %v950, %v723
        %v1880 = vmul.f32 %v951, %v708
        %v1881 = vmul.f32 %v952, %v713
        %v1882 = vmul.f32 %v953, %v718
        %v1883 = vmul.f32 %v954, %v723
        %v1884 = vmul.f32 %v955, %v708
        %v1885 = vmul.f32 %v956, %v713
        %v1886 = vmul.f32 %v957, %v718
        %v1887 = vmul.f32 %v958, %v723
        %v1888 = vmul.f32 %v959, %v708
        %v1889 = vmul.f32 %v960, %v713
        %v1890 = vmul.f32 %v961, %v718
        %v1891 = vmul.f32 %v962, %v723
        %v1892 = vmul.f32 %v963, %v708
        %v1893 = vmul.f32 %v964, %v713
        %v1894 = vmul.f32 %v965, %v718
        %v1895 = vmul.f32 %v966, %v723
        %v1896 = vmul.f32 %v967, %v708
        %v1897 = vmul.f32 %v968, %v713
        %v1898 = vmul.f32 %v969, %v718
        %v1899 = vmul.f32 %v970, %v723
        %v1900 = vmul.f32 %v971, %v708
        %v1901 = vmul.f32 %v972, %v713
        %v1902 = vmul.f32 %v973, %v718
        %v1903 = vmul.f32 %v974, %v723
        %v1904 = vmul.f32 %v975, %v708
        %v1905 = vmul.f32 %v976, %v713
        %v1906 = vmul.f32 %v977, %v718
        %v1907 = vmul.f32 %v978, %v723
        %v1908 = vmul.f32 %v979, %v708
        %v1909 = vmul.f32 %v980, %v713
        %v1910 = vmul.f32 %v981, %v718
        %v1911 = vmul.f32 %v982, %v723
        %v1912 = vmul.f32 %v983, %v708
        %v1913 = vmul.f32 %v984, %v713
        %v1914 = vmul.f32 %v985, %v718
        %v1915 = vmul.f32 %v986, %v723
        %v1916 = vmul.f32 %v987, %v708
        %v1917 = vmul.f32 %v988, %v713
        %v1918 = vmul.f32 %v989, %v718
        %v1919 = vmul.f32 %v990, %v723
        %v1920 = vmul.f32 %v991, %v708
        %v1921 = vmul.f32 %v992, %v713
        %v1922 = vmul.f32 %v993, %v718
        %v1923 = vmul.f32 %v994, %v723
        %v1924 = vmul.f32 %v995, %v708
        %v1925 = vmul.f32 %v996, %v713
        %v1926 = vmul.f32 %v997, %v718
        %v1927 = vmul.f32 %v998, %v723
        %v1928 = vmul.f32 %v999, %v708
        %v1929 = vmul.f32 %v1000, %v713
        %v1930 = vmul.f32 %v1001, %v718
        %v1931 = vmul.f32 %v1002, %v723
        %v1932 = vmul.f32 %v1003, %v708
        %v1933 = vmul.f32 %v1004, %v713
        %v1934 = vmul.f32 %v1005, %v718
        %v1935 = vmul.f32 %v1006, %v723
        %v1936 = vmul.f32 %v1007, %v708
        %v1937 = vmul.f32 %v1008, %v713
        %v1938 = vmul.f32 %v1009, %v718
        %v1939 = vmul.f32 %v1010, %v723
        %v1940 = vmul.f32 %v1011, %v708
        %v1941 = vmul.f32 %v1012, %v713
        %v1942 = vmul.f32 %v1013, %v718
        %v1943 = vmul.f32 %v1014, %v723
        %v1944 = vmul.f32 %v1015, %v708
        %v1945 = vmul.f32 %v1016, %v713
        %v1946 = vmul.f32 %v1017, %v718
        %v1947 = vmul.f32 %v1018, %v723
        %v1948 = vmul.f32 %v1019, %v708
        %v1949 = vmul.f32 %v1020, %v713
        %v1950 = vmul.f32 %v1021, %v718
        %v1951 = vmul.f32 %v1022, %v723
        %v1952 = vmul.f32 %v1023, %v708
        %v1953 = vmul.f32 %v1024, %v713
        %v1954 = vmul.f32 %v1025, %v718
        %v1955 = vmul.f32 %v1026, %v723
        %v1956 = vmul.f32 %v1027, %v708
        %v1957 = vmul.f32 %v1028, %v713
        %v1958 = vmul.f32 %v1029, %v718
        %v1959 = vmul.f32 %v1030, %v723
        %v1960 = vmul.f32 %v1031, %v708
        %v1961 = vmul.f32 %v1032, %v713
        %v1962 = vmul.f32 %v1033, %v718
        %v1963 = vmul.f32 %v1034, %v723
        %v1964 = vmul.f32 %v1035, %v708
        %v1965 = vmul.f32 %v1036, %v713
        %v1966 = vmul.f32 %v1037, %v718
        %v1967 = vmul.f32 %v1038, %v723
        %v1968 = vmul.f32 %v1039, %v708
        %v1969 = vmul.f32 %v1040, %v713
        %v1970 = vmul.f32 %v1041, %v718
        %v1971 = vmul.f32 %v1042, %v723
        %v1972 = vmul.f32 %v1043, %v708
        %v1973 = vmul.f32 %v1044, %v713
        %v1974 = vmul.f32 %v1045, %v718
        %v1975 = vmul.f32 %v1046, %v723
        %v1976 = vmul.f32 %v1047, %v708
        %v1977 = vmul.f32 %v1048, %v713
        %v1978 = vmul.f32 %v1049, %v718
        %v1979 = vmul.f32 %v1050, %v723
        %v1980 = vmul.f32 %v1051, %v708
        %v1981 = vmul.f32 %v1052, %v713
        %v1982 = vmul.f32 %v1053, %v718
        %v1983 = vmul.f32 %v1054, %v723
        %v1984 = vmul.f32 %v1055, %v708
        %v1985 = vmul.f32 %v1056, %v713
        %v1986 = vmul.f32 %v1057, %v718
        %v1987 = vmul.f32 %v1058, %v723
        %v1988 = vmul.f32 %v1059, %v708
        %v1989 = vmul.f32 %v1060, %v713
        %v1990 = vmul.f32 %v1061, %v718
        %v1991 = vmul.f32 %v1062, %v723
        %v1992 = vmul.f32 %v1063, %v708
        %v1993 = vmul.f32 %v1064, %v713
        %v1994 = vmul.f32 %v1065, %v718
        %v1995 = vmul.f32 %v1066, %v723
        %v1996 = vmul.f32 %v811, %v793
        %v1997 = vmul.f32 %v812, %v798
        %v1998 = vmul.f32 %v813, %v803
        %v1999 = vmul.f32 %v814, %v808
        %v2000 = vmul.f32 %v815, %v793
        %v2001 = vmul.f32 %v816, %v798
        %v2002 = vmul.f32 %v817, %v803
        %v2003 = vmul.f32 %v818, %v808
        %v2004 = vmul.f32 %v819, %v793
        %v2005 = vmul.f32 %v820, %v798
        %v2006 = vmul.f32 %v821, %v803
        %v2007 = vmul.f32 %v822, %v808
        %v2008 = vmul.f32 %v823, %v793
        %v2009 = vmul.f32 %v824, %v798
        %v2010 = vmul.f32 %v825, %v803
        %v2011 = vmul.f32 %v826, %v808
        %v2012 = vmul.f32 %v827, %v793
        %v2013 = vmul.f32 %v828, %v798
        %v2014 = vmul.f32 %v829, %v803
        %v2015 = vmul.f32 %v830, %v808
        %v2016 = vmul.f32 %v831, %v793
        %v2017 = vmul.f32 %v832, %v798
        %v2018 = vmul.f32 %v833, %v803
        %v2019 = vmul.f32 %v834, %v808
        %v2020 = vmul.f32 %v835, %v793
        %v2021 = vmul.f32 %v836, %v798
        %v2022 = vmul.f32 %v837, %v803
        %v2023 = vmul.f32 %v838, %v808
        %v2024 = vmul.f32 %v839, %v793
        %v2025 = vmul.f32 %v840, %v798
        %v2026 = vmul.f32 %v841, %v803
        %v2027 = vmul.f32 %v842, %v808
        %v2028 = vmul.f32 %v843, %v793
        %v2029 = vmul.f32 %v844, %v798
        %v2030 = vmul.f32 %v845, %v803
        %v2031 = vmul.f32 %v846, %v808
        %v2032 = vmul.f32 %v847, %v793
        %v2033 = vmul.f32 %v848, %v798
        %v2034 = vmul.f32 %v849, %v803
        %v2035 = vmul.f32 %v850, %v808
        %v2036 = vmul.f32 %v851, %v793
        %v2037 = vmul.f32 %v852, %v798
        %v2038 = vmul.f32 %v853, %v803
        %v2039 = vmul.f32 %v854, %v808
        %v2040 = vmul.f32 %v855, %v793
        %v2041 = vmul.f32 %v856, %v798
        %v2042 = vmul.f32 %v857, %v803
        %v2043 = vmul.f32 %v858, %v808
        %v2044 = vmul.f32 %v859, %v793
        %v2045 = vmul.f32 %v860, %v798
        %v2046 = vmul.f32 %v861, %v803
        %v2047 = vmul.f32 %v862, %v808
        %v2048 = vmul.f32 %v863, %v793
        %v2049 = vmul.f32 %v864, %v798
        %v2050 = vmul.f32 %v865, %v803
        %v2051 = vmul.f32 %v866, %v808
        %v2052 = vmul.f32 %v867, %v793
        %v2053 = vmul.f32 %v868, %v798
        %v2054 = vmul.f32 %v869, %v803
        %v2055 = vmul.f32 %v870, %v808
        %v2056 = vmul.f32 %v871, %v793
        %v2057 = vmul.f32 %v872, %v798
        %v2058 = vmul.f32 %v873, %v803
        %v2059 = vmul.f32 %v874, %v808
        %v2060 = vmul.f32 %v875, %v793
        %v2061 = vmul.f32 %v876, %v798
        %v2062 = vmul.f32 %v877, %v803
        %v2063 = vmul.f32 %v878, %v808
        %v2064 = vmul.f32 %v879, %v793
        %v2065 = vmul.f32 %v880, %v798
        %v2066 = vmul.f32 %v881, %v803
        %v2067 = vmul.f32 %v882, %v808
        %v2068 = vmul.f32 %v883, %v793
        %v2069 = vmul.f32 %v884, %v798
        %v2070 = vmul.f32 %v885, %v803
        %v2071 = vmul.f32 %v886, %v808
        %v2072 = vmul.f32 %v887, %v793
        %v2073 = vmul.f32 %v888, %v798
        %v2074 = vmul.f32 %v889, %v803
        %v2075 = vmul.f32 %v890, %v808
        %v2076 = vmul.f32 %v891, %v793
        %v2077 = vmul.f32 %v892, %v798
        %v2078 = vmul.f32 %v893, %v803
        %v2079 = vmul.f32 %v894, %v808
        %v2080 = vmul.f32 %v895, %v793
        %v2081 = vmul.f32 %v896, %v798
        %v2082 = vmul.f32 %v897, %v803
        %v2083 = vmul.f32 %v898, %v808
        %v2084 = vmul.f32 %v899, %v793
        %v2085 = vmul.f32 %v900, %v798
        %v2086 = vmul.f32 %v901, %v803
        %v2087 = vmul.f32 %v902, %v808
        %v2088 = vmul.f32 %v903, %v793
        %v2089 = vmul.f32 %v904, %v798
        %v2090 = vmul.f32 %v905, %v803
        %v2091 = vmul.f32 %v906, %v808
        %v2092 = vmul.f32 %v907, %v793
        %v2093 = vmul.f32 %v908, %v798
        %v2094 = vmul.f32 %v909, %v803
        %v2095 = vmul.f32 %v910, %v808
        %v2096 = vmul.f32 %v911, %v793
        %v2097 = vmul.f32 %v912, %v798
        %v2098 = vmul.f32 %v913, %v803
        %v2099 = vmul.f32 %v914, %v808
        %v2100 = vmul.f32 %v915, %v793
        %v2101 = vmul.f32 %v916, %v798
        %v2102 = vmul.f32 %v917, %v803
        %v2103 = vmul.f32 %v918, %v808
        %v2104 = vmul.f32 %v919, %v793
        %v2105 = vmul.f32 %v920, %v798
        %v2106 = vmul.f32 %v921, %v803
        %v2107 = vmul.f32 %v922, %v808
        %v2108 = vmul.f32 %v923, %v793
        %v2109 = vmul.f32 %v924, %v798
        %v2110 = vmul.f32 %v925, %v803
        %v2111 = vmul.f32 %v926, %v808
        %v2112 = vmul.f32 %v927, %v793
        %v2113 = vmul.f32 %v928, %v798
        %v2114 = vmul.f32 %v929, %v803
        %v2115 = vmul.f32 %v930, %v808
        %v2116 = vmul.f32 %v931, %v793
        %v2117 = vmul.f32 %v932, %v798
        %v2118 = vmul.f32 %v933, %v803
        %v2119 = vmul.f32 %v934, %v808
        %v2120 = vmul.f32 %v935, %v793
        %v2121 = vmul.f32 %v936, %v798
        %v2122 = vmul.f32 %v937, %v803
        %v2123 = vmul.f32 %v938, %v808
        %v2124 = vadd.f32 %v1868, %v1996
        %v2125 = vadd.f32 %v1869, %v1997
        %v2126 = vadd.f32 %v1870, %v1998
        %v2127 = vadd.f32 %v1871, %v1999
        %v2128 = vadd.f32 %v1872, %v2000
        %v2129 = vadd.f32 %v1873, %v2001
        %v2130 = vadd.f32 %v1874, %v2002
        %v2131 = vadd.f32 %v1875, %v2003
        %v2132 = vadd.f32 %v1876, %v2004
        %v2133 = vadd.f32 %v1877, %v2005
        %v2134 = vadd.f32 %v1878, %v2006
        %v2135 = vadd.f32 %v1879, %v2007
        %v2136 = vadd.f32 %v1880, %v2008
        %v2137 = vadd.f32 %v1881, %v2009
        %v2138 = vadd.f32 %v1882, %v2010
        %v2139 = vadd.f32 %v1883, %v2011
        %v2140 = vadd.f32 %v1884, %v2012
        %v2141 = vadd.f32 %v1885, %v2013
        %v2142 = vadd.f32 %v1886, %v2014
        %v2143 = vadd.f32 %v1887, %v2015
        %v2144 = vadd.f32 %v1888, %v2016
        %v2145 = vadd.f32 %v1889, %v2017
        %v2146 = vadd.f32 %v1890, %v2018
        %v2147 = vadd.f32 %v1891, %v2019
        %v2148 = vadd.f32 %v1892, %v2020
        %v2149 = vadd.f32 %v1893, %v2021
        %v2150 = vadd.f32 %v1894, %v2022
        %v2151 = vadd.f32 %v1895, %v2023
        %v2152 = vadd.f32 %v1896, %v2024
        %v2153 = vadd.f32 %v1897, %v2025
        %v2154 = vadd.f32 %v1898, %v2026
        %v2155 = vadd.f32 %v1899, %v2027
        %v2156 = vadd.f32 %v1900, %v2028
        %v2157 = vadd.f32 %v1901, %v2029
        %v2158 = vadd.f32 %v1902, %v2030
        %v2159 = vadd.f32 %v1903, %v2031
        %v2160 = vadd.f32 %v1904, %v2032
        %v2161 = vadd.f32 %v1905, %v2033
        %v2162 = vadd.f32 %v1906, %v2034
        %v2163 = vadd.f32 %v1907, %v2035
        %v2164 = vadd.f32 %v1908, %v2036
        %v2165 = vadd.f32 %v1909, %v2037
        %v2166 = vadd.f32 %v1910, %v2038
        %v2167 = vadd.f32 %v1911, %v2039
        %v2168 = vadd.f32 %v1912, %v2040
        %v2169 = vadd.f32 %v1913, %v2041
        %v2170 = vadd.f32 %v1914, %v2042
        %v2171 = vadd.f32 %v1915, %v2043
        %v2172 = vadd.f32 %v1916, %v2044
        %v2173 = vadd.f32 %v1917, %v2045
        %v2174 = vadd.f32 %v1918, %v2046
        %v2175 = vadd.f32 %v1919, %v2047
        %v2176 = vadd.f32 %v1920, %v2048
        %v2177 = vadd.f32 %v1921, %v2049
        %v2178 = vadd.f32 %v1922, %v2050
        %v2179 = vadd.f32 %v1923, %v2051
        %v2180 = vadd.f32 %v1924, %v2052
        %v2181 = vadd.f32 %v1925, %v2053
        %v2182 = vadd.f32 %v1926, %v2054
        %v2183 = vadd.f32 %v1927, %v2055
        %v2184 = vadd.f32 %v1928, %v2056
        %v2185 = vadd.f32 %v1929, %v2057
        %v2186 = vadd.f32 %v1930, %v2058
        %v2187 = vadd.f32 %v1931, %v2059
        %v2188 = vadd.f32 %v1932, %v2060
        %v2189 = vadd.f32 %v1933, %v2061
        %v2190 = vadd.f32 %v1934, %v2062
        %v2191 = vadd.f32 %v1935, %v2063
        %v2192 = vadd.f32 %v1936, %v2064
        %v2193 = vadd.f32 %v1937, %v2065
        %v2194 = vadd.f32 %v1938, %v2066
        %v2195 = vadd.f32 %v1939, %v2067
        %v2196 = vadd.f32 %v1940, %v2068
        %v2197 = vadd.f32 %v1941, %v2069
        %v2198 = vadd.f32 %v1942, %v2070
        %v2199 = vadd.f32 %v1943, %v2071
        %v2200 = vadd.f32 %v1944, %v2072
        %v2201 = vadd.f32 %v1945, %v2073
        %v2202 = vadd.f32 %v1946, %v2074
        %v2203 = vadd.f32 %v1947, %v2075
        %v2204 = vadd.f32 %v1948, %v2076
        %v2205 = vadd.f32 %v1949, %v2077
        %v2206 = vadd.f32 %v1950, %v2078
        %v2207 = vadd.f32 %v1951, %v2079
        %v2208 = vadd.f32 %v1952, %v2080
        %v2209 = vadd.f32 %v1953, %v2081
        %v2210 = vadd.f32 %v1954, %v2082
        %v2211 = vadd.f32 %v1955, %v2083
        %v2212 = vadd.f32 %v1956, %v2084
        %v2213 = vadd.f32 %v1957, %v2085
        %v2214 = vadd.f32 %v1958, %v2086
        %v2215 = vadd.f32 %v1959, %v2087
        %v2216 = vadd.f32 %v1960, %v2088
        %v2217 = vadd.f32 %v1961, %v2089
        %v2218 = vadd.f32 %v1962, %v2090
        %v2219 = vadd.f32 %v1963, %v2091
        %v2220 = vadd.f32 %v1964, %v2092
        %v2221 = vadd.f32 %v1965, %v2093
        %v2222 = vadd.f32 %v1966, %v2094
        %v2223 = vadd.f32 %v1967, %v2095
        %v2224 = vadd.f32 %v1968, %v2096
        %v2225 = vadd.f32 %v1969, %v2097
        %v2226 = vadd.f32 %v1970, %v2098
        %v2227 = vadd.f32 %v1971, %v2099
        %v2228 = vadd.f32 %v1972, %v2100
        %v2229 = vadd.f32 %v1973, %v2101
        %v2230 = vadd.f32 %v1974, %v2102
        %v2231 = vadd.f32 %v1975, %v2103
        %v2232 = vadd.f32 %v1976, %v2104
        %v2233 = vadd.f32 %v1977, %v2105
        %v2234 = vadd.f32 %v1978, %v2106
        %v2235 = vadd.f32 %v1979, %v2107
        %v2236 = vadd.f32 %v1980, %v2108
        %v2237 = vadd.f32 %v1981, %v2109
        %v2238 = vadd.f32 %v1982, %v2110
        %v2239 = vadd.f32 %v1983, %v2111
        %v2240 = vadd.f32 %v1984, %v2112
        %v2241 = vadd.f32 %v1985, %v2113
        %v2242 = vadd.f32 %v1986, %v2114
        %v2243 = vadd.f32 %v1987, %v2115
        %v2244 = vadd.f32 %v1988, %v2116
        %v2245 = vadd.f32 %v1989, %v2117
        %v2246 = vadd.f32 %v1990, %v2118
        %v2247 = vadd.f32 %v1991, %v2119
        %v2248 = vadd.f32 %v1992, %v2120
        %v2249 = vadd.f32 %v1993, %v2121
        %v2250 = vadd.f32 %v1994, %v2122
        %v2251 = vadd.f32 %v1995, %v2123
        %v2252 = vsel %vm1451, %v2124, 0.0
        %v2253 = vsel %vm1451, %v2125, 0.0
        %v2254 = vadd.f32 %v2252, %v2253
        %v2255 = vsel %vm1451, %v2126, 0.0
        %v2256 = vadd.f32 %v2254, %v2255
        %v2257 = vsel %vm1451, %v2127, 0.0
        %v2258 = vadd.f32 %v2256, %v2257
        %v2259 = vrot.slane %v2258, 4
        %v2260 = vadd.f32 %v2258, %v2259
        %v2261 = vrot.slane %v2260, 2
        %v2262 = vadd.f32 %v2260, %v2261
        %v2263 = vrot.slane %v2262, 1
        %v2264 = vadd.f32 %v2262, %v2263
        %v2265 = vsel %vm1451, %v2128, 0.0
        %v2266 = vsel %vm1451, %v2129, 0.0
        %v2267 = vadd.f32 %v2265, %v2266
        %v2268 = vsel %vm1451, %v2130, 0.0
        %v2269 = vadd.f32 %v2267, %v2268
        %v2270 = vsel %vm1451, %v2131, 0.0
        %v2271 = vadd.f32 %v2269, %v2270
        %v2272 = vrot.slane %v2271, 4
        %v2273 = vadd.f32 %v2271, %v2272
        %v2274 = vrot.slane %v2273, 2
        %v2275 = vadd.f32 %v2273, %v2274
        %v2276 = vrot.slane %v2275, 1
        %v2277 = vadd.f32 %v2275, %v2276
        %v2278 = vsel %vm1451, %v2132, 0.0
        %v2279 = vsel %vm1451, %v2133, 0.0
        %v2280 = vadd.f32 %v2278, %v2279
        %v2281 = vsel %vm1451, %v2134, 0.0
        %v2282 = vadd.f32 %v2280, %v2281
        %v2283 = vsel %vm1451, %v2135, 0.0
        %v2284 = vadd.f32 %v2282, %v2283
        %v2285 = vrot.slane %v2284, 4
        %v2286 = vadd.f32 %v2284, %v2285
        %v2287 = vrot.slane %v2286, 2
        %v2288 = vadd.f32 %v2286, %v2287
        %v2289 = vrot.slane %v2288, 1
        %v2290 = vadd.f32 %v2288, %v2289
        %v2291 = vsel %vm1451, %v2136, 0.0
        %v2292 = vsel %vm1451, %v2137, 0.0
        %v2293 = vadd.f32 %v2291, %v2292
        %v2294 = vsel %vm1451, %v2138, 0.0
        %v2295 = vadd.f32 %v2293, %v2294
        %v2296 = vsel %vm1451, %v2139, 0.0
        %v2297 = vadd.f32 %v2295, %v2296
        %v2298 = vrot.slane %v2297, 4
        %v2299 = vadd.f32 %v2297, %v2298
        %v2300 = vrot.slane %v2299, 2
        %v2301 = vadd.f32 %v2299, %v2300
        %v2302 = vrot.slane %v2301, 1
        %v2303 = vadd.f32 %v2301, %v2302
        %v2304 = vsel %vm1451, %v2140, 0.0
        %v2305 = vsel %vm1451, %v2141, 0.0
        %v2306 = vadd.f32 %v2304, %v2305
        %v2307 = vsel %vm1451, %v2142, 0.0
        %v2308 = vadd.f32 %v2306, %v2307
        %v2309 = vsel %vm1451, %v2143, 0.0
        %v2310 = vadd.f32 %v2308, %v2309
        %v2311 = vrot.slane %v2310, 4
        %v2312 = vadd.f32 %v2310, %v2311
        %v2313 = vrot.slane %v2312, 2
        %v2314 = vadd.f32 %v2312, %v2313
        %v2315 = vrot.slane %v2314, 1
        %v2316 = vadd.f32 %v2314, %v2315
        %v2317 = vsel %vm1451, %v2144, 0.0
        %v2318 = vsel %vm1451, %v2145, 0.0
        %v2319 = vadd.f32 %v2317, %v2318
        %v2320 = vsel %vm1451, %v2146, 0.0
        %v2321 = vadd.f32 %v2319, %v2320
        %v2322 = vsel %vm1451, %v2147, 0.0
        %v2323 = vadd.f32 %v2321, %v2322
        %v2324 = vrot.slane %v2323, 4
        %v2325 = vadd.f32 %v2323, %v2324
        %v2326 = vrot.slane %v2325, 2
        %v2327 = vadd.f32 %v2325, %v2326
        %v2328 = vrot.slane %v2327, 1
        %v2329 = vadd.f32 %v2327, %v2328
        %v2330 = vsel %vm1451, %v2148, 0.0
        %v2331 = vsel %vm1451, %v2149, 0.0
        %v2332 = vadd.f32 %v2330, %v2331
        %v2333 = vsel %vm1451, %v2150, 0.0
        %v2334 = vadd.f32 %v2332, %v2333
        %v2335 = vsel %vm1451, %v2151, 0.0
        %v2336 = vadd.f32 %v2334, %v2335
        %v2337 = vrot.slane %v2336, 4
        %v2338 = vadd.f32 %v2336, %v2337
        %v2339 = vrot.slane %v2338, 2
        %v2340 = vadd.f32 %v2338, %v2339
        %v2341 = vrot.slane %v2340, 1
        %v2342 = vadd.f32 %v2340, %v2341
        %v2343 = vsel %vm1451, %v2152, 0.0
        %v2344 = vsel %vm1451, %v2153, 0.0
        %v2345 = vadd.f32 %v2343, %v2344
        %v2346 = vsel %vm1451, %v2154, 0.0
        %v2347 = vadd.f32 %v2345, %v2346
        %v2348 = vsel %vm1451, %v2155, 0.0
        %v2349 = vadd.f32 %v2347, %v2348
        %v2350 = vrot.slane %v2349, 4
        %v2351 = vadd.f32 %v2349, %v2350
        %v2352 = vrot.slane %v2351, 2
        %v2353 = vadd.f32 %v2351, %v2352
        %v2354 = vrot.slane %v2353, 1
        %v2355 = vadd.f32 %v2353, %v2354
        %v2356 = vsel %vm1451, %v2156, 0.0
        %v2357 = vsel %vm1451, %v2157, 0.0
        %v2358 = vadd.f32 %v2356, %v2357
        %v2359 = vsel %vm1451, %v2158, 0.0
        %v2360 = vadd.f32 %v2358, %v2359
        %v2361 = vsel %vm1451, %v2159, 0.0
        %v2362 = vadd.f32 %v2360, %v2361
        %v2363 = vrot.slane %v2362, 4
        %v2364 = vadd.f32 %v2362, %v2363
        %v2365 = vrot.slane %v2364, 2
        %v2366 = vadd.f32 %v2364, %v2365
        %v2367 = vrot.slane %v2366, 1
        %v2368 = vadd.f32 %v2366, %v2367
        %v2369 = vsel %vm1451, %v2160, 0.0
        %v2370 = vsel %vm1451, %v2161, 0.0
        %v2371 = vadd.f32 %v2369, %v2370
        %v2372 = vsel %vm1451, %v2162, 0.0
        %v2373 = vadd.f32 %v2371, %v2372
        %v2374 = vsel %vm1451, %v2163, 0.0
        %v2375 = vadd.f32 %v2373, %v2374
        %v2376 = vrot.slane %v2375, 4
        %v2377 = vadd.f32 %v2375, %v2376
        %v2378 = vrot.slane %v2377, 2
        %v2379 = vadd.f32 %v2377, %v2378
        %v2380 = vrot.slane %v2379, 1
        %v2381 = vadd.f32 %v2379, %v2380
        %v2382 = vsel %vm1451, %v2164, 0.0
        %v2383 = vsel %vm1451, %v2165, 0.0
        %v2384 = vadd.f32 %v2382, %v2383
        %v2385 = vsel %vm1451, %v2166, 0.0
        %v2386 = vadd.f32 %v2384, %v2385
        %v2387 = vsel %vm1451, %v2167, 0.0
        %v2388 = vadd.f32 %v2386, %v2387
        %v2389 = vrot.slane %v2388, 4
        %v2390 = vadd.f32 %v2388, %v2389
        %v2391 = vrot.slane %v2390, 2
        %v2392 = vadd.f32 %v2390, %v2391
        %v2393 = vrot.slane %v2392, 1
        %v2394 = vadd.f32 %v2392, %v2393
        %v2395 = vsel %vm1451, %v2168, 0.0
        %v2396 = vsel %vm1451, %v2169, 0.0
        %v2397 = vadd.f32 %v2395, %v2396
        %v2398 = vsel %vm1451, %v2170, 0.0
        %v2399 = vadd.f32 %v2397, %v2398
        %v2400 = vsel %vm1451, %v2171, 0.0
        %v2401 = vadd.f32 %v2399, %v2400
        %v2402 = vrot.slane %v2401, 4
        %v2403 = vadd.f32 %v2401, %v2402
        %v2404 = vrot.slane %v2403, 2
        %v2405 = vadd.f32 %v2403, %v2404
        %v2406 = vrot.slane %v2405, 1
        %v2407 = vadd.f32 %v2405, %v2406
        %v2408 = vsel %vm1451, %v2172, 0.0
        %v2409 = vsel %vm1451, %v2173, 0.0
        %v2410 = vadd.f32 %v2408, %v2409
        %v2411 = vsel %vm1451, %v2174, 0.0
        %v2412 = vadd.f32 %v2410, %v2411
        %v2413 = vsel %vm1451, %v2175, 0.0
        %v2414 = vadd.f32 %v2412, %v2413
        %v2415 = vrot.slane %v2414, 4
        %v2416 = vadd.f32 %v2414, %v2415
        %v2417 = vrot.slane %v2416, 2
        %v2418 = vadd.f32 %v2416, %v2417
        %v2419 = vrot.slane %v2418, 1
        %v2420 = vadd.f32 %v2418, %v2419
        %v2421 = vsel %vm1451, %v2176, 0.0
        %v2422 = vsel %vm1451, %v2177, 0.0
        %v2423 = vadd.f32 %v2421, %v2422
        %v2424 = vsel %vm1451, %v2178, 0.0
        %v2425 = vadd.f32 %v2423, %v2424
        %v2426 = vsel %vm1451, %v2179, 0.0
        %v2427 = vadd.f32 %v2425, %v2426
        %v2428 = vrot.slane %v2427, 4
        %v2429 = vadd.f32 %v2427, %v2428
        %v2430 = vrot.slane %v2429, 2
        %v2431 = vadd.f32 %v2429, %v2430
        %v2432 = vrot.slane %v2431, 1
        %v2433 = vadd.f32 %v2431, %v2432
        %v2434 = vsel %vm1451, %v2180, 0.0
        %v2435 = vsel %vm1451, %v2181, 0.0
        %v2436 = vadd.f32 %v2434, %v2435
        %v2437 = vsel %vm1451, %v2182, 0.0
        %v2438 = vadd.f32 %v2436, %v2437
        %v2439 = vsel %vm1451, %v2183, 0.0
        %v2440 = vadd.f32 %v2438, %v2439
        %v2441 = vrot.slane %v2440, 4
        %v2442 = vadd.f32 %v2440, %v2441
        %v2443 = vrot.slane %v2442, 2
        %v2444 = vadd.f32 %v2442, %v2443
        %v2445 = vrot.slane %v2444, 1
        %v2446 = vadd.f32 %v2444, %v2445
        %v2447 = vsel %vm1451, %v2184, 0.0
        %v2448 = vsel %vm1451, %v2185, 0.0
        %v2449 = vadd.f32 %v2447, %v2448
        %v2450 = vsel %vm1451, %v2186, 0.0
        %v2451 = vadd.f32 %v2449, %v2450
        %v2452 = vsel %vm1451, %v2187, 0.0
        %v2453 = vadd.f32 %v2451, %v2452
        %v2454 = vrot.slane %v2453, 4
        %v2455 = vadd.f32 %v2453, %v2454
        %v2456 = vrot.slane %v2455, 2
        %v2457 = vadd.f32 %v2455, %v2456
        %v2458 = vrot.slane %v2457, 1
        %v2459 = vadd.f32 %v2457, %v2458
        %v2460 = vsel %vm1451, %v2188, 0.0
        %v2461 = vsel %vm1451, %v2189, 0.0
        %v2462 = vadd.f32 %v2460, %v2461
        %v2463 = vsel %vm1451, %v2190, 0.0
        %v2464 = vadd.f32 %v2462, %v2463
        %v2465 = vsel %vm1451, %v2191, 0.0
        %v2466 = vadd.f32 %v2464, %v2465
        %v2467 = vrot.slane %v2466, 4
        %v2468 = vadd.f32 %v2466, %v2467
        %v2469 = vrot.slane %v2468, 2
        %v2470 = vadd.f32 %v2468, %v2469
        %v2471 = vrot.slane %v2470, 1
        %v2472 = vadd.f32 %v2470, %v2471
        %v2473 = vsel %vm1451, %v2192, 0.0
        %v2474 = vsel %vm1451, %v2193, 0.0
        %v2475 = vadd.f32 %v2473, %v2474
        %v2476 = vsel %vm1451, %v2194, 0.0
        %v2477 = vadd.f32 %v2475, %v2476
        %v2478 = vsel %vm1451, %v2195, 0.0
        %v2479 = vadd.f32 %v2477, %v2478
        %v2480 = vrot.slane %v2479, 4
        %v2481 = vadd.f32 %v2479, %v2480
        %v2482 = vrot.slane %v2481, 2
        %v2483 = vadd.f32 %v2481, %v2482
        %v2484 = vrot.slane %v2483, 1
        %v2485 = vadd.f32 %v2483, %v2484
        %v2486 = vsel %vm1451, %v2196, 0.0
        %v2487 = vsel %vm1451, %v2197, 0.0
        %v2488 = vadd.f32 %v2486, %v2487
        %v2489 = vsel %vm1451, %v2198, 0.0
        %v2490 = vadd.f32 %v2488, %v2489
        %v2491 = vsel %vm1451, %v2199, 0.0
        %v2492 = vadd.f32 %v2490, %v2491
        %v2493 = vrot.slane %v2492, 4
        %v2494 = vadd.f32 %v2492, %v2493
        %v2495 = vrot.slane %v2494, 2
        %v2496 = vadd.f32 %v2494, %v2495
        %v2497 = vrot.slane %v2496, 1
        %v2498 = vadd.f32 %v2496, %v2497
        %v2499 = vsel %vm1451, %v2200, 0.0
        %v2500 = vsel %vm1451, %v2201, 0.0
        %v2501 = vadd.f32 %v2499, %v2500
        %v2502 = vsel %vm1451, %v2202, 0.0
        %v2503 = vadd.f32 %v2501, %v2502
        %v2504 = vsel %vm1451, %v2203, 0.0
        %v2505 = vadd.f32 %v2503, %v2504
        %v2506 = vrot.slane %v2505, 4
        %v2507 = vadd.f32 %v2505, %v2506
        %v2508 = vrot.slane %v2507, 2
        %v2509 = vadd.f32 %v2507, %v2508
        %v2510 = vrot.slane %v2509, 1
        %v2511 = vadd.f32 %v2509, %v2510
        %v2512 = vsel %vm1451, %v2204, 0.0
        %v2513 = vsel %vm1451, %v2205, 0.0
        %v2514 = vadd.f32 %v2512, %v2513
        %v2515 = vsel %vm1451, %v2206, 0.0
        %v2516 = vadd.f32 %v2514, %v2515
        %v2517 = vsel %vm1451, %v2207, 0.0
        %v2518 = vadd.f32 %v2516, %v2517
        %v2519 = vrot.slane %v2518, 4
        %v2520 = vadd.f32 %v2518, %v2519
        %v2521 = vrot.slane %v2520, 2
        %v2522 = vadd.f32 %v2520, %v2521
        %v2523 = vrot.slane %v2522, 1
        %v2524 = vadd.f32 %v2522, %v2523
        %v2525 = vsel %vm1451, %v2208, 0.0
        %v2526 = vsel %vm1451, %v2209, 0.0
        %v2527 = vadd.f32 %v2525, %v2526
        %v2528 = vsel %vm1451, %v2210, 0.0
        %v2529 = vadd.f32 %v2527, %v2528
        %v2530 = vsel %vm1451, %v2211, 0.0
        %v2531 = vadd.f32 %v2529, %v2530
        %v2532 = vrot.slane %v2531, 4
        %v2533 = vadd.f32 %v2531, %v2532
        %v2534 = vrot.slane %v2533, 2
        %v2535 = vadd.f32 %v2533, %v2534
        %v2536 = vrot.slane %v2535, 1
        %v2537 = vadd.f32 %v2535, %v2536
        %v2538 = vsel %vm1451, %v2212, 0.0
        %v2539 = vsel %vm1451, %v2213, 0.0
        %v2540 = vadd.f32 %v2538, %v2539
        %v2541 = vsel %vm1451, %v2214, 0.0
        %v2542 = vadd.f32 %v2540, %v2541
        %v2543 = vsel %vm1451, %v2215, 0.0
        %v2544 = vadd.f32 %v2542, %v2543
        %v2545 = vrot.slane %v2544, 4
        %v2546 = vadd.f32 %v2544, %v2545
        %v2547 = vrot.slane %v2546, 2
        %v2548 = vadd.f32 %v2546, %v2547
        %v2549 = vrot.slane %v2548, 1
        %v2550 = vadd.f32 %v2548, %v2549
        %v2551 = vsel %vm1451, %v2216, 0.0
        %v2552 = vsel %vm1451, %v2217, 0.0
        %v2553 = vadd.f32 %v2551, %v2552
        %v2554 = vsel %vm1451, %v2218, 0.0
        %v2555 = vadd.f32 %v2553, %v2554
        %v2556 = vsel %vm1451, %v2219, 0.0
        %v2557 = vadd.f32 %v2555, %v2556
        %v2558 = vrot.slane %v2557, 4
        %v2559 = vadd.f32 %v2557, %v2558
        %v2560 = vrot.slane %v2559, 2
        %v2561 = vadd.f32 %v2559, %v2560
        %v2562 = vrot.slane %v2561, 1
        %v2563 = vadd.f32 %v2561, %v2562
        %v2564 = vsel %vm1451, %v2220, 0.0
        %v2565 = vsel %vm1451, %v2221, 0.0
        %v2566 = vadd.f32 %v2564, %v2565
        %v2567 = vsel %vm1451, %v2222, 0.0
        %v2568 = vadd.f32 %v2566, %v2567
        %v2569 = vsel %vm1451, %v2223, 0.0
        %v2570 = vadd.f32 %v2568, %v2569
        %v2571 = vrot.slane %v2570, 4
        %v2572 = vadd.f32 %v2570, %v2571
        %v2573 = vrot.slane %v2572, 2
        %v2574 = vadd.f32 %v2572, %v2573
        %v2575 = vrot.slane %v2574, 1
        %v2576 = vadd.f32 %v2574, %v2575
        %v2577 = vsel %vm1451, %v2224, 0.0
        %v2578 = vsel %vm1451, %v2225, 0.0
        %v2579 = vadd.f32 %v2577, %v2578
        %v2580 = vsel %vm1451, %v2226, 0.0
        %v2581 = vadd.f32 %v2579, %v2580
        %v2582 = vsel %vm1451, %v2227, 0.0
        %v2583 = vadd.f32 %v2581, %v2582
        %v2584 = vrot.slane %v2583, 4
        %v2585 = vadd.f32 %v2583, %v2584
        %v2586 = vrot.slane %v2585, 2
        %v2587 = vadd.f32 %v2585, %v2586
        %v2588 = vrot.slane %v2587, 1
        %v2589 = vadd.f32 %v2587, %v2588
        %v2590 = vsel %vm1451, %v2228, 0.0
        %v2591 = vsel %vm1451, %v2229, 0.0
        %v2592 = vadd.f32 %v2590, %v2591
        %v2593 = vsel %vm1451, %v2230, 0.0
        %v2594 = vadd.f32 %v2592, %v2593
        %v2595 = vsel %vm1451, %v2231, 0.0
        %v2596 = vadd.f32 %v2594, %v2595
        %v2597 = vrot.slane %v2596, 4
        %v2598 = vadd.f32 %v2596, %v2597
        %v2599 = vrot.slane %v2598, 2
        %v2600 = vadd.f32 %v2598, %v2599
        %v2601 = vrot.slane %v2600, 1
        %v2602 = vadd.f32 %v2600, %v2601
        %v2603 = vsel %vm1451, %v2232, 0.0
        %v2604 = vsel %vm1451, %v2233, 0.0
        %v2605 = vadd.f32 %v2603, %v2604
        %v2606 = vsel %vm1451, %v2234, 0.0
        %v2607 = vadd.f32 %v2605, %v2606
        %v2608 = vsel %vm1451, %v2235, 0.0
        %v2609 = vadd.f32 %v2607, %v2608
        %v2610 = vrot.slane %v2609, 4
        %v2611 = vadd.f32 %v2609, %v2610
        %v2612 = vrot.slane %v2611, 2
        %v2613 = vadd.f32 %v2611, %v2612
        %v2614 = vrot.slane %v2613, 1
        %v2615 = vadd.f32 %v2613, %v2614
        %v2616 = vsel %vm1451, %v2236, 0.0
        %v2617 = vsel %vm1451, %v2237, 0.0
        %v2618 = vadd.f32 %v2616, %v2617
        %v2619 = vsel %vm1451, %v2238, 0.0
        %v2620 = vadd.f32 %v2618, %v2619
        %v2621 = vsel %vm1451, %v2239, 0.0
        %v2622 = vadd.f32 %v2620, %v2621
        %v2623 = vrot.slane %v2622, 4
        %v2624 = vadd.f32 %v2622, %v2623
        %v2625 = vrot.slane %v2624, 2
        %v2626 = vadd.f32 %v2624, %v2625
        %v2627 = vrot.slane %v2626, 1
        %v2628 = vadd.f32 %v2626, %v2627
        %v2629 = vsel %vm1451, %v2240, 0.0
        %v2630 = vsel %vm1451, %v2241, 0.0
        %v2631 = vadd.f32 %v2629, %v2630
        %v2632 = vsel %vm1451, %v2242, 0.0
        %v2633 = vadd.f32 %v2631, %v2632
        %v2634 = vsel %vm1451, %v2243, 0.0
        %v2635 = vadd.f32 %v2633, %v2634
        %v2636 = vrot.slane %v2635, 4
        %v2637 = vadd.f32 %v2635, %v2636
        %v2638 = vrot.slane %v2637, 2
        %v2639 = vadd.f32 %v2637, %v2638
        %v2640 = vrot.slane %v2639, 1
        %v2641 = vadd.f32 %v2639, %v2640
        %v2642 = vsel %vm1451, %v2244, 0.0
        %v2643 = vsel %vm1451, %v2245, 0.0
        %v2644 = vadd.f32 %v2642, %v2643
        %v2645 = vsel %vm1451, %v2246, 0.0
        %v2646 = vadd.f32 %v2644, %v2645
        %v2647 = vsel %vm1451, %v2247, 0.0
        %v2648 = vadd.f32 %v2646, %v2647
        %v2649 = vrot.slane %v2648, 4
        %v2650 = vadd.f32 %v2648, %v2649
        %v2651 = vrot.slane %v2650, 2
        %v2652 = vadd.f32 %v2650, %v2651
        %v2653 = vrot.slane %v2652, 1
        %v2654 = vadd.f32 %v2652, %v2653
        %v2655 = vsel %vm1451, %v2248, 0.0
        %v2656 = vsel %vm1451, %v2249, 0.0
        %v2657 = vadd.f32 %v2655, %v2656
        %v2658 = vsel %vm1451, %v2250, 0.0
        %v2659 = vadd.f32 %v2657, %v2658
        %v2660 = vsel %vm1451, %v2251, 0.0
        %v2661 = vadd.f32 %v2659, %v2660
        %v2662 = vrot.slane %v2661, 4
        %v2663 = vadd.f32 %v2661, %v2662
        %v2664 = vrot.slane %v2663, 2
        %v2665 = vadd.f32 %v2663, %v2664
        %v2666 = vrot.slane %v2665, 1
        %v2667 = vadd.f32 %v2665, %v2666
        %vm2700 = vcmask 1041409
        %v2701 = vsel %vm2700, %v2277, %v2264
        %vm2702 = vcmask 1042434
        %v2703 = vsel %vm2702, %v2290, %v2701
        %vm2704 = vcmask 1043459
        %v2705 = vsel %vm2704, %v2303, %v2703
        %vm2706 = vcmask 1044484
        %v2707 = vsel %vm2706, %v2316, %v2705
        %vm2708 = vcmask 1045509
        %v2709 = vsel %vm2708, %v2329, %v2707
        %vm2710 = vcmask 1046534
        %v2711 = vsel %vm2710, %v2342, %v2709
        %vm2712 = vcmask 1047559
        %v2713 = vsel %vm2712, %v2355, %v2711
        %v2714 = vsel %vm2700, %v2381, %v2368
        %v2715 = vsel %vm2702, %v2394, %v2714
        %v2716 = vsel %vm2704, %v2407, %v2715
        %v2717 = vsel %vm2706, %v2420, %v2716
        %v2718 = vsel %vm2708, %v2433, %v2717
        %v2719 = vsel %vm2710, %v2446, %v2718
        %v2720 = vsel %vm2712, %v2459, %v2719
        %v2721 = vsel %vm2700, %v2485, %v2472
        %v2722 = vsel %vm2702, %v2498, %v2721
        %v2723 = vsel %vm2704, %v2511, %v2722
        %v2724 = vsel %vm2706, %v2524, %v2723
        %v2725 = vsel %vm2708, %v2537, %v2724
        %v2726 = vsel %vm2710, %v2550, %v2725
        %v2727 = vsel %vm2712, %v2563, %v2726
        %v2728 = vsel %vm2700, %v2589, %v2576
        %v2729 = vsel %vm2702, %v2602, %v2728
        %v2730 = vsel %vm2704, %v2615, %v2729
        %v2731 = vsel %vm2706, %v2628, %v2730
        %v2732 = vsel %vm2708, %v2641, %v2731
        %v2733 = vsel %vm2710, %v2654, %v2732
        %v2734 = vsel %vm2712, %v2667, %v2733
        %v2735 = vsel %vm1451, %v2713, 0
        %v2737 = vsel %vm1451, %v2720, 0
        %v2739 = vsel %vm1451, %v2727, 0
        %v2741 = vsel %vm1451, %v2734, 0
        %2743 = vmatprep.subr.mxu0 0.0
        %2744 = vmatpush1.msra.mxu0 %v627
        %2745 = vmatprep.subr.mxu0 0.0
        %2746 = vmatpush1.msra.mxu0 0.0
        %2747 = vmatprep.subr.mxu0 0.0
        %2748 = vmatpush1.msra.mxu0 0.0
        %2749 = vmatprep.subr.mxu0 0.0
        %2750 = vmatpush1.msra.mxu0 0.0
        %2751 = vmatprep.subr.mxu0 0.0
        %2752 = vmatpush1.msra.mxu0 0.0
        %2753 = vmatprep.subr.mxu0 0.0
        %2754 = vmatpush1.msra.mxu0 0.0
        %2755 = vmatprep.subr.mxu0 0.0
        %2756 = vmatpush1.msra.mxu0 0.0
        %2757 = vmatprep.subr.mxu0 0.0
        %2758 = vmatpush1.msra.mxu0 0.0
        %2759 = vmatprep.subr.mxu0 0.0
        %2760 = vmatpush1.msra.mxu0 0.0
        %2761 = vmatprep.subr.mxu0 0.0
        %2762 = vmatpush1.msra.mxu0 0.0
        %2763 = vmatprep.subr.mxu0 0.0
        %2764 = vmatpush1.msra.mxu0 0.0
        %2765 = vmatprep.subr.mxu0 0.0
        %2766 = vmatpush1.msra.mxu0 0.0
        %2767 = vmatprep.subr.mxu0 0.0
        %2768 = vmatpush1.msra.mxu0 0.0
        %2769 = vmatprep.subr.mxu0 0.0
        %2770 = vmatpush1.msra.mxu0 0.0
        %2771 = vmatprep.subr.mxu0 0.0
        %2772 = vmatpush1.msra.mxu0 0.0
        %2773 = vmatprep.subr.mxu0 0.0
        %2774 = vmatpush1.msra.mxu0 0.0
        %2775 = vmatprep.subr.mxu0 0.0
        %2776 = vmatpush1.msra.mxu0 0.0
        %2777 = vmatprep.subr.mxu0 0.0
        %2778 = vmatpush1.msra.mxu0 0.0
        %2779 = vmatprep.subr.mxu0 0.0
        %2780 = vmatpush1.msra.mxu0 0.0
        %2781 = vmatprep.subr.mxu0 0.0
        %2782 = vmatpush1.msra.mxu0 0.0
        %2783 = vmatprep.subr.mxu0 0.0
        %2784 = vmatpush1.msra.mxu0 0.0
        %2785 = vmatprep.subr.mxu0 0.0
        %2786 = vmatpush1.msra.mxu0 0.0
        %2787 = vmatprep.subr.mxu0 0.0
        %2788 = vmatpush1.msra.mxu0 0.0
        %2789 = vmatprep.subr.mxu0 0.0
        %2790 = vmatpush1.msra.mxu0 0.0
        %2791 = vmatprep.subr.mxu0 0.0
        %2792 = vmatpush1.msra.mxu0 0.0
        %2793 = vmatprep.subr.mxu0 0.0
        %2794 = vmatpush1.msra.mxu0 0.0
        %2795 = vmatprep.subr.mxu0 0.0
        %2796 = vmatpush1.msra.mxu0 0.0
        %2797 = vmatprep.subr.mxu0 0.0
        %2798 = vmatpush1.msra.mxu0 0.0
        %2799 = vmatprep.subr.mxu0 0.0
        %2800 = vmatpush1.msra.mxu0 0.0
        %2801 = vmatprep.subr.mxu0 0.0
        %2802 = vmatpush1.msra.mxu0 0.0
        %2803 = vmatprep.subr.mxu0 0.0
        %2804 = vmatpush1.msra.mxu0 0.0
        %2805 = vmatprep.subr.mxu0 0.0
        %2806 = vmatpush1.msra.mxu0 0.0
        %2807 = vmatprep.mubr.f32.mxu0 0.0
        %2808 = vmatmul.mubr.f32.gmra.mrb[0].mxu0 %v2735
        %v2809 = vpop.f32.mrb[0].mxu0
        %v2810 = vadd.f32 0.0, %v2809
        %v2811 = vpop.f32.mrb[0].mxu0
        %2812 = vmatprep.mubr.f32.mxu0 0.0
        %2813 = vmatmul.mubr.f32.gmra.mrb[0].mxu0 %v2737
        %v2814 = vpop.f32.mrb[0].mxu0
        %v2815 = vadd.f32 0.0, %v2814
        %v2816 = vpop.f32.mrb[0].mxu0
        %2817 = vmatprep.mubr.f32.mxu0 0.0
        %2818 = vmatmul.mubr.f32.gmra.mrb[0].mxu0 %v2739
        %v2819 = vpop.f32.mrb[0].mxu0
        %v2820 = vadd.f32 0.0, %v2819
        %v2821 = vpop.f32.mrb[0].mxu0
        %2822 = vmatprep.mubr.f32.mxu0 0.0
        %2823 = vmatmul.mubr.f32.gmra.mrb[0].mxu0 %v2741
        %v2824 = vpop.f32.mrb[0].mxu0
        %v2825 = vadd.f32 0.0, %v2824
        %v2826 = vpop.f32.mrb[0].mxu0
        %2827 = vdwg.mxu0
        %v2860 = vsel %vm2700, %v1477, %v1464
        %v2861 = vsel %vm2702, %v1490, %v2860
        %v2862 = vsel %vm2704, %v1503, %v2861
        %v2863 = vsel %vm2706, %v1516, %v2862
        %v2864 = vsel %vm2708, %v1529, %v2863
        %v2865 = vsel %vm2710, %v1542, %v2864
        %v2866 = vsel %vm2712, %v1555, %v2865
        %v2867 = vsel %vm2700, %v1581, %v1568
        %v2868 = vsel %vm2702, %v1594, %v2867
        %v2869 = vsel %vm2704, %v1607, %v2868
        %v2870 = vsel %vm2706, %v1620, %v2869
        %v2871 = vsel %vm2708, %v1633, %v2870
        %v2872 = vsel %vm2710, %v1646, %v2871
        %v2873 = vsel %vm2712, %v1659, %v2872
        %v2874 = vsel %vm2700, %v1685, %v1672
        %v2875 = vsel %vm2702, %v1698, %v2874
        %v2876 = vsel %vm2704, %v1711, %v2875
        %v2877 = vsel %vm2706, %v1724, %v2876
        %v2878 = vsel %vm2708, %v1737, %v2877
        %v2879 = vsel %vm2710, %v1750, %v2878
        %v2880 = vsel %vm2712, %v1763, %v2879
        %v2881 = vsel %vm2700, %v1789, %v1776
        %v2882 = vsel %vm2702, %v1802, %v2881
        %v2883 = vsel %vm2704, %v1815, %v2882
        %v2884 = vsel %vm2706, %v1828, %v2883
        %v2885 = vsel %vm2708, %v1841, %v2884
        %v2886 = vsel %vm2710, %v1854, %v2885
        %v2887 = vsel %vm2712, %v1867, %v2886
        %v2888 = vsel %vm1451, %v2866, 0
        %v2890 = vsel %vm1451, %v2873, 0
        %v2892 = vsel %vm1451, %v2880, 0
        %v2894 = vsel %vm1451, %v2887, 0
        %2896 = vmatprep.subr.mxu0 0.0
        %2897 = vmatpush1.msra.mxu0 %v626
        %2898 = vmatprep.subr.mxu0 0.0
        %2899 = vmatpush1.msra.mxu0 0.0
        %2900 = vmatprep.subr.mxu0 0.0
        %2901 = vmatpush1.msra.mxu0 0.0
        %2902 = vmatprep.subr.mxu0 0.0
        %2903 = vmatpush1.msra.mxu0 0.0
        %2904 = vmatprep.subr.mxu0 0.0
        %2905 = vmatpush1.msra.mxu0 0.0
        %2906 = vmatprep.subr.mxu0 0.0
        %2907 = vmatpush1.msra.mxu0 0.0
        %2908 = vmatprep.subr.mxu0 0.0
        %2909 = vmatpush1.msra.mxu0 0.0
        %2910 = vmatprep.subr.mxu0 0.0
        %2911 = vmatpush1.msra.mxu0 0.0
        %2912 = vmatprep.subr.mxu0 0.0
        %2913 = vmatpush1.msra.mxu0 0.0
        %2914 = vmatprep.subr.mxu0 0.0
        %2915 = vmatpush1.msra.mxu0 0.0
        %2916 = vmatprep.subr.mxu0 0.0
        %2917 = vmatpush1.msra.mxu0 0.0
        %2918 = vmatprep.subr.mxu0 0.0
        %2919 = vmatpush1.msra.mxu0 0.0
        %2920 = vmatprep.subr.mxu0 0.0
        %2921 = vmatpush1.msra.mxu0 0.0
        %2922 = vmatprep.subr.mxu0 0.0
        %2923 = vmatpush1.msra.mxu0 0.0
        %2924 = vmatprep.subr.mxu0 0.0
        %2925 = vmatpush1.msra.mxu0 0.0
        %2926 = vmatprep.subr.mxu0 0.0
        %2927 = vmatpush1.msra.mxu0 0.0
        %2928 = vmatprep.subr.mxu0 0.0
        %2929 = vmatpush1.msra.mxu0 0.0
        %2930 = vmatprep.subr.mxu0 0.0
        %2931 = vmatpush1.msra.mxu0 0.0
        %2932 = vmatprep.subr.mxu0 0.0
        %2933 = vmatpush1.msra.mxu0 0.0
        %2934 = vmatprep.subr.mxu0 0.0
        %2935 = vmatpush1.msra.mxu0 0.0
        %2936 = vmatprep.subr.mxu0 0.0
        %2937 = vmatpush1.msra.mxu0 0.0
        %2938 = vmatprep.subr.mxu0 0.0
        %2939 = vmatpush1.msra.mxu0 0.0
        %2940 = vmatprep.subr.mxu0 0.0
        %2941 = vmatpush1.msra.mxu0 0.0
        %2942 = vmatprep.subr.mxu0 0.0
        %2943 = vmatpush1.msra.mxu0 0.0
        %2944 = vmatprep.subr.mxu0 0.0
        %2945 = vmatpush1.msra.mxu0 0.0
        %2946 = vmatprep.subr.mxu0 0.0
        %2947 = vmatpush1.msra.mxu0 0.0
        %2948 = vmatprep.subr.mxu0 0.0
        %2949 = vmatpush1.msra.mxu0 0.0
        %2950 = vmatprep.subr.mxu0 0.0
        %2951 = vmatpush1.msra.mxu0 0.0
        %2952 = vmatprep.subr.mxu0 0.0
        %2953 = vmatpush1.msra.mxu0 0.0
        %2954 = vmatprep.subr.mxu0 0.0
        %2955 = vmatpush1.msra.mxu0 0.0
        %2956 = vmatprep.subr.mxu0 0.0
        %2957 = vmatpush1.msra.mxu0 0.0
        %2958 = vmatprep.subr.mxu0 0.0
        %2959 = vmatpush1.msra.mxu0 0.0
        %2960 = vmatprep.mubr.f32.mxu0 0.0
        %2961 = vmatmul.mubr.f32.gmra.mrb[0].mxu0 %v2888
        %v2962 = vpop.f32.mrb[0].mxu0
        %v2963 = vadd.f32 %v2810, %v2962
        %v2964 = vpop.f32.mrb[0].mxu0
        %2965 = vmatprep.mubr.f32.mxu0 0.0
        %2966 = vmatmul.mubr.f32.gmra.mrb[0].mxu0 %v2890
        %v2967 = vpop.f32.mrb[0].mxu0
        %v2968 = vadd.f32 %v2815, %v2967
        %v2969 = vpop.f32.mrb[0].mxu0
        %2970 = vmatprep.mubr.f32.mxu0 0.0
        %2971 = vmatmul.mubr.f32.gmra.mrb[0].mxu0 %v2892
        %v2972 = vpop.f32.mrb[0].mxu0
        %v2973 = vadd.f32 %v2820, %v2972
        %v2974 = vpop.f32.mrb[0].mxu0
        %2975 = vmatprep.mubr.f32.mxu0 0.0
        %2976 = vmatmul.mubr.f32.gmra.mrb[0].mxu0 %v2894
        %v2977 = vpop.f32.mrb[0].mxu0
        %v2978 = vadd.f32 %v2825, %v2977
        %v2979 = vpop.f32.mrb[0].mxu0
        %2980 = vdwg.mxu0
        %v2981 = vld [vmem:[%s9] sm:$0xff]
        %v2982 = vld [vmem:[%s9 + $0x8] sm:$0xff]
        %v2983 = vld [vmem:[%s9 + $0x10] sm:$0xff]
        %v2984 = vld [vmem:[%s9 + $0x18] sm:$0xff]
        %v2985 = vld [vmem:[%s10] sm:$0xff]
        %v2986 = vld [vmem:[%s10 + $0x8] sm:$0xff]
        %v2987 = vld [vmem:[%s10 + $0x10] sm:$0xff]
        %v2988 = vld [vmem:[%s10 + $0x18] sm:$0xff]
        %2990 = vset.pattern.permute.xlu0 0
        %2991 = vperm.xlu0 %2990, %v2985
        %v2992 = vpop.permute.xlu0 %2991
        %2995 = vset.pattern.permute.xlu0 0
        %2996 = vperm.xlu0 %2995, %v2986
        %v2997 = vpop.permute.xlu0 %2996
        %3000 = vset.pattern.permute.xlu0 0
        %3001 = vperm.xlu0 %3000, %v2987
        %v3002 = vpop.permute.xlu0 %3001
        %3005 = vset.pattern.permute.xlu0 0
        %3006 = vperm.xlu0 %3005, %v2988
        %v3007 = vpop.permute.xlu0 %3006
        %vm3009 = vcmask 261120
        %v3011 = vsel %vm3009, %v2981, 0
        %v3014 = vsel %vm3009, %v2982, 0
        %v3017 = vsel %vm3009, %v2983, 0
        %v3020 = vsel %vm3009, %v2984, 0
        %3022 = vmatprep.subr.mxu0 0.0
        %3023 = vmatpush1.msra.mxu0 %v604
        %3024 = vmatprep.subr.mxu0 0.0
        %3025 = vmatpush1.msra.mxu0 %v609
        %3026 = vmatprep.subr.mxu0 0.0
        %3027 = vmatpush1.msra.mxu0 %v614
        %3028 = vmatprep.subr.mxu0 0.0
        %3029 = vmatpush1.msra.mxu0 %v619
        %3030 = vmatprep.subr.mxu0 0.0
        %3031 = vmatpush1.msra.mxu0 0.0
        %3032 = vmatprep.subr.mxu0 0.0
        %3033 = vmatpush1.msra.mxu0 0.0
        %3034 = vmatprep.subr.mxu0 0.0
        %3035 = vmatpush1.msra.mxu0 0.0
        %3036 = vmatprep.subr.mxu0 0.0
        %3037 = vmatpush1.msra.mxu0 0.0
        %3038 = vmatprep.subr.mxu0 0.0
        %3039 = vmatpush1.msra.mxu0 0.0
        %3040 = vmatprep.subr.mxu0 0.0
        %3041 = vmatpush1.msra.mxu0 0.0
        %3042 = vmatprep.subr.mxu0 0.0
        %3043 = vmatpush1.msra.mxu0 0.0
        %3044 = vmatprep.subr.mxu0 0.0
        %3045 = vmatpush1.msra.mxu0 0.0
        %3046 = vmatprep.subr.mxu0 0.0
        %3047 = vmatpush1.msra.mxu0 0.0
        %3048 = vmatprep.subr.mxu0 0.0
        %3049 = vmatpush1.msra.mxu0 0.0
        %3050 = vmatprep.subr.mxu0 0.0
        %3051 = vmatpush1.msra.mxu0 0.0
        %3052 = vmatprep.subr.mxu0 0.0
        %3053 = vmatpush1.msra.mxu0 0.0
        %3054 = vmatprep.subr.mxu0 0.0
        %3055 = vmatpush1.msra.mxu0 0.0
        %3056 = vmatprep.subr.mxu0 0.0
        %3057 = vmatpush1.msra.mxu0 0.0
        %3058 = vmatprep.subr.mxu0 0.0
        %3059 = vmatpush1.msra.mxu0 0.0
        %3060 = vmatprep.subr.mxu0 0.0
        %3061 = vmatpush1.msra.mxu0 0.0
        %3062 = vmatprep.subr.mxu0 0.0
        %3063 = vmatpush1.msra.mxu0 0.0
        %3064 = vmatprep.subr.mxu0 0.0
        %3065 = vmatpush1.msra.mxu0 0.0
        %3066 = vmatprep.subr.mxu0 0.0
        %3067 = vmatpush1.msra.mxu0 0.0
        %3068 = vmatprep.subr.mxu0 0.0
        %3069 = vmatpush1.msra.mxu0 0.0
        %3070 = vmatprep.subr.mxu0 0.0
        %3071 = vmatpush1.msra.mxu0 0.0
        %3072 = vmatprep.subr.mxu0 0.0
        %3073 = vmatpush1.msra.mxu0 0.0
        %3074 = vmatprep.subr.mxu0 0.0
        %3075 = vmatpush1.msra.mxu0 0.0
        %3076 = vmatprep.subr.mxu0 0.0
        %3077 = vmatpush1.msra.mxu0 0.0
        %3078 = vmatprep.subr.mxu0 0.0
        %3079 = vmatpush1.msra.mxu0 0.0
        %3080 = vmatprep.subr.mxu0 0.0
        %3081 = vmatpush1.msra.mxu0 0.0
        %3082 = vmatprep.subr.mxu0 0.0
        %3083 = vmatpush1.msra.mxu0 0.0
        %3084 = vmatprep.subr.mxu0 0.0
        %3085 = vmatpush1.msra.mxu0 0.0
        %3086 = vmatprep.mubr.f32.mxu0 0.0
        %3087 = vmatmul.mubr.f32.gmra.mrb[0].mxu0 %v3011
        %v3088 = vpop.f32.mrb[0].mxu0
        %v3089 = vadd.f32 %v2992, %v3088
        %v3090 = vpop.f32.mrb[0].mxu0
        %3091 = vmatprep.mubr.f32.mxu0 0.0
        %3092 = vmatmul.mubr.f32.gmra.mrb[0].mxu0 %v3014
        %v3093 = vpop.f32.mrb[0].mxu0
        %v3094 = vadd.f32 %v2997, %v3093
        %v3095 = vpop.f32.mrb[0].mxu0
        %3096 = vmatprep.mubr.f32.mxu0 0.0
        %3097 = vmatmul.mubr.f32.gmra.mrb[0].mxu0 %v3017
        %v3098 = vpop.f32.mrb[0].mxu0
        %v3099 = vadd.f32 %v3002, %v3098
        %v3100 = vpop.f32.mrb[0].mxu0
        %3101 = vmatprep.mubr.f32.mxu0 0.0
        %3102 = vmatmul.mubr.f32.gmra.mrb[0].mxu0 %v3020
        %v3103 = vpop.f32.mrb[0].mxu0
        %v3104 = vadd.f32 %v3007, %v3103
        %v3105 = vpop.f32.mrb[0].mxu0
        %3106 = vdwg.mxu0
        %v3107 = vadd.f32 %v2963, %v3089
        %v3108 = vadd.f32 %v2968, %v3094
        %v3109 = vadd.f32 %v2973, %v3099
        %v3110 = vadd.f32 %v2978, %v3104
        %v3111 = vmax.f32 %v3107, 0.0
        %v3112 = vmax.f32 %v3108, 0.0
        %v3113 = vmax.f32 %v3109, 0.0
        %v3114 = vmax.f32 %v3110, 0.0
        %v3116 = vsel %vm628, %v3111, 0
        %v3119 = vsel %vm628, %v3112, 0
        %v3122 = vsel %vm628, %v3113, 0
        %v3125 = vsel %vm628, %v3114, 0
        %3127 = vmatprep.subr.mxu0 0.0
        %3128 = vmatpush1.msra.mxu0 %v622
        %3129 = vmatprep.subr.mxu0 0.0
        %3130 = vmatpush1.msra.mxu0 %v623
        %3131 = vmatprep.subr.mxu0 0.0
        %3132 = vmatpush1.msra.mxu0 0.0
        %3133 = vmatprep.subr.mxu0 0.0
        %3134 = vmatpush1.msra.mxu0 0.0
        %3135 = vmatprep.subr.mxu0 0.0
        %3136 = vmatpush1.msra.mxu0 0.0
        %3137 = vmatprep.subr.mxu0 0.0
        %3138 = vmatpush1.msra.mxu0 0.0
        %3139 = vmatprep.subr.mxu0 0.0
        %3140 = vmatpush1.msra.mxu0 0.0
        %3141 = vmatprep.subr.mxu0 0.0
        %3142 = vmatpush1.msra.mxu0 0.0
        %3143 = vmatprep.subr.mxu0 0.0
        %3144 = vmatpush1.msra.mxu0 0.0
        %3145 = vmatprep.subr.mxu0 0.0
        %3146 = vmatpush1.msra.mxu0 0.0
        %3147 = vmatprep.subr.mxu0 0.0
        %3148 = vmatpush1.msra.mxu0 0.0
        %3149 = vmatprep.subr.mxu0 0.0
        %3150 = vmatpush1.msra.mxu0 0.0
        %3151 = vmatprep.subr.mxu0 0.0
        %3152 = vmatpush1.msra.mxu0 0.0
        %3153 = vmatprep.subr.mxu0 0.0
        %3154 = vmatpush1.msra.mxu0 0.0
        %3155 = vmatprep.subr.mxu0 0.0
        %3156 = vmatpush1.msra.mxu0 0.0
        %3157 = vmatprep.subr.mxu0 0.0
        %3158 = vmatpush1.msra.mxu0 0.0
        %3159 = vmatprep.subr.mxu0 0.0
        %3160 = vmatpush1.msra.mxu0 0.0
        %3161 = vmatprep.subr.mxu0 0.0
        %3162 = vmatpush1.msra.mxu0 0.0
        %3163 = vmatprep.subr.mxu0 0.0
        %3164 = vmatpush1.msra.mxu0 0.0
        %3165 = vmatprep.subr.mxu0 0.0
        %3166 = vmatpush1.msra.mxu0 0.0
        %3167 = vmatprep.subr.mxu0 0.0
        %3168 = vmatpush1.msra.mxu0 0.0
        %3169 = vmatprep.subr.mxu0 0.0
        %3170 = vmatpush1.msra.mxu0 0.0
        %3171 = vmatprep.subr.mxu0 0.0
        %3172 = vmatpush1.msra.mxu0 0.0
        %3173 = vmatprep.subr.mxu0 0.0
        %3174 = vmatpush1.msra.mxu0 0.0
        %3175 = vmatprep.subr.mxu0 0.0
        %3176 = vmatpush1.msra.mxu0 0.0
        %3177 = vmatprep.subr.mxu0 0.0
        %3178 = vmatpush1.msra.mxu0 0.0
        %3179 = vmatprep.subr.mxu0 0.0
        %3180 = vmatpush1.msra.mxu0 0.0
        %3181 = vmatprep.subr.mxu0 0.0
        %3182 = vmatpush1.msra.mxu0 0.0
        %3183 = vmatprep.subr.mxu0 0.0
        %3184 = vmatpush1.msra.mxu0 0.0
        %3185 = vmatprep.subr.mxu0 0.0
        %3186 = vmatpush1.msra.mxu0 0.0
        %3187 = vmatprep.subr.mxu0 0.0
        %3188 = vmatpush1.msra.mxu0 0.0
        %3189 = vmatprep.subr.mxu0 0.0
        %3190 = vmatpush1.msra.mxu0 0.0
        %3191 = vmatprep.mubr.f32.mxu0 0.0
        %3192 = vmatmul.mubr.f32.gmra.mrb[0].mxu0 %v3116
        %v3193 = vpop.f32.mrb[0].mxu0
        %v3194 = vadd.f32 0.0, %v3193
        %v3195 = vpop.f32.mrb[0].mxu0
        %3196 = vmatprep.mubr.f32.mxu0 0.0
        %3197 = vmatmul.mubr.f32.gmra.mrb[0].mxu0 %v3119
        %v3198 = vpop.f32.mrb[0].mxu0
        %v3199 = vadd.f32 0.0, %v3198
        %v3200 = vpop.f32.mrb[0].mxu0
        %3201 = vmatprep.mubr.f32.mxu0 0.0
        %3202 = vmatmul.mubr.f32.gmra.mrb[0].mxu0 %v3122
        %v3203 = vpop.f32.mrb[0].mxu0
        %v3204 = vadd.f32 0.0, %v3203
        %v3205 = vpop.f32.mrb[0].mxu0
        %3206 = vmatprep.mubr.f32.mxu0 0.0
        %3207 = vmatmul.mubr.f32.gmra.mrb[0].mxu0 %v3125
        %v3208 = vpop.f32.mrb[0].mxu0
        %v3209 = vadd.f32 0.0, %v3208
        %v3210 = vpop.f32.mrb[0].mxu0
        %3211 = vdwg.mxu0
        %3212 = vmatprep.subr.mxu0 0.0
        %3213 = vmatpush1.msra.mxu0 %v624
        %3214 = vmatprep.subr.mxu0 0.0
        %3215 = vmatpush1.msra.mxu0 %v625
        %3216 = vmatprep.subr.mxu0 0.0
        %3217 = vmatpush1.msra.mxu0 0.0
        %3218 = vmatprep.subr.mxu0 0.0
        %3219 = vmatpush1.msra.mxu0 0.0
        %3220 = vmatprep.subr.mxu0 0.0
        %3221 = vmatpush1.msra.mxu0 0.0
        %3222 = vmatprep.subr.mxu0 0.0
        %3223 = vmatpush1.msra.mxu0 0.0
        %3224 = vmatprep.subr.mxu0 0.0
        %3225 = vmatpush1.msra.mxu0 0.0
        %3226 = vmatprep.subr.mxu0 0.0
        %3227 = vmatpush1.msra.mxu0 0.0
        %3228 = vmatprep.subr.mxu0 0.0
        %3229 = vmatpush1.msra.mxu0 0.0
        %3230 = vmatprep.subr.mxu0 0.0
        %3231 = vmatpush1.msra.mxu0 0.0
        %3232 = vmatprep.subr.mxu0 0.0
        %3233 = vmatpush1.msra.mxu0 0.0
        %3234 = vmatprep.subr.mxu0 0.0
        %3235 = vmatpush1.msra.mxu0 0.0
        %3236 = vmatprep.subr.mxu0 0.0
        %3237 = vmatpush1.msra.mxu0 0.0
        %3238 = vmatprep.subr.mxu0 0.0
        %3239 = vmatpush1.msra.mxu0 0.0
        %3240 = vmatprep.subr.mxu0 0.0
        %3241 = vmatpush1.msra.mxu0 0.0
        %3242 = vmatprep.subr.mxu0 0.0
        %3243 = vmatpush1.msra.mxu0 0.0
        %3244 = vmatprep.subr.mxu0 0.0
        %3245 = vmatpush1.msra.mxu0 0.0
        %3246 = vmatprep.subr.mxu0 0.0
        %3247 = vmatpush1.msra.mxu0 0.0
        %3248 = vmatprep.subr.mxu0 0.0
        %3249 = vmatpush1.msra.mxu0 0.0
        %3250 = vmatprep.subr.mxu0 0.0
        %3251 = vmatpush1.msra.mxu0 0.0
        %3252 = vmatprep.subr.mxu0 0.0
        %3253 = vmatpush1.msra.mxu0 0.0
        %3254 = vmatprep.subr.mxu0 0.0
        %3255 = vmatpush1.msra.mxu0 0.0
        %3256 = vmatprep.subr.mxu0 0.0
        %3257 = vmatpush1.msra.mxu0 0.0
        %3258 = vmatprep.subr.mxu0 0.0
        %3259 = vmatpush1.msra.mxu0 0.0
        %3260 = vmatprep.subr.mxu0 0.0
        %3261 = vmatpush1.msra.mxu0 0.0
        %3262 = vmatprep.subr.mxu0 0.0
        %3263 = vmatpush1.msra.mxu0 0.0
        %3264 = vmatprep.subr.mxu0 0.0
        %3265 = vmatpush1.msra.mxu0 0.0
        %3266 = vmatprep.subr.mxu0 0.0
        %3267 = vmatpush1.msra.mxu0 0.0
        %3268 = vmatprep.subr.mxu0 0.0
        %3269 = vmatpush1.msra.mxu0 0.0
        %3270 = vmatprep.subr.mxu0 0.0
        %3271 = vmatpush1.msra.mxu0 0.0
        %3272 = vmatprep.subr.mxu0 0.0
        %3273 = vmatpush1.msra.mxu0 0.0
        %3274 = vmatprep.subr.mxu0 0.0
        %3275 = vmatpush1.msra.mxu0 0.0
        %3276 = vmatprep.mubr.f32.mxu0 0.0
        %3277 = vmatmul.mubr.f32.gmra.mrb[0].mxu0 %v3116
        %v3278 = vpop.f32.mrb[0].mxu0
        %v3279 = vadd.f32 0.0, %v3278
        %v3280 = vpop.f32.mrb[0].mxu0
        %3281 = vmatprep.mubr.f32.mxu0 0.0
        %3282 = vmatmul.mubr.f32.gmra.mrb[0].mxu0 %v3119
        %v3283 = vpop.f32.mrb[0].mxu0
        %v3284 = vadd.f32 0.0, %v3283
        %v3285 = vpop.f32.mrb[0].mxu0
        %3286 = vmatprep.mubr.f32.mxu0 0.0
        %3287 = vmatmul.mubr.f32.gmra.mrb[0].mxu0 %v3122
        %v3288 = vpop.f32.mrb[0].mxu0
        %v3289 = vadd.f32 0.0, %v3288
        %v3290 = vpop.f32.mrb[0].mxu0
        %3291 = vmatprep.mubr.f32.mxu0 0.0
        %3292 = vmatmul.mubr.f32.gmra.mrb[0].mxu0 %v3125
        %v3293 = vpop.f32.mrb[0].mxu0
        %v3294 = vadd.f32 0.0, %v3293
        %v3295 = vpop.f32.mrb[0].mxu0
        %3296 = vdwg.mxu0
        %s3297 = scalar_lea.vmem %s7, 1024
        %v3298 = vld [vmem:[%s3297] sm:$0xff]
        %v3299 = vld [vmem:[%s3297 + $0x8] sm:$0xff]
        %v3300 = vld [vmem:[%s3297 + $0x10] sm:$0xff]
        %v3301 = vld [vmem:[%s3297 + $0x18] sm:$0xff]
        %v3302 = vld [vmem:[%s3297 + $0x20] sm:$0xff]
        %v3303 = vld [vmem:[%s3297 + $0x28] sm:$0xff]
        %v3304 = vld [vmem:[%s3297 + $0x30] sm:$0xff]
        %v3305 = vld [vmem:[%s3297 + $0x38] sm:$0xff]
        %v3306 = vld [vmem:[%s3297 + $0x40] sm:$0xff]
        %v3307 = vld [vmem:[%s3297 + $0x48] sm:$0xff]
        %v3308 = vld [vmem:[%s3297 + $0x50] sm:$0xff]
        %v3309 = vld [vmem:[%s3297 + $0x58] sm:$0xff]
        %v3310 = vld [vmem:[%s3297 + $0x60] sm:$0xff]
        %v3311 = vld [vmem:[%s3297 + $0x68] sm:$0xff]
        %v3312 = vld [vmem:[%s3297 + $0x70] sm:$0xff]
        %v3313 = vld [vmem:[%s3297 + $0x78] sm:$0xff]
        %v3314 = vld [vmem:[%s3297 + $0x80] sm:$0xff]
        %v3315 = vld [vmem:[%s3297 + $0x88] sm:$0xff]
        %v3316 = vld [vmem:[%s3297 + $0x90] sm:$0xff]
        %v3317 = vld [vmem:[%s3297 + $0x98] sm:$0xff]
        %v3318 = vld [vmem:[%s3297 + $0xa0] sm:$0xff]
        %v3319 = vld [vmem:[%s3297 + $0xa8] sm:$0xff]
        %v3320 = vld [vmem:[%s3297 + $0xb0] sm:$0xff]
        %v3321 = vld [vmem:[%s3297 + $0xb8] sm:$0xff]
        %v3322 = vld [vmem:[%s3297 + $0xc0] sm:$0xff]
        %v3323 = vld [vmem:[%s3297 + $0xc8] sm:$0xff]
        %v3324 = vld [vmem:[%s3297 + $0xd0] sm:$0xff]
        %v3325 = vld [vmem:[%s3297 + $0xd8] sm:$0xff]
        %v3326 = vld [vmem:[%s3297 + $0xe0] sm:$0xff]
        %v3327 = vld [vmem:[%s3297 + $0xe8] sm:$0xff]
        %v3328 = vld [vmem:[%s3297 + $0xf0] sm:$0xff]
        %v3329 = vld [vmem:[%s3297 + $0xf8] sm:$0xff]
        %v3330 = vld [vmem:[%s3297 + $0x100] sm:$0xff]
        %v3331 = vld [vmem:[%s3297 + $0x108] sm:$0xff]
        %v3332 = vld [vmem:[%s3297 + $0x110] sm:$0xff]
        %v3333 = vld [vmem:[%s3297 + $0x118] sm:$0xff]
        %v3334 = vld [vmem:[%s3297 + $0x120] sm:$0xff]
        %v3335 = vld [vmem:[%s3297 + $0x128] sm:$0xff]
        %v3336 = vld [vmem:[%s3297 + $0x130] sm:$0xff]
        %v3337 = vld [vmem:[%s3297 + $0x138] sm:$0xff]
        %v3338 = vld [vmem:[%s3297 + $0x140] sm:$0xff]
        %v3339 = vld [vmem:[%s3297 + $0x148] sm:$0xff]
        %v3340 = vld [vmem:[%s3297 + $0x150] sm:$0xff]
        %v3341 = vld [vmem:[%s3297 + $0x158] sm:$0xff]
        %v3342 = vld [vmem:[%s3297 + $0x160] sm:$0xff]
        %v3343 = vld [vmem:[%s3297 + $0x168] sm:$0xff]
        %v3344 = vld [vmem:[%s3297 + $0x170] sm:$0xff]
        %v3345 = vld [vmem:[%s3297 + $0x178] sm:$0xff]
        %v3346 = vld [vmem:[%s3297 + $0x180] sm:$0xff]
        %v3347 = vld [vmem:[%s3297 + $0x188] sm:$0xff]
        %v3348 = vld [vmem:[%s3297 + $0x190] sm:$0xff]
        %v3349 = vld [vmem:[%s3297 + $0x198] sm:$0xff]
        %v3350 = vld [vmem:[%s3297 + $0x1a0] sm:$0xff]
        %v3351 = vld [vmem:[%s3297 + $0x1a8] sm:$0xff]
        %v3352 = vld [vmem:[%s3297 + $0x1b0] sm:$0xff]
        %v3353 = vld [vmem:[%s3297 + $0x1b8] sm:$0xff]
        %v3354 = vld [vmem:[%s3297 + $0x1c0] sm:$0xff]
        %v3355 = vld [vmem:[%s3297 + $0x1c8] sm:$0xff]
        %v3356 = vld [vmem:[%s3297 + $0x1d0] sm:$0xff]
        %v3357 = vld [vmem:[%s3297 + $0x1d8] sm:$0xff]
        %v3358 = vld [vmem:[%s3297 + $0x1e0] sm:$0xff]
        %v3359 = vld [vmem:[%s3297 + $0x1e8] sm:$0xff]
        %v3360 = vld [vmem:[%s3297 + $0x1f0] sm:$0xff]
        %v3361 = vld [vmem:[%s3297 + $0x1f8] sm:$0xff]
        %v3362 = vld [vmem:[%s3297 + $0x200] sm:$0xff]
        %v3363 = vld [vmem:[%s3297 + $0x208] sm:$0xff]
        %v3364 = vld [vmem:[%s3297 + $0x210] sm:$0xff]
        %v3365 = vld [vmem:[%s3297 + $0x218] sm:$0xff]
        %v3366 = vld [vmem:[%s3297 + $0x220] sm:$0xff]
        %v3367 = vld [vmem:[%s3297 + $0x228] sm:$0xff]
        %v3368 = vld [vmem:[%s3297 + $0x230] sm:$0xff]
        %v3369 = vld [vmem:[%s3297 + $0x238] sm:$0xff]
        %v3370 = vld [vmem:[%s3297 + $0x240] sm:$0xff]
        %v3371 = vld [vmem:[%s3297 + $0x248] sm:$0xff]
        %v3372 = vld [vmem:[%s3297 + $0x250] sm:$0xff]
        %v3373 = vld [vmem:[%s3297 + $0x258] sm:$0xff]
        %v3374 = vld [vmem:[%s3297 + $0x260] sm:$0xff]
        %v3375 = vld [vmem:[%s3297 + $0x268] sm:$0xff]
        %v3376 = vld [vmem:[%s3297 + $0x270] sm:$0xff]
        %v3377 = vld [vmem:[%s3297 + $0x278] sm:$0xff]
        %v3378 = vld [vmem:[%s3297 + $0x280] sm:$0xff]
        %v3379 = vld [vmem:[%s3297 + $0x288] sm:$0xff]
        %v3380 = vld [vmem:[%s3297 + $0x290] sm:$0xff]
        %v3381 = vld [vmem:[%s3297 + $0x298] sm:$0xff]
        %v3382 = vld [vmem:[%s3297 + $0x2a0] sm:$0xff]
        %v3383 = vld [vmem:[%s3297 + $0x2a8] sm:$0xff]
        %v3384 = vld [vmem:[%s3297 + $0x2b0] sm:$0xff]
        %v3385 = vld [vmem:[%s3297 + $0x2b8] sm:$0xff]
        %v3386 = vld [vmem:[%s3297 + $0x2c0] sm:$0xff]
        %v3387 = vld [vmem:[%s3297 + $0x2c8] sm:$0xff]
        %v3388 = vld [vmem:[%s3297 + $0x2d0] sm:$0xff]
        %v3389 = vld [vmem:[%s3297 + $0x2d8] sm:$0xff]
        %v3390 = vld [vmem:[%s3297 + $0x2e0] sm:$0xff]
        %v3391 = vld [vmem:[%s3297 + $0x2e8] sm:$0xff]
        %v3392 = vld [vmem:[%s3297 + $0x2f0] sm:$0xff]
        %v3393 = vld [vmem:[%s3297 + $0x2f8] sm:$0xff]
        %v3394 = vld [vmem:[%s3297 + $0x300] sm:$0xff]
        %v3395 = vld [vmem:[%s3297 + $0x308] sm:$0xff]
        %v3396 = vld [vmem:[%s3297 + $0x310] sm:$0xff]
        %v3397 = vld [vmem:[%s3297 + $0x318] sm:$0xff]
        %v3398 = vld [vmem:[%s3297 + $0x320] sm:$0xff]
        %v3399 = vld [vmem:[%s3297 + $0x328] sm:$0xff]
        %v3400 = vld [vmem:[%s3297 + $0x330] sm:$0xff]
        %v3401 = vld [vmem:[%s3297 + $0x338] sm:$0xff]
        %v3402 = vld [vmem:[%s3297 + $0x340] sm:$0xff]
        %v3403 = vld [vmem:[%s3297 + $0x348] sm:$0xff]
        %v3404 = vld [vmem:[%s3297 + $0x350] sm:$0xff]
        %v3405 = vld [vmem:[%s3297 + $0x358] sm:$0xff]
        %v3406 = vld [vmem:[%s3297 + $0x360] sm:$0xff]
        %v3407 = vld [vmem:[%s3297 + $0x368] sm:$0xff]
        %v3408 = vld [vmem:[%s3297 + $0x370] sm:$0xff]
        %v3409 = vld [vmem:[%s3297 + $0x378] sm:$0xff]
        %v3410 = vld [vmem:[%s3297 + $0x380] sm:$0xff]
        %v3411 = vld [vmem:[%s3297 + $0x388] sm:$0xff]
        %v3412 = vld [vmem:[%s3297 + $0x390] sm:$0xff]
        %v3413 = vld [vmem:[%s3297 + $0x398] sm:$0xff]
        %v3414 = vld [vmem:[%s3297 + $0x3a0] sm:$0xff]
        %v3415 = vld [vmem:[%s3297 + $0x3a8] sm:$0xff]
        %v3416 = vld [vmem:[%s3297 + $0x3b0] sm:$0xff]
        %v3417 = vld [vmem:[%s3297 + $0x3b8] sm:$0xff]
        %v3418 = vld [vmem:[%s3297 + $0x3c0] sm:$0xff]
        %v3419 = vld [vmem:[%s3297 + $0x3c8] sm:$0xff]
        %v3420 = vld [vmem:[%s3297 + $0x3d0] sm:$0xff]
        %v3421 = vld [vmem:[%s3297 + $0x3d8] sm:$0xff]
        %v3422 = vld [vmem:[%s3297 + $0x3e0] sm:$0xff]
        %v3423 = vld [vmem:[%s3297 + $0x3e8] sm:$0xff]
        %v3424 = vld [vmem:[%s3297 + $0x3f0] sm:$0xff]
        %v3425 = vld [vmem:[%s3297 + $0x3f8] sm:$0xff]
        %s3426 = scalar_lea.vmem %s8, 1024
        %v3427 = vld [vmem:[%s3426] sm:$0xff]
        %v3428 = vld [vmem:[%s3426 + $0x8] sm:$0xff]
        %v3429 = vld [vmem:[%s3426 + $0x10] sm:$0xff]
        %v3430 = vld [vmem:[%s3426 + $0x18] sm:$0xff]
        %v3431 = vld [vmem:[%s3426 + $0x20] sm:$0xff]
        %v3432 = vld [vmem:[%s3426 + $0x28] sm:$0xff]
        %v3433 = vld [vmem:[%s3426 + $0x30] sm:$0xff]
        %v3434 = vld [vmem:[%s3426 + $0x38] sm:$0xff]
        %v3435 = vld [vmem:[%s3426 + $0x40] sm:$0xff]
        %v3436 = vld [vmem:[%s3426 + $0x48] sm:$0xff]
        %v3437 = vld [vmem:[%s3426 + $0x50] sm:$0xff]
        %v3438 = vld [vmem:[%s3426 + $0x58] sm:$0xff]
        %v3439 = vld [vmem:[%s3426 + $0x60] sm:$0xff]
        %v3440 = vld [vmem:[%s3426 + $0x68] sm:$0xff]
        %v3441 = vld [vmem:[%s3426 + $0x70] sm:$0xff]
        %v3442 = vld [vmem:[%s3426 + $0x78] sm:$0xff]
        %v3443 = vld [vmem:[%s3426 + $0x80] sm:$0xff]
        %v3444 = vld [vmem:[%s3426 + $0x88] sm:$0xff]
        %v3445 = vld [vmem:[%s3426 + $0x90] sm:$0xff]
        %v3446 = vld [vmem:[%s3426 + $0x98] sm:$0xff]
        %v3447 = vld [vmem:[%s3426 + $0xa0] sm:$0xff]
        %v3448 = vld [vmem:[%s3426 + $0xa8] sm:$0xff]
        %v3449 = vld [vmem:[%s3426 + $0xb0] sm:$0xff]
        %v3450 = vld [vmem:[%s3426 + $0xb8] sm:$0xff]
        %v3451 = vld [vmem:[%s3426 + $0xc0] sm:$0xff]
        %v3452 = vld [vmem:[%s3426 + $0xc8] sm:$0xff]
        %v3453 = vld [vmem:[%s3426 + $0xd0] sm:$0xff]
        %v3454 = vld [vmem:[%s3426 + $0xd8] sm:$0xff]
        %v3455 = vld [vmem:[%s3426 + $0xe0] sm:$0xff]
        %v3456 = vld [vmem:[%s3426 + $0xe8] sm:$0xff]
        %v3457 = vld [vmem:[%s3426 + $0xf0] sm:$0xff]
        %v3458 = vld [vmem:[%s3426 + $0xf8] sm:$0xff]
        %v3459 = vld [vmem:[%s3426 + $0x100] sm:$0xff]
        %v3460 = vld [vmem:[%s3426 + $0x108] sm:$0xff]
        %v3461 = vld [vmem:[%s3426 + $0x110] sm:$0xff]
        %v3462 = vld [vmem:[%s3426 + $0x118] sm:$0xff]
        %v3463 = vld [vmem:[%s3426 + $0x120] sm:$0xff]
        %v3464 = vld [vmem:[%s3426 + $0x128] sm:$0xff]
        %v3465 = vld [vmem:[%s3426 + $0x130] sm:$0xff]
        %v3466 = vld [vmem:[%s3426 + $0x138] sm:$0xff]
        %v3467 = vld [vmem:[%s3426 + $0x140] sm:$0xff]
        %v3468 = vld [vmem:[%s3426 + $0x148] sm:$0xff]
        %v3469 = vld [vmem:[%s3426 + $0x150] sm:$0xff]
        %v3470 = vld [vmem:[%s3426 + $0x158] sm:$0xff]
        %v3471 = vld [vmem:[%s3426 + $0x160] sm:$0xff]
        %v3472 = vld [vmem:[%s3426 + $0x168] sm:$0xff]
        %v3473 = vld [vmem:[%s3426 + $0x170] sm:$0xff]
        %v3474 = vld [vmem:[%s3426 + $0x178] sm:$0xff]
        %v3475 = vld [vmem:[%s3426 + $0x180] sm:$0xff]
        %v3476 = vld [vmem:[%s3426 + $0x188] sm:$0xff]
        %v3477 = vld [vmem:[%s3426 + $0x190] sm:$0xff]
        %v3478 = vld [vmem:[%s3426 + $0x198] sm:$0xff]
        %v3479 = vld [vmem:[%s3426 + $0x1a0] sm:$0xff]
        %v3480 = vld [vmem:[%s3426 + $0x1a8] sm:$0xff]
        %v3481 = vld [vmem:[%s3426 + $0x1b0] sm:$0xff]
        %v3482 = vld [vmem:[%s3426 + $0x1b8] sm:$0xff]
        %v3483 = vld [vmem:[%s3426 + $0x1c0] sm:$0xff]
        %v3484 = vld [vmem:[%s3426 + $0x1c8] sm:$0xff]
        %v3485 = vld [vmem:[%s3426 + $0x1d0] sm:$0xff]
        %v3486 = vld [vmem:[%s3426 + $0x1d8] sm:$0xff]
        %v3487 = vld [vmem:[%s3426 + $0x1e0] sm:$0xff]
        %v3488 = vld [vmem:[%s3426 + $0x1e8] sm:$0xff]
        %v3489 = vld [vmem:[%s3426 + $0x1f0] sm:$0xff]
        %v3490 = vld [vmem:[%s3426 + $0x1f8] sm:$0xff]
        %v3491 = vld [vmem:[%s3426 + $0x200] sm:$0xff]
        %v3492 = vld [vmem:[%s3426 + $0x208] sm:$0xff]
        %v3493 = vld [vmem:[%s3426 + $0x210] sm:$0xff]
        %v3494 = vld [vmem:[%s3426 + $0x218] sm:$0xff]
        %v3495 = vld [vmem:[%s3426 + $0x220] sm:$0xff]
        %v3496 = vld [vmem:[%s3426 + $0x228] sm:$0xff]
        %v3497 = vld [vmem:[%s3426 + $0x230] sm:$0xff]
        %v3498 = vld [vmem:[%s3426 + $0x238] sm:$0xff]
        %v3499 = vld [vmem:[%s3426 + $0x240] sm:$0xff]
        %v3500 = vld [vmem:[%s3426 + $0x248] sm:$0xff]
        %v3501 = vld [vmem:[%s3426 + $0x250] sm:$0xff]
        %v3502 = vld [vmem:[%s3426 + $0x258] sm:$0xff]
        %v3503 = vld [vmem:[%s3426 + $0x260] sm:$0xff]
        %v3504 = vld [vmem:[%s3426 + $0x268] sm:$0xff]
        %v3505 = vld [vmem:[%s3426 + $0x270] sm:$0xff]
        %v3506 = vld [vmem:[%s3426 + $0x278] sm:$0xff]
        %v3507 = vld [vmem:[%s3426 + $0x280] sm:$0xff]
        %v3508 = vld [vmem:[%s3426 + $0x288] sm:$0xff]
        %v3509 = vld [vmem:[%s3426 + $0x290] sm:$0xff]
        %v3510 = vld [vmem:[%s3426 + $0x298] sm:$0xff]
        %v3511 = vld [vmem:[%s3426 + $0x2a0] sm:$0xff]
        %v3512 = vld [vmem:[%s3426 + $0x2a8] sm:$0xff]
        %v3513 = vld [vmem:[%s3426 + $0x2b0] sm:$0xff]
        %v3514 = vld [vmem:[%s3426 + $0x2b8] sm:$0xff]
        %v3515 = vld [vmem:[%s3426 + $0x2c0] sm:$0xff]
        %v3516 = vld [vmem:[%s3426 + $0x2c8] sm:$0xff]
        %v3517 = vld [vmem:[%s3426 + $0x2d0] sm:$0xff]
        %v3518 = vld [vmem:[%s3426 + $0x2d8] sm:$0xff]
        %v3519 = vld [vmem:[%s3426 + $0x2e0] sm:$0xff]
        %v3520 = vld [vmem:[%s3426 + $0x2e8] sm:$0xff]
        %v3521 = vld [vmem:[%s3426 + $0x2f0] sm:$0xff]
        %v3522 = vld [vmem:[%s3426 + $0x2f8] sm:$0xff]
        %v3523 = vld [vmem:[%s3426 + $0x300] sm:$0xff]
        %v3524 = vld [vmem:[%s3426 + $0x308] sm:$0xff]
        %v3525 = vld [vmem:[%s3426 + $0x310] sm:$0xff]
        %v3526 = vld [vmem:[%s3426 + $0x318] sm:$0xff]
        %v3527 = vld [vmem:[%s3426 + $0x320] sm:$0xff]
        %v3528 = vld [vmem:[%s3426 + $0x328] sm:$0xff]
        %v3529 = vld [vmem:[%s3426 + $0x330] sm:$0xff]
        %v3530 = vld [vmem:[%s3426 + $0x338] sm:$0xff]
        %v3531 = vld [vmem:[%s3426 + $0x340] sm:$0xff]
        %v3532 = vld [vmem:[%s3426 + $0x348] sm:$0xff]
        %v3533 = vld [vmem:[%s3426 + $0x350] sm:$0xff]
        %v3534 = vld [vmem:[%s3426 + $0x358] sm:$0xff]
        %v3535 = vld [vmem:[%s3426 + $0x360] sm:$0xff]
        %v3536 = vld [vmem:[%s3426 + $0x368] sm:$0xff]
        %v3537 = vld [vmem:[%s3426 + $0x370] sm:$0xff]
        %v3538 = vld [vmem:[%s3426 + $0x378] sm:$0xff]
        %v3539 = vld [vmem:[%s3426 + $0x380] sm:$0xff]
        %v3540 = vld [vmem:[%s3426 + $0x388] sm:$0xff]
        %v3541 = vld [vmem:[%s3426 + $0x390] sm:$0xff]
        %v3542 = vld [vmem:[%s3426 + $0x398] sm:$0xff]
        %v3543 = vld [vmem:[%s3426 + $0x3a0] sm:$0xff]
        %v3544 = vld [vmem:[%s3426 + $0x3a8] sm:$0xff]
        %v3545 = vld [vmem:[%s3426 + $0x3b0] sm:$0xff]
        %v3546 = vld [vmem:[%s3426 + $0x3b8] sm:$0xff]
        %v3547 = vld [vmem:[%s3426 + $0x3c0] sm:$0xff]
        %v3548 = vld [vmem:[%s3426 + $0x3c8] sm:$0xff]
        %v3549 = vld [vmem:[%s3426 + $0x3d0] sm:$0xff]
        %v3550 = vld [vmem:[%s3426 + $0x3d8] sm:$0xff]
        %v3551 = vld [vmem:[%s3426 + $0x3e0] sm:$0xff]
        %v3552 = vld [vmem:[%s3426 + $0x3e8] sm:$0xff]
        %v3553 = vld [vmem:[%s3426 + $0x3f0] sm:$0xff]
        %v3554 = vld [vmem:[%s3426 + $0x3f8] sm:$0xff]
        %v3555 = vmul.f32 %v3298, %v3194
        %v3556 = vmul.f32 %v3299, %v3199
        %v3557 = vmul.f32 %v3300, %v3204
        %v3558 = vmul.f32 %v3301, %v3209
        %v3559 = vmul.f32 %v3302, %v3194
        %v3560 = vmul.f32 %v3303, %v3199
        %v3561 = vmul.f32 %v3304, %v3204
        %v3562 = vmul.f32 %v3305, %v3209
        %v3563 = vmul.f32 %v3306, %v3194
        %v3564 = vmul.f32 %v3307, %v3199
        %v3565 = vmul.f32 %v3308, %v3204
        %v3566 = vmul.f32 %v3309, %v3209
        %v3567 = vmul.f32 %v3310, %v3194
        %v3568 = vmul.f32 %v3311, %v3199
        %v3569 = vmul.f32 %v3312, %v3204
        %v3570 = vmul.f32 %v3313, %v3209
        %v3571 = vmul.f32 %v3314, %v3194
        %v3572 = vmul.f32 %v3315, %v3199
        %v3573 = vmul.f32 %v3316, %v3204
        %v3574 = vmul.f32 %v3317, %v3209
        %v3575 = vmul.f32 %v3318, %v3194
        %v3576 = vmul.f32 %v3319, %v3199
        %v3577 = vmul.f32 %v3320, %v3204
        %v3578 = vmul.f32 %v3321, %v3209
        %v3579 = vmul.f32 %v3322, %v3194
        %v3580 = vmul.f32 %v3323, %v3199
        %v3581 = vmul.f32 %v3324, %v3204
        %v3582 = vmul.f32 %v3325, %v3209
        %v3583 = vmul.f32 %v3326, %v3194
        %v3584 = vmul.f32 %v3327, %v3199
        %v3585 = vmul.f32 %v3328, %v3204
        %v3586 = vmul.f32 %v3329, %v3209
        %v3587 = vmul.f32 %v3330, %v3194
        %v3588 = vmul.f32 %v3331, %v3199
        %v3589 = vmul.f32 %v3332, %v3204
        %v3590 = vmul.f32 %v3333, %v3209
        %v3591 = vmul.f32 %v3334, %v3194
        %v3592 = vmul.f32 %v3335, %v3199
        %v3593 = vmul.f32 %v3336, %v3204
        %v3594 = vmul.f32 %v3337, %v3209
        %v3595 = vmul.f32 %v3338, %v3194
        %v3596 = vmul.f32 %v3339, %v3199
        %v3597 = vmul.f32 %v3340, %v3204
        %v3598 = vmul.f32 %v3341, %v3209
        %v3599 = vmul.f32 %v3342, %v3194
        %v3600 = vmul.f32 %v3343, %v3199
        %v3601 = vmul.f32 %v3344, %v3204
        %v3602 = vmul.f32 %v3345, %v3209
        %v3603 = vmul.f32 %v3346, %v3194
        %v3604 = vmul.f32 %v3347, %v3199
        %v3605 = vmul.f32 %v3348, %v3204
        %v3606 = vmul.f32 %v3349, %v3209
        %v3607 = vmul.f32 %v3350, %v3194
        %v3608 = vmul.f32 %v3351, %v3199
        %v3609 = vmul.f32 %v3352, %v3204
        %v3610 = vmul.f32 %v3353, %v3209
        %v3611 = vmul.f32 %v3354, %v3194
        %v3612 = vmul.f32 %v3355, %v3199
        %v3613 = vmul.f32 %v3356, %v3204
        %v3614 = vmul.f32 %v3357, %v3209
        %v3615 = vmul.f32 %v3358, %v3194
        %v3616 = vmul.f32 %v3359, %v3199
        %v3617 = vmul.f32 %v3360, %v3204
        %v3618 = vmul.f32 %v3361, %v3209
        %v3619 = vmul.f32 %v3362, %v3194
        %v3620 = vmul.f32 %v3363, %v3199
        %v3621 = vmul.f32 %v3364, %v3204
        %v3622 = vmul.f32 %v3365, %v3209
        %v3623 = vmul.f32 %v3366, %v3194
        %v3624 = vmul.f32 %v3367, %v3199
        %v3625 = vmul.f32 %v3368, %v3204
        %v3626 = vmul.f32 %v3369, %v3209
        %v3627 = vmul.f32 %v3370, %v3194
        %v3628 = vmul.f32 %v3371, %v3199
        %v3629 = vmul.f32 %v3372, %v3204
        %v3630 = vmul.f32 %v3373, %v3209
        %v3631 = vmul.f32 %v3374, %v3194
        %v3632 = vmul.f32 %v3375, %v3199
        %v3633 = vmul.f32 %v3376, %v3204
        %v3634 = vmul.f32 %v3377, %v3209
        %v3635 = vmul.f32 %v3378, %v3194
        %v3636 = vmul.f32 %v3379, %v3199
        %v3637 = vmul.f32 %v3380, %v3204
        %v3638 = vmul.f32 %v3381, %v3209
        %v3639 = vmul.f32 %v3382, %v3194
        %v3640 = vmul.f32 %v3383, %v3199
        %v3641 = vmul.f32 %v3384, %v3204
        %v3642 = vmul.f32 %v3385, %v3209
        %v3643 = vmul.f32 %v3386, %v3194
        %v3644 = vmul.f32 %v3387, %v3199
        %v3645 = vmul.f32 %v3388, %v3204
        %v3646 = vmul.f32 %v3389, %v3209
        %v3647 = vmul.f32 %v3390, %v3194
        %v3648 = vmul.f32 %v3391, %v3199
        %v3649 = vmul.f32 %v3392, %v3204
        %v3650 = vmul.f32 %v3393, %v3209
        %v3651 = vmul.f32 %v3394, %v3194
        %v3652 = vmul.f32 %v3395, %v3199
        %v3653 = vmul.f32 %v3396, %v3204
        %v3654 = vmul.f32 %v3397, %v3209
        %v3655 = vmul.f32 %v3398, %v3194
        %v3656 = vmul.f32 %v3399, %v3199
        %v3657 = vmul.f32 %v3400, %v3204
        %v3658 = vmul.f32 %v3401, %v3209
        %v3659 = vmul.f32 %v3402, %v3194
        %v3660 = vmul.f32 %v3403, %v3199
        %v3661 = vmul.f32 %v3404, %v3204
        %v3662 = vmul.f32 %v3405, %v3209
        %v3663 = vmul.f32 %v3406, %v3194
        %v3664 = vmul.f32 %v3407, %v3199
        %v3665 = vmul.f32 %v3408, %v3204
        %v3666 = vmul.f32 %v3409, %v3209
        %v3667 = vmul.f32 %v3410, %v3194
        %v3668 = vmul.f32 %v3411, %v3199
        %v3669 = vmul.f32 %v3412, %v3204
        %v3670 = vmul.f32 %v3413, %v3209
        %v3671 = vmul.f32 %v3414, %v3194
        %v3672 = vmul.f32 %v3415, %v3199
        %v3673 = vmul.f32 %v3416, %v3204
        %v3674 = vmul.f32 %v3417, %v3209
        %v3675 = vmul.f32 %v3418, %v3194
        %v3676 = vmul.f32 %v3419, %v3199
        %v3677 = vmul.f32 %v3420, %v3204
        %v3678 = vmul.f32 %v3421, %v3209
        %v3679 = vmul.f32 %v3422, %v3194
        %v3680 = vmul.f32 %v3423, %v3199
        %v3681 = vmul.f32 %v3424, %v3204
        %v3682 = vmul.f32 %v3425, %v3209
        %v3683 = vmul.f32 %v3427, %v3279
        %v3684 = vmul.f32 %v3428, %v3284
        %v3685 = vmul.f32 %v3429, %v3289
        %v3686 = vmul.f32 %v3430, %v3294
        %v3687 = vmul.f32 %v3431, %v3279
        %v3688 = vmul.f32 %v3432, %v3284
        %v3689 = vmul.f32 %v3433, %v3289
        %v3690 = vmul.f32 %v3434, %v3294
        %v3691 = vmul.f32 %v3435, %v3279
        %v3692 = vmul.f32 %v3436, %v3284
        %v3693 = vmul.f32 %v3437, %v3289
        %v3694 = vmul.f32 %v3438, %v3294
        %v3695 = vmul.f32 %v3439, %v3279
        %v3696 = vmul.f32 %v3440, %v3284
        %v3697 = vmul.f32 %v3441, %v3289
        %v3698 = vmul.f32 %v3442, %v3294
        %v3699 = vmul.f32 %v3443, %v3279
        %v3700 = vmul.f32 %v3444, %v3284
        %v3701 = vmul.f32 %v3445, %v3289
        %v3702 = vmul.f32 %v3446, %v3294
        %v3703 = vmul.f32 %v3447, %v3279
        %v3704 = vmul.f32 %v3448, %v3284
        %v3705 = vmul.f32 %v3449, %v3289
        %v3706 = vmul.f32 %v3450, %v3294
        %v3707 = vmul.f32 %v3451, %v3279
        %v3708 = vmul.f32 %v3452, %v3284
        %v3709 = vmul.f32 %v3453, %v3289
        %v3710 = vmul.f32 %v3454, %v3294
        %v3711 = vmul.f32 %v3455, %v3279
        %v3712 = vmul.f32 %v3456, %v3284
        %v3713 = vmul.f32 %v3457, %v3289
        %v3714 = vmul.f32 %v3458, %v3294
        %v3715 = vmul.f32 %v3459, %v3279
        %v3716 = vmul.f32 %v3460, %v3284
        %v3717 = vmul.f32 %v3461, %v3289
        %v3718 = vmul.f32 %v3462, %v3294
        %v3719 = vmul.f32 %v3463, %v3279
        %v3720 = vmul.f32 %v3464, %v3284
        %v3721 = vmul.f32 %v3465, %v3289
        %v3722 = vmul.f32 %v3466, %v3294
        %v3723 = vmul.f32 %v3467, %v3279
        %v3724 = vmul.f32 %v3468, %v3284
        %v3725 = vmul.f32 %v3469, %v3289
        %v3726 = vmul.f32 %v3470, %v3294
        %v3727 = vmul.f32 %v3471, %v3279
        %v3728 = vmul.f32 %v3472, %v3284
        %v3729 = vmul.f32 %v3473, %v3289
        %v3730 = vmul.f32 %v3474, %v3294
        %v3731 = vmul.f32 %v3475, %v3279
        %v3732 = vmul.f32 %v3476, %v3284
        %v3733 = vmul.f32 %v3477, %v3289
        %v3734 = vmul.f32 %v3478, %v3294
        %v3735 = vmul.f32 %v3479, %v3279
        %v3736 = vmul.f32 %v3480, %v3284
        %v3737 = vmul.f32 %v3481, %v3289
        %v3738 = vmul.f32 %v3482, %v3294
        %v3739 = vmul.f32 %v3483, %v3279
        %v3740 = vmul.f32 %v3484, %v3284
        %v3741 = vmul.f32 %v3485, %v3289
        %v3742 = vmul.f32 %v3486, %v3294
        %v3743 = vmul.f32 %v3487, %v3279
        %v3744 = vmul.f32 %v3488, %v3284
        %v3745 = vmul.f32 %v3489, %v3289
        %v3746 = vmul.f32 %v3490, %v3294
        %v3747 = vmul.f32 %v3491, %v3279
        %v3748 = vmul.f32 %v3492, %v3284
        %v3749 = vmul.f32 %v3493, %v3289
        %v3750 = vmul.f32 %v3494, %v3294
        %v3751 = vmul.f32 %v3495, %v3279
        %v3752 = vmul.f32 %v3496, %v3284
        %v3753 = vmul.f32 %v3497, %v3289
        %v3754 = vmul.f32 %v3498, %v3294
        %v3755 = vmul.f32 %v3499, %v3279
        %v3756 = vmul.f32 %v3500, %v3284
        %v3757 = vmul.f32 %v3501, %v3289
        %v3758 = vmul.f32 %v3502, %v3294
        %v3759 = vmul.f32 %v3503, %v3279
        %v3760 = vmul.f32 %v3504, %v3284
        %v3761 = vmul.f32 %v3505, %v3289
        %v3762 = vmul.f32 %v3506, %v3294
        %v3763 = vmul.f32 %v3507, %v3279
        %v3764 = vmul.f32 %v3508, %v3284
        %v3765 = vmul.f32 %v3509, %v3289
        %v3766 = vmul.f32 %v3510, %v3294
        %v3767 = vmul.f32 %v3511, %v3279
        %v3768 = vmul.f32 %v3512, %v3284
        %v3769 = vmul.f32 %v3513, %v3289
        %v3770 = vmul.f32 %v3514, %v3294
        %v3771 = vmul.f32 %v3515, %v3279
        %v3772 = vmul.f32 %v3516, %v3284
        %v3773 = vmul.f32 %v3517, %v3289
        %v3774 = vmul.f32 %v3518, %v3294
        %v3775 = vmul.f32 %v3519, %v3279
        %v3776 = vmul.f32 %v3520, %v3284
        %v3777 = vmul.f32 %v3521, %v3289
        %v3778 = vmul.f32 %v3522, %v3294
        %v3779 = vmul.f32 %v3523, %v3279
        %v3780 = vmul.f32 %v3524, %v3284
        %v3781 = vmul.f32 %v3525, %v3289
        %v3782 = vmul.f32 %v3526, %v3294
        %v3783 = vmul.f32 %v3527, %v3279
        %v3784 = vmul.f32 %v3528, %v3284
        %v3785 = vmul.f32 %v3529, %v3289
        %v3786 = vmul.f32 %v3530, %v3294
        %v3787 = vmul.f32 %v3531, %v3279
        %v3788 = vmul.f32 %v3532, %v3284
        %v3789 = vmul.f32 %v3533, %v3289
        %v3790 = vmul.f32 %v3534, %v3294
        %v3791 = vmul.f32 %v3535, %v3279
        %v3792 = vmul.f32 %v3536, %v3284
        %v3793 = vmul.f32 %v3537, %v3289
        %v3794 = vmul.f32 %v3538, %v3294
        %v3795 = vmul.f32 %v3539, %v3279
        %v3796 = vmul.f32 %v3540, %v3284
        %v3797 = vmul.f32 %v3541, %v3289
        %v3798 = vmul.f32 %v3542, %v3294
        %v3799 = vmul.f32 %v3543, %v3279
        %v3800 = vmul.f32 %v3544, %v3284
        %v3801 = vmul.f32 %v3545, %v3289
        %v3802 = vmul.f32 %v3546, %v3294
        %v3803 = vmul.f32 %v3547, %v3279
        %v3804 = vmul.f32 %v3548, %v3284
        %v3805 = vmul.f32 %v3549, %v3289
        %v3806 = vmul.f32 %v3550, %v3294
        %v3807 = vmul.f32 %v3551, %v3279
        %v3808 = vmul.f32 %v3552, %v3284
        %v3809 = vmul.f32 %v3553, %v3289
        %v3810 = vmul.f32 %v3554, %v3294
        %v3811 = vsub.f32 %v3555, %v3683
        %v3812 = vsub.f32 %v3556, %v3684
        %v3813 = vsub.f32 %v3557, %v3685
        %v3814 = vsub.f32 %v3558, %v3686
        %v3815 = vsub.f32 %v3559, %v3687
        %v3816 = vsub.f32 %v3560, %v3688
        %v3817 = vsub.f32 %v3561, %v3689
        %v3818 = vsub.f32 %v3562, %v3690
        %v3819 = vsub.f32 %v3563, %v3691
        %v3820 = vsub.f32 %v3564, %v3692
        %v3821 = vsub.f32 %v3565, %v3693
        %v3822 = vsub.f32 %v3566, %v3694
        %v3823 = vsub.f32 %v3567, %v3695
        %v3824 = vsub.f32 %v3568, %v3696
        %v3825 = vsub.f32 %v3569, %v3697
        %v3826 = vsub.f32 %v3570, %v3698
        %v3827 = vsub.f32 %v3571, %v3699
        %v3828 = vsub.f32 %v3572, %v3700
        %v3829 = vsub.f32 %v3573, %v3701
        %v3830 = vsub.f32 %v3574, %v3702
        %v3831 = vsub.f32 %v3575, %v3703
        %v3832 = vsub.f32 %v3576, %v3704
        %v3833 = vsub.f32 %v3577, %v3705
        %v3834 = vsub.f32 %v3578, %v3706
        %v3835 = vsub.f32 %v3579, %v3707
        %v3836 = vsub.f32 %v3580, %v3708
        %v3837 = vsub.f32 %v3581, %v3709
        %v3838 = vsub.f32 %v3582, %v3710
        %v3839 = vsub.f32 %v3583, %v3711
        %v3840 = vsub.f32 %v3584, %v3712
        %v3841 = vsub.f32 %v3585, %v3713
        %v3842 = vsub.f32 %v3586, %v3714
        %v3843 = vsub.f32 %v3587, %v3715
        %v3844 = vsub.f32 %v3588, %v3716
        %v3845 = vsub.f32 %v3589, %v3717
        %v3846 = vsub.f32 %v3590, %v3718
        %v3847 = vsub.f32 %v3591, %v3719
        %v3848 = vsub.f32 %v3592, %v3720
        %v3849 = vsub.f32 %v3593, %v3721
        %v3850 = vsub.f32 %v3594, %v3722
        %v3851 = vsub.f32 %v3595, %v3723
        %v3852 = vsub.f32 %v3596, %v3724
        %v3853 = vsub.f32 %v3597, %v3725
        %v3854 = vsub.f32 %v3598, %v3726
        %v3855 = vsub.f32 %v3599, %v3727
        %v3856 = vsub.f32 %v3600, %v3728
        %v3857 = vsub.f32 %v3601, %v3729
        %v3858 = vsub.f32 %v3602, %v3730
        %v3859 = vsub.f32 %v3603, %v3731
        %v3860 = vsub.f32 %v3604, %v3732
        %v3861 = vsub.f32 %v3605, %v3733
        %v3862 = vsub.f32 %v3606, %v3734
        %v3863 = vsub.f32 %v3607, %v3735
        %v3864 = vsub.f32 %v3608, %v3736
        %v3865 = vsub.f32 %v3609, %v3737
        %v3866 = vsub.f32 %v3610, %v3738
        %v3867 = vsub.f32 %v3611, %v3739
        %v3868 = vsub.f32 %v3612, %v3740
        %v3869 = vsub.f32 %v3613, %v3741
        %v3870 = vsub.f32 %v3614, %v3742
        %v3871 = vsub.f32 %v3615, %v3743
        %v3872 = vsub.f32 %v3616, %v3744
        %v3873 = vsub.f32 %v3617, %v3745
        %v3874 = vsub.f32 %v3618, %v3746
        %v3875 = vsub.f32 %v3619, %v3747
        %v3876 = vsub.f32 %v3620, %v3748
        %v3877 = vsub.f32 %v3621, %v3749
        %v3878 = vsub.f32 %v3622, %v3750
        %v3879 = vsub.f32 %v3623, %v3751
        %v3880 = vsub.f32 %v3624, %v3752
        %v3881 = vsub.f32 %v3625, %v3753
        %v3882 = vsub.f32 %v3626, %v3754
        %v3883 = vsub.f32 %v3627, %v3755
        %v3884 = vsub.f32 %v3628, %v3756
        %v3885 = vsub.f32 %v3629, %v3757
        %v3886 = vsub.f32 %v3630, %v3758
        %v3887 = vsub.f32 %v3631, %v3759
        %v3888 = vsub.f32 %v3632, %v3760
        %v3889 = vsub.f32 %v3633, %v3761
        %v3890 = vsub.f32 %v3634, %v3762
        %v3891 = vsub.f32 %v3635, %v3763
        %v3892 = vsub.f32 %v3636, %v3764
        %v3893 = vsub.f32 %v3637, %v3765
        %v3894 = vsub.f32 %v3638, %v3766
        %v3895 = vsub.f32 %v3639, %v3767
        %v3896 = vsub.f32 %v3640, %v3768
        %v3897 = vsub.f32 %v3641, %v3769
        %v3898 = vsub.f32 %v3642, %v3770
        %v3899 = vsub.f32 %v3643, %v3771
        %v3900 = vsub.f32 %v3644, %v3772
        %v3901 = vsub.f32 %v3645, %v3773
        %v3902 = vsub.f32 %v3646, %v3774
        %v3903 = vsub.f32 %v3647, %v3775
        %v3904 = vsub.f32 %v3648, %v3776
        %v3905 = vsub.f32 %v3649, %v3777
        %v3906 = vsub.f32 %v3650, %v3778
        %v3907 = vsub.f32 %v3651, %v3779
        %v3908 = vsub.f32 %v3652, %v3780
        %v3909 = vsub.f32 %v3653, %v3781
        %v3910 = vsub.f32 %v3654, %v3782
        %v3911 = vsub.f32 %v3655, %v3783
        %v3912 = vsub.f32 %v3656, %v3784
        %v3913 = vsub.f32 %v3657, %v3785
        %v3914 = vsub.f32 %v3658, %v3786
        %v3915 = vsub.f32 %v3659, %v3787
        %v3916 = vsub.f32 %v3660, %v3788
        %v3917 = vsub.f32 %v3661, %v3789
        %v3918 = vsub.f32 %v3662, %v3790
        %v3919 = vsub.f32 %v3663, %v3791
        %v3920 = vsub.f32 %v3664, %v3792
        %v3921 = vsub.f32 %v3665, %v3793
        %v3922 = vsub.f32 %v3666, %v3794
        %v3923 = vsub.f32 %v3667, %v3795
        %v3924 = vsub.f32 %v3668, %v3796
        %v3925 = vsub.f32 %v3669, %v3797
        %v3926 = vsub.f32 %v3670, %v3798
        %v3927 = vsub.f32 %v3671, %v3799
        %v3928 = vsub.f32 %v3672, %v3800
        %v3929 = vsub.f32 %v3673, %v3801
        %v3930 = vsub.f32 %v3674, %v3802
        %v3931 = vsub.f32 %v3675, %v3803
        %v3932 = vsub.f32 %v3676, %v3804
        %v3933 = vsub.f32 %v3677, %v3805
        %v3934 = vsub.f32 %v3678, %v3806
        %v3935 = vsub.f32 %v3679, %v3807
        %v3936 = vsub.f32 %v3680, %v3808
        %v3937 = vsub.f32 %v3681, %v3809
        %v3938 = vsub.f32 %v3682, %v3810
        %v3939 = vsel %vm1451, %v3811, 0.0
        %v3940 = vsel %vm1451, %v3812, 0.0
        %v3941 = vadd.f32 %v3939, %v3940
        %v3942 = vsel %vm1451, %v3813, 0.0
        %v3943 = vadd.f32 %v3941, %v3942
        %v3944 = vsel %vm1451, %v3814, 0.0
        %v3945 = vadd.f32 %v3943, %v3944
        %v3946 = vrot.slane %v3945, 4
        %v3947 = vadd.f32 %v3945, %v3946
        %v3948 = vrot.slane %v3947, 2
        %v3949 = vadd.f32 %v3947, %v3948
        %v3950 = vrot.slane %v3949, 1
        %v3951 = vadd.f32 %v3949, %v3950
        %v3952 = vsel %vm1451, %v3815, 0.0
        %v3953 = vsel %vm1451, %v3816, 0.0
        %v3954 = vadd.f32 %v3952, %v3953
        %v3955 = vsel %vm1451, %v3817, 0.0
        %v3956 = vadd.f32 %v3954, %v3955
        %v3957 = vsel %vm1451, %v3818, 0.0
        %v3958 = vadd.f32 %v3956, %v3957
        %v3959 = vrot.slane %v3958, 4
        %v3960 = vadd.f32 %v3958, %v3959
        %v3961 = vrot.slane %v3960, 2
        %v3962 = vadd.f32 %v3960, %v3961
        %v3963 = vrot.slane %v3962, 1
        %v3964 = vadd.f32 %v3962, %v3963
        %v3965 = vsel %vm1451, %v3819, 0.0
        %v3966 = vsel %vm1451, %v3820, 0.0
        %v3967 = vadd.f32 %v3965, %v3966
        %v3968 = vsel %vm1451, %v3821, 0.0
        %v3969 = vadd.f32 %v3967, %v3968
        %v3970 = vsel %vm1451, %v3822, 0.0
        %v3971 = vadd.f32 %v3969, %v3970
        %v3972 = vrot.slane %v3971, 4
        %v3973 = vadd.f32 %v3971, %v3972
        %v3974 = vrot.slane %v3973, 2
        %v3975 = vadd.f32 %v3973, %v3974
        %v3976 = vrot.slane %v3975, 1
        %v3977 = vadd.f32 %v3975, %v3976
        %v3978 = vsel %vm1451, %v3823, 0.0
        %v3979 = vsel %vm1451, %v3824, 0.0
        %v3980 = vadd.f32 %v3978, %v3979
        %v3981 = vsel %vm1451, %v3825, 0.0
        %v3982 = vadd.f32 %v3980, %v3981
        %v3983 = vsel %vm1451, %v3826, 0.0
        %v3984 = vadd.f32 %v3982, %v3983
        %v3985 = vrot.slane %v3984, 4
        %v3986 = vadd.f32 %v3984, %v3985
        %v3987 = vrot.slane %v3986, 2
        %v3988 = vadd.f32 %v3986, %v3987
        %v3989 = vrot.slane %v3988, 1
        %v3990 = vadd.f32 %v3988, %v3989
        %v3991 = vsel %vm1451, %v3827, 0.0
        %v3992 = vsel %vm1451, %v3828, 0.0
        %v3993 = vadd.f32 %v3991, %v3992
        %v3994 = vsel %vm1451, %v3829, 0.0
        %v3995 = vadd.f32 %v3993, %v3994
        %v3996 = vsel %vm1451, %v3830, 0.0
        %v3997 = vadd.f32 %v3995, %v3996
        %v3998 = vrot.slane %v3997, 4
        %v3999 = vadd.f32 %v3997, %v3998
        %v4000 = vrot.slane %v3999, 2
        %v4001 = vadd.f32 %v3999, %v4000
        %v4002 = vrot.slane %v4001, 1
        %v4003 = vadd.f32 %v4001, %v4002
        %v4004 = vsel %vm1451, %v3831, 0.0
        %v4005 = vsel %vm1451, %v3832, 0.0
        %v4006 = vadd.f32 %v4004, %v4005
        %v4007 = vsel %vm1451, %v3833, 0.0
        %v4008 = vadd.f32 %v4006, %v4007
        %v4009 = vsel %vm1451, %v3834, 0.0
        %v4010 = vadd.f32 %v4008, %v4009
        %v4011 = vrot.slane %v4010, 4
        %v4012 = vadd.f32 %v4010, %v4011
        %v4013 = vrot.slane %v4012, 2
        %v4014 = vadd.f32 %v4012, %v4013
        %v4015 = vrot.slane %v4014, 1
        %v4016 = vadd.f32 %v4014, %v4015
        %v4017 = vsel %vm1451, %v3835, 0.0
        %v4018 = vsel %vm1451, %v3836, 0.0
        %v4019 = vadd.f32 %v4017, %v4018
        %v4020 = vsel %vm1451, %v3837, 0.0
        %v4021 = vadd.f32 %v4019, %v4020
        %v4022 = vsel %vm1451, %v3838, 0.0
        %v4023 = vadd.f32 %v4021, %v4022
        %v4024 = vrot.slane %v4023, 4
        %v4025 = vadd.f32 %v4023, %v4024
        %v4026 = vrot.slane %v4025, 2
        %v4027 = vadd.f32 %v4025, %v4026
        %v4028 = vrot.slane %v4027, 1
        %v4029 = vadd.f32 %v4027, %v4028
        %v4030 = vsel %vm1451, %v3839, 0.0
        %v4031 = vsel %vm1451, %v3840, 0.0
        %v4032 = vadd.f32 %v4030, %v4031
        %v4033 = vsel %vm1451, %v3841, 0.0
        %v4034 = vadd.f32 %v4032, %v4033
        %v4035 = vsel %vm1451, %v3842, 0.0
        %v4036 = vadd.f32 %v4034, %v4035
        %v4037 = vrot.slane %v4036, 4
        %v4038 = vadd.f32 %v4036, %v4037
        %v4039 = vrot.slane %v4038, 2
        %v4040 = vadd.f32 %v4038, %v4039
        %v4041 = vrot.slane %v4040, 1
        %v4042 = vadd.f32 %v4040, %v4041
        %v4043 = vsel %vm1451, %v3843, 0.0
        %v4044 = vsel %vm1451, %v3844, 0.0
        %v4045 = vadd.f32 %v4043, %v4044
        %v4046 = vsel %vm1451, %v3845, 0.0
        %v4047 = vadd.f32 %v4045, %v4046
        %v4048 = vsel %vm1451, %v3846, 0.0
        %v4049 = vadd.f32 %v4047, %v4048
        %v4050 = vrot.slane %v4049, 4
        %v4051 = vadd.f32 %v4049, %v4050
        %v4052 = vrot.slane %v4051, 2
        %v4053 = vadd.f32 %v4051, %v4052
        %v4054 = vrot.slane %v4053, 1
        %v4055 = vadd.f32 %v4053, %v4054
        %v4056 = vsel %vm1451, %v3847, 0.0
        %v4057 = vsel %vm1451, %v3848, 0.0
        %v4058 = vadd.f32 %v4056, %v4057
        %v4059 = vsel %vm1451, %v3849, 0.0
        %v4060 = vadd.f32 %v4058, %v4059
        %v4061 = vsel %vm1451, %v3850, 0.0
        %v4062 = vadd.f32 %v4060, %v4061
        %v4063 = vrot.slane %v4062, 4
        %v4064 = vadd.f32 %v4062, %v4063
        %v4065 = vrot.slane %v4064, 2
        %v4066 = vadd.f32 %v4064, %v4065
        %v4067 = vrot.slane %v4066, 1
        %v4068 = vadd.f32 %v4066, %v4067
        %v4069 = vsel %vm1451, %v3851, 0.0
        %v4070 = vsel %vm1451, %v3852, 0.0
        %v4071 = vadd.f32 %v4069, %v4070
        %v4072 = vsel %vm1451, %v3853, 0.0
        %v4073 = vadd.f32 %v4071, %v4072
        %v4074 = vsel %vm1451, %v3854, 0.0
        %v4075 = vadd.f32 %v4073, %v4074
        %v4076 = vrot.slane %v4075, 4
        %v4077 = vadd.f32 %v4075, %v4076
        %v4078 = vrot.slane %v4077, 2
        %v4079 = vadd.f32 %v4077, %v4078
        %v4080 = vrot.slane %v4079, 1
        %v4081 = vadd.f32 %v4079, %v4080
        %v4082 = vsel %vm1451, %v3855, 0.0
        %v4083 = vsel %vm1451, %v3856, 0.0
        %v4084 = vadd.f32 %v4082, %v4083
        %v4085 = vsel %vm1451, %v3857, 0.0
        %v4086 = vadd.f32 %v4084, %v4085
        %v4087 = vsel %vm1451, %v3858, 0.0
        %v4088 = vadd.f32 %v4086, %v4087
        %v4089 = vrot.slane %v4088, 4
        %v4090 = vadd.f32 %v4088, %v4089
        %v4091 = vrot.slane %v4090, 2
        %v4092 = vadd.f32 %v4090, %v4091
        %v4093 = vrot.slane %v4092, 1
        %v4094 = vadd.f32 %v4092, %v4093
        %v4095 = vsel %vm1451, %v3859, 0.0
        %v4096 = vsel %vm1451, %v3860, 0.0
        %v4097 = vadd.f32 %v4095, %v4096
        %v4098 = vsel %vm1451, %v3861, 0.0
        %v4099 = vadd.f32 %v4097, %v4098
        %v4100 = vsel %vm1451, %v3862, 0.0
        %v4101 = vadd.f32 %v4099, %v4100
        %v4102 = vrot.slane %v4101, 4
        %v4103 = vadd.f32 %v4101, %v4102
        %v4104 = vrot.slane %v4103, 2
        %v4105 = vadd.f32 %v4103, %v4104
        %v4106 = vrot.slane %v4105, 1
        %v4107 = vadd.f32 %v4105, %v4106
        %v4108 = vsel %vm1451, %v3863, 0.0
        %v4109 = vsel %vm1451, %v3864, 0.0
        %v4110 = vadd.f32 %v4108, %v4109
        %v4111 = vsel %vm1451, %v3865, 0.0
        %v4112 = vadd.f32 %v4110, %v4111
        %v4113 = vsel %vm1451, %v3866, 0.0
        %v4114 = vadd.f32 %v4112, %v4113
        %v4115 = vrot.slane %v4114, 4
        %v4116 = vadd.f32 %v4114, %v4115
        %v4117 = vrot.slane %v4116, 2
        %v4118 = vadd.f32 %v4116, %v4117
        %v4119 = vrot.slane %v4118, 1
        %v4120 = vadd.f32 %v4118, %v4119
        %v4121 = vsel %vm1451, %v3867, 0.0
        %v4122 = vsel %vm1451, %v3868, 0.0
        %v4123 = vadd.f32 %v4121, %v4122
        %v4124 = vsel %vm1451, %v3869, 0.0
        %v4125 = vadd.f32 %v4123, %v4124
        %v4126 = vsel %vm1451, %v3870, 0.0
        %v4127 = vadd.f32 %v4125, %v4126
        %v4128 = vrot.slane %v4127, 4
        %v4129 = vadd.f32 %v4127, %v4128
        %v4130 = vrot.slane %v4129, 2
        %v4131 = vadd.f32 %v4129, %v4130
        %v4132 = vrot.slane %v4131, 1
        %v4133 = vadd.f32 %v4131, %v4132
        %v4134 = vsel %vm1451, %v3871, 0.0
        %v4135 = vsel %vm1451, %v3872, 0.0
        %v4136 = vadd.f32 %v4134, %v4135
        %v4137 = vsel %vm1451, %v3873, 0.0
        %v4138 = vadd.f32 %v4136, %v4137
        %v4139 = vsel %vm1451, %v3874, 0.0
        %v4140 = vadd.f32 %v4138, %v4139
        %v4141 = vrot.slane %v4140, 4
        %v4142 = vadd.f32 %v4140, %v4141
        %v4143 = vrot.slane %v4142, 2
        %v4144 = vadd.f32 %v4142, %v4143
        %v4145 = vrot.slane %v4144, 1
        %v4146 = vadd.f32 %v4144, %v4145
        %v4147 = vsel %vm1451, %v3875, 0.0
        %v4148 = vsel %vm1451, %v3876, 0.0
        %v4149 = vadd.f32 %v4147, %v4148
        %v4150 = vsel %vm1451, %v3877, 0.0
        %v4151 = vadd.f32 %v4149, %v4150
        %v4152 = vsel %vm1451, %v3878, 0.0
        %v4153 = vadd.f32 %v4151, %v4152
        %v4154 = vrot.slane %v4153, 4
        %v4155 = vadd.f32 %v4153, %v4154
        %v4156 = vrot.slane %v4155, 2
        %v4157 = vadd.f32 %v4155, %v4156
        %v4158 = vrot.slane %v4157, 1
        %v4159 = vadd.f32 %v4157, %v4158
        %v4160 = vsel %vm1451, %v3879, 0.0
        %v4161 = vsel %vm1451, %v3880, 0.0
        %v4162 = vadd.f32 %v4160, %v4161
        %v4163 = vsel %vm1451, %v3881, 0.0
        %v4164 = vadd.f32 %v4162, %v4163
        %v4165 = vsel %vm1451, %v3882, 0.0
        %v4166 = vadd.f32 %v4164, %v4165
        %v4167 = vrot.slane %v4166, 4
        %v4168 = vadd.f32 %v4166, %v4167
        %v4169 = vrot.slane %v4168, 2
        %v4170 = vadd.f32 %v4168, %v4169
        %v4171 = vrot.slane %v4170, 1
        %v4172 = vadd.f32 %v4170, %v4171
        %v4173 = vsel %vm1451, %v3883, 0.0
        %v4174 = vsel %vm1451, %v3884, 0.0
        %v4175 = vadd.f32 %v4173, %v4174
        %v4176 = vsel %vm1451, %v3885, 0.0
        %v4177 = vadd.f32 %v4175, %v4176
        %v4178 = vsel %vm1451, %v3886, 0.0
        %v4179 = vadd.f32 %v4177, %v4178
        %v4180 = vrot.slane %v4179, 4
        %v4181 = vadd.f32 %v4179, %v4180
        %v4182 = vrot.slane %v4181, 2
        %v4183 = vadd.f32 %v4181, %v4182
        %v4184 = vrot.slane %v4183, 1
        %v4185 = vadd.f32 %v4183, %v4184
        %v4186 = vsel %vm1451, %v3887, 0.0
        %v4187 = vsel %vm1451, %v3888, 0.0
        %v4188 = vadd.f32 %v4186, %v4187
        %v4189 = vsel %vm1451, %v3889, 0.0
        %v4190 = vadd.f32 %v4188, %v4189
        %v4191 = vsel %vm1451, %v3890, 0.0
        %v4192 = vadd.f32 %v4190, %v4191
        %v4193 = vrot.slane %v4192, 4
        %v4194 = vadd.f32 %v4192, %v4193
        %v4195 = vrot.slane %v4194, 2
        %v4196 = vadd.f32 %v4194, %v4195
        %v4197 = vrot.slane %v4196, 1
        %v4198 = vadd.f32 %v4196, %v4197
        %v4199 = vsel %vm1451, %v3891, 0.0
        %v4200 = vsel %vm1451, %v3892, 0.0
        %v4201 = vadd.f32 %v4199, %v4200
        %v4202 = vsel %vm1451, %v3893, 0.0
        %v4203 = vadd.f32 %v4201, %v4202
        %v4204 = vsel %vm1451, %v3894, 0.0
        %v4205 = vadd.f32 %v4203, %v4204
        %v4206 = vrot.slane %v4205, 4
        %v4207 = vadd.f32 %v4205, %v4206
        %v4208 = vrot.slane %v4207, 2
        %v4209 = vadd.f32 %v4207, %v4208
        %v4210 = vrot.slane %v4209, 1
        %v4211 = vadd.f32 %v4209, %v4210
        %v4212 = vsel %vm1451, %v3895, 0.0
        %v4213 = vsel %vm1451, %v3896, 0.0
        %v4214 = vadd.f32 %v4212, %v4213
        %v4215 = vsel %vm1451, %v3897, 0.0
        %v4216 = vadd.f32 %v4214, %v4215
        %v4217 = vsel %vm1451, %v3898, 0.0
        %v4218 = vadd.f32 %v4216, %v4217
        %v4219 = vrot.slane %v4218, 4
        %v4220 = vadd.f32 %v4218, %v4219
        %v4221 = vrot.slane %v4220, 2
        %v4222 = vadd.f32 %v4220, %v4221
        %v4223 = vrot.slane %v4222, 1
        %v4224 = vadd.f32 %v4222, %v4223
        %v4225 = vsel %vm1451, %v3899, 0.0
        %v4226 = vsel %vm1451, %v3900, 0.0
        %v4227 = vadd.f32 %v4225, %v4226
        %v4228 = vsel %vm1451, %v3901, 0.0
        %v4229 = vadd.f32 %v4227, %v4228
        %v4230 = vsel %vm1451, %v3902, 0.0
        %v4231 = vadd.f32 %v4229, %v4230
        %v4232 = vrot.slane %v4231, 4
        %v4233 = vadd.f32 %v4231, %v4232
        %v4234 = vrot.slane %v4233, 2
        %v4235 = vadd.f32 %v4233, %v4234
        %v4236 = vrot.slane %v4235, 1
        %v4237 = vadd.f32 %v4235, %v4236
        %v4238 = vsel %vm1451, %v3903, 0.0
        %v4239 = vsel %vm1451, %v3904, 0.0
        %v4240 = vadd.f32 %v4238, %v4239
        %v4241 = vsel %vm1451, %v3905, 0.0
        %v4242 = vadd.f32 %v4240, %v4241
        %v4243 = vsel %vm1451, %v3906, 0.0
        %v4244 = vadd.f32 %v4242, %v4243
        %v4245 = vrot.slane %v4244, 4
        %v4246 = vadd.f32 %v4244, %v4245
        %v4247 = vrot.slane %v4246, 2
        %v4248 = vadd.f32 %v4246, %v4247
        %v4249 = vrot.slane %v4248, 1
        %v4250 = vadd.f32 %v4248, %v4249
        %v4251 = vsel %vm1451, %v3907, 0.0
        %v4252 = vsel %vm1451, %v3908, 0.0
        %v4253 = vadd.f32 %v4251, %v4252
        %v4254 = vsel %vm1451, %v3909, 0.0
        %v4255 = vadd.f32 %v4253, %v4254
        %v4256 = vsel %vm1451, %v3910, 0.0
        %v4257 = vadd.f32 %v4255, %v4256
        %v4258 = vrot.slane %v4257, 4
        %v4259 = vadd.f32 %v4257, %v4258
        %v4260 = vrot.slane %v4259, 2
        %v4261 = vadd.f32 %v4259, %v4260
        %v4262 = vrot.slane %v4261, 1
        %v4263 = vadd.f32 %v4261, %v4262
        %v4264 = vsel %vm1451, %v3911, 0.0
        %v4265 = vsel %vm1451, %v3912, 0.0
        %v4266 = vadd.f32 %v4264, %v4265
        %v4267 = vsel %vm1451, %v3913, 0.0
        %v4268 = vadd.f32 %v4266, %v4267
        %v4269 = vsel %vm1451, %v3914, 0.0
        %v4270 = vadd.f32 %v4268, %v4269
        %v4271 = vrot.slane %v4270, 4
        %v4272 = vadd.f32 %v4270, %v4271
        %v4273 = vrot.slane %v4272, 2
        %v4274 = vadd.f32 %v4272, %v4273
        %v4275 = vrot.slane %v4274, 1
        %v4276 = vadd.f32 %v4274, %v4275
        %v4277 = vsel %vm1451, %v3915, 0.0
        %v4278 = vsel %vm1451, %v3916, 0.0
        %v4279 = vadd.f32 %v4277, %v4278
        %v4280 = vsel %vm1451, %v3917, 0.0
        %v4281 = vadd.f32 %v4279, %v4280
        %v4282 = vsel %vm1451, %v3918, 0.0
        %v4283 = vadd.f32 %v4281, %v4282
        %v4284 = vrot.slane %v4283, 4
        %v4285 = vadd.f32 %v4283, %v4284
        %v4286 = vrot.slane %v4285, 2
        %v4287 = vadd.f32 %v4285, %v4286
        %v4288 = vrot.slane %v4287, 1
        %v4289 = vadd.f32 %v4287, %v4288
        %v4290 = vsel %vm1451, %v3919, 0.0
        %v4291 = vsel %vm1451, %v3920, 0.0
        %v4292 = vadd.f32 %v4290, %v4291
        %v4293 = vsel %vm1451, %v3921, 0.0
        %v4294 = vadd.f32 %v4292, %v4293
        %v4295 = vsel %vm1451, %v3922, 0.0
        %v4296 = vadd.f32 %v4294, %v4295
        %v4297 = vrot.slane %v4296, 4
        %v4298 = vadd.f32 %v4296, %v4297
        %v4299 = vrot.slane %v4298, 2
        %v4300 = vadd.f32 %v4298, %v4299
        %v4301 = vrot.slane %v4300, 1
        %v4302 = vadd.f32 %v4300, %v4301
        %v4303 = vsel %vm1451, %v3923, 0.0
        %v4304 = vsel %vm1451, %v3924, 0.0
        %v4305 = vadd.f32 %v4303, %v4304
        %v4306 = vsel %vm1451, %v3925, 0.0
        %v4307 = vadd.f32 %v4305, %v4306
        %v4308 = vsel %vm1451, %v3926, 0.0
        %v4309 = vadd.f32 %v4307, %v4308
        %v4310 = vrot.slane %v4309, 4
        %v4311 = vadd.f32 %v4309, %v4310
        %v4312 = vrot.slane %v4311, 2
        %v4313 = vadd.f32 %v4311, %v4312
        %v4314 = vrot.slane %v4313, 1
        %v4315 = vadd.f32 %v4313, %v4314
        %v4316 = vsel %vm1451, %v3927, 0.0
        %v4317 = vsel %vm1451, %v3928, 0.0
        %v4318 = vadd.f32 %v4316, %v4317
        %v4319 = vsel %vm1451, %v3929, 0.0
        %v4320 = vadd.f32 %v4318, %v4319
        %v4321 = vsel %vm1451, %v3930, 0.0
        %v4322 = vadd.f32 %v4320, %v4321
        %v4323 = vrot.slane %v4322, 4
        %v4324 = vadd.f32 %v4322, %v4323
        %v4325 = vrot.slane %v4324, 2
        %v4326 = vadd.f32 %v4324, %v4325
        %v4327 = vrot.slane %v4326, 1
        %v4328 = vadd.f32 %v4326, %v4327
        %v4329 = vsel %vm1451, %v3931, 0.0
        %v4330 = vsel %vm1451, %v3932, 0.0
        %v4331 = vadd.f32 %v4329, %v4330
        %v4332 = vsel %vm1451, %v3933, 0.0
        %v4333 = vadd.f32 %v4331, %v4332
        %v4334 = vsel %vm1451, %v3934, 0.0
        %v4335 = vadd.f32 %v4333, %v4334
        %v4336 = vrot.slane %v4335, 4
        %v4337 = vadd.f32 %v4335, %v4336
        %v4338 = vrot.slane %v4337, 2
        %v4339 = vadd.f32 %v4337, %v4338
        %v4340 = vrot.slane %v4339, 1
        %v4341 = vadd.f32 %v4339, %v4340
        %v4342 = vsel %vm1451, %v3935, 0.0
        %v4343 = vsel %vm1451, %v3936, 0.0
        %v4344 = vadd.f32 %v4342, %v4343
        %v4345 = vsel %vm1451, %v3937, 0.0
        %v4346 = vadd.f32 %v4344, %v4345
        %v4347 = vsel %vm1451, %v3938, 0.0
        %v4348 = vadd.f32 %v4346, %v4347
        %v4349 = vrot.slane %v4348, 4
        %v4350 = vadd.f32 %v4348, %v4349
        %v4351 = vrot.slane %v4350, 2
        %v4352 = vadd.f32 %v4350, %v4351
        %v4353 = vrot.slane %v4352, 1
        %v4354 = vadd.f32 %v4352, %v4353
        %v4355 = vmul.f32 %v3427, %v3194
        %v4356 = vmul.f32 %v3428, %v3199
        %v4357 = vmul.f32 %v3429, %v3204
        %v4358 = vmul.f32 %v3430, %v3209
        %v4359 = vmul.f32 %v3431, %v3194
        %v4360 = vmul.f32 %v3432, %v3199
        %v4361 = vmul.f32 %v3433, %v3204
        %v4362 = vmul.f32 %v3434, %v3209
        %v4363 = vmul.f32 %v3435, %v3194
        %v4364 = vmul.f32 %v3436, %v3199
        %v4365 = vmul.f32 %v3437, %v3204
        %v4366 = vmul.f32 %v3438, %v3209
        %v4367 = vmul.f32 %v3439, %v3194
        %v4368 = vmul.f32 %v3440, %v3199
        %v4369 = vmul.f32 %v3441, %v3204
        %v4370 = vmul.f32 %v3442, %v3209
        %v4371 = vmul.f32 %v3443, %v3194
        %v4372 = vmul.f32 %v3444, %v3199
        %v4373 = vmul.f32 %v3445, %v3204
        %v4374 = vmul.f32 %v3446, %v3209
        %v4375 = vmul.f32 %v3447, %v3194
        %v4376 = vmul.f32 %v3448, %v3199
        %v4377 = vmul.f32 %v3449, %v3204
        %v4378 = vmul.f32 %v3450, %v3209
        %v4379 = vmul.f32 %v3451, %v3194
        %v4380 = vmul.f32 %v3452, %v3199
        %v4381 = vmul.f32 %v3453, %v3204
        %v4382 = vmul.f32 %v3454, %v3209
        %v4383 = vmul.f32 %v3455, %v3194
        %v4384 = vmul.f32 %v3456, %v3199
        %v4385 = vmul.f32 %v3457, %v3204
        %v4386 = vmul.f32 %v3458, %v3209
        %v4387 = vmul.f32 %v3459, %v3194
        %v4388 = vmul.f32 %v3460, %v3199
        %v4389 = vmul.f32 %v3461, %v3204
        %v4390 = vmul.f32 %v3462, %v3209
        %v4391 = vmul.f32 %v3463, %v3194
        %v4392 = vmul.f32 %v3464, %v3199
        %v4393 = vmul.f32 %v3465, %v3204
        %v4394 = vmul.f32 %v3466, %v3209
        %v4395 = vmul.f32 %v3467, %v3194
        %v4396 = vmul.f32 %v3468, %v3199
        %v4397 = vmul.f32 %v3469, %v3204
        %v4398 = vmul.f32 %v3470, %v3209
        %v4399 = vmul.f32 %v3471, %v3194
        %v4400 = vmul.f32 %v3472, %v3199
        %v4401 = vmul.f32 %v3473, %v3204
        %v4402 = vmul.f32 %v3474, %v3209
        %v4403 = vmul.f32 %v3475, %v3194
        %v4404 = vmul.f32 %v3476, %v3199
        %v4405 = vmul.f32 %v3477, %v3204
        %v4406 = vmul.f32 %v3478, %v3209
        %v4407 = vmul.f32 %v3479, %v3194
        %v4408 = vmul.f32 %v3480, %v3199
        %v4409 = vmul.f32 %v3481, %v3204
        %v4410 = vmul.f32 %v3482, %v3209
        %v4411 = vmul.f32 %v3483, %v3194
        %v4412 = vmul.f32 %v3484, %v3199
        %v4413 = vmul.f32 %v3485, %v3204
        %v4414 = vmul.f32 %v3486, %v3209
        %v4415 = vmul.f32 %v3487, %v3194
        %v4416 = vmul.f32 %v3488, %v3199
        %v4417 = vmul.f32 %v3489, %v3204
        %v4418 = vmul.f32 %v3490, %v3209
        %v4419 = vmul.f32 %v3491, %v3194
        %v4420 = vmul.f32 %v3492, %v3199
        %v4421 = vmul.f32 %v3493, %v3204
        %v4422 = vmul.f32 %v3494, %v3209
        %v4423 = vmul.f32 %v3495, %v3194
        %v4424 = vmul.f32 %v3496, %v3199
        %v4425 = vmul.f32 %v3497, %v3204
        %v4426 = vmul.f32 %v3498, %v3209
        %v4427 = vmul.f32 %v3499, %v3194
        %v4428 = vmul.f32 %v3500, %v3199
        %v4429 = vmul.f32 %v3501, %v3204
        %v4430 = vmul.f32 %v3502, %v3209
        %v4431 = vmul.f32 %v3503, %v3194
        %v4432 = vmul.f32 %v3504, %v3199
        %v4433 = vmul.f32 %v3505, %v3204
        %v4434 = vmul.f32 %v3506, %v3209
        %v4435 = vmul.f32 %v3507, %v3194
        %v4436 = vmul.f32 %v3508, %v3199
        %v4437 = vmul.f32 %v3509, %v3204
        %v4438 = vmul.f32 %v3510, %v3209
        %v4439 = vmul.f32 %v3511, %v3194
        %v4440 = vmul.f32 %v3512, %v3199
        %v4441 = vmul.f32 %v3513, %v3204
        %v4442 = vmul.f32 %v3514, %v3209
        %v4443 = vmul.f32 %v3515, %v3194
        %v4444 = vmul.f32 %v3516, %v3199
        %v4445 = vmul.f32 %v3517, %v3204
        %v4446 = vmul.f32 %v3518, %v3209
        %v4447 = vmul.f32 %v3519, %v3194
        %v4448 = vmul.f32 %v3520, %v3199
        %v4449 = vmul.f32 %v3521, %v3204
        %v4450 = vmul.f32 %v3522, %v3209
        %v4451 = vmul.f32 %v3523, %v3194
        %v4452 = vmul.f32 %v3524, %v3199
        %v4453 = vmul.f32 %v3525, %v3204
        %v4454 = vmul.f32 %v3526, %v3209
        %v4455 = vmul.f32 %v3527, %v3194
        %v4456 = vmul.f32 %v3528, %v3199
        %v4457 = vmul.f32 %v3529, %v3204
        %v4458 = vmul.f32 %v3530, %v3209
        %v4459 = vmul.f32 %v3531, %v3194
        %v4460 = vmul.f32 %v3532, %v3199
        %v4461 = vmul.f32 %v3533, %v3204
        %v4462 = vmul.f32 %v3534, %v3209
        %v4463 = vmul.f32 %v3535, %v3194
        %v4464 = vmul.f32 %v3536, %v3199
        %v4465 = vmul.f32 %v3537, %v3204
        %v4466 = vmul.f32 %v3538, %v3209
        %v4467 = vmul.f32 %v3539, %v3194
        %v4468 = vmul.f32 %v3540, %v3199
        %v4469 = vmul.f32 %v3541, %v3204
        %v4470 = vmul.f32 %v3542, %v3209
        %v4471 = vmul.f32 %v3543, %v3194
        %v4472 = vmul.f32 %v3544, %v3199
        %v4473 = vmul.f32 %v3545, %v3204
        %v4474 = vmul.f32 %v3546, %v3209
        %v4475 = vmul.f32 %v3547, %v3194
        %v4476 = vmul.f32 %v3548, %v3199
        %v4477 = vmul.f32 %v3549, %v3204
        %v4478 = vmul.f32 %v3550, %v3209
        %v4479 = vmul.f32 %v3551, %v3194
        %v4480 = vmul.f32 %v3552, %v3199
        %v4481 = vmul.f32 %v3553, %v3204
        %v4482 = vmul.f32 %v3554, %v3209
        %v4483 = vmul.f32 %v3298, %v3279
        %v4484 = vmul.f32 %v3299, %v3284
        %v4485 = vmul.f32 %v3300, %v3289
        %v4486 = vmul.f32 %v3301, %v3294
        %v4487 = vmul.f32 %v3302, %v3279
        %v4488 = vmul.f32 %v3303, %v3284
        %v4489 = vmul.f32 %v3304, %v3289
        %v4490 = vmul.f32 %v3305, %v3294
        %v4491 = vmul.f32 %v3306, %v3279
        %v4492 = vmul.f32 %v3307, %v3284
        %v4493 = vmul.f32 %v3308, %v3289
        %v4494 = vmul.f32 %v3309, %v3294
        %v4495 = vmul.f32 %v3310, %v3279
        %v4496 = vmul.f32 %v3311, %v3284
        %v4497 = vmul.f32 %v3312, %v3289
        %v4498 = vmul.f32 %v3313, %v3294
        %v4499 = vmul.f32 %v3314, %v3279
        %v4500 = vmul.f32 %v3315, %v3284
        %v4501 = vmul.f32 %v3316, %v3289
        %v4502 = vmul.f32 %v3317, %v3294
        %v4503 = vmul.f32 %v3318, %v3279
        %v4504 = vmul.f32 %v3319, %v3284
        %v4505 = vmul.f32 %v3320, %v3289
        %v4506 = vmul.f32 %v3321, %v3294
        %v4507 = vmul.f32 %v3322, %v3279
        %v4508 = vmul.f32 %v3323, %v3284
        %v4509 = vmul.f32 %v3324, %v3289
        %v4510 = vmul.f32 %v3325, %v3294
        %v4511 = vmul.f32 %v3326, %v3279
        %v4512 = vmul.f32 %v3327, %v3284
        %v4513 = vmul.f32 %v3328, %v3289
        %v4514 = vmul.f32 %v3329, %v3294
        %v4515 = vmul.f32 %v3330, %v3279
        %v4516 = vmul.f32 %v3331, %v3284
        %v4517 = vmul.f32 %v3332, %v3289
        %v4518 = vmul.f32 %v3333, %v3294
        %v4519 = vmul.f32 %v3334, %v3279
        %v4520 = vmul.f32 %v3335, %v3284
        %v4521 = vmul.f32 %v3336, %v3289
        %v4522 = vmul.f32 %v3337, %v3294
        %v4523 = vmul.f32 %v3338, %v3279
        %v4524 = vmul.f32 %v3339, %v3284
        %v4525 = vmul.f32 %v3340, %v3289
        %v4526 = vmul.f32 %v3341, %v3294
        %v4527 = vmul.f32 %v3342, %v3279
        %v4528 = vmul.f32 %v3343, %v3284
        %v4529 = vmul.f32 %v3344, %v3289
        %v4530 = vmul.f32 %v3345, %v3294
        %v4531 = vmul.f32 %v3346, %v3279
        %v4532 = vmul.f32 %v3347, %v3284
        %v4533 = vmul.f32 %v3348, %v3289
        %v4534 = vmul.f32 %v3349, %v3294
        %v4535 = vmul.f32 %v3350, %v3279
        %v4536 = vmul.f32 %v3351, %v3284
        %v4537 = vmul.f32 %v3352, %v3289
        %v4538 = vmul.f32 %v3353, %v3294
        %v4539 = vmul.f32 %v3354, %v3279
        %v4540 = vmul.f32 %v3355, %v3284
        %v4541 = vmul.f32 %v3356, %v3289
        %v4542 = vmul.f32 %v3357, %v3294
        %v4543 = vmul.f32 %v3358, %v3279
        %v4544 = vmul.f32 %v3359, %v3284
        %v4545 = vmul.f32 %v3360, %v3289
        %v4546 = vmul.f32 %v3361, %v3294
        %v4547 = vmul.f32 %v3362, %v3279
        %v4548 = vmul.f32 %v3363, %v3284
        %v4549 = vmul.f32 %v3364, %v3289
        %v4550 = vmul.f32 %v3365, %v3294
        %v4551 = vmul.f32 %v3366, %v3279
        %v4552 = vmul.f32 %v3367, %v3284
        %v4553 = vmul.f32 %v3368, %v3289
        %v4554 = vmul.f32 %v3369, %v3294
        %v4555 = vmul.f32 %v3370, %v3279
        %v4556 = vmul.f32 %v3371, %v3284
        %v4557 = vmul.f32 %v3372, %v3289
        %v4558 = vmul.f32 %v3373, %v3294
        %v4559 = vmul.f32 %v3374, %v3279
        %v4560 = vmul.f32 %v3375, %v3284
        %v4561 = vmul.f32 %v3376, %v3289
        %v4562 = vmul.f32 %v3377, %v3294
        %v4563 = vmul.f32 %v3378, %v3279
        %v4564 = vmul.f32 %v3379, %v3284
        %v4565 = vmul.f32 %v3380, %v3289
        %v4566 = vmul.f32 %v3381, %v3294
        %v4567 = vmul.f32 %v3382, %v3279
        %v4568 = vmul.f32 %v3383, %v3284
        %v4569 = vmul.f32 %v3384, %v3289
        %v4570 = vmul.f32 %v3385, %v3294
        %v4571 = vmul.f32 %v3386, %v3279
        %v4572 = vmul.f32 %v3387, %v3284
        %v4573 = vmul.f32 %v3388, %v3289
        %v4574 = vmul.f32 %v3389, %v3294
        %v4575 = vmul.f32 %v3390, %v3279
        %v4576 = vmul.f32 %v3391, %v3284
        %v4577 = vmul.f32 %v3392, %v3289
        %v4578 = vmul.f32 %v3393, %v3294
        %v4579 = vmul.f32 %v3394, %v3279
        %v4580 = vmul.f32 %v3395, %v3284
        %v4581 = vmul.f32 %v3396, %v3289
        %v4582 = vmul.f32 %v3397, %v3294
        %v4583 = vmul.f32 %v3398, %v3279
        %v4584 = vmul.f32 %v3399, %v3284
        %v4585 = vmul.f32 %v3400, %v3289
        %v4586 = vmul.f32 %v3401, %v3294
        %v4587 = vmul.f32 %v3402, %v3279
        %v4588 = vmul.f32 %v3403, %v3284
        %v4589 = vmul.f32 %v3404, %v3289
        %v4590 = vmul.f32 %v3405, %v3294
        %v4591 = vmul.f32 %v3406, %v3279
        %v4592 = vmul.f32 %v3407, %v3284
        %v4593 = vmul.f32 %v3408, %v3289
        %v4594 = vmul.f32 %v3409, %v3294
        %v4595 = vmul.f32 %v3410, %v3279
        %v4596 = vmul.f32 %v3411, %v3284
        %v4597 = vmul.f32 %v3412, %v3289
        %v4598 = vmul.f32 %v3413, %v3294
        %v4599 = vmul.f32 %v3414, %v3279
        %v4600 = vmul.f32 %v3415, %v3284
        %v4601 = vmul.f32 %v3416, %v3289
        %v4602 = vmul.f32 %v3417, %v3294
        %v4603 = vmul.f32 %v3418, %v3279
        %v4604 = vmul.f32 %v3419, %v3284
        %v4605 = vmul.f32 %v3420, %v3289
        %v4606 = vmul.f32 %v3421, %v3294
        %v4607 = vmul.f32 %v3422, %v3279
        %v4608 = vmul.f32 %v3423, %v3284
        %v4609 = vmul.f32 %v3424, %v3289
        %v4610 = vmul.f32 %v3425, %v3294
        %v4611 = vadd.f32 %v4355, %v4483
        %v4612 = vadd.f32 %v4356, %v4484
        %v4613 = vadd.f32 %v4357, %v4485
        %v4614 = vadd.f32 %v4358, %v4486
        %v4615 = vadd.f32 %v4359, %v4487
        %v4616 = vadd.f32 %v4360, %v4488
        %v4617 = vadd.f32 %v4361, %v4489
        %v4618 = vadd.f32 %v4362, %v4490
        %v4619 = vadd.f32 %v4363, %v4491
        %v4620 = vadd.f32 %v4364, %v4492
        %v4621 = vadd.f32 %v4365, %v4493
        %v4622 = vadd.f32 %v4366, %v4494
        %v4623 = vadd.f32 %v4367, %v4495
        %v4624 = vadd.f32 %v4368, %v4496
        %v4625 = vadd.f32 %v4369, %v4497
        %v4626 = vadd.f32 %v4370, %v4498
        %v4627 = vadd.f32 %v4371, %v4499
        %v4628 = vadd.f32 %v4372, %v4500
        %v4629 = vadd.f32 %v4373, %v4501
        %v4630 = vadd.f32 %v4374, %v4502
        %v4631 = vadd.f32 %v4375, %v4503
        %v4632 = vadd.f32 %v4376, %v4504
        %v4633 = vadd.f32 %v4377, %v4505
        %v4634 = vadd.f32 %v4378, %v4506
        %v4635 = vadd.f32 %v4379, %v4507
        %v4636 = vadd.f32 %v4380, %v4508
        %v4637 = vadd.f32 %v4381, %v4509
        %v4638 = vadd.f32 %v4382, %v4510
        %v4639 = vadd.f32 %v4383, %v4511
        %v4640 = vadd.f32 %v4384, %v4512
        %v4641 = vadd.f32 %v4385, %v4513
        %v4642 = vadd.f32 %v4386, %v4514
        %v4643 = vadd.f32 %v4387, %v4515
        %v4644 = vadd.f32 %v4388, %v4516
        %v4645 = vadd.f32 %v4389, %v4517
        %v4646 = vadd.f32 %v4390, %v4518
        %v4647 = vadd.f32 %v4391, %v4519
        %v4648 = vadd.f32 %v4392, %v4520
        %v4649 = vadd.f32 %v4393, %v4521
        %v4650 = vadd.f32 %v4394, %v4522
        %v4651 = vadd.f32 %v4395, %v4523
        %v4652 = vadd.f32 %v4396, %v4524
        %v4653 = vadd.f32 %v4397, %v4525
        %v4654 = vadd.f32 %v4398, %v4526
        %v4655 = vadd.f32 %v4399, %v4527
        %v4656 = vadd.f32 %v4400, %v4528
        %v4657 = vadd.f32 %v4401, %v4529
        %v4658 = vadd.f32 %v4402, %v4530
        %v4659 = vadd.f32 %v4403, %v4531
        %v4660 = vadd.f32 %v4404, %v4532
        %v4661 = vadd.f32 %v4405, %v4533
        %v4662 = vadd.f32 %v4406, %v4534
        %v4663 = vadd.f32 %v4407, %v4535
        %v4664 = vadd.f32 %v4408, %v4536
        %v4665 = vadd.f32 %v4409, %v4537
        %v4666 = vadd.f32 %v4410, %v4538
        %v4667 = vadd.f32 %v4411, %v4539
        %v4668 = vadd.f32 %v4412, %v4540
        %v4669 = vadd.f32 %v4413, %v4541
        %v4670 = vadd.f32 %v4414, %v4542
        %v4671 = vadd.f32 %v4415, %v4543
        %v4672 = vadd.f32 %v4416, %v4544
        %v4673 = vadd.f32 %v4417, %v4545
        %v4674 = vadd.f32 %v4418, %v4546
        %v4675 = vadd.f32 %v4419, %v4547
        %v4676 = vadd.f32 %v4420, %v4548
        %v4677 = vadd.f32 %v4421, %v4549
        %v4678 = vadd.f32 %v4422, %v4550
        %v4679 = vadd.f32 %v4423, %v4551
        %v4680 = vadd.f32 %v4424, %v4552
        %v4681 = vadd.f32 %v4425, %v4553
        %v4682 = vadd.f32 %v4426, %v4554
        %v4683 = vadd.f32 %v4427, %v4555
        %v4684 = vadd.f32 %v4428, %v4556
        %v4685 = vadd.f32 %v4429, %v4557
        %v4686 = vadd.f32 %v4430, %v4558
        %v4687 = vadd.f32 %v4431, %v4559
        %v4688 = vadd.f32 %v4432, %v4560
        %v4689 = vadd.f32 %v4433, %v4561
        %v4690 = vadd.f32 %v4434, %v4562
        %v4691 = vadd.f32 %v4435, %v4563
        %v4692 = vadd.f32 %v4436, %v4564
        %v4693 = vadd.f32 %v4437, %v4565
        %v4694 = vadd.f32 %v4438, %v4566
        %v4695 = vadd.f32 %v4439, %v4567
        %v4696 = vadd.f32 %v4440, %v4568
        %v4697 = vadd.f32 %v4441, %v4569
        %v4698 = vadd.f32 %v4442, %v4570
        %v4699 = vadd.f32 %v4443, %v4571
        %v4700 = vadd.f32 %v4444, %v4572
        %v4701 = vadd.f32 %v4445, %v4573
        %v4702 = vadd.f32 %v4446, %v4574
        %v4703 = vadd.f32 %v4447, %v4575
        %v4704 = vadd.f32 %v4448, %v4576
        %v4705 = vadd.f32 %v4449, %v4577
        %v4706 = vadd.f32 %v4450, %v4578
        %v4707 = vadd.f32 %v4451, %v4579
        %v4708 = vadd.f32 %v4452, %v4580
        %v4709 = vadd.f32 %v4453, %v4581
        %v4710 = vadd.f32 %v4454, %v4582
        %v4711 = vadd.f32 %v4455, %v4583
        %v4712 = vadd.f32 %v4456, %v4584
        %v4713 = vadd.f32 %v4457, %v4585
        %v4714 = vadd.f32 %v4458, %v4586
        %v4715 = vadd.f32 %v4459, %v4587
        %v4716 = vadd.f32 %v4460, %v4588
        %v4717 = vadd.f32 %v4461, %v4589
        %v4718 = vadd.f32 %v4462, %v4590
        %v4719 = vadd.f32 %v4463, %v4591
        %v4720 = vadd.f32 %v4464, %v4592
        %v4721 = vadd.f32 %v4465, %v4593
        %v4722 = vadd.f32 %v4466, %v4594
        %v4723 = vadd.f32 %v4467, %v4595
        %v4724 = vadd.f32 %v4468, %v4596
        %v4725 = vadd.f32 %v4469, %v4597
        %v4726 = vadd.f32 %v4470, %v4598
        %v4727 = vadd.f32 %v4471, %v4599
        %v4728 = vadd.f32 %v4472, %v4600
        %v4729 = vadd.f32 %v4473, %v4601
        %v4730 = vadd.f32 %v4474, %v4602
        %v4731 = vadd.f32 %v4475, %v4603
        %v4732 = vadd.f32 %v4476, %v4604
        %v4733 = vadd.f32 %v4477, %v4605
        %v4734 = vadd.f32 %v4478, %v4606
        %v4735 = vadd.f32 %v4479, %v4607
        %v4736 = vadd.f32 %v4480, %v4608
        %v4737 = vadd.f32 %v4481, %v4609
        %v4738 = vadd.f32 %v4482, %v4610
        %v4739 = vsel %vm1451, %v4611, 0.0
        %v4740 = vsel %vm1451, %v4612, 0.0
        %v4741 = vadd.f32 %v4739, %v4740
        %v4742 = vsel %vm1451, %v4613, 0.0
        %v4743 = vadd.f32 %v4741, %v4742
        %v4744 = vsel %vm1451, %v4614, 0.0
        %v4745 = vadd.f32 %v4743, %v4744
        %v4746 = vrot.slane %v4745, 4
        %v4747 = vadd.f32 %v4745, %v4746
        %v4748 = vrot.slane %v4747, 2
        %v4749 = vadd.f32 %v4747, %v4748
        %v4750 = vrot.slane %v4749, 1
        %v4751 = vadd.f32 %v4749, %v4750
        %v4752 = vsel %vm1451, %v4615, 0.0
        %v4753 = vsel %vm1451, %v4616, 0.0
        %v4754 = vadd.f32 %v4752, %v4753
        %v4755 = vsel %vm1451, %v4617, 0.0
        %v4756 = vadd.f32 %v4754, %v4755
        %v4757 = vsel %vm1451, %v4618, 0.0
        %v4758 = vadd.f32 %v4756, %v4757
        %v4759 = vrot.slane %v4758, 4
        %v4760 = vadd.f32 %v4758, %v4759
        %v4761 = vrot.slane %v4760, 2
        %v4762 = vadd.f32 %v4760, %v4761
        %v4763 = vrot.slane %v4762, 1
        %v4764 = vadd.f32 %v4762, %v4763
        %v4765 = vsel %vm1451, %v4619, 0.0
        %v4766 = vsel %vm1451, %v4620, 0.0
        %v4767 = vadd.f32 %v4765, %v4766
        %v4768 = vsel %vm1451, %v4621, 0.0
        %v4769 = vadd.f32 %v4767, %v4768
        %v4770 = vsel %vm1451, %v4622, 0.0
        %v4771 = vadd.f32 %v4769, %v4770
        %v4772 = vrot.slane %v4771, 4
        %v4773 = vadd.f32 %v4771, %v4772
        %v4774 = vrot.slane %v4773, 2
        %v4775 = vadd.f32 %v4773, %v4774
        %v4776 = vrot.slane %v4775, 1
        %v4777 = vadd.f32 %v4775, %v4776
        %v4778 = vsel %vm1451, %v4623, 0.0
        %v4779 = vsel %vm1451, %v4624, 0.0
        %v4780 = vadd.f32 %v4778, %v4779
        %v4781 = vsel %vm1451, %v4625, 0.0
        %v4782 = vadd.f32 %v4780, %v4781
        %v4783 = vsel %vm1451, %v4626, 0.0
        %v4784 = vadd.f32 %v4782, %v4783
        %v4785 = vrot.slane %v4784, 4
        %v4786 = vadd.f32 %v4784, %v4785
        %v4787 = vrot.slane %v4786, 2
        %v4788 = vadd.f32 %v4786, %v4787
        %v4789 = vrot.slane %v4788, 1
        %v4790 = vadd.f32 %v4788, %v4789
        %v4791 = vsel %vm1451, %v4627, 0.0
        %v4792 = vsel %vm1451, %v4628, 0.0
        %v4793 = vadd.f32 %v4791, %v4792
        %v4794 = vsel %vm1451, %v4629, 0.0
        %v4795 = vadd.f32 %v4793, %v4794
        %v4796 = vsel %vm1451, %v4630, 0.0
        %v4797 = vadd.f32 %v4795, %v4796
        %v4798 = vrot.slane %v4797, 4
        %v4799 = vadd.f32 %v4797, %v4798
        %v4800 = vrot.slane %v4799, 2
        %v4801 = vadd.f32 %v4799, %v4800
        %v4802 = vrot.slane %v4801, 1
        %v4803 = vadd.f32 %v4801, %v4802
        %v4804 = vsel %vm1451, %v4631, 0.0
        %v4805 = vsel %vm1451, %v4632, 0.0
        %v4806 = vadd.f32 %v4804, %v4805
        %v4807 = vsel %vm1451, %v4633, 0.0
        %v4808 = vadd.f32 %v4806, %v4807
        %v4809 = vsel %vm1451, %v4634, 0.0
        %v4810 = vadd.f32 %v4808, %v4809
        %v4811 = vrot.slane %v4810, 4
        %v4812 = vadd.f32 %v4810, %v4811
        %v4813 = vrot.slane %v4812, 2
        %v4814 = vadd.f32 %v4812, %v4813
        %v4815 = vrot.slane %v4814, 1
        %v4816 = vadd.f32 %v4814, %v4815
        %v4817 = vsel %vm1451, %v4635, 0.0
        %v4818 = vsel %vm1451, %v4636, 0.0
        %v4819 = vadd.f32 %v4817, %v4818
        %v4820 = vsel %vm1451, %v4637, 0.0
        %v4821 = vadd.f32 %v4819, %v4820
        %v4822 = vsel %vm1451, %v4638, 0.0
        %v4823 = vadd.f32 %v4821, %v4822
        %v4824 = vrot.slane %v4823, 4
        %v4825 = vadd.f32 %v4823, %v4824
        %v4826 = vrot.slane %v4825, 2
        %v4827 = vadd.f32 %v4825, %v4826
        %v4828 = vrot.slane %v4827, 1
        %v4829 = vadd.f32 %v4827, %v4828
        %v4830 = vsel %vm1451, %v4639, 0.0
        %v4831 = vsel %vm1451, %v4640, 0.0
        %v4832 = vadd.f32 %v4830, %v4831
        %v4833 = vsel %vm1451, %v4641, 0.0
        %v4834 = vadd.f32 %v4832, %v4833
        %v4835 = vsel %vm1451, %v4642, 0.0
        %v4836 = vadd.f32 %v4834, %v4835
        %v4837 = vrot.slane %v4836, 4
        %v4838 = vadd.f32 %v4836, %v4837
        %v4839 = vrot.slane %v4838, 2
        %v4840 = vadd.f32 %v4838, %v4839
        %v4841 = vrot.slane %v4840, 1
        %v4842 = vadd.f32 %v4840, %v4841
        %v4843 = vsel %vm1451, %v4643, 0.0
        %v4844 = vsel %vm1451, %v4644, 0.0
        %v4845 = vadd.f32 %v4843, %v4844
        %v4846 = vsel %vm1451, %v4645, 0.0
        %v4847 = vadd.f32 %v4845, %v4846
        %v4848 = vsel %vm1451, %v4646, 0.0
        %v4849 = vadd.f32 %v4847, %v4848
        %v4850 = vrot.slane %v4849, 4
        %v4851 = vadd.f32 %v4849, %v4850
        %v4852 = vrot.slane %v4851, 2
        %v4853 = vadd.f32 %v4851, %v4852
        %v4854 = vrot.slane %v4853, 1
        %v4855 = vadd.f32 %v4853, %v4854
        %v4856 = vsel %vm1451, %v4647, 0.0
        %v4857 = vsel %vm1451, %v4648, 0.0
        %v4858 = vadd.f32 %v4856, %v4857
        %v4859 = vsel %vm1451, %v4649, 0.0
        %v4860 = vadd.f32 %v4858, %v4859
        %v4861 = vsel %vm1451, %v4650, 0.0
        %v4862 = vadd.f32 %v4860, %v4861
        %v4863 = vrot.slane %v4862, 4
        %v4864 = vadd.f32 %v4862, %v4863
        %v4865 = vrot.slane %v4864, 2
        %v4866 = vadd.f32 %v4864, %v4865
        %v4867 = vrot.slane %v4866, 1
        %v4868 = vadd.f32 %v4866, %v4867
        %v4869 = vsel %vm1451, %v4651, 0.0
        %v4870 = vsel %vm1451, %v4652, 0.0
        %v4871 = vadd.f32 %v4869, %v4870
        %v4872 = vsel %vm1451, %v4653, 0.0
        %v4873 = vadd.f32 %v4871, %v4872
        %v4874 = vsel %vm1451, %v4654, 0.0
        %v4875 = vadd.f32 %v4873, %v4874
        %v4876 = vrot.slane %v4875, 4
        %v4877 = vadd.f32 %v4875, %v4876
        %v4878 = vrot.slane %v4877, 2
        %v4879 = vadd.f32 %v4877, %v4878
        %v4880 = vrot.slane %v4879, 1
        %v4881 = vadd.f32 %v4879, %v4880
        %v4882 = vsel %vm1451, %v4655, 0.0
        %v4883 = vsel %vm1451, %v4656, 0.0
        %v4884 = vadd.f32 %v4882, %v4883
        %v4885 = vsel %vm1451, %v4657, 0.0
        %v4886 = vadd.f32 %v4884, %v4885
        %v4887 = vsel %vm1451, %v4658, 0.0
        %v4888 = vadd.f32 %v4886, %v4887
        %v4889 = vrot.slane %v4888, 4
        %v4890 = vadd.f32 %v4888, %v4889
        %v4891 = vrot.slane %v4890, 2
        %v4892 = vadd.f32 %v4890, %v4891
        %v4893 = vrot.slane %v4892, 1
        %v4894 = vadd.f32 %v4892, %v4893
        %v4895 = vsel %vm1451, %v4659, 0.0
        %v4896 = vsel %vm1451, %v4660, 0.0
        %v4897 = vadd.f32 %v4895, %v4896
        %v4898 = vsel %vm1451, %v4661, 0.0
        %v4899 = vadd.f32 %v4897, %v4898
        %v4900 = vsel %vm1451, %v4662, 0.0
        %v4901 = vadd.f32 %v4899, %v4900
        %v4902 = vrot.slane %v4901, 4
        %v4903 = vadd.f32 %v4901, %v4902
        %v4904 = vrot.slane %v4903, 2
        %v4905 = vadd.f32 %v4903, %v4904
        %v4906 = vrot.slane %v4905, 1
        %v4907 = vadd.f32 %v4905, %v4906
        %v4908 = vsel %vm1451, %v4663, 0.0
        %v4909 = vsel %vm1451, %v4664, 0.0
        %v4910 = vadd.f32 %v4908, %v4909
        %v4911 = vsel %vm1451, %v4665, 0.0
        %v4912 = vadd.f32 %v4910, %v4911
        %v4913 = vsel %vm1451, %v4666, 0.0
        %v4914 = vadd.f32 %v4912, %v4913
        %v4915 = vrot.slane %v4914, 4
        %v4916 = vadd.f32 %v4914, %v4915
        %v4917 = vrot.slane %v4916, 2
        %v4918 = vadd.f32 %v4916, %v4917
        %v4919 = vrot.slane %v4918, 1
        %v4920 = vadd.f32 %v4918, %v4919
        %v4921 = vsel %vm1451, %v4667, 0.0
        %v4922 = vsel %vm1451, %v4668, 0.0
        %v4923 = vadd.f32 %v4921, %v4922
        %v4924 = vsel %vm1451, %v4669, 0.0
        %v4925 = vadd.f32 %v4923, %v4924
        %v4926 = vsel %vm1451, %v4670, 0.0
        %v4927 = vadd.f32 %v4925, %v4926
        %v4928 = vrot.slane %v4927, 4
        %v4929 = vadd.f32 %v4927, %v4928
        %v4930 = vrot.slane %v4929, 2
        %v4931 = vadd.f32 %v4929, %v4930
        %v4932 = vrot.slane %v4931, 1
        %v4933 = vadd.f32 %v4931, %v4932
        %v4934 = vsel %vm1451, %v4671, 0.0
        %v4935 = vsel %vm1451, %v4672, 0.0
        %v4936 = vadd.f32 %v4934, %v4935
        %v4937 = vsel %vm1451, %v4673, 0.0
        %v4938 = vadd.f32 %v4936, %v4937
        %v4939 = vsel %vm1451, %v4674, 0.0
        %v4940 = vadd.f32 %v4938, %v4939
        %v4941 = vrot.slane %v4940, 4
        %v4942 = vadd.f32 %v4940, %v4941
        %v4943 = vrot.slane %v4942, 2
        %v4944 = vadd.f32 %v4942, %v4943
        %v4945 = vrot.slane %v4944, 1
        %v4946 = vadd.f32 %v4944, %v4945
        %v4947 = vsel %vm1451, %v4675, 0.0
        %v4948 = vsel %vm1451, %v4676, 0.0
        %v4949 = vadd.f32 %v4947, %v4948
        %v4950 = vsel %vm1451, %v4677, 0.0
        %v4951 = vadd.f32 %v4949, %v4950
        %v4952 = vsel %vm1451, %v4678, 0.0
        %v4953 = vadd.f32 %v4951, %v4952
        %v4954 = vrot.slane %v4953, 4
        %v4955 = vadd.f32 %v4953, %v4954
        %v4956 = vrot.slane %v4955, 2
        %v4957 = vadd.f32 %v4955, %v4956
        %v4958 = vrot.slane %v4957, 1
        %v4959 = vadd.f32 %v4957, %v4958
        %v4960 = vsel %vm1451, %v4679, 0.0
        %v4961 = vsel %vm1451, %v4680, 0.0
        %v4962 = vadd.f32 %v4960, %v4961
        %v4963 = vsel %vm1451, %v4681, 0.0
        %v4964 = vadd.f32 %v4962, %v4963
        %v4965 = vsel %vm1451, %v4682, 0.0
        %v4966 = vadd.f32 %v4964, %v4965
        %v4967 = vrot.slane %v4966, 4
        %v4968 = vadd.f32 %v4966, %v4967
        %v4969 = vrot.slane %v4968, 2
        %v4970 = vadd.f32 %v4968, %v4969
        %v4971 = vrot.slane %v4970, 1
        %v4972 = vadd.f32 %v4970, %v4971
        %v4973 = vsel %vm1451, %v4683, 0.0
        %v4974 = vsel %vm1451, %v4684, 0.0
        %v4975 = vadd.f32 %v4973, %v4974
        %v4976 = vsel %vm1451, %v4685, 0.0
        %v4977 = vadd.f32 %v4975, %v4976
        %v4978 = vsel %vm1451, %v4686, 0.0
        %v4979 = vadd.f32 %v4977, %v4978
        %v4980 = vrot.slane %v4979, 4
        %v4981 = vadd.f32 %v4979, %v4980
        %v4982 = vrot.slane %v4981, 2
        %v4983 = vadd.f32 %v4981, %v4982
        %v4984 = vrot.slane %v4983, 1
        %v4985 = vadd.f32 %v4983, %v4984
        %v4986 = vsel %vm1451, %v4687, 0.0
        %v4987 = vsel %vm1451, %v4688, 0.0
        %v4988 = vadd.f32 %v4986, %v4987
        %v4989 = vsel %vm1451, %v4689, 0.0
        %v4990 = vadd.f32 %v4988, %v4989
        %v4991 = vsel %vm1451, %v4690, 0.0
        %v4992 = vadd.f32 %v4990, %v4991
        %v4993 = vrot.slane %v4992, 4
        %v4994 = vadd.f32 %v4992, %v4993
        %v4995 = vrot.slane %v4994, 2
        %v4996 = vadd.f32 %v4994, %v4995
        %v4997 = vrot.slane %v4996, 1
        %v4998 = vadd.f32 %v4996, %v4997
        %v4999 = vsel %vm1451, %v4691, 0.0
        %v5000 = vsel %vm1451, %v4692, 0.0
        %v5001 = vadd.f32 %v4999, %v5000
        %v5002 = vsel %vm1451, %v4693, 0.0
        %v5003 = vadd.f32 %v5001, %v5002
        %v5004 = vsel %vm1451, %v4694, 0.0
        %v5005 = vadd.f32 %v5003, %v5004
        %v5006 = vrot.slane %v5005, 4
        %v5007 = vadd.f32 %v5005, %v5006
        %v5008 = vrot.slane %v5007, 2
        %v5009 = vadd.f32 %v5007, %v5008
        %v5010 = vrot.slane %v5009, 1
        %v5011 = vadd.f32 %v5009, %v5010
        %v5012 = vsel %vm1451, %v4695, 0.0
        %v5013 = vsel %vm1451, %v4696, 0.0
        %v5014 = vadd.f32 %v5012, %v5013
        %v5015 = vsel %vm1451, %v4697, 0.0
        %v5016 = vadd.f32 %v5014, %v5015
        %v5017 = vsel %vm1451, %v4698, 0.0
        %v5018 = vadd.f32 %v5016, %v5017
        %v5019 = vrot.slane %v5018, 4
        %v5020 = vadd.f32 %v5018, %v5019
        %v5021 = vrot.slane %v5020, 2
        %v5022 = vadd.f32 %v5020, %v5021
        %v5023 = vrot.slane %v5022, 1
        %v5024 = vadd.f32 %v5022, %v5023
        %v5025 = vsel %vm1451, %v4699, 0.0
        %v5026 = vsel %vm1451, %v4700, 0.0
        %v5027 = vadd.f32 %v5025, %v5026
        %v5028 = vsel %vm1451, %v4701, 0.0
        %v5029 = vadd.f32 %v5027, %v5028
        %v5030 = vsel %vm1451, %v4702, 0.0
        %v5031 = vadd.f32 %v5029, %v5030
        %v5032 = vrot.slane %v5031, 4
        %v5033 = vadd.f32 %v5031, %v5032
        %v5034 = vrot.slane %v5033, 2
        %v5035 = vadd.f32 %v5033, %v5034
        %v5036 = vrot.slane %v5035, 1
        %v5037 = vadd.f32 %v5035, %v5036
        %v5038 = vsel %vm1451, %v4703, 0.0
        %v5039 = vsel %vm1451, %v4704, 0.0
        %v5040 = vadd.f32 %v5038, %v5039
        %v5041 = vsel %vm1451, %v4705, 0.0
        %v5042 = vadd.f32 %v5040, %v5041
        %v5043 = vsel %vm1451, %v4706, 0.0
        %v5044 = vadd.f32 %v5042, %v5043
        %v5045 = vrot.slane %v5044, 4
        %v5046 = vadd.f32 %v5044, %v5045
        %v5047 = vrot.slane %v5046, 2
        %v5048 = vadd.f32 %v5046, %v5047
        %v5049 = vrot.slane %v5048, 1
        %v5050 = vadd.f32 %v5048, %v5049
        %v5051 = vsel %vm1451, %v4707, 0.0
        %v5052 = vsel %vm1451, %v4708, 0.0
        %v5053 = vadd.f32 %v5051, %v5052
        %v5054 = vsel %vm1451, %v4709, 0.0
        %v5055 = vadd.f32 %v5053, %v5054
        %v5056 = vsel %vm1451, %v4710, 0.0
        %v5057 = vadd.f32 %v5055, %v5056
        %v5058 = vrot.slane %v5057, 4
        %v5059 = vadd.f32 %v5057, %v5058
        %v5060 = vrot.slane %v5059, 2
        %v5061 = vadd.f32 %v5059, %v5060
        %v5062 = vrot.slane %v5061, 1
        %v5063 = vadd.f32 %v5061, %v5062
        %v5064 = vsel %vm1451, %v4711, 0.0
        %v5065 = vsel %vm1451, %v4712, 0.0
        %v5066 = vadd.f32 %v5064, %v5065
        %v5067 = vsel %vm1451, %v4713, 0.0
        %v5068 = vadd.f32 %v5066, %v5067
        %v5069 = vsel %vm1451, %v4714, 0.0
        %v5070 = vadd.f32 %v5068, %v5069
        %v5071 = vrot.slane %v5070, 4
        %v5072 = vadd.f32 %v5070, %v5071
        %v5073 = vrot.slane %v5072, 2
        %v5074 = vadd.f32 %v5072, %v5073
        %v5075 = vrot.slane %v5074, 1
        %v5076 = vadd.f32 %v5074, %v5075
        %v5077 = vsel %vm1451, %v4715, 0.0
        %v5078 = vsel %vm1451, %v4716, 0.0
        %v5079 = vadd.f32 %v5077, %v5078
        %v5080 = vsel %vm1451, %v4717, 0.0
        %v5081 = vadd.f32 %v5079, %v5080
        %v5082 = vsel %vm1451, %v4718, 0.0
        %v5083 = vadd.f32 %v5081, %v5082
        %v5084 = vrot.slane %v5083, 4
        %v5085 = vadd.f32 %v5083, %v5084
        %v5086 = vrot.slane %v5085, 2
        %v5087 = vadd.f32 %v5085, %v5086
        %v5088 = vrot.slane %v5087, 1
        %v5089 = vadd.f32 %v5087, %v5088
        %v5090 = vsel %vm1451, %v4719, 0.0
        %v5091 = vsel %vm1451, %v4720, 0.0
        %v5092 = vadd.f32 %v5090, %v5091
        %v5093 = vsel %vm1451, %v4721, 0.0
        %v5094 = vadd.f32 %v5092, %v5093
        %v5095 = vsel %vm1451, %v4722, 0.0
        %v5096 = vadd.f32 %v5094, %v5095
        %v5097 = vrot.slane %v5096, 4
        %v5098 = vadd.f32 %v5096, %v5097
        %v5099 = vrot.slane %v5098, 2
        %v5100 = vadd.f32 %v5098, %v5099
        %v5101 = vrot.slane %v5100, 1
        %v5102 = vadd.f32 %v5100, %v5101
        %v5103 = vsel %vm1451, %v4723, 0.0
        %v5104 = vsel %vm1451, %v4724, 0.0
        %v5105 = vadd.f32 %v5103, %v5104
        %v5106 = vsel %vm1451, %v4725, 0.0
        %v5107 = vadd.f32 %v5105, %v5106
        %v5108 = vsel %vm1451, %v4726, 0.0
        %v5109 = vadd.f32 %v5107, %v5108
        %v5110 = vrot.slane %v5109, 4
        %v5111 = vadd.f32 %v5109, %v5110
        %v5112 = vrot.slane %v5111, 2
        %v5113 = vadd.f32 %v5111, %v5112
        %v5114 = vrot.slane %v5113, 1
        %v5115 = vadd.f32 %v5113, %v5114
        %v5116 = vsel %vm1451, %v4727, 0.0
        %v5117 = vsel %vm1451, %v4728, 0.0
        %v5118 = vadd.f32 %v5116, %v5117
        %v5119 = vsel %vm1451, %v4729, 0.0
        %v5120 = vadd.f32 %v5118, %v5119
        %v5121 = vsel %vm1451, %v4730, 0.0
        %v5122 = vadd.f32 %v5120, %v5121
        %v5123 = vrot.slane %v5122, 4
        %v5124 = vadd.f32 %v5122, %v5123
        %v5125 = vrot.slane %v5124, 2
        %v5126 = vadd.f32 %v5124, %v5125
        %v5127 = vrot.slane %v5126, 1
        %v5128 = vadd.f32 %v5126, %v5127
        %v5129 = vsel %vm1451, %v4731, 0.0
        %v5130 = vsel %vm1451, %v4732, 0.0
        %v5131 = vadd.f32 %v5129, %v5130
        %v5132 = vsel %vm1451, %v4733, 0.0
        %v5133 = vadd.f32 %v5131, %v5132
        %v5134 = vsel %vm1451, %v4734, 0.0
        %v5135 = vadd.f32 %v5133, %v5134
        %v5136 = vrot.slane %v5135, 4
        %v5137 = vadd.f32 %v5135, %v5136
        %v5138 = vrot.slane %v5137, 2
        %v5139 = vadd.f32 %v5137, %v5138
        %v5140 = vrot.slane %v5139, 1
        %v5141 = vadd.f32 %v5139, %v5140
        %v5142 = vsel %vm1451, %v4735, 0.0
        %v5143 = vsel %vm1451, %v4736, 0.0
        %v5144 = vadd.f32 %v5142, %v5143
        %v5145 = vsel %vm1451, %v4737, 0.0
        %v5146 = vadd.f32 %v5144, %v5145
        %v5147 = vsel %vm1451, %v4738, 0.0
        %v5148 = vadd.f32 %v5146, %v5147
        %v5149 = vrot.slane %v5148, 4
        %v5150 = vadd.f32 %v5148, %v5149
        %v5151 = vrot.slane %v5150, 2
        %v5152 = vadd.f32 %v5150, %v5151
        %v5153 = vrot.slane %v5152, 1
        %v5154 = vadd.f32 %v5152, %v5153
        %v5187 = vsel %vm2700, %v4764, %v4751
        %v5188 = vsel %vm2702, %v4777, %v5187
        %v5189 = vsel %vm2704, %v4790, %v5188
        %v5190 = vsel %vm2706, %v4803, %v5189
        %v5191 = vsel %vm2708, %v4816, %v5190
        %v5192 = vsel %vm2710, %v4829, %v5191
        %v5193 = vsel %vm2712, %v4842, %v5192
        %v5194 = vsel %vm2700, %v4868, %v4855
        %v5195 = vsel %vm2702, %v4881, %v5194
        %v5196 = vsel %vm2704, %v4894, %v5195
        %v5197 = vsel %vm2706, %v4907, %v5196
        %v5198 = vsel %vm2708, %v4920, %v5197
        %v5199 = vsel %vm2710, %v4933, %v5198
        %v5200 = vsel %vm2712, %v4946, %v5199
        %v5201 = vsel %vm2700, %v4972, %v4959
        %v5202 = vsel %vm2702, %v4985, %v5201
        %v5203 = vsel %vm2704, %v4998, %v5202
        %v5204 = vsel %vm2706, %v5011, %v5203
        %v5205 = vsel %vm2708, %v5024, %v5204
        %v5206 = vsel %vm2710, %v5037, %v5205
        %v5207 = vsel %vm2712, %v5050, %v5206
        %v5208 = vsel %vm2700, %v5076, %v5063
        %v5209 = vsel %vm2702, %v5089, %v5208
        %v5210 = vsel %vm2704, %v5102, %v5209
        %v5211 = vsel %vm2706, %v5115, %v5210
        %v5212 = vsel %vm2708, %v5128, %v5211
        %v5213 = vsel %vm2710, %v5141, %v5212
        %v5214 = vsel %vm2712, %v5154, %v5213
        %v5215 = vsel %vm1451, %v5193, 0
        %v5217 = vsel %vm1451, %v5200, 0
        %v5219 = vsel %vm1451, %v5207, 0
        %v5221 = vsel %vm1451, %v5214, 0
        %5223 = vmatprep.subr.mxu0 0.0
        %5224 = vmatpush1.msra.mxu0 %v627
        %5225 = vmatprep.subr.mxu0 0.0
        %5226 = vmatpush1.msra.mxu0 0.0
        %5227 = vmatprep.subr.mxu0 0.0
        %5228 = vmatpush1.msra.mxu0 0.0
        %5229 = vmatprep.subr.mxu0 0.0
        %5230 = vmatpush1.msra.mxu0 0.0
        %5231 = vmatprep.subr.mxu0 0.0
        %5232 = vmatpush1.msra.mxu0 0.0
        %5233 = vmatprep.subr.mxu0 0.0
        %5234 = vmatpush1.msra.mxu0 0.0
        %5235 = vmatprep.subr.mxu0 0.0
        %5236 = vmatpush1.msra.mxu0 0.0
        %5237 = vmatprep.subr.mxu0 0.0
        %5238 = vmatpush1.msra.mxu0 0.0
        %5239 = vmatprep.subr.mxu0 0.0
        %5240 = vmatpush1.msra.mxu0 0.0
        %5241 = vmatprep.subr.mxu0 0.0
        %5242 = vmatpush1.msra.mxu0 0.0
        %5243 = vmatprep.subr.mxu0 0.0
        %5244 = vmatpush1.msra.mxu0 0.0
        %5245 = vmatprep.subr.mxu0 0.0
        %5246 = vmatpush1.msra.mxu0 0.0
        %5247 = vmatprep.subr.mxu0 0.0
        %5248 = vmatpush1.msra.mxu0 0.0
        %5249 = vmatprep.subr.mxu0 0.0
        %5250 = vmatpush1.msra.mxu0 0.0
        %5251 = vmatprep.subr.mxu0 0.0
        %5252 = vmatpush1.msra.mxu0 0.0
        %5253 = vmatprep.subr.mxu0 0.0
        %5254 = vmatpush1.msra.mxu0 0.0
        %5255 = vmatprep.subr.mxu0 0.0
        %5256 = vmatpush1.msra.mxu0 0.0
        %5257 = vmatprep.subr.mxu0 0.0
        %5258 = vmatpush1.msra.mxu0 0.0
        %5259 = vmatprep.subr.mxu0 0.0
        %5260 = vmatpush1.msra.mxu0 0.0
        %5261 = vmatprep.subr.mxu0 0.0
        %5262 = vmatpush1.msra.mxu0 0.0
        %5263 = vmatprep.subr.mxu0 0.0
        %5264 = vmatpush1.msra.mxu0 0.0
        %5265 = vmatprep.subr.mxu0 0.0
        %5266 = vmatpush1.msra.mxu0 0.0
        %5267 = vmatprep.subr.mxu0 0.0
        %5268 = vmatpush1.msra.mxu0 0.0
        %5269 = vmatprep.subr.mxu0 0.0
        %5270 = vmatpush1.msra.mxu0 0.0
        %5271 = vmatprep.subr.mxu0 0.0
        %5272 = vmatpush1.msra.mxu0 0.0
        %5273 = vmatprep.subr.mxu0 0.0
        %5274 = vmatpush1.msra.mxu0 0.0
        %5275 = vmatprep.subr.mxu0 0.0
        %5276 = vmatpush1.msra.mxu0 0.0
        %5277 = vmatprep.subr.mxu0 0.0
        %5278 = vmatpush1.msra.mxu0 0.0
        %5279 = vmatprep.subr.mxu0 0.0
        %5280 = vmatpush1.msra.mxu0 0.0
        %5281 = vmatprep.subr.mxu0 0.0
        %5282 = vmatpush1.msra.mxu0 0.0
        %5283 = vmatprep.subr.mxu0 0.0
        %5284 = vmatpush1.msra.mxu0 0.0
        %5285 = vmatprep.subr.mxu0 0.0
        %5286 = vmatpush1.msra.mxu0 0.0
        %5287 = vmatprep.mubr.f32.mxu0 0.0
        %5288 = vmatmul.mubr.f32.gmra.mrb[0].mxu0 %v5215
        %v5289 = vpop.f32.mrb[0].mxu0
        %v5290 = vadd.f32 0.0, %v5289
        %v5291 = vpop.f32.mrb[0].mxu0
        %5292 = vmatprep.mubr.f32.mxu0 0.0
        %5293 = vmatmul.mubr.f32.gmra.mrb[0].mxu0 %v5217
        %v5294 = vpop.f32.mrb[0].mxu0
        %v5295 = vadd.f32 0.0, %v5294
        %v5296 = vpop.f32.mrb[0].mxu0
        %5297 = vmatprep.mubr.f32.mxu0 0.0
        %5298 = vmatmul.mubr.f32.gmra.mrb[0].mxu0 %v5219
        %v5299 = vpop.f32.mrb[0].mxu0
        %v5300 = vadd.f32 0.0, %v5299
        %v5301 = vpop.f32.mrb[0].mxu0
        %5302 = vmatprep.mubr.f32.mxu0 0.0
        %5303 = vmatmul.mubr.f32.gmra.mrb[0].mxu0 %v5221
        %v5304 = vpop.f32.mrb[0].mxu0
        %v5305 = vadd.f32 0.0, %v5304
        %v5306 = vpop.f32.mrb[0].mxu0
        %5307 = vdwg.mxu0
        %v5340 = vsel %vm2700, %v3964, %v3951
        %v5341 = vsel %vm2702, %v3977, %v5340
        %v5342 = vsel %vm2704, %v3990, %v5341
        %v5343 = vsel %vm2706, %v4003, %v5342
        %v5344 = vsel %vm2708, %v4016, %v5343
        %v5345 = vsel %vm2710, %v4029, %v5344
        %v5346 = vsel %vm2712, %v4042, %v5345
        %v5347 = vsel %vm2700, %v4068, %v4055
        %v5348 = vsel %vm2702, %v4081, %v5347
        %v5349 = vsel %vm2704, %v4094, %v5348
        %v5350 = vsel %vm2706, %v4107, %v5349
        %v5351 = vsel %vm2708, %v4120, %v5350
        %v5352 = vsel %vm2710, %v4133, %v5351
        %v5353 = vsel %vm2712, %v4146, %v5352
        %v5354 = vsel %vm2700, %v4172, %v4159
        %v5355 = vsel %vm2702, %v4185, %v5354
        %v5356 = vsel %vm2704, %v4198, %v5355
        %v5357 = vsel %vm2706, %v4211, %v5356
        %v5358 = vsel %vm2708, %v4224, %v5357
        %v5359 = vsel %vm2710, %v4237, %v5358
        %v5360 = vsel %vm2712, %v4250, %v5359
        %v5361 = vsel %vm2700, %v4276, %v4263
        %v5362 = vsel %vm2702, %v4289, %v5361
        %v5363 = vsel %vm2704, %v4302, %v5362
        %v5364 = vsel %vm2706, %v4315, %v5363
        %v5365 = vsel %vm2708, %v4328, %v5364
        %v5366 = vsel %vm2710, %v4341, %v5365
        %v5367 = vsel %vm2712, %v4354, %v5366
        %v5368 = vsel %vm1451, %v5346, 0
        %v5370 = vsel %vm1451, %v5353, 0
        %v5372 = vsel %vm1451, %v5360, 0
        %v5374 = vsel %vm1451, %v5367, 0
        %5376 = vmatprep.subr.mxu0 0.0
        %5377 = vmatpush1.msra.mxu0 %v626
        %5378 = vmatprep.subr.mxu0 0.0
        %5379 = vmatpush1.msra.mxu0 0.0
        %5380 = vmatprep.subr.mxu0 0.0
        %5381 = vmatpush1.msra.mxu0 0.0
        %5382 = vmatprep.subr.mxu0 0.0
        %5383 = vmatpush1.msra.mxu0 0.0
        %5384 = vmatprep.subr.mxu0 0.0
        %5385 = vmatpush1.msra.mxu0 0.0
        %5386 = vmatprep.subr.mxu0 0.0
        %5387 = vmatpush1.msra.mxu0 0.0
        %5388 = vmatprep.subr.mxu0 0.0
        %5389 = vmatpush1.msra.mxu0 0.0
        %5390 = vmatprep.subr.mxu0 0.0
        %5391 = vmatpush1.msra.mxu0 0.0
        %5392 = vmatprep.subr.mxu0 0.0
        %5393 = vmatpush1.msra.mxu0 0.0
        %5394 = vmatprep.subr.mxu0 0.0
        %5395 = vmatpush1.msra.mxu0 0.0
        %5396 = vmatprep.subr.mxu0 0.0
        %5397 = vmatpush1.msra.mxu0 0.0
        %5398 = vmatprep.subr.mxu0 0.0
        %5399 = vmatpush1.msra.mxu0 0.0
        %5400 = vmatprep.subr.mxu0 0.0
        %5401 = vmatpush1.msra.mxu0 0.0
        %5402 = vmatprep.subr.mxu0 0.0
        %5403 = vmatpush1.msra.mxu0 0.0
        %5404 = vmatprep.subr.mxu0 0.0
        %5405 = vmatpush1.msra.mxu0 0.0
        %5406 = vmatprep.subr.mxu0 0.0
        %5407 = vmatpush1.msra.mxu0 0.0
        %5408 = vmatprep.subr.mxu0 0.0
        %5409 = vmatpush1.msra.mxu0 0.0
        %5410 = vmatprep.subr.mxu0 0.0
        %5411 = vmatpush1.msra.mxu0 0.0
        %5412 = vmatprep.subr.mxu0 0.0
        %5413 = vmatpush1.msra.mxu0 0.0
        %5414 = vmatprep.subr.mxu0 0.0
        %5415 = vmatpush1.msra.mxu0 0.0
        %5416 = vmatprep.subr.mxu0 0.0
        %5417 = vmatpush1.msra.mxu0 0.0
        %5418 = vmatprep.subr.mxu0 0.0
        %5419 = vmatpush1.msra.mxu0 0.0
        %5420 = vmatprep.subr.mxu0 0.0
        %5421 = vmatpush1.msra.mxu0 0.0
        %5422 = vmatprep.subr.mxu0 0.0
        %5423 = vmatpush1.msra.mxu0 0.0
        %5424 = vmatprep.subr.mxu0 0.0
        %5425 = vmatpush1.msra.mxu0 0.0
        %5426 = vmatprep.subr.mxu0 0.0
        %5427 = vmatpush1.msra.mxu0 0.0
        %5428 = vmatprep.subr.mxu0 0.0
        %5429 = vmatpush1.msra.mxu0 0.0
        %5430 = vmatprep.subr.mxu0 0.0
        %5431 = vmatpush1.msra.mxu0 0.0
        %5432 = vmatprep.subr.mxu0 0.0
        %5433 = vmatpush1.msra.mxu0 0.0
        %5434 = vmatprep.subr.mxu0 0.0
        %5435 = vmatpush1.msra.mxu0 0.0
        %5436 = vmatprep.subr.mxu0 0.0
        %5437 = vmatpush1.msra.mxu0 0.0
        %5438 = vmatprep.subr.mxu0 0.0
        %5439 = vmatpush1.msra.mxu0 0.0
        %5440 = vmatprep.mubr.f32.mxu0 0.0
        %5441 = vmatmul.mubr.f32.gmra.mrb[0].mxu0 %v5368
        %v5442 = vpop.f32.mrb[0].mxu0
        %v5443 = vadd.f32 %v5290, %v5442
        %v5444 = vpop.f32.mrb[0].mxu0
        %5445 = vmatprep.mubr.f32.mxu0 0.0
        %5446 = vmatmul.mubr.f32.gmra.mrb[0].mxu0 %v5370
        %v5447 = vpop.f32.mrb[0].mxu0
        %v5448 = vadd.f32 %v5295, %v5447
        %v5449 = vpop.f32.mrb[0].mxu0
        %5450 = vmatprep.mubr.f32.mxu0 0.0
        %5451 = vmatmul.mubr.f32.gmra.mrb[0].mxu0 %v5372
        %v5452 = vpop.f32.mrb[0].mxu0
        %v5453 = vadd.f32 %v5300, %v5452
        %v5454 = vpop.f32.mrb[0].mxu0
        %5455 = vmatprep.mubr.f32.mxu0 0.0
        %5456 = vmatmul.mubr.f32.gmra.mrb[0].mxu0 %v5374
        %v5457 = vpop.f32.mrb[0].mxu0
        %v5458 = vadd.f32 %v5305, %v5457
        %v5459 = vpop.f32.mrb[0].mxu0
        %5460 = vdwg.mxu0
        %s5461 = scalar_lea.vmem %s9, 32
        %v5462 = vld [vmem:[%s5461] sm:$0xff]
        %v5463 = vld [vmem:[%s5461 + $0x8] sm:$0xff]
        %v5464 = vld [vmem:[%s5461 + $0x10] sm:$0xff]
        %v5465 = vld [vmem:[%s5461 + $0x18] sm:$0xff]
        %s5466 = scalar_lea.vmem %s10, 32
        %v5467 = vld [vmem:[%s5466] sm:$0xff]
        %v5468 = vld [vmem:[%s5466 + $0x8] sm:$0xff]
        %v5469 = vld [vmem:[%s5466 + $0x10] sm:$0xff]
        %v5470 = vld [vmem:[%s5466 + $0x18] sm:$0xff]
        %5472 = vset.pattern.permute.xlu0 0
        %5473 = vperm.xlu0 %5472, %v5467
        %v5474 = vpop.permute.xlu0 %5473
        %5477 = vset.pattern.permute.xlu0 0
        %5478 = vperm.xlu0 %5477, %v5468
        %v5479 = vpop.permute.xlu0 %5478
        %5482 = vset.pattern.permute.xlu0 0
        %5483 = vperm.xlu0 %5482, %v5469
        %v5484 = vpop.permute.xlu0 %5483
        %5487 = vset.pattern.permute.xlu0 0
        %5488 = vperm.xlu0 %5487, %v5470
        %v5489 = vpop.permute.xlu0 %5488
        %v5492 = vsel %vm3009, %v5462, 0
        %v5495 = vsel %vm3009, %v5463, 0
        %v5498 = vsel %vm3009, %v5464, 0
        %v5501 = vsel %vm3009, %v5465, 0
        %5503 = vmatprep.subr.mxu0 0.0
        %5504 = vmatpush1.msra.mxu0 %v3111
        %5505 = vmatprep.subr.mxu0 0.0
        %5506 = vmatpush1.msra.mxu0 %v3112
        %5507 = vmatprep.subr.mxu0 0.0
        %5508 = vmatpush1.msra.mxu0 %v3113
        %5509 = vmatprep.subr.mxu0 0.0
        %5510 = vmatpush1.msra.mxu0 %v3114
        %5511 = vmatprep.subr.mxu0 0.0
        %5512 = vmatpush1.msra.mxu0 0.0
        %5513 = vmatprep.subr.mxu0 0.0
        %5514 = vmatpush1.msra.mxu0 0.0
        %5515 = vmatprep.subr.mxu0 0.0
        %5516 = vmatpush1.msra.mxu0 0.0
        %5517 = vmatprep.subr.mxu0 0.0
        %5518 = vmatpush1.msra.mxu0 0.0
        %5519 = vmatprep.subr.mxu0 0.0
        %5520 = vmatpush1.msra.mxu0 0.0
        %5521 = vmatprep.subr.mxu0 0.0
        %5522 = vmatpush1.msra.mxu0 0.0
        %5523 = vmatprep.subr.mxu0 0.0
        %5524 = vmatpush1.msra.mxu0 0.0
        %5525 = vmatprep.subr.mxu0 0.0
        %5526 = vmatpush1.msra.mxu0 0.0
        %5527 = vmatprep.subr.mxu0 0.0
        %5528 = vmatpush1.msra.mxu0 0.0
        %5529 = vmatprep.subr.mxu0 0.0
        %5530 = vmatpush1.msra.mxu0 0.0
        %5531 = vmatprep.subr.mxu0 0.0
        %5532 = vmatpush1.msra.mxu0 0.0
        %5533 = vmatprep.subr.mxu0 0.0
        %5534 = vmatpush1.msra.mxu0 0.0
        %5535 = vmatprep.subr.mxu0 0.0
        %5536 = vmatpush1.msra.mxu0 0.0
        %5537 = vmatprep.subr.mxu0 0.0
        %5538 = vmatpush1.msra.mxu0 0.0
        %5539 = vmatprep.subr.mxu0 0.0
        %5540 = vmatpush1.msra.mxu0 0.0
        %5541 = vmatprep.subr.mxu0 0.0
        %5542 = vmatpush1.msra.mxu0 0.0
        %5543 = vmatprep.subr.mxu0 0.0
        %5544 = vmatpush1.msra.mxu0 0.0
        %5545 = vmatprep.subr.mxu0 0.0
        %5546 = vmatpush1.msra.mxu0 0.0
        %5547 = vmatprep.subr.mxu0 0.0
        %5548 = vmatpush1.msra.mxu0 0.0
        %5549 = vmatprep.subr.mxu0 0.0
        %5550 = vmatpush1.msra.mxu0 0.0
        %5551 = vmatprep.subr.mxu0 0.0
        %5552 = vmatpush1.msra.mxu0 0.0
        %5553 = vmatprep.subr.mxu0 0.0
        %5554 = vmatpush1.msra.mxu0 0.0
        %5555 = vmatprep.subr.mxu0 0.0
        %5556 = vmatpush1.msra.mxu0 0.0
        %5557 = vmatprep.subr.mxu0 0.0
        %5558 = vmatpush1.msra.mxu0 0.0
        %5559 = vmatprep.subr.mxu0 0.0
        %5560 = vmatpush1.msra.mxu0 0.0
        %5561 = vmatprep.subr.mxu0 0.0
        %5562 = vmatpush1.msra.mxu0 0.0
        %5563 = vmatprep.subr.mxu0 0.0
        %5564 = vmatpush1.msra.mxu0 0.0
        %5565 = vmatprep.subr.mxu0 0.0
        %5566 = vmatpush1.msra.mxu0 0.0
        %5567 = vmatprep.mubr.f32.mxu0 0.0
        %5568 = vmatmul.mubr.f32.gmra.mrb[0].mxu0 %v5492
        %v5569 = vpop.f32.mrb[0].mxu0
        %v5570 = vadd.f32 %v5474, %v5569
        %v5571 = vpop.f32.mrb[0].mxu0
        %5572 = vmatprep.mubr.f32.mxu0 0.0
        %5573 = vmatmul.mubr.f32.gmra.mrb[0].mxu0 %v5495
        %v5574 = vpop.f32.mrb[0].mxu0
        %v5575 = vadd.f32 %v5479, %v5574
        %v5576 = vpop.f32.mrb[0].mxu0
        %5577 = vmatprep.mubr.f32.mxu0 0.0
        %5578 = vmatmul.mubr.f32.gmra.mrb[0].mxu0 %v5498
        %v5579 = vpop.f32.mrb[0].mxu0
        %v5580 = vadd.f32 %v5484, %v5579
        %v5581 = vpop.f32.mrb[0].mxu0
        %5582 = vmatprep.mubr.f32.mxu0 0.0
        %5583 = vmatmul.mubr.f32.gmra.mrb[0].mxu0 %v5501
        %v5584 = vpop.f32.mrb[0].mxu0
        %v5585 = vadd.f32 %v5489, %v5584
        %v5586 = vpop.f32.mrb[0].mxu0
        %5587 = vdwg.mxu0
        %v5588 = vadd.f32 %v5443, %v5570
        %v5589 = vadd.f32 %v5448, %v5575
        %v5590 = vadd.f32 %v5453, %v5580
        %v5591 = vadd.f32 %v5458, %v5585
        %v5592 = vmax.f32 %v5588, 0.0
        %v5593 = vmax.f32 %v5589, 0.0
        %v5594 = vmax.f32 %v5590, 0.0
        %v5595 = vmax.f32 %v5591, 0.0
        %v5597 = vsel %vm628, %v5592, 0
        %v5600 = vsel %vm628, %v5593, 0
        %v5603 = vsel %vm628, %v5594, 0
        %v5606 = vsel %vm628, %v5595, 0
        %5608 = vmatprep.subr.mxu0 0.0
        %5609 = vmatpush1.msra.mxu0 %v622
        %5610 = vmatprep.subr.mxu0 0.0
        %5611 = vmatpush1.msra.mxu0 %v623
        %5612 = vmatprep.subr.mxu0 0.0
        %5613 = vmatpush1.msra.mxu0 0.0
        %5614 = vmatprep.subr.mxu0 0.0
        %5615 = vmatpush1.msra.mxu0 0.0
        %5616 = vmatprep.subr.mxu0 0.0
        %5617 = vmatpush1.msra.mxu0 0.0
        %5618 = vmatprep.subr.mxu0 0.0
        %5619 = vmatpush1.msra.mxu0 0.0
        %5620 = vmatprep.subr.mxu0 0.0
        %5621 = vmatpush1.msra.mxu0 0.0
        %5622 = vmatprep.subr.mxu0 0.0
        %5623 = vmatpush1.msra.mxu0 0.0
        %5624 = vmatprep.subr.mxu0 0.0
        %5625 = vmatpush1.msra.mxu0 0.0
        %5626 = vmatprep.subr.mxu0 0.0
        %5627 = vmatpush1.msra.mxu0 0.0
        %5628 = vmatprep.subr.mxu0 0.0
        %5629 = vmatpush1.msra.mxu0 0.0
        %5630 = vmatprep.subr.mxu0 0.0
        %5631 = vmatpush1.msra.mxu0 0.0
        %5632 = vmatprep.subr.mxu0 0.0
        %5633 = vmatpush1.msra.mxu0 0.0
        %5634 = vmatprep.subr.mxu0 0.0
        %5635 = vmatpush1.msra.mxu0 0.0
        %5636 = vmatprep.subr.mxu0 0.0
        %5637 = vmatpush1.msra.mxu0 0.0
        %5638 = vmatprep.subr.mxu0 0.0
        %5639 = vmatpush1.msra.mxu0 0.0
        %5640 = vmatprep.subr.mxu0 0.0
        %5641 = vmatpush1.msra.mxu0 0.0
        %5642 = vmatprep.subr.mxu0 0.0
        %5643 = vmatpush1.msra.mxu0 0.0
        %5644 = vmatprep.subr.mxu0 0.0
        %5645 = vmatpush1.msra.mxu0 0.0
        %5646 = vmatprep.subr.mxu0 0.0
        %5647 = vmatpush1.msra.mxu0 0.0
        %5648 = vmatprep.subr.mxu0 0.0
        %5649 = vmatpush1.msra.mxu0 0.0
        %5650 = vmatprep.subr.mxu0 0.0
        %5651 = vmatpush1.msra.mxu0 0.0
        %5652 = vmatprep.subr.mxu0 0.0
        %5653 = vmatpush1.msra.mxu0 0.0
        %5654 = vmatprep.subr.mxu0 0.0
        %5655 = vmatpush1.msra.mxu0 0.0
        %5656 = vmatprep.subr.mxu0 0.0
        %5657 = vmatpush1.msra.mxu0 0.0
        %5658 = vmatprep.subr.mxu0 0.0
        %5659 = vmatpush1.msra.mxu0 0.0
        %5660 = vmatprep.subr.mxu0 0.0
        %5661 = vmatpush1.msra.mxu0 0.0
        %5662 = vmatprep.subr.mxu0 0.0
        %5663 = vmatpush1.msra.mxu0 0.0
        %5664 = vmatprep.subr.mxu0 0.0
        %5665 = vmatpush1.msra.mxu0 0.0
        %5666 = vmatprep.subr.mxu0 0.0
        %5667 = vmatpush1.msra.mxu0 0.0
        %5668 = vmatprep.subr.mxu0 0.0
        %5669 = vmatpush1.msra.mxu0 0.0
        %5670 = vmatprep.subr.mxu0 0.0
        %5671 = vmatpush1.msra.mxu0 0.0
        %5672 = vmatprep.mubr.f32.mxu0 0.0
        %5673 = vmatmul.mubr.f32.gmra.mrb[0].mxu0 %v5597
        %v5674 = vpop.f32.mrb[0].mxu0
        %v5675 = vadd.f32 0.0, %v5674
        %v5676 = vpop.f32.mrb[0].mxu0
        %5677 = vmatprep.mubr.f32.mxu0 0.0
        %5678 = vmatmul.mubr.f32.gmra.mrb[0].mxu0 %v5600
        %v5679 = vpop.f32.mrb[0].mxu0
        %v5680 = vadd.f32 0.0, %v5679
        %v5681 = vpop.f32.mrb[0].mxu0
        %5682 = vmatprep.mubr.f32.mxu0 0.0
        %5683 = vmatmul.mubr.f32.gmra.mrb[0].mxu0 %v5603
        %v5684 = vpop.f32.mrb[0].mxu0
        %v5685 = vadd.f32 0.0, %v5684
        %v5686 = vpop.f32.mrb[0].mxu0
        %5687 = vmatprep.mubr.f32.mxu0 0.0
        %5688 = vmatmul.mubr.f32.gmra.mrb[0].mxu0 %v5606
        %v5689 = vpop.f32.mrb[0].mxu0
        %v5690 = vadd.f32 0.0, %v5689
        %v5691 = vpop.f32.mrb[0].mxu0
        %5692 = vdwg.mxu0
        %5693 = vmatprep.subr.mxu0 0.0
        %5694 = vmatpush1.msra.mxu0 %v624
        %5695 = vmatprep.subr.mxu0 0.0
        %5696 = vmatpush1.msra.mxu0 %v625
        %5697 = vmatprep.subr.mxu0 0.0
        %5698 = vmatpush1.msra.mxu0 0.0
        %5699 = vmatprep.subr.mxu0 0.0
        %5700 = vmatpush1.msra.mxu0 0.0
        %5701 = vmatprep.subr.mxu0 0.0
        %5702 = vmatpush1.msra.mxu0 0.0
        %5703 = vmatprep.subr.mxu0 0.0
        %5704 = vmatpush1.msra.mxu0 0.0
        %5705 = vmatprep.subr.mxu0 0.0
        %5706 = vmatpush1.msra.mxu0 0.0
        %5707 = vmatprep.subr.mxu0 0.0
        %5708 = vmatpush1.msra.mxu0 0.0
        %5709 = vmatprep.subr.mxu0 0.0
        %5710 = vmatpush1.msra.mxu0 0.0
        %5711 = vmatprep.subr.mxu0 0.0
        %5712 = vmatpush1.msra.mxu0 0.0
        %5713 = vmatprep.subr.mxu0 0.0
        %5714 = vmatpush1.msra.mxu0 0.0
        %5715 = vmatprep.subr.mxu0 0.0
        %5716 = vmatpush1.msra.mxu0 0.0
        %5717 = vmatprep.subr.mxu0 0.0
        %5718 = vmatpush1.msra.mxu0 0.0
        %5719 = vmatprep.subr.mxu0 0.0
        %5720 = vmatpush1.msra.mxu0 0.0
        %5721 = vmatprep.subr.mxu0 0.0
        %5722 = vmatpush1.msra.mxu0 0.0
        %5723 = vmatprep.subr.mxu0 0.0
        %5724 = vmatpush1.msra.mxu0 0.0
        %5725 = vmatprep.subr.mxu0 0.0
        %5726 = vmatpush1.msra.mxu0 0.0
        %5727 = vmatprep.subr.mxu0 0.0
        %5728 = vmatpush1.msra.mxu0 0.0
        %5729 = vmatprep.subr.mxu0 0.0
        %5730 = vmatpush1.msra.mxu0 0.0
        %5731 = vmatprep.subr.mxu0 0.0
        %5732 = vmatpush1.msra.mxu0 0.0
        %5733 = vmatprep.subr.mxu0 0.0
        %5734 = vmatpush1.msra.mxu0 0.0
        %5735 = vmatprep.subr.mxu0 0.0
        %5736 = vmatpush1.msra.mxu0 0.0
        %5737 = vmatprep.subr.mxu0 0.0
        %5738 = vmatpush1.msra.mxu0 0.0
        %5739 = vmatprep.subr.mxu0 0.0
        %5740 = vmatpush1.msra.mxu0 0.0
        %5741 = vmatprep.subr.mxu0 0.0
        %5742 = vmatpush1.msra.mxu0 0.0
        %5743 = vmatprep.subr.mxu0 0.0
        %5744 = vmatpush1.msra.mxu0 0.0
        %5745 = vmatprep.subr.mxu0 0.0
        %5746 = vmatpush1.msra.mxu0 0.0
        %5747 = vmatprep.subr.mxu0 0.0
        %5748 = vmatpush1.msra.mxu0 0.0
        %5749 = vmatprep.subr.mxu0 0.0
        %5750 = vmatpush1.msra.mxu0 0.0
        %5751 = vmatprep.subr.mxu0 0.0
        %5752 = vmatpush1.msra.mxu0 0.0
        %5753 = vmatprep.subr.mxu0 0.0
        %5754 = vmatpush1.msra.mxu0 0.0
        %5755 = vmatprep.subr.mxu0 0.0
        %5756 = vmatpush1.msra.mxu0 0.0
        %5757 = vmatprep.mubr.f32.mxu0 0.0
        %5758 = vmatmul.mubr.f32.gmra.mrb[0].mxu0 %v5597
        %v5759 = vpop.f32.mrb[0].mxu0
        %v5760 = vadd.f32 0.0, %v5759
        %v5761 = vpop.f32.mrb[0].mxu0
        %5762 = vmatprep.mubr.f32.mxu0 0.0
        %5763 = vmatmul.mubr.f32.gmra.mrb[0].mxu0 %v5600
        %v5764 = vpop.f32.mrb[0].mxu0
        %v5765 = vadd.f32 0.0, %v5764
        %v5766 = vpop.f32.mrb[0].mxu0
        %5767 = vmatprep.mubr.f32.mxu0 0.0
        %5768 = vmatmul.mubr.f32.gmra.mrb[0].mxu0 %v5603
        %v5769 = vpop.f32.mrb[0].mxu0
        %v5770 = vadd.f32 0.0, %v5769
        %v5771 = vpop.f32.mrb[0].mxu0
        %5772 = vmatprep.mubr.f32.mxu0 0.0
        %5773 = vmatmul.mubr.f32.gmra.mrb[0].mxu0 %v5606
        %v5774 = vpop.f32.mrb[0].mxu0
        %v5775 = vadd.f32 0.0, %v5774
        %v5776 = vpop.f32.mrb[0].mxu0
        %5777 = vdwg.mxu0
        %s5778 = scalar_lea.vmem %s7, 2048
        %v5779 = vld [vmem:[%s5778] sm:$0xff]
        %v5780 = vld [vmem:[%s5778 + $0x8] sm:$0xff]
        %v5781 = vld [vmem:[%s5778 + $0x10] sm:$0xff]
        %v5782 = vld [vmem:[%s5778 + $0x18] sm:$0xff]
        %v5783 = vld [vmem:[%s5778 + $0x20] sm:$0xff]
        %v5784 = vld [vmem:[%s5778 + $0x28] sm:$0xff]
        %v5785 = vld [vmem:[%s5778 + $0x30] sm:$0xff]
        %v5786 = vld [vmem:[%s5778 + $0x38] sm:$0xff]
        %v5787 = vld [vmem:[%s5778 + $0x40] sm:$0xff]
        %v5788 = vld [vmem:[%s5778 + $0x48] sm:$0xff]
        %v5789 = vld [vmem:[%s5778 + $0x50] sm:$0xff]
        %v5790 = vld [vmem:[%s5778 + $0x58] sm:$0xff]
        %v5791 = vld [vmem:[%s5778 + $0x60] sm:$0xff]
        %v5792 = vld [vmem:[%s5778 + $0x68] sm:$0xff]
        %v5793 = vld [vmem:[%s5778 + $0x70] sm:$0xff]
        %v5794 = vld [vmem:[%s5778 + $0x78] sm:$0xff]
        %v5795 = vld [vmem:[%s5778 + $0x80] sm:$0xff]
        %v5796 = vld [vmem:[%s5778 + $0x88] sm:$0xff]
        %v5797 = vld [vmem:[%s5778 + $0x90] sm:$0xff]
        %v5798 = vld [vmem:[%s5778 + $0x98] sm:$0xff]
        %v5799 = vld [vmem:[%s5778 + $0xa0] sm:$0xff]
        %v5800 = vld [vmem:[%s5778 + $0xa8] sm:$0xff]
        %v5801 = vld [vmem:[%s5778 + $0xb0] sm:$0xff]
        %v5802 = vld [vmem:[%s5778 + $0xb8] sm:$0xff]
        %v5803 = vld [vmem:[%s5778 + $0xc0] sm:$0xff]
        %v5804 = vld [vmem:[%s5778 + $0xc8] sm:$0xff]
        %v5805 = vld [vmem:[%s5778 + $0xd0] sm:$0xff]
        %v5806 = vld [vmem:[%s5778 + $0xd8] sm:$0xff]
        %v5807 = vld [vmem:[%s5778 + $0xe0] sm:$0xff]
        %v5808 = vld [vmem:[%s5778 + $0xe8] sm:$0xff]
        %v5809 = vld [vmem:[%s5778 + $0xf0] sm:$0xff]
        %v5810 = vld [vmem:[%s5778 + $0xf8] sm:$0xff]
        %v5811 = vld [vmem:[%s5778 + $0x100] sm:$0xff]
        %v5812 = vld [vmem:[%s5778 + $0x108] sm:$0xff]
        %v5813 = vld [vmem:[%s5778 + $0x110] sm:$0xff]
        %v5814 = vld [vmem:[%s5778 + $0x118] sm:$0xff]
        %v5815 = vld [vmem:[%s5778 + $0x120] sm:$0xff]
        %v5816 = vld [vmem:[%s5778 + $0x128] sm:$0xff]
        %v5817 = vld [vmem:[%s5778 + $0x130] sm:$0xff]
        %v5818 = vld [vmem:[%s5778 + $0x138] sm:$0xff]
        %v5819 = vld [vmem:[%s5778 + $0x140] sm:$0xff]
        %v5820 = vld [vmem:[%s5778 + $0x148] sm:$0xff]
        %v5821 = vld [vmem:[%s5778 + $0x150] sm:$0xff]
        %v5822 = vld [vmem:[%s5778 + $0x158] sm:$0xff]
        %v5823 = vld [vmem:[%s5778 + $0x160] sm:$0xff]
        %v5824 = vld [vmem:[%s5778 + $0x168] sm:$0xff]
        %v5825 = vld [vmem:[%s5778 + $0x170] sm:$0xff]
        %v5826 = vld [vmem:[%s5778 + $0x178] sm:$0xff]
        %v5827 = vld [vmem:[%s5778 + $0x180] sm:$0xff]
        %v5828 = vld [vmem:[%s5778 + $0x188] sm:$0xff]
        %v5829 = vld [vmem:[%s5778 + $0x190] sm:$0xff]
        %v5830 = vld [vmem:[%s5778 + $0x198] sm:$0xff]
        %v5831 = vld [vmem:[%s5778 + $0x1a0] sm:$0xff]
        %v5832 = vld [vmem:[%s5778 + $0x1a8] sm:$0xff]
        %v5833 = vld [vmem:[%s5778 + $0x1b0] sm:$0xff]
        %v5834 = vld [vmem:[%s5778 + $0x1b8] sm:$0xff]
        %v5835 = vld [vmem:[%s5778 + $0x1c0] sm:$0xff]
        %v5836 = vld [vmem:[%s5778 + $0x1c8] sm:$0xff]
        %v5837 = vld [vmem:[%s5778 + $0x1d0] sm:$0xff]
        %v5838 = vld [vmem:[%s5778 + $0x1d8] sm:$0xff]
        %v5839 = vld [vmem:[%s5778 + $0x1e0] sm:$0xff]
        %v5840 = vld [vmem:[%s5778 + $0x1e8] sm:$0xff]
        %v5841 = vld [vmem:[%s5778 + $0x1f0] sm:$0xff]
        %v5842 = vld [vmem:[%s5778 + $0x1f8] sm:$0xff]
        %v5843 = vld [vmem:[%s5778 + $0x200] sm:$0xff]
        %v5844 = vld [vmem:[%s5778 + $0x208] sm:$0xff]
        %v5845 = vld [vmem:[%s5778 + $0x210] sm:$0xff]
        %v5846 = vld [vmem:[%s5778 + $0x218] sm:$0xff]
        %v5847 = vld [vmem:[%s5778 + $0x220] sm:$0xff]
        %v5848 = vld [vmem:[%s5778 + $0x228] sm:$0xff]
        %v5849 = vld [vmem:[%s5778 + $0x230] sm:$0xff]
        %v5850 = vld [vmem:[%s5778 + $0x238] sm:$0xff]
        %v5851 = vld [vmem:[%s5778 + $0x240] sm:$0xff]
        %v5852 = vld [vmem:[%s5778 + $0x248] sm:$0xff]
        %v5853 = vld [vmem:[%s5778 + $0x250] sm:$0xff]
        %v5854 = vld [vmem:[%s5778 + $0x258] sm:$0xff]
        %v5855 = vld [vmem:[%s5778 + $0x260] sm:$0xff]
        %v5856 = vld [vmem:[%s5778 + $0x268] sm:$0xff]
        %v5857 = vld [vmem:[%s5778 + $0x270] sm:$0xff]
        %v5858 = vld [vmem:[%s5778 + $0x278] sm:$0xff]
        %v5859 = vld [vmem:[%s5778 + $0x280] sm:$0xff]
        %v5860 = vld [vmem:[%s5778 + $0x288] sm:$0xff]
        %v5861 = vld [vmem:[%s5778 + $0x290] sm:$0xff]
        %v5862 = vld [vmem:[%s5778 + $0x298] sm:$0xff]
        %v5863 = vld [vmem:[%s5778 + $0x2a0] sm:$0xff]
        %v5864 = vld [vmem:[%s5778 + $0x2a8] sm:$0xff]
        %v5865 = vld [vmem:[%s5778 + $0x2b0] sm:$0xff]
        %v5866 = vld [vmem:[%s5778 + $0x2b8] sm:$0xff]
        %v5867 = vld [vmem:[%s5778 + $0x2c0] sm:$0xff]
        %v5868 = vld [vmem:[%s5778 + $0x2c8] sm:$0xff]
        %v5869 = vld [vmem:[%s5778 + $0x2d0] sm:$0xff]
        %v5870 = vld [vmem:[%s5778 + $0x2d8] sm:$0xff]
        %v5871 = vld [vmem:[%s5778 + $0x2e0] sm:$0xff]
        %v5872 = vld [vmem:[%s5778 + $0x2e8] sm:$0xff]
        %v5873 = vld [vmem:[%s5778 + $0x2f0] sm:$0xff]
        %v5874 = vld [vmem:[%s5778 + $0x2f8] sm:$0xff]
        %v5875 = vld [vmem:[%s5778 + $0x300] sm:$0xff]
        %v5876 = vld [vmem:[%s5778 + $0x308] sm:$0xff]
        %v5877 = vld [vmem:[%s5778 + $0x310] sm:$0xff]
        %v5878 = vld [vmem:[%s5778 + $0x318] sm:$0xff]
        %v5879 = vld [vmem:[%s5778 + $0x320] sm:$0xff]
        %v5880 = vld [vmem:[%s5778 + $0x328] sm:$0xff]
        %v5881 = vld [vmem:[%s5778 + $0x330] sm:$0xff]
        %v5882 = vld [vmem:[%s5778 + $0x338] sm:$0xff]
        %v5883 = vld [vmem:[%s5778 + $0x340] sm:$0xff]
        %v5884 = vld [vmem:[%s5778 + $0x348] sm:$0xff]
        %v5885 = vld [vmem:[%s5778 + $0x350] sm:$0xff]
        %v5886 = vld [vmem:[%s5778 + $0x358] sm:$0xff]
        %v5887 = vld [vmem:[%s5778 + $0x360] sm:$0xff]
        %v5888 = vld [vmem:[%s5778 + $0x368] sm:$0xff]
        %v5889 = vld [vmem:[%s5778 + $0x370] sm:$0xff]
        %v5890 = vld [vmem:[%s5778 + $0x378] sm:$0xff]
        %v5891 = vld [vmem:[%s5778 + $0x380] sm:$0xff]
        %v5892 = vld [vmem:[%s5778 + $0x388] sm:$0xff]
        %v5893 = vld [vmem:[%s5778 + $0x390] sm:$0xff]
        %v5894 = vld [vmem:[%s5778 + $0x398] sm:$0xff]
        %v5895 = vld [vmem:[%s5778 + $0x3a0] sm:$0xff]
        %v5896 = vld [vmem:[%s5778 + $0x3a8] sm:$0xff]
        %v5897 = vld [vmem:[%s5778 + $0x3b0] sm:$0xff]
        %v5898 = vld [vmem:[%s5778 + $0x3b8] sm:$0xff]
        %v5899 = vld [vmem:[%s5778 + $0x3c0] sm:$0xff]
        %v5900 = vld [vmem:[%s5778 + $0x3c8] sm:$0xff]
        %v5901 = vld [vmem:[%s5778 + $0x3d0] sm:$0xff]
        %v5902 = vld [vmem:[%s5778 + $0x3d8] sm:$0xff]
        %v5903 = vld [vmem:[%s5778 + $0x3e0] sm:$0xff]
        %v5904 = vld [vmem:[%s5778 + $0x3e8] sm:$0xff]
        %v5905 = vld [vmem:[%s5778 + $0x3f0] sm:$0xff]
        %v5906 = vld [vmem:[%s5778 + $0x3f8] sm:$0xff]
        %s5907 = scalar_lea.vmem %s8, 2048
        %v5908 = vld [vmem:[%s5907] sm:$0xff]
        %v5909 = vld [vmem:[%s5907 + $0x8] sm:$0xff]
        %v5910 = vld [vmem:[%s5907 + $0x10] sm:$0xff]
        %v5911 = vld [vmem:[%s5907 + $0x18] sm:$0xff]
        %v5912 = vld [vmem:[%s5907 + $0x20] sm:$0xff]
        %v5913 = vld [vmem:[%s5907 + $0x28] sm:$0xff]
        %v5914 = vld [vmem:[%s5907 + $0x30] sm:$0xff]
        %v5915 = vld [vmem:[%s5907 + $0x38] sm:$0xff]
        %v5916 = vld [vmem:[%s5907 + $0x40] sm:$0xff]
        %v5917 = vld [vmem:[%s5907 + $0x48] sm:$0xff]
        %v5918 = vld [vmem:[%s5907 + $0x50] sm:$0xff]
        %v5919 = vld [vmem:[%s5907 + $0x58] sm:$0xff]
        %v5920 = vld [vmem:[%s5907 + $0x60] sm:$0xff]
        %v5921 = vld [vmem:[%s5907 + $0x68] sm:$0xff]
        %v5922 = vld [vmem:[%s5907 + $0x70] sm:$0xff]
        %v5923 = vld [vmem:[%s5907 + $0x78] sm:$0xff]
        %v5924 = vld [vmem:[%s5907 + $0x80] sm:$0xff]
        %v5925 = vld [vmem:[%s5907 + $0x88] sm:$0xff]
        %v5926 = vld [vmem:[%s5907 + $0x90] sm:$0xff]
        %v5927 = vld [vmem:[%s5907 + $0x98] sm:$0xff]
        %v5928 = vld [vmem:[%s5907 + $0xa0] sm:$0xff]
        %v5929 = vld [vmem:[%s5907 + $0xa8] sm:$0xff]
        %v5930 = vld [vmem:[%s5907 + $0xb0] sm:$0xff]
        %v5931 = vld [vmem:[%s5907 + $0xb8] sm:$0xff]
        %v5932 = vld [vmem:[%s5907 + $0xc0] sm:$0xff]
        %v5933 = vld [vmem:[%s5907 + $0xc8] sm:$0xff]
        %v5934 = vld [vmem:[%s5907 + $0xd0] sm:$0xff]
        %v5935 = vld [vmem:[%s5907 + $0xd8] sm:$0xff]
        %v5936 = vld [vmem:[%s5907 + $0xe0] sm:$0xff]
        %v5937 = vld [vmem:[%s5907 + $0xe8] sm:$0xff]
        %v5938 = vld [vmem:[%s5907 + $0xf0] sm:$0xff]
        %v5939 = vld [vmem:[%s5907 + $0xf8] sm:$0xff]
        %v5940 = vld [vmem:[%s5907 + $0x100] sm:$0xff]
        %v5941 = vld [vmem:[%s5907 + $0x108] sm:$0xff]
        %v5942 = vld [vmem:[%s5907 + $0x110] sm:$0xff]
        %v5943 = vld [vmem:[%s5907 + $0x118] sm:$0xff]
        %v5944 = vld [vmem:[%s5907 + $0x120] sm:$0xff]
        %v5945 = vld [vmem:[%s5907 + $0x128] sm:$0xff]
        %v5946 = vld [vmem:[%s5907 + $0x130] sm:$0xff]
        %v5947 = vld [vmem:[%s5907 + $0x138] sm:$0xff]
        %v5948 = vld [vmem:[%s5907 + $0x140] sm:$0xff]
        %v5949 = vld [vmem:[%s5907 + $0x148] sm:$0xff]
        %v5950 = vld [vmem:[%s5907 + $0x150] sm:$0xff]
        %v5951 = vld [vmem:[%s5907 + $0x158] sm:$0xff]
        %v5952 = vld [vmem:[%s5907 + $0x160] sm:$0xff]
        %v5953 = vld [vmem:[%s5907 + $0x168] sm:$0xff]
        %v5954 = vld [vmem:[%s5907 + $0x170] sm:$0xff]
        %v5955 = vld [vmem:[%s5907 + $0x178] sm:$0xff]
        %v5956 = vld [vmem:[%s5907 + $0x180] sm:$0xff]
        %v5957 = vld [vmem:[%s5907 + $0x188] sm:$0xff]
        %v5958 = vld [vmem:[%s5907 + $0x190] sm:$0xff]
        %v5959 = vld [vmem:[%s5907 + $0x198] sm:$0xff]
        %v5960 = vld [vmem:[%s5907 + $0x1a0] sm:$0xff]
        %v5961 = vld [vmem:[%s5907 + $0x1a8] sm:$0xff]
        %v5962 = vld [vmem:[%s5907 + $0x1b0] sm:$0xff]
        %v5963 = vld [vmem:[%s5907 + $0x1b8] sm:$0xff]
        %v5964 = vld [vmem:[%s5907 + $0x1c0] sm:$0xff]
        %v5965 = vld [vmem:[%s5907 + $0x1c8] sm:$0xff]
        %v5966 = vld [vmem:[%s5907 + $0x1d0] sm:$0xff]
        %v5967 = vld [vmem:[%s5907 + $0x1d8] sm:$0xff]
        %v5968 = vld [vmem:[%s5907 + $0x1e0] sm:$0xff]
        %v5969 = vld [vmem:[%s5907 + $0x1e8] sm:$0xff]
        %v5970 = vld [vmem:[%s5907 + $0x1f0] sm:$0xff]
        %v5971 = vld [vmem:[%s5907 + $0x1f8] sm:$0xff]
        %v5972 = vld [vmem:[%s5907 + $0x200] sm:$0xff]
        %v5973 = vld [vmem:[%s5907 + $0x208] sm:$0xff]
        %v5974 = vld [vmem:[%s5907 + $0x210] sm:$0xff]
        %v5975 = vld [vmem:[%s5907 + $0x218] sm:$0xff]
        %v5976 = vld [vmem:[%s5907 + $0x220] sm:$0xff]
        %v5977 = vld [vmem:[%s5907 + $0x228] sm:$0xff]
        %v5978 = vld [vmem:[%s5907 + $0x230] sm:$0xff]
        %v5979 = vld [vmem:[%s5907 + $0x238] sm:$0xff]
        %v5980 = vld [vmem:[%s5907 + $0x240] sm:$0xff]
        %v5981 = vld [vmem:[%s5907 + $0x248] sm:$0xff]
        %v5982 = vld [vmem:[%s5907 + $0x250] sm:$0xff]
        %v5983 = vld [vmem:[%s5907 + $0x258] sm:$0xff]
        %v5984 = vld [vmem:[%s5907 + $0x260] sm:$0xff]
        %v5985 = vld [vmem:[%s5907 + $0x268] sm:$0xff]
        %v5986 = vld [vmem:[%s5907 + $0x270] sm:$0xff]
        %v5987 = vld [vmem:[%s5907 + $0x278] sm:$0xff]
        %v5988 = vld [vmem:[%s5907 + $0x280] sm:$0xff]
        %v5989 = vld [vmem:[%s5907 + $0x288] sm:$0xff]
        %v5990 = vld [vmem:[%s5907 + $0x290] sm:$0xff]
        %v5991 = vld [vmem:[%s5907 + $0x298] sm:$0xff]
        %v5992 = vld [vmem:[%s5907 + $0x2a0] sm:$0xff]
        %v5993 = vld [vmem:[%s5907 + $0x2a8] sm:$0xff]
        %v5994 = vld [vmem:[%s5907 + $0x2b0] sm:$0xff]
        %v5995 = vld [vmem:[%s5907 + $0x2b8] sm:$0xff]
        %v5996 = vld [vmem:[%s5907 + $0x2c0] sm:$0xff]
        %v5997 = vld [vmem:[%s5907 + $0x2c8] sm:$0xff]
        %v5998 = vld [vmem:[%s5907 + $0x2d0] sm:$0xff]
        %v5999 = vld [vmem:[%s5907 + $0x2d8] sm:$0xff]
        %v6000 = vld [vmem:[%s5907 + $0x2e0] sm:$0xff]
        %v6001 = vld [vmem:[%s5907 + $0x2e8] sm:$0xff]
        %v6002 = vld [vmem:[%s5907 + $0x2f0] sm:$0xff]
        %v6003 = vld [vmem:[%s5907 + $0x2f8] sm:$0xff]
        %v6004 = vld [vmem:[%s5907 + $0x300] sm:$0xff]
        %v6005 = vld [vmem:[%s5907 + $0x308] sm:$0xff]
        %v6006 = vld [vmem:[%s5907 + $0x310] sm:$0xff]
        %v6007 = vld [vmem:[%s5907 + $0x318] sm:$0xff]
        %v6008 = vld [vmem:[%s5907 + $0x320] sm:$0xff]
        %v6009 = vld [vmem:[%s5907 + $0x328] sm:$0xff]
        %v6010 = vld [vmem:[%s5907 + $0x330] sm:$0xff]
        %v6011 = vld [vmem:[%s5907 + $0x338] sm:$0xff]
        %v6012 = vld [vmem:[%s5907 + $0x340] sm:$0xff]
        %v6013 = vld [vmem:[%s5907 + $0x348] sm:$0xff]
        %v6014 = vld [vmem:[%s5907 + $0x350] sm:$0xff]
        %v6015 = vld [vmem:[%s5907 + $0x358] sm:$0xff]
        %v6016 = vld [vmem:[%s5907 + $0x360] sm:$0xff]
        %v6017 = vld [vmem:[%s5907 + $0x368] sm:$0xff]
        %v6018 = vld [vmem:[%s5907 + $0x370] sm:$0xff]
        %v6019 = vld [vmem:[%s5907 + $0x378] sm:$0xff]
        %v6020 = vld [vmem:[%s5907 + $0x380] sm:$0xff]
        %v6021 = vld [vmem:[%s5907 + $0x388] sm:$0xff]
        %v6022 = vld [vmem:[%s5907 + $0x390] sm:$0xff]
        %v6023 = vld [vmem:[%s5907 + $0x398] sm:$0xff]
        %v6024 = vld [vmem:[%s5907 + $0x3a0] sm:$0xff]
        %v6025 = vld [vmem:[%s5907 + $0x3a8] sm:$0xff]
        %v6026 = vld [vmem:[%s5907 + $0x3b0] sm:$0xff]
        %v6027 = vld [vmem:[%s5907 + $0x3b8] sm:$0xff]
        %v6028 = vld [vmem:[%s5907 + $0x3c0] sm:$0xff]
        %v6029 = vld [vmem:[%s5907 + $0x3c8] sm:$0xff]
        %v6030 = vld [vmem:[%s5907 + $0x3d0] sm:$0xff]
        %v6031 = vld [vmem:[%s5907 + $0x3d8] sm:$0xff]
        %v6032 = vld [vmem:[%s5907 + $0x3e0] sm:$0xff]
        %v6033 = vld [vmem:[%s5907 + $0x3e8] sm:$0xff]
        %v6034 = vld [vmem:[%s5907 + $0x3f0] sm:$0xff]
        %v6035 = vld [vmem:[%s5907 + $0x3f8] sm:$0xff]
        %v6036 = vmul.f32 %v5779, %v5675
        %v6037 = vmul.f32 %v5780, %v5680
        %v6038 = vmul.f32 %v5781, %v5685
        %v6039 = vmul.f32 %v5782, %v5690
        %v6040 = vmul.f32 %v5783, %v5675
        %v6041 = vmul.f32 %v5784, %v5680
        %v6042 = vmul.f32 %v5785, %v5685
        %v6043 = vmul.f32 %v5786, %v5690
        %v6044 = vmul.f32 %v5787, %v5675
        %v6045 = vmul.f32 %v5788, %v5680
        %v6046 = vmul.f32 %v5789, %v5685
        %v6047 = vmul.f32 %v5790, %v5690
        %v6048 = vmul.f32 %v5791, %v5675
        %v6049 = vmul.f32 %v5792, %v5680
        %v6050 = vmul.f32 %v5793, %v5685
        %v6051 = vmul.f32 %v5794, %v5690
        %v6052 = vmul.f32 %v5795, %v5675
        %v6053 = vmul.f32 %v5796, %v5680
        %v6054 = vmul.f32 %v5797, %v5685
        %v6055 = vmul.f32 %v5798, %v5690
        %v6056 = vmul.f32 %v5799, %v5675
        %v6057 = vmul.f32 %v5800, %v5680
        %v6058 = vmul.f32 %v5801, %v5685
        %v6059 = vmul.f32 %v5802, %v5690
        %v6060 = vmul.f32 %v5803, %v5675
        %v6061 = vmul.f32 %v5804, %v5680
        %v6062 = vmul.f32 %v5805, %v5685
        %v6063 = vmul.f32 %v5806, %v5690
        %v6064 = vmul.f32 %v5807, %v5675
        %v6065 = vmul.f32 %v5808, %v5680
        %v6066 = vmul.f32 %v5809, %v5685
        %v6067 = vmul.f32 %v5810, %v5690
        %v6068 = vmul.f32 %v5811, %v5675
        %v6069 = vmul.f32 %v5812, %v5680
        %v6070 = vmul.f32 %v5813, %v5685
        %v6071 = vmul.f32 %v5814, %v5690
        %v6072 = vmul.f32 %v5815, %v5675
        %v6073 = vmul.f32 %v5816, %v5680
        %v6074 = vmul.f32 %v5817, %v5685
        %v6075 = vmul.f32 %v5818, %v5690
        %v6076 = vmul.f32 %v5819, %v5675
        %v6077 = vmul.f32 %v5820, %v5680
        %v6078 = vmul.f32 %v5821, %v5685
        %v6079 = vmul.f32 %v5822, %v5690
        %v6080 = vmul.f32 %v5823, %v5675
        %v6081 = vmul.f32 %v5824, %v5680
        %v6082 = vmul.f32 %v5825, %v5685
        %v6083 = vmul.f32 %v5826, %v5690
        %v6084 = vmul.f32 %v5827, %v5675
        %v6085 = vmul.f32 %v5828, %v5680
        %v6086 = vmul.f32 %v5829, %v5685
        %v6087 = vmul.f32 %v5830, %v5690
        %v6088 = vmul.f32 %v5831, %v5675
        %v6089 = vmul.f32 %v5832, %v5680
        %v6090 = vmul.f32 %v5833, %v5685
        %v6091 = vmul.f32 %v5834, %v5690
        %v6092 = vmul.f32 %v5835, %v5675
        %v6093 = vmul.f32 %v5836, %v5680
        %v6094 = vmul.f32 %v5837, %v5685
        %v6095 = vmul.f32 %v5838, %v5690
        %v6096 = vmul.f32 %v5839, %v5675
        %v6097 = vmul.f32 %v5840, %v5680
        %v6098 = vmul.f32 %v5841, %v5685
        %v6099 = vmul.f32 %v5842, %v5690
        %v6100 = vmul.f32 %v5843, %v5675
        %v6101 = vmul.f32 %v5844, %v5680
        %v6102 = vmul.f32 %v5845, %v5685
        %v6103 = vmul.f32 %v5846, %v5690
        %v6104 = vmul.f32 %v5847, %v5675
        %v6105 = vmul.f32 %v5848, %v5680
        %v6106 = vmul.f32 %v5849, %v5685
        %v6107 = vmul.f32 %v5850, %v5690
        %v6108 = vmul.f32 %v5851, %v5675
        %v6109 = vmul.f32 %v5852, %v5680
        %v6110 = vmul.f32 %v5853, %v5685
        %v6111 = vmul.f32 %v5854, %v5690
        %v6112 = vmul.f32 %v5855, %v5675
        %v6113 = vmul.f32 %v5856, %v5680
        %v6114 = vmul.f32 %v5857, %v5685
        %v6115 = vmul.f32 %v5858, %v5690
        %v6116 = vmul.f32 %v5859, %v5675
        %v6117 = vmul.f32 %v5860, %v5680
        %v6118 = vmul.f32 %v5861, %v5685
        %v6119 = vmul.f32 %v5862, %v5690
        %v6120 = vmul.f32 %v5863, %v5675
        %v6121 = vmul.f32 %v5864, %v5680
        %v6122 = vmul.f32 %v5865, %v5685
        %v6123 = vmul.f32 %v5866, %v5690
        %v6124 = vmul.f32 %v5867, %v5675
        %v6125 = vmul.f32 %v5868, %v5680
        %v6126 = vmul.f32 %v5869, %v5685
        %v6127 = vmul.f32 %v5870, %v5690
        %v6128 = vmul.f32 %v5871, %v5675
        %v6129 = vmul.f32 %v5872, %v5680
        %v6130 = vmul.f32 %v5873, %v5685
        %v6131 = vmul.f32 %v5874, %v5690
        %v6132 = vmul.f32 %v5875, %v5675
        %v6133 = vmul.f32 %v5876, %v5680
        %v6134 = vmul.f32 %v5877, %v5685
        %v6135 = vmul.f32 %v5878, %v5690
        %v6136 = vmul.f32 %v5879, %v5675
        %v6137 = vmul.f32 %v5880, %v5680
        %v6138 = vmul.f32 %v5881, %v5685
        %v6139 = vmul.f32 %v5882, %v5690
        %v6140 = vmul.f32 %v5883, %v5675
        %v6141 = vmul.f32 %v5884, %v5680
        %v6142 = vmul.f32 %v5885, %v5685
        %v6143 = vmul.f32 %v5886, %v5690
        %v6144 = vmul.f32 %v5887, %v5675
        %v6145 = vmul.f32 %v5888, %v5680
        %v6146 = vmul.f32 %v5889, %v5685
        %v6147 = vmul.f32 %v5890, %v5690
        %v6148 = vmul.f32 %v5891, %v5675
        %v6149 = vmul.f32 %v5892, %v5680
        %v6150 = vmul.f32 %v5893, %v5685
        %v6151 = vmul.f32 %v5894, %v5690
        %v6152 = vmul.f32 %v5895, %v5675
        %v6153 = vmul.f32 %v5896, %v5680
        %v6154 = vmul.f32 %v5897, %v5685
        %v6155 = vmul.f32 %v5898, %v5690
        %v6156 = vmul.f32 %v5899, %v5675
        %v6157 = vmul.f32 %v5900, %v5680
        %v6158 = vmul.f32 %v5901, %v5685
        %v6159 = vmul.f32 %v5902, %v5690
        %v6160 = vmul.f32 %v5903, %v5675
        %v6161 = vmul.f32 %v5904, %v5680
        %v6162 = vmul.f32 %v5905, %v5685
        %v6163 = vmul.f32 %v5906, %v5690
        %v6164 = vmul.f32 %v5908, %v5760
        %v6165 = vmul.f32 %v5909, %v5765
        %v6166 = vmul.f32 %v5910, %v5770
        %v6167 = vmul.f32 %v5911, %v5775
        %v6168 = vmul.f32 %v5912, %v5760
        %v6169 = vmul.f32 %v5913, %v5765
        %v6170 = vmul.f32 %v5914, %v5770
        %v6171 = vmul.f32 %v5915, %v5775
        %v6172 = vmul.f32 %v5916, %v5760
        %v6173 = vmul.f32 %v5917, %v5765
        %v6174 = vmul.f32 %v5918, %v5770
        %v6175 = vmul.f32 %v5919, %v5775
        %v6176 = vmul.f32 %v5920, %v5760
        %v6177 = vmul.f32 %v5921, %v5765
        %v6178 = vmul.f32 %v5922, %v5770
        %v6179 = vmul.f32 %v5923, %v5775
        %v6180 = vmul.f32 %v5924, %v5760
        %v6181 = vmul.f32 %v5925, %v5765
        %v6182 = vmul.f32 %v5926, %v5770
        %v6183 = vmul.f32 %v5927, %v5775
        %v6184 = vmul.f32 %v5928, %v5760
        %v6185 = vmul.f32 %v5929, %v5765
        %v6186 = vmul.f32 %v5930, %v5770
        %v6187 = vmul.f32 %v5931, %v5775
        %v6188 = vmul.f32 %v5932, %v5760
        %v6189 = vmul.f32 %v5933, %v5765
        %v6190 = vmul.f32 %v5934, %v5770
        %v6191 = vmul.f32 %v5935, %v5775
        %v6192 = vmul.f32 %v5936, %v5760
        %v6193 = vmul.f32 %v5937, %v5765
        %v6194 = vmul.f32 %v5938, %v5770
        %v6195 = vmul.f32 %v5939, %v5775
        %v6196 = vmul.f32 %v5940, %v5760
        %v6197 = vmul.f32 %v5941, %v5765
        %v6198 = vmul.f32 %v5942, %v5770
        %v6199 = vmul.f32 %v5943, %v5775
        %v6200 = vmul.f32 %v5944, %v5760
        %v6201 = vmul.f32 %v5945, %v5765
        %v6202 = vmul.f32 %v5946, %v5770
        %v6203 = vmul.f32 %v5947, %v5775
        %v6204 = vmul.f32 %v5948, %v5760
        %v6205 = vmul.f32 %v5949, %v5765
        %v6206 = vmul.f32 %v5950, %v5770
        %v6207 = vmul.f32 %v5951, %v5775
        %v6208 = vmul.f32 %v5952, %v5760
        %v6209 = vmul.f32 %v5953, %v5765
        %v6210 = vmul.f32 %v5954, %v5770
        %v6211 = vmul.f32 %v5955, %v5775
        %v6212 = vmul.f32 %v5956, %v5760
        %v6213 = vmul.f32 %v5957, %v5765
        %v6214 = vmul.f32 %v5958, %v5770
        %v6215 = vmul.f32 %v5959, %v5775
        %v6216 = vmul.f32 %v5960, %v5760
        %v6217 = vmul.f32 %v5961, %v5765
        %v6218 = vmul.f32 %v5962, %v5770
        %v6219 = vmul.f32 %v5963, %v5775
        %v6220 = vmul.f32 %v5964, %v5760
        %v6221 = vmul.f32 %v5965, %v5765
        %v6222 = vmul.f32 %v5966, %v5770
        %v6223 = vmul.f32 %v5967, %v5775
        %v6224 = vmul.f32 %v5968, %v5760
        %v6225 = vmul.f32 %v5969, %v5765
        %v6226 = vmul.f32 %v5970, %v5770
        %v6227 = vmul.f32 %v5971, %v5775
        %v6228 = vmul.f32 %v5972, %v5760
        %v6229 = vmul.f32 %v5973, %v5765
        %v6230 = vmul.f32 %v5974, %v5770
        %v6231 = vmul.f32 %v5975, %v5775
        %v6232 = vmul.f32 %v5976, %v5760
        %v6233 = vmul.f32 %v5977, %v5765
        %v6234 = vmul.f32 %v5978, %v5770
        %v6235 = vmul.f32 %v5979, %v5775
        %v6236 = vmul.f32 %v5980, %v5760
        %v6237 = vmul.f32 %v5981, %v5765
        %v6238 = vmul.f32 %v5982, %v5770
        %v6239 = vmul.f32 %v5983, %v5775
        %v6240 = vmul.f32 %v5984, %v5760
        %v6241 = vmul.f32 %v5985, %v5765
        %v6242 = vmul.f32 %v5986, %v5770
        %v6243 = vmul.f32 %v5987, %v5775
        %v6244 = vmul.f32 %v5988, %v5760
        %v6245 = vmul.f32 %v5989, %v5765
        %v6246 = vmul.f32 %v5990, %v5770
        %v6247 = vmul.f32 %v5991, %v5775
        %v6248 = vmul.f32 %v5992, %v5760
        %v6249 = vmul.f32 %v5993, %v5765
        %v6250 = vmul.f32 %v5994, %v5770
        %v6251 = vmul.f32 %v5995, %v5775
        %v6252 = vmul.f32 %v5996, %v5760
        %v6253 = vmul.f32 %v5997, %v5765
        %v6254 = vmul.f32 %v5998, %v5770
        %v6255 = vmul.f32 %v5999, %v5775
        %v6256 = vmul.f32 %v6000, %v5760
        %v6257 = vmul.f32 %v6001, %v5765
        %v6258 = vmul.f32 %v6002, %v5770
        %v6259 = vmul.f32 %v6003, %v5775
        %v6260 = vmul.f32 %v6004, %v5760
        %v6261 = vmul.f32 %v6005, %v5765
        %v6262 = vmul.f32 %v6006, %v5770
        %v6263 = vmul.f32 %v6007, %v5775
        %v6264 = vmul.f32 %v6008, %v5760
        %v6265 = vmul.f32 %v6009, %v5765
        %v6266 = vmul.f32 %v6010, %v5770
        %v6267 = vmul.f32 %v6011, %v5775
        %v6268 = vmul.f32 %v6012, %v5760
        %v6269 = vmul.f32 %v6013, %v5765
        %v6270 = vmul.f32 %v6014, %v5770
        %v6271 = vmul.f32 %v6015, %v5775
        %v6272 = vmul.f32 %v6016, %v5760
        %v6273 = vmul.f32 %v6017, %v5765
        %v6274 = vmul.f32 %v6018, %v5770
        %v6275 = vmul.f32 %v6019, %v5775
        %v6276 = vmul.f32 %v6020, %v5760
        %v6277 = vmul.f32 %v6021, %v5765
        %v6278 = vmul.f32 %v6022, %v5770
        %v6279 = vmul.f32 %v6023, %v5775
        %v6280 = vmul.f32 %v6024, %v5760
        %v6281 = vmul.f32 %v6025, %v5765
        %v6282 = vmul.f32 %v6026, %v5770
        %v6283 = vmul.f32 %v6027, %v5775
        %v6284 = vmul.f32 %v6028, %v5760
        %v6285 = vmul.f32 %v6029, %v5765
        %v6286 = vmul.f32 %v6030, %v5770
        %v6287 = vmul.f32 %v6031, %v5775
        %v6288 = vmul.f32 %v6032, %v5760
        %v6289 = vmul.f32 %v6033, %v5765
        %v6290 = vmul.f32 %v6034, %v5770
        %v6291 = vmul.f32 %v6035, %v5775
        %v6292 = vsub.f32 %v6036, %v6164
        %v6293 = vsub.f32 %v6037, %v6165
        %v6294 = vsub.f32 %v6038, %v6166
        %v6295 = vsub.f32 %v6039, %v6167
        %v6296 = vsub.f32 %v6040, %v6168
        %v6297 = vsub.f32 %v6041, %v6169
        %v6298 = vsub.f32 %v6042, %v6170
        %v6299 = vsub.f32 %v6043, %v6171
        %v6300 = vsub.f32 %v6044, %v6172
        %v6301 = vsub.f32 %v6045, %v6173
        %v6302 = vsub.f32 %v6046, %v6174
        %v6303 = vsub.f32 %v6047, %v6175
        %v6304 = vsub.f32 %v6048, %v6176
        %v6305 = vsub.f32 %v6049, %v6177
        %v6306 = vsub.f32 %v6050, %v6178
        %v6307 = vsub.f32 %v6051, %v6179
        %v6308 = vsub.f32 %v6052, %v6180
        %v6309 = vsub.f32 %v6053, %v6181
        %v6310 = vsub.f32 %v6054, %v6182
        %v6311 = vsub.f32 %v6055, %v6183
        %v6312 = vsub.f32 %v6056, %v6184
        %v6313 = vsub.f32 %v6057, %v6185
        %v6314 = vsub.f32 %v6058, %v6186
        %v6315 = vsub.f32 %v6059, %v6187
        %v6316 = vsub.f32 %v6060, %v6188
        %v6317 = vsub.f32 %v6061, %v6189
        %v6318 = vsub.f32 %v6062, %v6190
        %v6319 = vsub.f32 %v6063, %v6191
        %v6320 = vsub.f32 %v6064, %v6192
        %v6321 = vsub.f32 %v6065, %v6193
        %v6322 = vsub.f32 %v6066, %v6194
        %v6323 = vsub.f32 %v6067, %v6195
        %v6324 = vsub.f32 %v6068, %v6196
        %v6325 = vsub.f32 %v6069, %v6197
        %v6326 = vsub.f32 %v6070, %v6198
        %v6327 = vsub.f32 %v6071, %v6199
        %v6328 = vsub.f32 %v6072, %v6200
        %v6329 = vsub.f32 %v6073, %v6201
        %v6330 = vsub.f32 %v6074, %v6202
        %v6331 = vsub.f32 %v6075, %v6203
        %v6332 = vsub.f32 %v6076, %v6204
        %v6333 = vsub.f32 %v6077, %v6205
        %v6334 = vsub.f32 %v6078, %v6206
        %v6335 = vsub.f32 %v6079, %v6207
        %v6336 = vsub.f32 %v6080, %v6208
        %v6337 = vsub.f32 %v6081, %v6209
        %v6338 = vsub.f32 %v6082, %v6210
        %v6339 = vsub.f32 %v6083, %v6211
        %v6340 = vsub.f32 %v6084, %v6212
        %v6341 = vsub.f32 %v6085, %v6213
        %v6342 = vsub.f32 %v6086, %v6214
        %v6343 = vsub.f32 %v6087, %v6215
        %v6344 = vsub.f32 %v6088, %v6216
        %v6345 = vsub.f32 %v6089, %v6217
        %v6346 = vsub.f32 %v6090, %v6218
        %v6347 = vsub.f32 %v6091, %v6219
        %v6348 = vsub.f32 %v6092, %v6220
        %v6349 = vsub.f32 %v6093, %v6221
        %v6350 = vsub.f32 %v6094, %v6222
        %v6351 = vsub.f32 %v6095, %v6223
        %v6352 = vsub.f32 %v6096, %v6224
        %v6353 = vsub.f32 %v6097, %v6225
        %v6354 = vsub.f32 %v6098, %v6226
        %v6355 = vsub.f32 %v6099, %v6227
        %v6356 = vsub.f32 %v6100, %v6228
        %v6357 = vsub.f32 %v6101, %v6229
        %v6358 = vsub.f32 %v6102, %v6230
        %v6359 = vsub.f32 %v6103, %v6231
        %v6360 = vsub.f32 %v6104, %v6232
        %v6361 = vsub.f32 %v6105, %v6233
        %v6362 = vsub.f32 %v6106, %v6234
        %v6363 = vsub.f32 %v6107, %v6235
        %v6364 = vsub.f32 %v6108, %v6236
        %v6365 = vsub.f32 %v6109, %v6237
        %v6366 = vsub.f32 %v6110, %v6238
        %v6367 = vsub.f32 %v6111, %v6239
        %v6368 = vsub.f32 %v6112, %v6240
        %v6369 = vsub.f32 %v6113, %v6241
        %v6370 = vsub.f32 %v6114, %v6242
        %v6371 = vsub.f32 %v6115, %v6243
        %v6372 = vsub.f32 %v6116, %v6244
        %v6373 = vsub.f32 %v6117, %v6245
        %v6374 = vsub.f32 %v6118, %v6246
        %v6375 = vsub.f32 %v6119, %v6247
        %v6376 = vsub.f32 %v6120, %v6248
        %v6377 = vsub.f32 %v6121, %v6249
        %v6378 = vsub.f32 %v6122, %v6250
        %v6379 = vsub.f32 %v6123, %v6251
        %v6380 = vsub.f32 %v6124, %v6252
        %v6381 = vsub.f32 %v6125, %v6253
        %v6382 = vsub.f32 %v6126, %v6254
        %v6383 = vsub.f32 %v6127, %v6255
        %v6384 = vsub.f32 %v6128, %v6256
        %v6385 = vsub.f32 %v6129, %v6257
        %v6386 = vsub.f32 %v6130, %v6258
        %v6387 = vsub.f32 %v6131, %v6259
        %v6388 = vsub.f32 %v6132, %v6260
        %v6389 = vsub.f32 %v6133, %v6261
        %v6390 = vsub.f32 %v6134, %v6262
        %v6391 = vsub.f32 %v6135, %v6263
        %v6392 = vsub.f32 %v6136, %v6264
        %v6393 = vsub.f32 %v6137, %v6265
        %v6394 = vsub.f32 %v6138, %v6266
        %v6395 = vsub.f32 %v6139, %v6267
        %v6396 = vsub.f32 %v6140, %v6268
        %v6397 = vsub.f32 %v6141, %v6269
        %v6398 = vsub.f32 %v6142, %v6270
        %v6399 = vsub.f32 %v6143, %v6271
        %v6400 = vsub.f32 %v6144, %v6272
        %v6401 = vsub.f32 %v6145, %v6273
        %v6402 = vsub.f32 %v6146, %v6274
        %v6403 = vsub.f32 %v6147, %v6275
        %v6404 = vsub.f32 %v6148, %v6276
        %v6405 = vsub.f32 %v6149, %v6277
        %v6406 = vsub.f32 %v6150, %v6278
        %v6407 = vsub.f32 %v6151, %v6279
        %v6408 = vsub.f32 %v6152, %v6280
        %v6409 = vsub.f32 %v6153, %v6281
        %v6410 = vsub.f32 %v6154, %v6282
        %v6411 = vsub.f32 %v6155, %v6283
        %v6412 = vsub.f32 %v6156, %v6284
        %v6413 = vsub.f32 %v6157, %v6285
        %v6414 = vsub.f32 %v6158, %v6286
        %v6415 = vsub.f32 %v6159, %v6287
        %v6416 = vsub.f32 %v6160, %v6288
        %v6417 = vsub.f32 %v6161, %v6289
        %v6418 = vsub.f32 %v6162, %v6290
        %v6419 = vsub.f32 %v6163, %v6291
        %v6420 = vsel %vm1451, %v6292, 0.0
        %v6421 = vsel %vm1451, %v6293, 0.0
        %v6422 = vadd.f32 %v6420, %v6421
        %v6423 = vsel %vm1451, %v6294, 0.0
        %v6424 = vadd.f32 %v6422, %v6423
        %v6425 = vsel %vm1451, %v6295, 0.0
        %v6426 = vadd.f32 %v6424, %v6425
        %v6427 = vrot.slane %v6426, 4
        %v6428 = vadd.f32 %v6426, %v6427
        %v6429 = vrot.slane %v6428, 2
        %v6430 = vadd.f32 %v6428, %v6429
        %v6431 = vrot.slane %v6430, 1
        %v6432 = vadd.f32 %v6430, %v6431
        %v6433 = vsel %vm1451, %v6296, 0.0
        %v6434 = vsel %vm1451, %v6297, 0.0
        %v6435 = vadd.f32 %v6433, %v6434
        %v6436 = vsel %vm1451, %v6298, 0.0
        %v6437 = vadd.f32 %v6435, %v6436
        %v6438 = vsel %vm1451, %v6299, 0.0
        %v6439 = vadd.f32 %v6437, %v6438
        %v6440 = vrot.slane %v6439, 4
        %v6441 = vadd.f32 %v6439, %v6440
        %v6442 = vrot.slane %v6441, 2
        %v6443 = vadd.f32 %v6441, %v6442
        %v6444 = vrot.slane %v6443, 1
        %v6445 = vadd.f32 %v6443, %v6444
        %v6446 = vsel %vm1451, %v6300, 0.0
        %v6447 = vsel %vm1451, %v6301, 0.0
        %v6448 = vadd.f32 %v6446, %v6447
        %v6449 = vsel %vm1451, %v6302, 0.0
        %v6450 = vadd.f32 %v6448, %v6449
        %v6451 = vsel %vm1451, %v6303, 0.0
        %v6452 = vadd.f32 %v6450, %v6451
        %v6453 = vrot.slane %v6452, 4
        %v6454 = vadd.f32 %v6452, %v6453
        %v6455 = vrot.slane %v6454, 2
        %v6456 = vadd.f32 %v6454, %v6455
        %v6457 = vrot.slane %v6456, 1
        %v6458 = vadd.f32 %v6456, %v6457
        %v6459 = vsel %vm1451, %v6304, 0.0
        %v6460 = vsel %vm1451, %v6305, 0.0
        %v6461 = vadd.f32 %v6459, %v6460
        %v6462 = vsel %vm1451, %v6306, 0.0
        %v6463 = vadd.f32 %v6461, %v6462
        %v6464 = vsel %vm1451, %v6307, 0.0
        %v6465 = vadd.f32 %v6463, %v6464
        %v6466 = vrot.slane %v6465, 4
        %v6467 = vadd.f32 %v6465, %v6466
        %v6468 = vrot.slane %v6467, 2
        %v6469 = vadd.f32 %v6467, %v6468
        %v6470 = vrot.slane %v6469, 1
        %v6471 = vadd.f32 %v6469, %v6470
        %v6472 = vsel %vm1451, %v6308, 0.0
        %v6473 = vsel %vm1451, %v6309, 0.0
        %v6474 = vadd.f32 %v6472, %v6473
        %v6475 = vsel %vm1451, %v6310, 0.0
        %v6476 = vadd.f32 %v6474, %v6475
        %v6477 = vsel %vm1451, %v6311, 0.0
        %v6478 = vadd.f32 %v6476, %v6477
        %v6479 = vrot.slane %v6478, 4
        %v6480 = vadd.f32 %v6478, %v6479
        %v6481 = vrot.slane %v6480, 2
        %v6482 = vadd.f32 %v6480, %v6481
        %v6483 = vrot.slane %v6482, 1
        %v6484 = vadd.f32 %v6482, %v6483
        %v6485 = vsel %vm1451, %v6312, 0.0
        %v6486 = vsel %vm1451, %v6313, 0.0
        %v6487 = vadd.f32 %v6485, %v6486
        %v6488 = vsel %vm1451, %v6314, 0.0
        %v6489 = vadd.f32 %v6487, %v6488
        %v6490 = vsel %vm1451, %v6315, 0.0
        %v6491 = vadd.f32 %v6489, %v6490
        %v6492 = vrot.slane %v6491, 4
        %v6493 = vadd.f32 %v6491, %v6492
        %v6494 = vrot.slane %v6493, 2
        %v6495 = vadd.f32 %v6493, %v6494
        %v6496 = vrot.slane %v6495, 1
        %v6497 = vadd.f32 %v6495, %v6496
        %v6498 = vsel %vm1451, %v6316, 0.0
        %v6499 = vsel %vm1451, %v6317, 0.0
        %v6500 = vadd.f32 %v6498, %v6499
        %v6501 = vsel %vm1451, %v6318, 0.0
        %v6502 = vadd.f32 %v6500, %v6501
        %v6503 = vsel %vm1451, %v6319, 0.0
        %v6504 = vadd.f32 %v6502, %v6503
        %v6505 = vrot.slane %v6504, 4
        %v6506 = vadd.f32 %v6504, %v6505
        %v6507 = vrot.slane %v6506, 2
        %v6508 = vadd.f32 %v6506, %v6507
        %v6509 = vrot.slane %v6508, 1
        %v6510 = vadd.f32 %v6508, %v6509
        %v6511 = vsel %vm1451, %v6320, 0.0
        %v6512 = vsel %vm1451, %v6321, 0.0
        %v6513 = vadd.f32 %v6511, %v6512
        %v6514 = vsel %vm1451, %v6322, 0.0
        %v6515 = vadd.f32 %v6513, %v6514
        %v6516 = vsel %vm1451, %v6323, 0.0
        %v6517 = vadd.f32 %v6515, %v6516
        %v6518 = vrot.slane %v6517, 4
        %v6519 = vadd.f32 %v6517, %v6518
        %v6520 = vrot.slane %v6519, 2
        %v6521 = vadd.f32 %v6519, %v6520
        %v6522 = vrot.slane %v6521, 1
        %v6523 = vadd.f32 %v6521, %v6522
        %v6524 = vsel %vm1451, %v6324, 0.0
        %v6525 = vsel %vm1451, %v6325, 0.0
        %v6526 = vadd.f32 %v6524, %v6525
        %v6527 = vsel %vm1451, %v6326, 0.0
        %v6528 = vadd.f32 %v6526, %v6527
        %v6529 = vsel %vm1451, %v6327, 0.0
        %v6530 = vadd.f32 %v6528, %v6529
        %v6531 = vrot.slane %v6530, 4
        %v6532 = vadd.f32 %v6530, %v6531
        %v6533 = vrot.slane %v6532, 2
        %v6534 = vadd.f32 %v6532, %v6533
        %v6535 = vrot.slane %v6534, 1
        %v6536 = vadd.f32 %v6534, %v6535
        %v6537 = vsel %vm1451, %v6328, 0.0
        %v6538 = vsel %vm1451, %v6329, 0.0
        %v6539 = vadd.f32 %v6537, %v6538
        %v6540 = vsel %vm1451, %v6330, 0.0
        %v6541 = vadd.f32 %v6539, %v6540
        %v6542 = vsel %vm1451, %v6331, 0.0
        %v6543 = vadd.f32 %v6541, %v6542
        %v6544 = vrot.slane %v6543, 4
        %v6545 = vadd.f32 %v6543, %v6544
        %v6546 = vrot.slane %v6545, 2
        %v6547 = vadd.f32 %v6545, %v6546
        %v6548 = vrot.slane %v6547, 1
        %v6549 = vadd.f32 %v6547, %v6548
        %v6550 = vsel %vm1451, %v6332, 0.0
        %v6551 = vsel %vm1451, %v6333, 0.0
        %v6552 = vadd.f32 %v6550, %v6551
        %v6553 = vsel %vm1451, %v6334, 0.0
        %v6554 = vadd.f32 %v6552, %v6553
        %v6555 = vsel %vm1451, %v6335, 0.0
        %v6556 = vadd.f32 %v6554, %v6555
        %v6557 = vrot.slane %v6556, 4
        %v6558 = vadd.f32 %v6556, %v6557
        %v6559 = vrot.slane %v6558, 2
        %v6560 = vadd.f32 %v6558, %v6559
        %v6561 = vrot.slane %v6560, 1
        %v6562 = vadd.f32 %v6560, %v6561
        %v6563 = vsel %vm1451, %v6336, 0.0
        %v6564 = vsel %vm1451, %v6337, 0.0
        %v6565 = vadd.f32 %v6563, %v6564
        %v6566 = vsel %vm1451, %v6338, 0.0
        %v6567 = vadd.f32 %v6565, %v6566
        %v6568 = vsel %vm1451, %v6339, 0.0
        %v6569 = vadd.f32 %v6567, %v6568
        %v6570 = vrot.slane %v6569, 4
        %v6571 = vadd.f32 %v6569, %v6570
        %v6572 = vrot.slane %v6571, 2
        %v6573 = vadd.f32 %v6571, %v6572
        %v6574 = vrot.slane %v6573, 1
        %v6575 = vadd.f32 %v6573, %v6574
        %v6576 = vsel %vm1451, %v6340, 0.0
        %v6577 = vsel %vm1451, %v6341, 0.0
        %v6578 = vadd.f32 %v6576, %v6577
        %v6579 = vsel %vm1451, %v6342, 0.0
        %v6580 = vadd.f32 %v6578, %v6579
        %v6581 = vsel %vm1451, %v6343, 0.0
        %v6582 = vadd.f32 %v6580, %v6581
        %v6583 = vrot.slane %v6582, 4
        %v6584 = vadd.f32 %v6582, %v6583
        %v6585 = vrot.slane %v6584, 2
        %v6586 = vadd.f32 %v6584, %v6585
        %v6587 = vrot.slane %v6586, 1
        %v6588 = vadd.f32 %v6586, %v6587
        %v6589 = vsel %vm1451, %v6344, 0.0
        %v6590 = vsel %vm1451, %v6345, 0.0
        %v6591 = vadd.f32 %v6589, %v6590
        %v6592 = vsel %vm1451, %v6346, 0.0
        %v6593 = vadd.f32 %v6591, %v6592
        %v6594 = vsel %vm1451, %v6347, 0.0
        %v6595 = vadd.f32 %v6593, %v6594
        %v6596 = vrot.slane %v6595, 4
        %v6597 = vadd.f32 %v6595, %v6596
        %v6598 = vrot.slane %v6597, 2
        %v6599 = vadd.f32 %v6597, %v6598
        %v6600 = vrot.slane %v6599, 1
        %v6601 = vadd.f32 %v6599, %v6600
        %v6602 = vsel %vm1451, %v6348, 0.0
        %v6603 = vsel %vm1451, %v6349, 0.0
        %v6604 = vadd.f32 %v6602, %v6603
        %v6605 = vsel %vm1451, %v6350, 0.0
        %v6606 = vadd.f32 %v6604, %v6605
        %v6607 = vsel %vm1451, %v6351, 0.0
        %v6608 = vadd.f32 %v6606, %v6607
        %v6609 = vrot.slane %v6608, 4
        %v6610 = vadd.f32 %v6608, %v6609
        %v6611 = vrot.slane %v6610, 2
        %v6612 = vadd.f32 %v6610, %v6611
        %v6613 = vrot.slane %v6612, 1
        %v6614 = vadd.f32 %v6612, %v6613
        %v6615 = vsel %vm1451, %v6352, 0.0
        %v6616 = vsel %vm1451, %v6353, 0.0
        %v6617 = vadd.f32 %v6615, %v6616
        %v6618 = vsel %vm1451, %v6354, 0.0
        %v6619 = vadd.f32 %v6617, %v6618
        %v6620 = vsel %vm1451, %v6355, 0.0
        %v6621 = vadd.f32 %v6619, %v6620
        %v6622 = vrot.slane %v6621, 4
        %v6623 = vadd.f32 %v6621, %v6622
        %v6624 = vrot.slane %v6623, 2
        %v6625 = vadd.f32 %v6623, %v6624
        %v6626 = vrot.slane %v6625, 1
        %v6627 = vadd.f32 %v6625, %v6626
        %v6628 = vsel %vm1451, %v6356, 0.0
        %v6629 = vsel %vm1451, %v6357, 0.0
        %v6630 = vadd.f32 %v6628, %v6629
        %v6631 = vsel %vm1451, %v6358, 0.0
        %v6632 = vadd.f32 %v6630, %v6631
        %v6633 = vsel %vm1451, %v6359, 0.0
        %v6634 = vadd.f32 %v6632, %v6633
        %v6635 = vrot.slane %v6634, 4
        %v6636 = vadd.f32 %v6634, %v6635
        %v6637 = vrot.slane %v6636, 2
        %v6638 = vadd.f32 %v6636, %v6637
        %v6639 = vrot.slane %v6638, 1
        %v6640 = vadd.f32 %v6638, %v6639
        %v6641 = vsel %vm1451, %v6360, 0.0
        %v6642 = vsel %vm1451, %v6361, 0.0
        %v6643 = vadd.f32 %v6641, %v6642
        %v6644 = vsel %vm1451, %v6362, 0.0
        %v6645 = vadd.f32 %v6643, %v6644
        %v6646 = vsel %vm1451, %v6363, 0.0
        %v6647 = vadd.f32 %v6645, %v6646
        %v6648 = vrot.slane %v6647, 4
        %v6649 = vadd.f32 %v6647, %v6648
        %v6650 = vrot.slane %v6649, 2
        %v6651 = vadd.f32 %v6649, %v6650
        %v6652 = vrot.slane %v6651, 1
        %v6653 = vadd.f32 %v6651, %v6652
        %v6654 = vsel %vm1451, %v6364, 0.0
        %v6655 = vsel %vm1451, %v6365, 0.0
        %v6656 = vadd.f32 %v6654, %v6655
        %v6657 = vsel %vm1451, %v6366, 0.0
        %v6658 = vadd.f32 %v6656, %v6657
        %v6659 = vsel %vm1451, %v6367, 0.0
        %v6660 = vadd.f32 %v6658, %v6659
        %v6661 = vrot.slane %v6660, 4
        %v6662 = vadd.f32 %v6660, %v6661
        %v6663 = vrot.slane %v6662, 2
        %v6664 = vadd.f32 %v6662, %v6663
        %v6665 = vrot.slane %v6664, 1
        %v6666 = vadd.f32 %v6664, %v6665
        %v6667 = vsel %vm1451, %v6368, 0.0
        %v6668 = vsel %vm1451, %v6369, 0.0
        %v6669 = vadd.f32 %v6667, %v6668
        %v6670 = vsel %vm1451, %v6370, 0.0
        %v6671 = vadd.f32 %v6669, %v6670
        %v6672 = vsel %vm1451, %v6371, 0.0
        %v6673 = vadd.f32 %v6671, %v6672
        %v6674 = vrot.slane %v6673, 4
        %v6675 = vadd.f32 %v6673, %v6674
        %v6676 = vrot.slane %v6675, 2
        %v6677 = vadd.f32 %v6675, %v6676
        %v6678 = vrot.slane %v6677, 1
        %v6679 = vadd.f32 %v6677, %v6678
        %v6680 = vsel %vm1451, %v6372, 0.0
        %v6681 = vsel %vm1451, %v6373, 0.0
        %v6682 = vadd.f32 %v6680, %v6681
        %v6683 = vsel %vm1451, %v6374, 0.0
        %v6684 = vadd.f32 %v6682, %v6683
        %v6685 = vsel %vm1451, %v6375, 0.0
        %v6686 = vadd.f32 %v6684, %v6685
        %v6687 = vrot.slane %v6686, 4
        %v6688 = vadd.f32 %v6686, %v6687
        %v6689 = vrot.slane %v6688, 2
        %v6690 = vadd.f32 %v6688, %v6689
        %v6691 = vrot.slane %v6690, 1
        %v6692 = vadd.f32 %v6690, %v6691
        %v6693 = vsel %vm1451, %v6376, 0.0
        %v6694 = vsel %vm1451, %v6377, 0.0
        %v6695 = vadd.f32 %v6693, %v6694
        %v6696 = vsel %vm1451, %v6378, 0.0
        %v6697 = vadd.f32 %v6695, %v6696
        %v6698 = vsel %vm1451, %v6379, 0.0
        %v6699 = vadd.f32 %v6697, %v6698
        %v6700 = vrot.slane %v6699, 4
        %v6701 = vadd.f32 %v6699, %v6700
        %v6702 = vrot.slane %v6701, 2
        %v6703 = vadd.f32 %v6701, %v6702
        %v6704 = vrot.slane %v6703, 1
        %v6705 = vadd.f32 %v6703, %v6704
        %v6706 = vsel %vm1451, %v6380, 0.0
        %v6707 = vsel %vm1451, %v6381, 0.0
        %v6708 = vadd.f32 %v6706, %v6707
        %v6709 = vsel %vm1451, %v6382, 0.0
        %v6710 = vadd.f32 %v6708, %v6709
        %v6711 = vsel %vm1451, %v6383, 0.0
        %v6712 = vadd.f32 %v6710, %v6711
        %v6713 = vrot.slane %v6712, 4
        %v6714 = vadd.f32 %v6712, %v6713
        %v6715 = vrot.slane %v6714, 2
        %v6716 = vadd.f32 %v6714, %v6715
        %v6717 = vrot.slane %v6716, 1
        %v6718 = vadd.f32 %v6716, %v6717
        %v6719 = vsel %vm1451, %v6384, 0.0
        %v6720 = vsel %vm1451, %v6385, 0.0
        %v6721 = vadd.f32 %v6719, %v6720
        %v6722 = vsel %vm1451, %v6386, 0.0
        %v6723 = vadd.f32 %v6721, %v6722
        %v6724 = vsel %vm1451, %v6387, 0.0
        %v6725 = vadd.f32 %v6723, %v6724
        %v6726 = vrot.slane %v6725, 4
        %v6727 = vadd.f32 %v6725, %v6726
        %v6728 = vrot.slane %v6727, 2
        %v6729 = vadd.f32 %v6727, %v6728
        %v6730 = vrot.slane %v6729, 1
        %v6731 = vadd.f32 %v6729, %v6730
        %v6732 = vsel %vm1451, %v6388, 0.0
        %v6733 = vsel %vm1451, %v6389, 0.0
        %v6734 = vadd.f32 %v6732, %v6733
        %v6735 = vsel %vm1451, %v6390, 0.0
        %v6736 = vadd.f32 %v6734, %v6735
        %v6737 = vsel %vm1451, %v6391, 0.0
        %v6738 = vadd.f32 %v6736, %v6737
        %v6739 = vrot.slane %v6738, 4
        %v6740 = vadd.f32 %v6738, %v6739
        %v6741 = vrot.slane %v6740, 2
        %v6742 = vadd.f32 %v6740, %v6741
        %v6743 = vrot.slane %v6742, 1
        %v6744 = vadd.f32 %v6742, %v6743
        %v6745 = vsel %vm1451, %v6392, 0.0
        %v6746 = vsel %vm1451, %v6393, 0.0
        %v6747 = vadd.f32 %v6745, %v6746
        %v6748 = vsel %vm1451, %v6394, 0.0
        %v6749 = vadd.f32 %v6747, %v6748
        %v6750 = vsel %vm1451, %v6395, 0.0
        %v6751 = vadd.f32 %v6749, %v6750
        %v6752 = vrot.slane %v6751, 4
        %v6753 = vadd.f32 %v6751, %v6752
        %v6754 = vrot.slane %v6753, 2
        %v6755 = vadd.f32 %v6753, %v6754
        %v6756 = vrot.slane %v6755, 1
        %v6757 = vadd.f32 %v6755, %v6756
        %v6758 = vsel %vm1451, %v6396, 0.0
        %v6759 = vsel %vm1451, %v6397, 0.0
        %v6760 = vadd.f32 %v6758, %v6759
        %v6761 = vsel %vm1451, %v6398, 0.0
        %v6762 = vadd.f32 %v6760, %v6761
        %v6763 = vsel %vm1451, %v6399, 0.0
        %v6764 = vadd.f32 %v6762, %v6763
        %v6765 = vrot.slane %v6764, 4
        %v6766 = vadd.f32 %v6764, %v6765
        %v6767 = vrot.slane %v6766, 2
        %v6768 = vadd.f32 %v6766, %v6767
        %v6769 = vrot.slane %v6768, 1
        %v6770 = vadd.f32 %v6768, %v6769
        %v6771 = vsel %vm1451, %v6400, 0.0
        %v6772 = vsel %vm1451, %v6401, 0.0
        %v6773 = vadd.f32 %v6771, %v6772
        %v6774 = vsel %vm1451, %v6402, 0.0
        %v6775 = vadd.f32 %v6773, %v6774
        %v6776 = vsel %vm1451, %v6403, 0.0
        %v6777 = vadd.f32 %v6775, %v6776
        %v6778 = vrot.slane %v6777, 4
        %v6779 = vadd.f32 %v6777, %v6778
        %v6780 = vrot.slane %v6779, 2
        %v6781 = vadd.f32 %v6779, %v6780
        %v6782 = vrot.slane %v6781, 1
        %v6783 = vadd.f32 %v6781, %v6782
        %v6784 = vsel %vm1451, %v6404, 0.0
        %v6785 = vsel %vm1451, %v6405, 0.0
        %v6786 = vadd.f32 %v6784, %v6785
        %v6787 = vsel %vm1451, %v6406, 0.0
        %v6788 = vadd.f32 %v6786, %v6787
        %v6789 = vsel %vm1451, %v6407, 0.0
        %v6790 = vadd.f32 %v6788, %v6789
        %v6791 = vrot.slane %v6790, 4
        %v6792 = vadd.f32 %v6790, %v6791
        %v6793 = vrot.slane %v6792, 2
        %v6794 = vadd.f32 %v6792, %v6793
        %v6795 = vrot.slane %v6794, 1
        %v6796 = vadd.f32 %v6794, %v6795
        %v6797 = vsel %vm1451, %v6408, 0.0
        %v6798 = vsel %vm1451, %v6409, 0.0
        %v6799 = vadd.f32 %v6797, %v6798
        %v6800 = vsel %vm1451, %v6410, 0.0
        %v6801 = vadd.f32 %v6799, %v6800
        %v6802 = vsel %vm1451, %v6411, 0.0
        %v6803 = vadd.f32 %v6801, %v6802
        %v6804 = vrot.slane %v6803, 4
        %v6805 = vadd.f32 %v6803, %v6804
        %v6806 = vrot.slane %v6805, 2
        %v6807 = vadd.f32 %v6805, %v6806
        %v6808 = vrot.slane %v6807, 1
        %v6809 = vadd.f32 %v6807, %v6808
        %v6810 = vsel %vm1451, %v6412, 0.0
        %v6811 = vsel %vm1451, %v6413, 0.0
        %v6812 = vadd.f32 %v6810, %v6811
        %v6813 = vsel %vm1451, %v6414, 0.0
        %v6814 = vadd.f32 %v6812, %v6813
        %v6815 = vsel %vm1451, %v6415, 0.0
        %v6816 = vadd.f32 %v6814, %v6815
        %v6817 = vrot.slane %v6816, 4
        %v6818 = vadd.f32 %v6816, %v6817
        %v6819 = vrot.slane %v6818, 2
        %v6820 = vadd.f32 %v6818, %v6819
        %v6821 = vrot.slane %v6820, 1
        %v6822 = vadd.f32 %v6820, %v6821
        %v6823 = vsel %vm1451, %v6416, 0.0
        %v6824 = vsel %vm1451, %v6417, 0.0
        %v6825 = vadd.f32 %v6823, %v6824
        %v6826 = vsel %vm1451, %v6418, 0.0
        %v6827 = vadd.f32 %v6825, %v6826
        %v6828 = vsel %vm1451, %v6419, 0.0
        %v6829 = vadd.f32 %v6827, %v6828
        %v6830 = vrot.slane %v6829, 4
        %v6831 = vadd.f32 %v6829, %v6830
        %v6832 = vrot.slane %v6831, 2
        %v6833 = vadd.f32 %v6831, %v6832
        %v6834 = vrot.slane %v6833, 1
        %v6835 = vadd.f32 %v6833, %v6834
        %v6836 = vmul.f32 %v5908, %v5675
        %v6837 = vmul.f32 %v5909, %v5680
        %v6838 = vmul.f32 %v5910, %v5685
        %v6839 = vmul.f32 %v5911, %v5690
        %v6840 = vmul.f32 %v5912, %v5675
        %v6841 = vmul.f32 %v5913, %v5680
        %v6842 = vmul.f32 %v5914, %v5685
        %v6843 = vmul.f32 %v5915, %v5690
        %v6844 = vmul.f32 %v5916, %v5675
        %v6845 = vmul.f32 %v5917, %v5680
        %v6846 = vmul.f32 %v5918, %v5685
        %v6847 = vmul.f32 %v5919, %v5690
        %v6848 = vmul.f32 %v5920, %v5675
        %v6849 = vmul.f32 %v5921, %v5680
        %v6850 = vmul.f32 %v5922, %v5685
        %v6851 = vmul.f32 %v5923, %v5690
        %v6852 = vmul.f32 %v5924, %v5675
        %v6853 = vmul.f32 %v5925, %v5680
        %v6854 = vmul.f32 %v5926, %v5685
        %v6855 = vmul.f32 %v5927, %v5690
        %v6856 = vmul.f32 %v5928, %v5675
        %v6857 = vmul.f32 %v5929, %v5680
        %v6858 = vmul.f32 %v5930, %v5685
        %v6859 = vmul.f32 %v5931, %v5690
        %v6860 = vmul.f32 %v5932, %v5675
        %v6861 = vmul.f32 %v5933, %v5680
        %v6862 = vmul.f32 %v5934, %v5685
        %v6863 = vmul.f32 %v5935, %v5690
        %v6864 = vmul.f32 %v5936, %v5675
        %v6865 = vmul.f32 %v5937, %v5680
        %v6866 = vmul.f32 %v5938, %v5685
        %v6867 = vmul.f32 %v5939, %v5690
        %v6868 = vmul.f32 %v5940, %v5675
        %v6869 = vmul.f32 %v5941, %v5680
        %v6870 = vmul.f32 %v5942, %v5685
        %v6871 = vmul.f32 %v5943, %v5690
        %v6872 = vmul.f32 %v5944, %v5675
        %v6873 = vmul.f32 %v5945, %v5680
        %v6874 = vmul.f32 %v5946, %v5685
        %v6875 = vmul.f32 %v5947, %v5690
        %v6876 = vmul.f32 %v5948, %v5675
        %v6877 = vmul.f32 %v5949, %v5680
        %v6878 = vmul.f32 %v5950, %v5685
        %v6879 = vmul.f32 %v5951, %v5690
        %v6880 = vmul.f32 %v5952, %v5675
        %v6881 = vmul.f32 %v5953, %v5680
        %v6882 = vmul.f32 %v5954, %v5685
        %v6883 = vmul.f32 %v5955, %v5690
        %v6884 = vmul.f32 %v5956, %v5675
        %v6885 = vmul.f32 %v5957, %v5680
        %v6886 = vmul.f32 %v5958, %v5685
        %v6887 = vmul.f32 %v5959, %v5690
        %v6888 = vmul.f32 %v5960, %v5675
        %v6889 = vmul.f32 %v5961, %v5680
        %v6890 = vmul.f32 %v5962, %v5685
        %v6891 = vmul.f32 %v5963, %v5690
        %v6892 = vmul.f32 %v5964, %v5675
        %v6893 = vmul.f32 %v5965, %v5680
        %v6894 = vmul.f32 %v5966, %v5685
        %v6895 = vmul.f32 %v5967, %v5690
        %v6896 = vmul.f32 %v5968, %v5675
        %v6897 = vmul.f32 %v5969, %v5680
        %v6898 = vmul.f32 %v5970, %v5685
        %v6899 = vmul.f32 %v5971, %v5690
        %v6900 = vmul.f32 %v5972, %v5675
        %v6901 = vmul.f32 %v5973, %v5680
        %v6902 = vmul.f32 %v5974, %v5685
        %v6903 = vmul.f32 %v5975, %v5690
        %v6904 = vmul.f32 %v5976, %v5675
        %v6905 = vmul.f32 %v5977, %v5680
        %v6906 = vmul.f32 %v5978, %v5685
        %v6907 = vmul.f32 %v5979, %v5690
        %v6908 = vmul.f32 %v5980, %v5675
        %v6909 = vmul.f32 %v5981, %v5680
        %v6910 = vmul.f32 %v5982, %v5685
        %v6911 = vmul.f32 %v5983, %v5690
        %v6912 = vmul.f32 %v5984, %v5675
        %v6913 = vmul.f32 %v5985, %v5680
        %v6914 = vmul.f32 %v5986, %v5685
        %v6915 = vmul.f32 %v5987, %v5690
        %v6916 = vmul.f32 %v5988, %v5675
        %v6917 = vmul.f32 %v5989, %v5680
        %v6918 = vmul.f32 %v5990, %v5685
        %v6919 = vmul.f32 %v5991, %v5690
        %v6920 = vmul.f32 %v5992, %v5675
        %v6921 = vmul.f32 %v5993, %v5680
        %v6922 = vmul.f32 %v5994, %v5685
        %v6923 = vmul.f32 %v5995, %v5690
        %v6924 = vmul.f32 %v5996, %v5675
        %v6925 = vmul.f32 %v5997, %v5680
        %v6926 = vmul.f32 %v5998, %v5685
        %v6927 = vmul.f32 %v5999, %v5690
        %v6928 = vmul.f32 %v6000, %v5675
        %v6929 = vmul.f32 %v6001, %v5680
        %v6930 = vmul.f32 %v6002, %v5685
        %v6931 = vmul.f32 %v6003, %v5690
        %v6932 = vmul.f32 %v6004, %v5675
        %v6933 = vmul.f32 %v6005, %v5680
        %v6934 = vmul.f32 %v6006, %v5685
        %v6935 = vmul.f32 %v6007, %v5690
        %v6936 = vmul.f32 %v6008, %v5675
        %v6937 = vmul.f32 %v6009, %v5680
        %v6938 = vmul.f32 %v6010, %v5685
        %v6939 = vmul.f32 %v6011, %v5690
        %v6940 = vmul.f32 %v6012, %v5675
        %v6941 = vmul.f32 %v6013, %v5680
        %v6942 = vmul.f32 %v6014, %v5685
        %v6943 = vmul.f32 %v6015, %v5690
        %v6944 = vmul.f32 %v6016, %v5675
        %v6945 = vmul.f32 %v6017, %v5680
        %v6946 = vmul.f32 %v6018, %v5685
        %v6947 = vmul.f32 %v6019, %v5690
        %v6948 = vmul.f32 %v6020, %v5675
        %v6949 = vmul.f32 %v6021, %v5680
        %v6950 = vmul.f32 %v6022, %v5685
        %v6951 = vmul.f32 %v6023, %v5690
        %v6952 = vmul.f32 %v6024, %v5675
        %v6953 = vmul.f32 %v6025, %v5680
        %v6954 = vmul.f32 %v6026, %v5685
        %v6955 = vmul.f32 %v6027, %v5690
        %v6956 = vmul.f32 %v6028, %v5675
        %v6957 = vmul.f32 %v6029, %v5680
        %v6958 = vmul.f32 %v6030, %v5685
        %v6959 = vmul.f32 %v6031, %v5690
        %v6960 = vmul.f32 %v6032, %v5675
        %v6961 = vmul.f32 %v6033, %v5680
        %v6962 = vmul.f32 %v6034, %v5685
        %v6963 = vmul.f32 %v6035, %v5690
        %v6964 = vmul.f32 %v5779, %v5760
        %v6965 = vmul.f32 %v5780, %v5765
        %v6966 = vmul.f32 %v5781, %v5770
        %v6967 = vmul.f32 %v5782, %v5775
        %v6968 = vmul.f32 %v5783, %v5760
        %v6969 = vmul.f32 %v5784, %v5765
        %v6970 = vmul.f32 %v5785, %v5770
        %v6971 = vmul.f32 %v5786, %v5775
        %v6972 = vmul.f32 %v5787, %v5760
        %v6973 = vmul.f32 %v5788, %v5765
        %v6974 = vmul.f32 %v5789, %v5770
        %v6975 = vmul.f32 %v5790, %v5775
        %v6976 = vmul.f32 %v5791, %v5760
        %v6977 = vmul.f32 %v5792, %v5765
        %v6978 = vmul.f32 %v5793, %v5770
        %v6979 = vmul.f32 %v5794, %v5775
        %v6980 = vmul.f32 %v5795, %v5760
        %v6981 = vmul.f32 %v5796, %v5765
        %v6982 = vmul.f32 %v5797, %v5770
        %v6983 = vmul.f32 %v5798, %v5775
        %v6984 = vmul.f32 %v5799, %v5760
        %v6985 = vmul.f32 %v5800, %v5765
        %v6986 = vmul.f32 %v5801, %v5770
        %v6987 = vmul.f32 %v5802, %v5775
        %v6988 = vmul.f32 %v5803, %v5760
        %v6989 = vmul.f32 %v5804, %v5765
        %v6990 = vmul.f32 %v5805, %v5770
        %v6991 = vmul.f32 %v5806, %v5775
        %v6992 = vmul.f32 %v5807, %v5760
        %v6993 = vmul.f32 %v5808, %v5765
        %v6994 = vmul.f32 %v5809, %v5770
        %v6995 = vmul.f32 %v5810, %v5775
        %v6996 = vmul.f32 %v5811, %v5760
        %v6997 = vmul.f32 %v5812, %v5765
        %v6998 = vmul.f32 %v5813, %v5770
        %v6999 = vmul.f32 %v5814, %v5775
        %v7000 = vmul.f32 %v5815, %v5760
        %v7001 = vmul.f32 %v5816, %v5765
        %v7002 = vmul.f32 %v5817, %v5770
        %v7003 = vmul.f32 %v5818, %v5775
        %v7004 = vmul.f32 %v5819, %v5760
        %v7005 = vmul.f32 %v5820, %v5765
        %v7006 = vmul.f32 %v5821, %v5770
        %v7007 = vmul.f32 %v5822, %v5775
        %v7008 = vmul.f32 %v5823, %v5760
        %v7009 = vmul.f32 %v5824, %v5765
        %v7010 = vmul.f32 %v5825, %v5770
        %v7011 = vmul.f32 %v5826, %v5775
        %v7012 = vmul.f32 %v5827, %v5760
        %v7013 = vmul.f32 %v5828, %v5765
        %v7014 = vmul.f32 %v5829, %v5770
        %v7015 = vmul.f32 %v5830, %v5775
        %v7016 = vmul.f32 %v5831, %v5760
        %v7017 = vmul.f32 %v5832, %v5765
        %v7018 = vmul.f32 %v5833, %v5770
        %v7019 = vmul.f32 %v5834, %v5775
        %v7020 = vmul.f32 %v5835, %v5760
        %v7021 = vmul.f32 %v5836, %v5765
        %v7022 = vmul.f32 %v5837, %v5770
        %v7023 = vmul.f32 %v5838, %v5775
        %v7024 = vmul.f32 %v5839, %v5760
        %v7025 = vmul.f32 %v5840, %v5765
        %v7026 = vmul.f32 %v5841, %v5770
        %v7027 = vmul.f32 %v5842, %v5775
        %v7028 = vmul.f32 %v5843, %v5760
        %v7029 = vmul.f32 %v5844, %v5765
        %v7030 = vmul.f32 %v5845, %v5770
        %v7031 = vmul.f32 %v5846, %v5775
        %v7032 = vmul.f32 %v5847, %v5760
        %v7033 = vmul.f32 %v5848, %v5765
        %v7034 = vmul.f32 %v5849, %v5770
        %v7035 = vmul.f32 %v5850, %v5775
        %v7036 = vmul.f32 %v5851, %v5760
        %v7037 = vmul.f32 %v5852, %v5765
        %v7038 = vmul.f32 %v5853, %v5770
        %v7039 = vmul.f32 %v5854, %v5775
        %v7040 = vmul.f32 %v5855, %v5760
        %v7041 = vmul.f32 %v5856, %v5765
        %v7042 = vmul.f32 %v5857, %v5770
        %v7043 = vmul.f32 %v5858, %v5775
        %v7044 = vmul.f32 %v5859, %v5760
        %v7045 = vmul.f32 %v5860, %v5765
        %v7046 = vmul.f32 %v5861, %v5770
        %v7047 = vmul.f32 %v5862, %v5775
        %v7048 = vmul.f32 %v5863, %v5760
        %v7049 = vmul.f32 %v5864, %v5765
        %v7050 = vmul.f32 %v5865, %v5770
        %v7051 = vmul.f32 %v5866, %v5775
        %v7052 = vmul.f32 %v5867, %v5760
        %v7053 = vmul.f32 %v5868, %v5765
        %v7054 = vmul.f32 %v5869, %v5770
        %v7055 = vmul.f32 %v5870, %v5775
        %v7056 = vmul.f32 %v5871, %v5760
        %v7057 = vmul.f32 %v5872, %v5765
        %v7058 = vmul.f32 %v5873, %v5770
        %v7059 = vmul.f32 %v5874, %v5775
        %v7060 = vmul.f32 %v5875, %v5760
        %v7061 = vmul.f32 %v5876, %v5765
        %v7062 = vmul.f32 %v5877, %v5770
        %v7063 = vmul.f32 %v5878, %v5775
        %v7064 = vmul.f32 %v5879, %v5760
        %v7065 = vmul.f32 %v5880, %v5765
        %v7066 = vmul.f32 %v5881, %v5770
        %v7067 = vmul.f32 %v5882, %v5775
        %v7068 = vmul.f32 %v5883, %v5760
        %v7069 = vmul.f32 %v5884, %v5765
        %v7070 = vmul.f32 %v5885, %v5770
        %v7071 = vmul.f32 %v5886, %v5775
        %v7072 = vmul.f32 %v5887, %v5760
        %v7073 = vmul.f32 %v5888, %v5765
        %v7074 = vmul.f32 %v5889, %v5770
        %v7075 = vmul.f32 %v5890, %v5775
        %v7076 = vmul.f32 %v5891, %v5760
        %v7077 = vmul.f32 %v5892, %v5765
        %v7078 = vmul.f32 %v5893, %v5770
        %v7079 = vmul.f32 %v5894, %v5775
        %v7080 = vmul.f32 %v5895, %v5760
        %v7081 = vmul.f32 %v5896, %v5765
        %v7082 = vmul.f32 %v5897, %v5770
        %v7083 = vmul.f32 %v5898, %v5775
        %v7084 = vmul.f32 %v5899, %v5760
        %v7085 = vmul.f32 %v5900, %v5765
        %v7086 = vmul.f32 %v5901, %v5770
        %v7087 = vmul.f32 %v5902, %v5775
        %v7088 = vmul.f32 %v5903, %v5760
        %v7089 = vmul.f32 %v5904, %v5765
        %v7090 = vmul.f32 %v5905, %v5770
        %v7091 = vmul.f32 %v5906, %v5775
        %v7092 = vadd.f32 %v6836, %v6964
        %v7093 = vadd.f32 %v6837, %v6965
        %v7094 = vadd.f32 %v6838, %v6966
        %v7095 = vadd.f32 %v6839, %v6967
        %v7096 = vadd.f32 %v6840, %v6968
        %v7097 = vadd.f32 %v6841, %v6969
        %v7098 = vadd.f32 %v6842, %v6970
        %v7099 = vadd.f32 %v6843, %v6971
        %v7100 = vadd.f32 %v6844, %v6972
        %v7101 = vadd.f32 %v6845, %v6973
        %v7102 = vadd.f32 %v6846, %v6974
        %v7103 = vadd.f32 %v6847, %v6975
        %v7104 = vadd.f32 %v6848, %v6976
        %v7105 = vadd.f32 %v6849, %v6977
        %v7106 = vadd.f32 %v6850, %v6978
        %v7107 = vadd.f32 %v6851, %v6979
        %v7108 = vadd.f32 %v6852, %v6980
        %v7109 = vadd.f32 %v6853, %v6981
        %v7110 = vadd.f32 %v6854, %v6982
        %v7111 = vadd.f32 %v6855, %v6983
        %v7112 = vadd.f32 %v6856, %v6984
        %v7113 = vadd.f32 %v6857, %v6985
        %v7114 = vadd.f32 %v6858, %v6986
        %v7115 = vadd.f32 %v6859, %v6987
        %v7116 = vadd.f32 %v6860, %v6988
        %v7117 = vadd.f32 %v6861, %v6989
        %v7118 = vadd.f32 %v6862, %v6990
        %v7119 = vadd.f32 %v6863, %v6991
        %v7120 = vadd.f32 %v6864, %v6992
        %v7121 = vadd.f32 %v6865, %v6993
        %v7122 = vadd.f32 %v6866, %v6994
        %v7123 = vadd.f32 %v6867, %v6995
        %v7124 = vadd.f32 %v6868, %v6996
        %v7125 = vadd.f32 %v6869, %v6997
        %v7126 = vadd.f32 %v6870, %v6998
        %v7127 = vadd.f32 %v6871, %v6999
        %v7128 = vadd.f32 %v6872, %v7000
        %v7129 = vadd.f32 %v6873, %v7001
        %v7130 = vadd.f32 %v6874, %v7002
        %v7131 = vadd.f32 %v6875, %v7003
        %v7132 = vadd.f32 %v6876, %v7004
        %v7133 = vadd.f32 %v6877, %v7005
        %v7134 = vadd.f32 %v6878, %v7006
        %v7135 = vadd.f32 %v6879, %v7007
        %v7136 = vadd.f32 %v6880, %v7008
        %v7137 = vadd.f32 %v6881, %v7009
        %v7138 = vadd.f32 %v6882, %v7010
        %v7139 = vadd.f32 %v6883, %v7011
        %v7140 = vadd.f32 %v6884, %v7012
        %v7141 = vadd.f32 %v6885, %v7013
        %v7142 = vadd.f32 %v6886, %v7014
        %v7143 = vadd.f32 %v6887, %v7015
        %v7144 = vadd.f32 %v6888, %v7016
        %v7145 = vadd.f32 %v6889, %v7017
        %v7146 = vadd.f32 %v6890, %v7018
        %v7147 = vadd.f32 %v6891, %v7019
        %v7148 = vadd.f32 %v6892, %v7020
        %v7149 = vadd.f32 %v6893, %v7021
        %v7150 = vadd.f32 %v6894, %v7022
        %v7151 = vadd.f32 %v6895, %v7023
        %v7152 = vadd.f32 %v6896, %v7024
        %v7153 = vadd.f32 %v6897, %v7025
        %v7154 = vadd.f32 %v6898, %v7026
        %v7155 = vadd.f32 %v6899, %v7027
        %v7156 = vadd.f32 %v6900, %v7028
        %v7157 = vadd.f32 %v6901, %v7029
        %v7158 = vadd.f32 %v6902, %v7030
        %v7159 = vadd.f32 %v6903, %v7031
        %v7160 = vadd.f32 %v6904, %v7032
        %v7161 = vadd.f32 %v6905, %v7033
        %v7162 = vadd.f32 %v6906, %v7034
        %v7163 = vadd.f32 %v6907, %v7035
        %v7164 = vadd.f32 %v6908, %v7036
        %v7165 = vadd.f32 %v6909, %v7037
        %v7166 = vadd.f32 %v6910, %v7038
        %v7167 = vadd.f32 %v6911, %v7039
        %v7168 = vadd.f32 %v6912, %v7040
        %v7169 = vadd.f32 %v6913, %v7041
        %v7170 = vadd.f32 %v6914, %v7042
        %v7171 = vadd.f32 %v6915, %v7043
        %v7172 = vadd.f32 %v6916, %v7044
        %v7173 = vadd.f32 %v6917, %v7045
        %v7174 = vadd.f32 %v6918, %v7046
        %v7175 = vadd.f32 %v6919, %v7047
        %v7176 = vadd.f32 %v6920, %v7048
        %v7177 = vadd.f32 %v6921, %v7049
        %v7178 = vadd.f32 %v6922, %v7050
        %v7179 = vadd.f32 %v6923, %v7051
        %v7180 = vadd.f32 %v6924, %v7052
        %v7181 = vadd.f32 %v6925, %v7053
        %v7182 = vadd.f32 %v6926, %v7054
        %v7183 = vadd.f32 %v6927, %v7055
        %v7184 = vadd.f32 %v6928, %v7056
        %v7185 = vadd.f32 %v6929, %v7057
        %v7186 = vadd.f32 %v6930, %v7058
        %v7187 = vadd.f32 %v6931, %v7059
        %v7188 = vadd.f32 %v6932, %v7060
        %v7189 = vadd.f32 %v6933, %v7061
        %v7190 = vadd.f32 %v6934, %v7062
        %v7191 = vadd.f32 %v6935, %v7063
        %v7192 = vadd.f32 %v6936, %v7064
        %v7193 = vadd.f32 %v6937, %v7065
        %v7194 = vadd.f32 %v6938, %v7066
        %v7195 = vadd.f32 %v6939, %v7067
        %v7196 = vadd.f32 %v6940, %v7068
        %v7197 = vadd.f32 %v6941, %v7069
        %v7198 = vadd.f32 %v6942, %v7070
        %v7199 = vadd.f32 %v6943, %v7071
        %v7200 = vadd.f32 %v6944, %v7072
        %v7201 = vadd.f32 %v6945, %v7073
        %v7202 = vadd.f32 %v6946, %v7074
        %v7203 = vadd.f32 %v6947, %v7075
        %v7204 = vadd.f32 %v6948, %v7076
        %v7205 = vadd.f32 %v6949, %v7077
        %v7206 = vadd.f32 %v6950, %v7078
        %v7207 = vadd.f32 %v6951, %v7079
        %v7208 = vadd.f32 %v6952, %v7080
        %v7209 = vadd.f32 %v6953, %v7081
        %v7210 = vadd.f32 %v6954, %v7082
        %v7211 = vadd.f32 %v6955, %v7083
        %v7212 = vadd.f32 %v6956, %v7084
        %v7213 = vadd.f32 %v6957, %v7085
        %v7214 = vadd.f32 %v6958, %v7086
        %v7215 = vadd.f32 %v6959, %v7087
        %v7216 = vadd.f32 %v6960, %v7088
        %v7217 = vadd.f32 %v6961, %v7089
        %v7218 = vadd.f32 %v6962, %v7090
        %v7219 = vadd.f32 %v6963, %v7091
        %v7220 = vsel %vm1451, %v7092, 0.0
        %v7221 = vsel %vm1451, %v7093, 0.0
        %v7222 = vadd.f32 %v7220, %v7221
        %v7223 = vsel %vm1451, %v7094, 0.0
        %v7224 = vadd.f32 %v7222, %v7223
        %v7225 = vsel %vm1451, %v7095, 0.0
        %v7226 = vadd.f32 %v7224, %v7225
        %v7227 = vrot.slane %v7226, 4
        %v7228 = vadd.f32 %v7226, %v7227
        %v7229 = vrot.slane %v7228, 2
        %v7230 = vadd.f32 %v7228, %v7229
        %v7231 = vrot.slane %v7230, 1
        %v7232 = vadd.f32 %v7230, %v7231
        %v7233 = vsel %vm1451, %v7096, 0.0
        %v7234 = vsel %vm1451, %v7097, 0.0
        %v7235 = vadd.f32 %v7233, %v7234
        %v7236 = vsel %vm1451, %v7098, 0.0
        %v7237 = vadd.f32 %v7235, %v7236
        %v7238 = vsel %vm1451, %v7099, 0.0
        %v7239 = vadd.f32 %v7237, %v7238
        %v7240 = vrot.slane %v7239, 4
        %v7241 = vadd.f32 %v7239, %v7240
        %v7242 = vrot.slane %v7241, 2
        %v7243 = vadd.f32 %v7241, %v7242
        %v7244 = vrot.slane %v7243, 1
        %v7245 = vadd.f32 %v7243, %v7244
        %v7246 = vsel %vm1451, %v7100, 0.0
        %v7247 = vsel %vm1451, %v7101, 0.0
        %v7248 = vadd.f32 %v7246, %v7247
        %v7249 = vsel %vm1451, %v7102, 0.0
        %v7250 = vadd.f32 %v7248, %v7249
        %v7251 = vsel %vm1451, %v7103, 0.0
        %v7252 = vadd.f32 %v7250, %v7251
        %v7253 = vrot.slane %v7252, 4
        %v7254 = vadd.f32 %v7252, %v7253
        %v7255 = vrot.slane %v7254, 2
        %v7256 = vadd.f32 %v7254, %v7255
        %v7257 = vrot.slane %v7256, 1
        %v7258 = vadd.f32 %v7256, %v7257
        %v7259 = vsel %vm1451, %v7104, 0.0
        %v7260 = vsel %vm1451, %v7105, 0.0
        %v7261 = vadd.f32 %v7259, %v7260
        %v7262 = vsel %vm1451, %v7106, 0.0
        %v7263 = vadd.f32 %v7261, %v7262
        %v7264 = vsel %vm1451, %v7107, 0.0
        %v7265 = vadd.f32 %v7263, %v7264
        %v7266 = vrot.slane %v7265, 4
        %v7267 = vadd.f32 %v7265, %v7266
        %v7268 = vrot.slane %v7267, 2
        %v7269 = vadd.f32 %v7267, %v7268
        %v7270 = vrot.slane %v7269, 1
        %v7271 = vadd.f32 %v7269, %v7270
        %v7272 = vsel %vm1451, %v7108, 0.0
        %v7273 = vsel %vm1451, %v7109, 0.0
        %v7274 = vadd.f32 %v7272, %v7273
        %v7275 = vsel %vm1451, %v7110, 0.0
        %v7276 = vadd.f32 %v7274, %v7275
        %v7277 = vsel %vm1451, %v7111, 0.0
        %v7278 = vadd.f32 %v7276, %v7277
        %v7279 = vrot.slane %v7278, 4
        %v7280 = vadd.f32 %v7278, %v7279
        %v7281 = vrot.slane %v7280, 2
        %v7282 = vadd.f32 %v7280, %v7281
        %v7283 = vrot.slane %v7282, 1
        %v7284 = vadd.f32 %v7282, %v7283
        %v7285 = vsel %vm1451, %v7112, 0.0
        %v7286 = vsel %vm1451, %v7113, 0.0
        %v7287 = vadd.f32 %v7285, %v7286
        %v7288 = vsel %vm1451, %v7114, 0.0
        %v7289 = vadd.f32 %v7287, %v7288
        %v7290 = vsel %vm1451, %v7115, 0.0
        %v7291 = vadd.f32 %v7289, %v7290
        %v7292 = vrot.slane %v7291, 4
        %v7293 = vadd.f32 %v7291, %v7292
        %v7294 = vrot.slane %v7293, 2
        %v7295 = vadd.f32 %v7293, %v7294
        %v7296 = vrot.slane %v7295, 1
        %v7297 = vadd.f32 %v7295, %v7296
        %v7298 = vsel %vm1451, %v7116, 0.0
        %v7299 = vsel %vm1451, %v7117, 0.0
        %v7300 = vadd.f32 %v7298, %v7299
        %v7301 = vsel %vm1451, %v7118, 0.0
        %v7302 = vadd.f32 %v7300, %v7301
        %v7303 = vsel %vm1451, %v7119, 0.0
        %v7304 = vadd.f32 %v7302, %v7303
        %v7305 = vrot.slane %v7304, 4
        %v7306 = vadd.f32 %v7304, %v7305
        %v7307 = vrot.slane %v7306, 2
        %v7308 = vadd.f32 %v7306, %v7307
        %v7309 = vrot.slane %v7308, 1
        %v7310 = vadd.f32 %v7308, %v7309
        %v7311 = vsel %vm1451, %v7120, 0.0
        %v7312 = vsel %vm1451, %v7121, 0.0
        %v7313 = vadd.f32 %v7311, %v7312
        %v7314 = vsel %vm1451, %v7122, 0.0
        %v7315 = vadd.f32 %v7313, %v7314
        %v7316 = vsel %vm1451, %v7123, 0.0
        %v7317 = vadd.f32 %v7315, %v7316
        %v7318 = vrot.slane %v7317, 4
        %v7319 = vadd.f32 %v7317, %v7318
        %v7320 = vrot.slane %v7319, 2
        %v7321 = vadd.f32 %v7319, %v7320
        %v7322 = vrot.slane %v7321, 1
        %v7323 = vadd.f32 %v7321, %v7322
        %v7324 = vsel %vm1451, %v7124, 0.0
        %v7325 = vsel %vm1451, %v7125, 0.0
        %v7326 = vadd.f32 %v7324, %v7325
        %v7327 = vsel %vm1451, %v7126, 0.0
        %v7328 = vadd.f32 %v7326, %v7327
        %v7329 = vsel %vm1451, %v7127, 0.0
        %v7330 = vadd.f32 %v7328, %v7329
        %v7331 = vrot.slane %v7330, 4
        %v7332 = vadd.f32 %v7330, %v7331
        %v7333 = vrot.slane %v7332, 2
        %v7334 = vadd.f32 %v7332, %v7333
        %v7335 = vrot.slane %v7334, 1
        %v7336 = vadd.f32 %v7334, %v7335
        %v7337 = vsel %vm1451, %v7128, 0.0
        %v7338 = vsel %vm1451, %v7129, 0.0
        %v7339 = vadd.f32 %v7337, %v7338
        %v7340 = vsel %vm1451, %v7130, 0.0
        %v7341 = vadd.f32 %v7339, %v7340
        %v7342 = vsel %vm1451, %v7131, 0.0
        %v7343 = vadd.f32 %v7341, %v7342
        %v7344 = vrot.slane %v7343, 4
        %v7345 = vadd.f32 %v7343, %v7344
        %v7346 = vrot.slane %v7345, 2
        %v7347 = vadd.f32 %v7345, %v7346
        %v7348 = vrot.slane %v7347, 1
        %v7349 = vadd.f32 %v7347, %v7348
        %v7350 = vsel %vm1451, %v7132, 0.0
        %v7351 = vsel %vm1451, %v7133, 0.0
        %v7352 = vadd.f32 %v7350, %v7351
        %v7353 = vsel %vm1451, %v7134, 0.0
        %v7354 = vadd.f32 %v7352, %v7353
        %v7355 = vsel %vm1451, %v7135, 0.0
        %v7356 = vadd.f32 %v7354, %v7355
        %v7357 = vrot.slane %v7356, 4
        %v7358 = vadd.f32 %v7356, %v7357
        %v7359 = vrot.slane %v7358, 2
        %v7360 = vadd.f32 %v7358, %v7359
        %v7361 = vrot.slane %v7360, 1
        %v7362 = vadd.f32 %v7360, %v7361
        %v7363 = vsel %vm1451, %v7136, 0.0
        %v7364 = vsel %vm1451, %v7137, 0.0
        %v7365 = vadd.f32 %v7363, %v7364
        %v7366 = vsel %vm1451, %v7138, 0.0
        %v7367 = vadd.f32 %v7365, %v7366
        %v7368 = vsel %vm1451, %v7139, 0.0
        %v7369 = vadd.f32 %v7367, %v7368
        %v7370 = vrot.slane %v7369, 4
        %v7371 = vadd.f32 %v7369, %v7370
        %v7372 = vrot.slane %v7371, 2
        %v7373 = vadd.f32 %v7371, %v7372
        %v7374 = vrot.slane %v7373, 1
        %v7375 = vadd.f32 %v7373, %v7374
        %v7376 = vsel %vm1451, %v7140, 0.0
        %v7377 = vsel %vm1451, %v7141, 0.0
        %v7378 = vadd.f32 %v7376, %v7377
        %v7379 = vsel %vm1451, %v7142, 0.0
        %v7380 = vadd.f32 %v7378, %v7379
        %v7381 = vsel %vm1451, %v7143, 0.0
        %v7382 = vadd.f32 %v7380, %v7381
        %v7383 = vrot.slane %v7382, 4
        %v7384 = vadd.f32 %v7382, %v7383
        %v7385 = vrot.slane %v7384, 2
        %v7386 = vadd.f32 %v7384, %v7385
        %v7387 = vrot.slane %v7386, 1
        %v7388 = vadd.f32 %v7386, %v7387
        %v7389 = vsel %vm1451, %v7144, 0.0
        %v7390 = vsel %vm1451, %v7145, 0.0
        %v7391 = vadd.f32 %v7389, %v7390
        %v7392 = vsel %vm1451, %v7146, 0.0
        %v7393 = vadd.f32 %v7391, %v7392
        %v7394 = vsel %vm1451, %v7147, 0.0
        %v7395 = vadd.f32 %v7393, %v7394
        %v7396 = vrot.slane %v7395, 4
        %v7397 = vadd.f32 %v7395, %v7396
        %v7398 = vrot.slane %v7397, 2
        %v7399 = vadd.f32 %v7397, %v7398
        %v7400 = vrot.slane %v7399, 1
        %v7401 = vadd.f32 %v7399, %v7400
        %v7402 = vsel %vm1451, %v7148, 0.0
        %v7403 = vsel %vm1451, %v7149, 0.0
        %v7404 = vadd.f32 %v7402, %v7403
        %v7405 = vsel %vm1451, %v7150, 0.0
        %v7406 = vadd.f32 %v7404, %v7405
        %v7407 = vsel %vm1451, %v7151, 0.0
        %v7408 = vadd.f32 %v7406, %v7407
        %v7409 = vrot.slane %v7408, 4
        %v7410 = vadd.f32 %v7408, %v7409
        %v7411 = vrot.slane %v7410, 2
        %v7412 = vadd.f32 %v7410, %v7411
        %v7413 = vrot.slane %v7412, 1
        %v7414 = vadd.f32 %v7412, %v7413
        %v7415 = vsel %vm1451, %v7152, 0.0
        %v7416 = vsel %vm1451, %v7153, 0.0
        %v7417 = vadd.f32 %v7415, %v7416
        %v7418 = vsel %vm1451, %v7154, 0.0
        %v7419 = vadd.f32 %v7417, %v7418
        %v7420 = vsel %vm1451, %v7155, 0.0
        %v7421 = vadd.f32 %v7419, %v7420
        %v7422 = vrot.slane %v7421, 4
        %v7423 = vadd.f32 %v7421, %v7422
        %v7424 = vrot.slane %v7423, 2
        %v7425 = vadd.f32 %v7423, %v7424
        %v7426 = vrot.slane %v7425, 1
        %v7427 = vadd.f32 %v7425, %v7426
        %v7428 = vsel %vm1451, %v7156, 0.0
        %v7429 = vsel %vm1451, %v7157, 0.0
        %v7430 = vadd.f32 %v7428, %v7429
        %v7431 = vsel %vm1451, %v7158, 0.0
        %v7432 = vadd.f32 %v7430, %v7431
        %v7433 = vsel %vm1451, %v7159, 0.0
        %v7434 = vadd.f32 %v7432, %v7433
        %v7435 = vrot.slane %v7434, 4
        %v7436 = vadd.f32 %v7434, %v7435
        %v7437 = vrot.slane %v7436, 2
        %v7438 = vadd.f32 %v7436, %v7437
        %v7439 = vrot.slane %v7438, 1
        %v7440 = vadd.f32 %v7438, %v7439
        %v7441 = vsel %vm1451, %v7160, 0.0
        %v7442 = vsel %vm1451, %v7161, 0.0
        %v7443 = vadd.f32 %v7441, %v7442
        %v7444 = vsel %vm1451, %v7162, 0.0
        %v7445 = vadd.f32 %v7443, %v7444
        %v7446 = vsel %vm1451, %v7163, 0.0
        %v7447 = vadd.f32 %v7445, %v7446
        %v7448 = vrot.slane %v7447, 4
        %v7449 = vadd.f32 %v7447, %v7448
        %v7450 = vrot.slane %v7449, 2
        %v7451 = vadd.f32 %v7449, %v7450
        %v7452 = vrot.slane %v7451, 1
        %v7453 = vadd.f32 %v7451, %v7452
        %v7454 = vsel %vm1451, %v7164, 0.0
        %v7455 = vsel %vm1451, %v7165, 0.0
        %v7456 = vadd.f32 %v7454, %v7455
        %v7457 = vsel %vm1451, %v7166, 0.0
        %v7458 = vadd.f32 %v7456, %v7457
        %v7459 = vsel %vm1451, %v7167, 0.0
        %v7460 = vadd.f32 %v7458, %v7459
        %v7461 = vrot.slane %v7460, 4
        %v7462 = vadd.f32 %v7460, %v7461
        %v7463 = vrot.slane %v7462, 2
        %v7464 = vadd.f32 %v7462, %v7463
        %v7465 = vrot.slane %v7464, 1
        %v7466 = vadd.f32 %v7464, %v7465
        %v7467 = vsel %vm1451, %v7168, 0.0
        %v7468 = vsel %vm1451, %v7169, 0.0
        %v7469 = vadd.f32 %v7467, %v7468
        %v7470 = vsel %vm1451, %v7170, 0.0
        %v7471 = vadd.f32 %v7469, %v7470
        %v7472 = vsel %vm1451, %v7171, 0.0
        %v7473 = vadd.f32 %v7471, %v7472
        %v7474 = vrot.slane %v7473, 4
        %v7475 = vadd.f32 %v7473, %v7474
        %v7476 = vrot.slane %v7475, 2
        %v7477 = vadd.f32 %v7475, %v7476
        %v7478 = vrot.slane %v7477, 1
        %v7479 = vadd.f32 %v7477, %v7478
        %v7480 = vsel %vm1451, %v7172, 0.0
        %v7481 = vsel %vm1451, %v7173, 0.0
        %v7482 = vadd.f32 %v7480, %v7481
        %v7483 = vsel %vm1451, %v7174, 0.0
        %v7484 = vadd.f32 %v7482, %v7483
        %v7485 = vsel %vm1451, %v7175, 0.0
        %v7486 = vadd.f32 %v7484, %v7485
        %v7487 = vrot.slane %v7486, 4
        %v7488 = vadd.f32 %v7486, %v7487
        %v7489 = vrot.slane %v7488, 2
        %v7490 = vadd.f32 %v7488, %v7489
        %v7491 = vrot.slane %v7490, 1
        %v7492 = vadd.f32 %v7490, %v7491
        %v7493 = vsel %vm1451, %v7176, 0.0
        %v7494 = vsel %vm1451, %v7177, 0.0
        %v7495 = vadd.f32 %v7493, %v7494
        %v7496 = vsel %vm1451, %v7178, 0.0
        %v7497 = vadd.f32 %v7495, %v7496
        %v7498 = vsel %vm1451, %v7179, 0.0
        %v7499 = vadd.f32 %v7497, %v7498
        %v7500 = vrot.slane %v7499, 4
        %v7501 = vadd.f32 %v7499, %v7500
        %v7502 = vrot.slane %v7501, 2
        %v7503 = vadd.f32 %v7501, %v7502
        %v7504 = vrot.slane %v7503, 1
        %v7505 = vadd.f32 %v7503, %v7504
        %v7506 = vsel %vm1451, %v7180, 0.0
        %v7507 = vsel %vm1451, %v7181, 0.0
        %v7508 = vadd.f32 %v7506, %v7507
        %v7509 = vsel %vm1451, %v7182, 0.0
        %v7510 = vadd.f32 %v7508, %v7509
        %v7511 = vsel %vm1451, %v7183, 0.0
        %v7512 = vadd.f32 %v7510, %v7511
        %v7513 = vrot.slane %v7512, 4
        %v7514 = vadd.f32 %v7512, %v7513
        %v7515 = vrot.slane %v7514, 2
        %v7516 = vadd.f32 %v7514, %v7515
        %v7517 = vrot.slane %v7516, 1
        %v7518 = vadd.f32 %v7516, %v7517
        %v7519 = vsel %vm1451, %v7184, 0.0
        %v7520 = vsel %vm1451, %v7185, 0.0
        %v7521 = vadd.f32 %v7519, %v7520
        %v7522 = vsel %vm1451, %v7186, 0.0
        %v7523 = vadd.f32 %v7521, %v7522
        %v7524 = vsel %vm1451, %v7187, 0.0
        %v7525 = vadd.f32 %v7523, %v7524
        %v7526 = vrot.slane %v7525, 4
        %v7527 = vadd.f32 %v7525, %v7526
        %v7528 = vrot.slane %v7527, 2
        %v7529 = vadd.f32 %v7527, %v7528
        %v7530 = vrot.slane %v7529, 1
        %v7531 = vadd.f32 %v7529, %v7530
        %v7532 = vsel %vm1451, %v7188, 0.0
        %v7533 = vsel %vm1451, %v7189, 0.0
        %v7534 = vadd.f32 %v7532, %v7533
        %v7535 = vsel %vm1451, %v7190, 0.0
        %v7536 = vadd.f32 %v7534, %v7535
        %v7537 = vsel %vm1451, %v7191, 0.0
        %v7538 = vadd.f32 %v7536, %v7537
        %v7539 = vrot.slane %v7538, 4
        %v7540 = vadd.f32 %v7538, %v7539
        %v7541 = vrot.slane %v7540, 2
        %v7542 = vadd.f32 %v7540, %v7541
        %v7543 = vrot.slane %v7542, 1
        %v7544 = vadd.f32 %v7542, %v7543
        %v7545 = vsel %vm1451, %v7192, 0.0
        %v7546 = vsel %vm1451, %v7193, 0.0
        %v7547 = vadd.f32 %v7545, %v7546
        %v7548 = vsel %vm1451, %v7194, 0.0
        %v7549 = vadd.f32 %v7547, %v7548
        %v7550 = vsel %vm1451, %v7195, 0.0
        %v7551 = vadd.f32 %v7549, %v7550
        %v7552 = vrot.slane %v7551, 4
        %v7553 = vadd.f32 %v7551, %v7552
        %v7554 = vrot.slane %v7553, 2
        %v7555 = vadd.f32 %v7553, %v7554
        %v7556 = vrot.slane %v7555, 1
        %v7557 = vadd.f32 %v7555, %v7556
        %v7558 = vsel %vm1451, %v7196, 0.0
        %v7559 = vsel %vm1451, %v7197, 0.0
        %v7560 = vadd.f32 %v7558, %v7559
        %v7561 = vsel %vm1451, %v7198, 0.0
        %v7562 = vadd.f32 %v7560, %v7561
        %v7563 = vsel %vm1451, %v7199, 0.0
        %v7564 = vadd.f32 %v7562, %v7563
        %v7565 = vrot.slane %v7564, 4
        %v7566 = vadd.f32 %v7564, %v7565
        %v7567 = vrot.slane %v7566, 2
        %v7568 = vadd.f32 %v7566, %v7567
        %v7569 = vrot.slane %v7568, 1
        %v7570 = vadd.f32 %v7568, %v7569
        %v7571 = vsel %vm1451, %v7200, 0.0
        %v7572 = vsel %vm1451, %v7201, 0.0
        %v7573 = vadd.f32 %v7571, %v7572
        %v7574 = vsel %vm1451, %v7202, 0.0
        %v7575 = vadd.f32 %v7573, %v7574
        %v7576 = vsel %vm1451, %v7203, 0.0
        %v7577 = vadd.f32 %v7575, %v7576
        %v7578 = vrot.slane %v7577, 4
        %v7579 = vadd.f32 %v7577, %v7578
        %v7580 = vrot.slane %v7579, 2
        %v7581 = vadd.f32 %v7579, %v7580
        %v7582 = vrot.slane %v7581, 1
        %v7583 = vadd.f32 %v7581, %v7582
        %v7584 = vsel %vm1451, %v7204, 0.0
        %v7585 = vsel %vm1451, %v7205, 0.0
        %v7586 = vadd.f32 %v7584, %v7585
        %v7587 = vsel %vm1451, %v7206, 0.0
        %v7588 = vadd.f32 %v7586, %v7587
        %v7589 = vsel %vm1451, %v7207, 0.0
        %v7590 = vadd.f32 %v7588, %v7589
        %v7591 = vrot.slane %v7590, 4
        %v7592 = vadd.f32 %v7590, %v7591
        %v7593 = vrot.slane %v7592, 2
        %v7594 = vadd.f32 %v7592, %v7593
        %v7595 = vrot.slane %v7594, 1
        %v7596 = vadd.f32 %v7594, %v7595
        %v7597 = vsel %vm1451, %v7208, 0.0
        %v7598 = vsel %vm1451, %v7209, 0.0
        %v7599 = vadd.f32 %v7597, %v7598
        %v7600 = vsel %vm1451, %v7210, 0.0
        %v7601 = vadd.f32 %v7599, %v7600
        %v7602 = vsel %vm1451, %v7211, 0.0
        %v7603 = vadd.f32 %v7601, %v7602
        %v7604 = vrot.slane %v7603, 4
        %v7605 = vadd.f32 %v7603, %v7604
        %v7606 = vrot.slane %v7605, 2
        %v7607 = vadd.f32 %v7605, %v7606
        %v7608 = vrot.slane %v7607, 1
        %v7609 = vadd.f32 %v7607, %v7608
        %v7610 = vsel %vm1451, %v7212, 0.0
        %v7611 = vsel %vm1451, %v7213, 0.0
        %v7612 = vadd.f32 %v7610, %v7611
        %v7613 = vsel %vm1451, %v7214, 0.0
        %v7614 = vadd.f32 %v7612, %v7613
        %v7615 = vsel %vm1451, %v7215, 0.0
        %v7616 = vadd.f32 %v7614, %v7615
        %v7617 = vrot.slane %v7616, 4
        %v7618 = vadd.f32 %v7616, %v7617
        %v7619 = vrot.slane %v7618, 2
        %v7620 = vadd.f32 %v7618, %v7619
        %v7621 = vrot.slane %v7620, 1
        %v7622 = vadd.f32 %v7620, %v7621
        %v7623 = vsel %vm1451, %v7216, 0.0
        %v7624 = vsel %vm1451, %v7217, 0.0
        %v7625 = vadd.f32 %v7623, %v7624
        %v7626 = vsel %vm1451, %v7218, 0.0
        %v7627 = vadd.f32 %v7625, %v7626
        %v7628 = vsel %vm1451, %v7219, 0.0
        %v7629 = vadd.f32 %v7627, %v7628
        %v7630 = vrot.slane %v7629, 4
        %v7631 = vadd.f32 %v7629, %v7630
        %v7632 = vrot.slane %v7631, 2
        %v7633 = vadd.f32 %v7631, %v7632
        %v7634 = vrot.slane %v7633, 1
        %v7635 = vadd.f32 %v7633, %v7634
        %v7668 = vsel %vm2700, %v7245, %v7232
        %v7669 = vsel %vm2702, %v7258, %v7668
        %v7670 = vsel %vm2704, %v7271, %v7669
        %v7671 = vsel %vm2706, %v7284, %v7670
        %v7672 = vsel %vm2708, %v7297, %v7671
        %v7673 = vsel %vm2710, %v7310, %v7672
        %v7674 = vsel %vm2712, %v7323, %v7673
        %v7675 = vsel %vm2700, %v7349, %v7336
        %v7676 = vsel %vm2702, %v7362, %v7675
        %v7677 = vsel %vm2704, %v7375, %v7676
        %v7678 = vsel %vm2706, %v7388, %v7677
        %v7679 = vsel %vm2708, %v7401, %v7678
        %v7680 = vsel %vm2710, %v7414, %v7679
        %v7681 = vsel %vm2712, %v7427, %v7680
        %v7682 = vsel %vm2700, %v7453, %v7440
        %v7683 = vsel %vm2702, %v7466, %v7682
        %v7684 = vsel %vm2704, %v7479, %v7683
        %v7685 = vsel %vm2706, %v7492, %v7684
        %v7686 = vsel %vm2708, %v7505, %v7685
        %v7687 = vsel %vm2710, %v7518, %v7686
        %v7688 = vsel %vm2712, %v7531, %v7687
        %v7689 = vsel %vm2700, %v7557, %v7544
        %v7690 = vsel %vm2702, %v7570, %v7689
        %v7691 = vsel %vm2704, %v7583, %v7690
        %v7692 = vsel %vm2706, %v7596, %v7691
        %v7693 = vsel %vm2708, %v7609, %v7692
        %v7694 = vsel %vm2710, %v7622, %v7693
        %v7695 = vsel %vm2712, %v7635, %v7694
        %v7696 = vsel %vm1451, %v7674, 0
        %v7698 = vsel %vm1451, %v7681, 0
        %v7700 = vsel %vm1451, %v7688, 0
        %v7702 = vsel %vm1451, %v7695, 0
        %7704 = vmatprep.subr.mxu0 0.0
        %7705 = vmatpush1.msra.mxu0 %v627
        %7706 = vmatprep.subr.mxu0 0.0
        %7707 = vmatpush1.msra.mxu0 0.0
        %7708 = vmatprep.subr.mxu0 0.0
        %7709 = vmatpush1.msra.mxu0 0.0
        %7710 = vmatprep.subr.mxu0 0.0
        %7711 = vmatpush1.msra.mxu0 0.0
        %7712 = vmatprep.subr.mxu0 0.0
        %7713 = vmatpush1.msra.mxu0 0.0
        %7714 = vmatprep.subr.mxu0 0.0
        %7715 = vmatpush1.msra.mxu0 0.0
        %7716 = vmatprep.subr.mxu0 0.0
        %7717 = vmatpush1.msra.mxu0 0.0
        %7718 = vmatprep.subr.mxu0 0.0
        %7719 = vmatpush1.msra.mxu0 0.0
        %7720 = vmatprep.subr.mxu0 0.0
        %7721 = vmatpush1.msra.mxu0 0.0
        %7722 = vmatprep.subr.mxu0 0.0
        %7723 = vmatpush1.msra.mxu0 0.0
        %7724 = vmatprep.subr.mxu0 0.0
        %7725 = vmatpush1.msra.mxu0 0.0
        %7726 = vmatprep.subr.mxu0 0.0
        %7727 = vmatpush1.msra.mxu0 0.0
        %7728 = vmatprep.subr.mxu0 0.0
        %7729 = vmatpush1.msra.mxu0 0.0
        %7730 = vmatprep.subr.mxu0 0.0
        %7731 = vmatpush1.msra.mxu0 0.0
        %7732 = vmatprep.subr.mxu0 0.0
        %7733 = vmatpush1.msra.mxu0 0.0
        %7734 = vmatprep.subr.mxu0 0.0
        %7735 = vmatpush1.msra.mxu0 0.0
        %7736 = vmatprep.subr.mxu0 0.0
        %7737 = vmatpush1.msra.mxu0 0.0
        %7738 = vmatprep.subr.mxu0 0.0
        %7739 = vmatpush1.msra.mxu0 0.0
        %7740 = vmatprep.subr.mxu0 0.0
        %7741 = vmatpush1.msra.mxu0 0.0
        %7742 = vmatprep.subr.mxu0 0.0
        %7743 = vmatpush1.msra.mxu0 0.0
        %7744 = vmatprep.subr.mxu0 0.0
        %7745 = vmatpush1.msra.mxu0 0.0
        %7746 = vmatprep.subr.mxu0 0.0
        %7747 = vmatpush1.msra.mxu0 0.0
        %7748 = vmatprep.subr.mxu0 0.0
        %7749 = vmatpush1.msra.mxu0 0.0
        %7750 = vmatprep.subr.mxu0 0.0
        %7751 = vmatpush1.msra.mxu0 0.0
        %7752 = vmatprep.subr.mxu0 0.0
        %7753 = vmatpush1.msra.mxu0 0.0
        %7754 = vmatprep.subr.mxu0 0.0
        %7755 = vmatpush1.msra.mxu0 0.0
        %7756 = vmatprep.subr.mxu0 0.0
        %7757 = vmatpush1.msra.mxu0 0.0
        %7758 = vmatprep.subr.mxu0 0.0
        %7759 = vmatpush1.msra.mxu0 0.0
        %7760 = vmatprep.subr.mxu0 0.0
        %7761 = vmatpush1.msra.mxu0 0.0
        %7762 = vmatprep.subr.mxu0 0.0
        %7763 = vmatpush1.msra.mxu0 0.0
        %7764 = vmatprep.subr.mxu0 0.0
        %7765 = vmatpush1.msra.mxu0 0.0
        %7766 = vmatprep.subr.mxu0 0.0
        %7767 = vmatpush1.msra.mxu0 0.0
        %7768 = vmatprep.mubr.f32.mxu0 0.0
        %7769 = vmatmul.mubr.f32.gmra.mrb[0].mxu0 %v7696
        %v7770 = vpop.f32.mrb[0].mxu0
        %v7771 = vadd.f32 0.0, %v7770
        %v7772 = vpop.f32.mrb[0].mxu0
        %7773 = vmatprep.mubr.f32.mxu0 0.0
        %7774 = vmatmul.mubr.f32.gmra.mrb[0].mxu0 %v7698
        %v7775 = vpop.f32.mrb[0].mxu0
        %v7776 = vadd.f32 0.0, %v7775
        %v7777 = vpop.f32.mrb[0].mxu0
        %7778 = vmatprep.mubr.f32.mxu0 0.0
        %7779 = vmatmul.mubr.f32.gmra.mrb[0].mxu0 %v7700
        %v7780 = vpop.f32.mrb[0].mxu0
        %v7781 = vadd.f32 0.0, %v7780
        %v7782 = vpop.f32.mrb[0].mxu0
        %7783 = vmatprep.mubr.f32.mxu0 0.0
        %7784 = vmatmul.mubr.f32.gmra.mrb[0].mxu0 %v7702
        %v7785 = vpop.f32.mrb[0].mxu0
        %v7786 = vadd.f32 0.0, %v7785
        %v7787 = vpop.f32.mrb[0].mxu0
        %7788 = vdwg.mxu0
        %v7821 = vsel %vm2700, %v6445, %v6432
        %v7822 = vsel %vm2702, %v6458, %v7821
        %v7823 = vsel %vm2704, %v6471, %v7822
        %v7824 = vsel %vm2706, %v6484, %v7823
        %v7825 = vsel %vm2708, %v6497, %v7824
        %v7826 = vsel %vm2710, %v6510, %v7825
        %v7827 = vsel %vm2712, %v6523, %v7826
        %v7828 = vsel %vm2700, %v6549, %v6536
        %v7829 = vsel %vm2702, %v6562, %v7828
        %v7830 = vsel %vm2704, %v6575, %v7829
        %v7831 = vsel %vm2706, %v6588, %v7830
        %v7832 = vsel %vm2708, %v6601, %v7831
        %v7833 = vsel %vm2710, %v6614, %v7832
        %v7834 = vsel %vm2712, %v6627, %v7833
        %v7835 = vsel %vm2700, %v6653, %v6640
        %v7836 = vsel %vm2702, %v6666, %v7835
        %v7837 = vsel %vm2704, %v6679, %v7836
        %v7838 = vsel %vm2706, %v6692, %v7837
        %v7839 = vsel %vm2708, %v6705, %v7838
        %v7840 = vsel %vm2710, %v6718, %v7839
        %v7841 = vsel %vm2712, %v6731, %v7840
        %v7842 = vsel %vm2700, %v6757, %v6744
        %v7843 = vsel %vm2702, %v6770, %v7842
        %v7844 = vsel %vm2704, %v6783, %v7843
        %v7845 = vsel %vm2706, %v6796, %v7844
        %v7846 = vsel %vm2708, %v6809, %v7845
        %v7847 = vsel %vm2710, %v6822, %v7846
        %v7848 = vsel %vm2712, %v6835, %v7847
        %v7849 = vsel %vm1451, %v7827, 0
        %v7851 = vsel %vm1451, %v7834, 0
        %v7853 = vsel %vm1451, %v7841, 0
        %v7855 = vsel %vm1451, %v7848, 0
        %7857 = vmatprep.subr.mxu0 0.0
        %7858 = vmatpush1.msra.mxu0 %v626
        %7859 = vmatprep.subr.mxu0 0.0
        %7860 = vmatpush1.msra.mxu0 0.0
        %7861 = vmatprep.subr.mxu0 0.0
        %7862 = vmatpush1.msra.mxu0 0.0
        %7863 = vmatprep.subr.mxu0 0.0
        %7864 = vmatpush1.msra.mxu0 0.0
        %7865 = vmatprep.subr.mxu0 0.0
        %7866 = vmatpush1.msra.mxu0 0.0
        %7867 = vmatprep.subr.mxu0 0.0
        %7868 = vmatpush1.msra.mxu0 0.0
        %7869 = vmatprep.subr.mxu0 0.0
        %7870 = vmatpush1.msra.mxu0 0.0
        %7871 = vmatprep.subr.mxu0 0.0
        %7872 = vmatpush1.msra.mxu0 0.0
        %7873 = vmatprep.subr.mxu0 0.0
        %7874 = vmatpush1.msra.mxu0 0.0
        %7875 = vmatprep.subr.mxu0 0.0
        %7876 = vmatpush1.msra.mxu0 0.0
        %7877 = vmatprep.subr.mxu0 0.0
        %7878 = vmatpush1.msra.mxu0 0.0
        %7879 = vmatprep.subr.mxu0 0.0
        %7880 = vmatpush1.msra.mxu0 0.0
        %7881 = vmatprep.subr.mxu0 0.0
        %7882 = vmatpush1.msra.mxu0 0.0
        %7883 = vmatprep.subr.mxu0 0.0
        %7884 = vmatpush1.msra.mxu0 0.0
        %7885 = vmatprep.subr.mxu0 0.0
        %7886 = vmatpush1.msra.mxu0 0.0
        %7887 = vmatprep.subr.mxu0 0.0
        %7888 = vmatpush1.msra.mxu0 0.0
        %7889 = vmatprep.subr.mxu0 0.0
        %7890 = vmatpush1.msra.mxu0 0.0
        %7891 = vmatprep.subr.mxu0 0.0
        %7892 = vmatpush1.msra.mxu0 0.0
        %7893 = vmatprep.subr.mxu0 0.0
        %7894 = vmatpush1.msra.mxu0 0.0
        %7895 = vmatprep.subr.mxu0 0.0
        %7896 = vmatpush1.msra.mxu0 0.0
        %7897 = vmatprep.subr.mxu0 0.0
        %7898 = vmatpush1.msra.mxu0 0.0
        %7899 = vmatprep.subr.mxu0 0.0
        %7900 = vmatpush1.msra.mxu0 0.0
        %7901 = vmatprep.subr.mxu0 0.0
        %7902 = vmatpush1.msra.mxu0 0.0
        %7903 = vmatprep.subr.mxu0 0.0
        %7904 = vmatpush1.msra.mxu0 0.0
        %7905 = vmatprep.subr.mxu0 0.0
        %7906 = vmatpush1.msra.mxu0 0.0
        %7907 = vmatprep.subr.mxu0 0.0
        %7908 = vmatpush1.msra.mxu0 0.0
        %7909 = vmatprep.subr.mxu0 0.0
        %7910 = vmatpush1.msra.mxu0 0.0
        %7911 = vmatprep.subr.mxu0 0.0
        %7912 = vmatpush1.msra.mxu0 0.0
        %7913 = vmatprep.subr.mxu0 0.0
        %7914 = vmatpush1.msra.mxu0 0.0
        %7915 = vmatprep.subr.mxu0 0.0
        %7916 = vmatpush1.msra.mxu0 0.0
        %7917 = vmatprep.subr.mxu0 0.0
        %7918 = vmatpush1.msra.mxu0 0.0
        %7919 = vmatprep.subr.mxu0 0.0
        %7920 = vmatpush1.msra.mxu0 0.0
        %7921 = vmatprep.mubr.f32.mxu0 0.0
        %7922 = vmatmul.mubr.f32.gmra.mrb[0].mxu0 %v7849
        %v7923 = vpop.f32.mrb[0].mxu0
        %v7924 = vadd.f32 %v7771, %v7923
        %v7925 = vpop.f32.mrb[0].mxu0
        %7926 = vmatprep.mubr.f32.mxu0 0.0
        %7927 = vmatmul.mubr.f32.gmra.mrb[0].mxu0 %v7851
        %v7928 = vpop.f32.mrb[0].mxu0
        %v7929 = vadd.f32 %v7776, %v7928
        %v7930 = vpop.f32.mrb[0].mxu0
        %7931 = vmatprep.mubr.f32.mxu0 0.0
        %7932 = vmatmul.mubr.f32.gmra.mrb[0].mxu0 %v7853
        %v7933 = vpop.f32.mrb[0].mxu0
        %v7934 = vadd.f32 %v7781, %v7933
        %v7935 = vpop.f32.mrb[0].mxu0
        %7936 = vmatprep.mubr.f32.mxu0 0.0
        %7937 = vmatmul.mubr.f32.gmra.mrb[0].mxu0 %v7855
        %v7938 = vpop.f32.mrb[0].mxu0
        %v7939 = vadd.f32 %v7786, %v7938
        %v7940 = vpop.f32.mrb[0].mxu0
        %7941 = vdwg.mxu0
        %s7942 = scalar_lea.vmem %s9, 64
        %v7943 = vld [vmem:[%s7942] sm:$0xff]
        %v7944 = vld [vmem:[%s7942 + $0x8] sm:$0xff]
        %v7945 = vld [vmem:[%s7942 + $0x10] sm:$0xff]
        %v7946 = vld [vmem:[%s7942 + $0x18] sm:$0xff]
        %s7947 = scalar_lea.vmem %s10, 64
        %v7948 = vld [vmem:[%s7947] sm:$0xff]
        %v7949 = vld [vmem:[%s7947 + $0x8] sm:$0xff]
        %v7950 = vld [vmem:[%s7947 + $0x10] sm:$0xff]
        %v7951 = vld [vmem:[%s7947 + $0x18] sm:$0xff]
        %7953 = vset.pattern.permute.xlu0 0
        %7954 = vperm.xlu0 %7953, %v7948
        %v7955 = vpop.permute.xlu0 %7954
        %7958 = vset.pattern.permute.xlu0 0
        %7959 = vperm.xlu0 %7958, %v7949
        %v7960 = vpop.permute.xlu0 %7959
        %7963 = vset.pattern.permute.xlu0 0
        %7964 = vperm.xlu0 %7963, %v7950
        %v7965 = vpop.permute.xlu0 %7964
        %7968 = vset.pattern.permute.xlu0 0
        %7969 = vperm.xlu0 %7968, %v7951
        %v7970 = vpop.permute.xlu0 %7969
        %v7973 = vsel %vm3009, %v7943, 0
        %v7976 = vsel %vm3009, %v7944, 0
        %v7979 = vsel %vm3009, %v7945, 0
        %v7982 = vsel %vm3009, %v7946, 0
        %7984 = vmatprep.subr.mxu0 0.0
        %7985 = vmatpush1.msra.mxu0 %v5592
        %7986 = vmatprep.subr.mxu0 0.0
        %7987 = vmatpush1.msra.mxu0 %v5593
        %7988 = vmatprep.subr.mxu0 0.0
        %7989 = vmatpush1.msra.mxu0 %v5594
        %7990 = vmatprep.subr.mxu0 0.0
        %7991 = vmatpush1.msra.mxu0 %v5595
        %7992 = vmatprep.subr.mxu0 0.0
        %7993 = vmatpush1.msra.mxu0 0.0
        %7994 = vmatprep.subr.mxu0 0.0
        %7995 = vmatpush1.msra.mxu0 0.0
        %7996 = vmatprep.subr.mxu0 0.0
        %7997 = vmatpush1.msra.mxu0 0.0
        %7998 = vmatprep.subr.mxu0 0.0
        %7999 = vmatpush1.msra.mxu0 0.0
        %8000 = vmatprep.subr.mxu0 0.0
        %8001 = vmatpush1.msra.mxu0 0.0
        %8002 = vmatprep.subr.mxu0 0.0
        %8003 = vmatpush1.msra.mxu0 0.0
        %8004 = vmatprep.subr.mxu0 0.0
        %8005 = vmatpush1.msra.mxu0 0.0
        %8006 = vmatprep.subr.mxu0 0.0
        %8007 = vmatpush1.msra.mxu0 0.0
        %8008 = vmatprep.subr.mxu0 0.0
        %8009 = vmatpush1.msra.mxu0 0.0
        %8010 = vmatprep.subr.mxu0 0.0
        %8011 = vmatpush1.msra.mxu0 0.0
        %8012 = vmatprep.subr.mxu0 0.0
        %8013 = vmatpush1.msra.mxu0 0.0
        %8014 = vmatprep.subr.mxu0 0.0
        %8015 = vmatpush1.msra.mxu0 0.0
        %8016 = vmatprep.subr.mxu0 0.0
        %8017 = vmatpush1.msra.mxu0 0.0
        %8018 = vmatprep.subr.mxu0 0.0
        %8019 = vmatpush1.msra.mxu0 0.0
        %8020 = vmatprep.subr.mxu0 0.0
        %8021 = vmatpush1.msra.mxu0 0.0
        %8022 = vmatprep.subr.mxu0 0.0
        %8023 = vmatpush1.msra.mxu0 0.0
        %8024 = vmatprep.subr.mxu0 0.0
        %8025 = vmatpush1.msra.mxu0 0.0
        %8026 = vmatprep.subr.mxu0 0.0
        %8027 = vmatpush1.msra.mxu0 0.0
        %8028 = vmatprep.subr.mxu0 0.0
        %8029 = vmatpush1.msra.mxu0 0.0
        %8030 = vmatprep.subr.mxu0 0.0
        %8031 = vmatpush1.msra.mxu0 0.0
        %8032 = vmatprep.subr.mxu0 0.0
        %8033 = vmatpush1.msra.mxu0 0.0
        %8034 = vmatprep.subr.mxu0 0.0
        %8035 = vmatpush1.msra.mxu0 0.0
        %8036 = vmatprep.subr.mxu0 0.0
        %8037 = vmatpush1.msra.mxu0 0.0
        %8038 = vmatprep.subr.mxu0 0.0
        %8039 = vmatpush1.msra.mxu0 0.0
        %8040 = vmatprep.subr.mxu0 0.0
        %8041 = vmatpush1.msra.mxu0 0.0
        %8042 = vmatprep.subr.mxu0 0.0
        %8043 = vmatpush1.msra.mxu0 0.0
        %8044 = vmatprep.subr.mxu0 0.0
        %8045 = vmatpush1.msra.mxu0 0.0
        %8046 = vmatprep.subr.mxu0 0.0
        %8047 = vmatpush1.msra.mxu0 0.0
        %8048 = vmatprep.mubr.f32.mxu0 0.0
        %8049 = vmatmul.mubr.f32.gmra.mrb[0].mxu0 %v7973
        %v8050 = vpop.f32.mrb[0].mxu0
        %v8051 = vadd.f32 %v7955, %v8050
        %v8052 = vpop.f32.mrb[0].mxu0
        %8053 = vmatprep.mubr.f32.mxu0 0.0
        %8054 = vmatmul.mubr.f32.gmra.mrb[0].mxu0 %v7976
        %v8055 = vpop.f32.mrb[0].mxu0
        %v8056 = vadd.f32 %v7960, %v8055
        %v8057 = vpop.f32.mrb[0].mxu0
        %8058 = vmatprep.mubr.f32.mxu0 0.0
        %8059 = vmatmul.mubr.f32.gmra.mrb[0].mxu0 %v7979
        %v8060 = vpop.f32.mrb[0].mxu0
        %v8061 = vadd.f32 %v7965, %v8060
        %v8062 = vpop.f32.mrb[0].mxu0
        %8063 = vmatprep.mubr.f32.mxu0 0.0
        %8064 = vmatmul.mubr.f32.gmra.mrb[0].mxu0 %v7982
        %v8065 = vpop.f32.mrb[0].mxu0
        %v8066 = vadd.f32 %v7970, %v8065
        %v8067 = vpop.f32.mrb[0].mxu0
        %8068 = vdwg.mxu0
        %v8069 = vadd.f32 %v7924, %v8051
        %v8070 = vadd.f32 %v7929, %v8056
        %v8071 = vadd.f32 %v7934, %v8061
        %v8072 = vadd.f32 %v7939, %v8066
        %v8073 = vmax.f32 %v8069, 0.0
        %v8074 = vmax.f32 %v8070, 0.0
        %v8075 = vmax.f32 %v8071, 0.0
        %v8076 = vmax.f32 %v8072, 0.0
        %v8078 = vsel %vm628, %v8073, 0
        %v8081 = vsel %vm628, %v8074, 0
        %v8084 = vsel %vm628, %v8075, 0
        %v8087 = vsel %vm628, %v8076, 0
        %8089 = vmatprep.subr.mxu0 0.0
        %8090 = vmatpush1.msra.mxu0 %v622
        %8091 = vmatprep.subr.mxu0 0.0
        %8092 = vmatpush1.msra.mxu0 %v623
        %8093 = vmatprep.subr.mxu0 0.0
        %8094 = vmatpush1.msra.mxu0 0.0
        %8095 = vmatprep.subr.mxu0 0.0
        %8096 = vmatpush1.msra.mxu0 0.0
        %8097 = vmatprep.subr.mxu0 0.0
        %8098 = vmatpush1.msra.mxu0 0.0
        %8099 = vmatprep.subr.mxu0 0.0
        %8100 = vmatpush1.msra.mxu0 0.0
        %8101 = vmatprep.subr.mxu0 0.0
        %8102 = vmatpush1.msra.mxu0 0.0
        %8103 = vmatprep.subr.mxu0 0.0
        %8104 = vmatpush1.msra.mxu0 0.0
        %8105 = vmatprep.subr.mxu0 0.0
        %8106 = vmatpush1.msra.mxu0 0.0
        %8107 = vmatprep.subr.mxu0 0.0
        %8108 = vmatpush1.msra.mxu0 0.0
        %8109 = vmatprep.subr.mxu0 0.0
        %8110 = vmatpush1.msra.mxu0 0.0
        %8111 = vmatprep.subr.mxu0 0.0
        %8112 = vmatpush1.msra.mxu0 0.0
        %8113 = vmatprep.subr.mxu0 0.0
        %8114 = vmatpush1.msra.mxu0 0.0
        %8115 = vmatprep.subr.mxu0 0.0
        %8116 = vmatpush1.msra.mxu0 0.0
        %8117 = vmatprep.subr.mxu0 0.0
        %8118 = vmatpush1.msra.mxu0 0.0
        %8119 = vmatprep.subr.mxu0 0.0
        %8120 = vmatpush1.msra.mxu0 0.0
        %8121 = vmatprep.subr.mxu0 0.0
        %8122 = vmatpush1.msra.mxu0 0.0
        %8123 = vmatprep.subr.mxu0 0.0
        %8124 = vmatpush1.msra.mxu0 0.0
        %8125 = vmatprep.subr.mxu0 0.0
        %8126 = vmatpush1.msra.mxu0 0.0
        %8127 = vmatprep.subr.mxu0 0.0
        %8128 = vmatpush1.msra.mxu0 0.0
        %8129 = vmatprep.subr.mxu0 0.0
        %8130 = vmatpush1.msra.mxu0 0.0
        %8131 = vmatprep.subr.mxu0 0.0
        %8132 = vmatpush1.msra.mxu0 0.0
        %8133 = vmatprep.subr.mxu0 0.0
        %8134 = vmatpush1.msra.mxu0 0.0
        %8135 = vmatprep.subr.mxu0 0.0
        %8136 = vmatpush1.msra.mxu0 0.0
        %8137 = vmatprep.subr.mxu0 0.0
        %8138 = vmatpush1.msra.mxu0 0.0
        %8139 = vmatprep.subr.mxu0 0.0
        %8140 = vmatpush1.msra.mxu0 0.0
        %8141 = vmatprep.subr.mxu0 0.0
        %8142 = vmatpush1.msra.mxu0 0.0
        %8143 = vmatprep.subr.mxu0 0.0
        %8144 = vmatpush1.msra.mxu0 0.0
        %8145 = vmatprep.subr.mxu0 0.0
        %8146 = vmatpush1.msra.mxu0 0.0
        %8147 = vmatprep.subr.mxu0 0.0
        %8148 = vmatpush1.msra.mxu0 0.0
        %8149 = vmatprep.subr.mxu0 0.0
        %8150 = vmatpush1.msra.mxu0 0.0
        %8151 = vmatprep.subr.mxu0 0.0
        %8152 = vmatpush1.msra.mxu0 0.0
        %8153 = vmatprep.mubr.f32.mxu0 0.0
        %8154 = vmatmul.mubr.f32.gmra.mrb[0].mxu0 %v8078
        %v8155 = vpop.f32.mrb[0].mxu0
        %v8156 = vadd.f32 0.0, %v8155
        %v8157 = vpop.f32.mrb[0].mxu0
        %8158 = vmatprep.mubr.f32.mxu0 0.0
        %8159 = vmatmul.mubr.f32.gmra.mrb[0].mxu0 %v8081
        %v8160 = vpop.f32.mrb[0].mxu0
        %v8161 = vadd.f32 0.0, %v8160
        %v8162 = vpop.f32.mrb[0].mxu0
        %8163 = vmatprep.mubr.f32.mxu0 0.0
        %8164 = vmatmul.mubr.f32.gmra.mrb[0].mxu0 %v8084
        %v8165 = vpop.f32.mrb[0].mxu0
        %v8166 = vadd.f32 0.0, %v8165
        %v8167 = vpop.f32.mrb[0].mxu0
        %8168 = vmatprep.mubr.f32.mxu0 0.0
        %8169 = vmatmul.mubr.f32.gmra.mrb[0].mxu0 %v8087
        %v8170 = vpop.f32.mrb[0].mxu0
        %v8171 = vadd.f32 0.0, %v8170
        %v8172 = vpop.f32.mrb[0].mxu0
        %8173 = vdwg.mxu0
        %8174 = vmatprep.subr.mxu0 0.0
        %8175 = vmatpush1.msra.mxu0 %v624
        %8176 = vmatprep.subr.mxu0 0.0
        %8177 = vmatpush1.msra.mxu0 %v625
        %8178 = vmatprep.subr.mxu0 0.0
        %8179 = vmatpush1.msra.mxu0 0.0
        %8180 = vmatprep.subr.mxu0 0.0
        %8181 = vmatpush1.msra.mxu0 0.0
        %8182 = vmatprep.subr.mxu0 0.0
        %8183 = vmatpush1.msra.mxu0 0.0
        %8184 = vmatprep.subr.mxu0 0.0
        %8185 = vmatpush1.msra.mxu0 0.0
        %8186 = vmatprep.subr.mxu0 0.0
        %8187 = vmatpush1.msra.mxu0 0.0
        %8188 = vmatprep.subr.mxu0 0.0
        %8189 = vmatpush1.msra.mxu0 0.0
        %8190 = vmatprep.subr.mxu0 0.0
        %8191 = vmatpush1.msra.mxu0 0.0
        %8192 = vmatprep.subr.mxu0 0.0
        %8193 = vmatpush1.msra.mxu0 0.0
        %8194 = vmatprep.subr.mxu0 0.0
        %8195 = vmatpush1.msra.mxu0 0.0
        %8196 = vmatprep.subr.mxu0 0.0
        %8197 = vmatpush1.msra.mxu0 0.0
        %8198 = vmatprep.subr.mxu0 0.0
        %8199 = vmatpush1.msra.mxu0 0.0
        %8200 = vmatprep.subr.mxu0 0.0
        %8201 = vmatpush1.msra.mxu0 0.0
        %8202 = vmatprep.subr.mxu0 0.0
        %8203 = vmatpush1.msra.mxu0 0.0
        %8204 = vmatprep.subr.mxu0 0.0
        %8205 = vmatpush1.msra.mxu0 0.0
        %8206 = vmatprep.subr.mxu0 0.0
        %8207 = vmatpush1.msra.mxu0 0.0
        %8208 = vmatprep.subr.mxu0 0.0
        %8209 = vmatpush1.msra.mxu0 0.0
        %8210 = vmatprep.subr.mxu0 0.0
        %8211 = vmatpush1.msra.mxu0 0.0
        %8212 = vmatprep.subr.mxu0 0.0
        %8213 = vmatpush1.msra.mxu0 0.0
        %8214 = vmatprep.subr.mxu0 0.0
        %8215 = vmatpush1.msra.mxu0 0.0
        %8216 = vmatprep.subr.mxu0 0.0
        %8217 = vmatpush1.msra.mxu0 0.0
        %8218 = vmatprep.subr.mxu0 0.0
        %8219 = vmatpush1.msra.mxu0 0.0
        %8220 = vmatprep.subr.mxu0 0.0
        %8221 = vmatpush1.msra.mxu0 0.0
        %8222 = vmatprep.subr.mxu0 0.0
        %8223 = vmatpush1.msra.mxu0 0.0
        %8224 = vmatprep.subr.mxu0 0.0
        %8225 = vmatpush1.msra.mxu0 0.0
        %8226 = vmatprep.subr.mxu0 0.0
        %8227 = vmatpush1.msra.mxu0 0.0
        %8228 = vmatprep.subr.mxu0 0.0
        %8229 = vmatpush1.msra.mxu0 0.0
        %8230 = vmatprep.subr.mxu0 0.0
        %8231 = vmatpush1.msra.mxu0 0.0
        %8232 = vmatprep.subr.mxu0 0.0
        %8233 = vmatpush1.msra.mxu0 0.0
        %8234 = vmatprep.subr.mxu0 0.0
        %8235 = vmatpush1.msra.mxu0 0.0
        %8236 = vmatprep.subr.mxu0 0.0
        %8237 = vmatpush1.msra.mxu0 0.0
        %8238 = vmatprep.mubr.f32.mxu0 0.0
        %8239 = vmatmul.mubr.f32.gmra.mrb[0].mxu0 %v8078
        %v8240 = vpop.f32.mrb[0].mxu0
        %v8241 = vadd.f32 0.0, %v8240
        %v8242 = vpop.f32.mrb[0].mxu0
        %8243 = vmatprep.mubr.f32.mxu0 0.0
        %8244 = vmatmul.mubr.f32.gmra.mrb[0].mxu0 %v8081
        %v8245 = vpop.f32.mrb[0].mxu0
        %v8246 = vadd.f32 0.0, %v8245
        %v8247 = vpop.f32.mrb[0].mxu0
        %8248 = vmatprep.mubr.f32.mxu0 0.0
        %8249 = vmatmul.mubr.f32.gmra.mrb[0].mxu0 %v8084
        %v8250 = vpop.f32.mrb[0].mxu0
        %v8251 = vadd.f32 0.0, %v8250
        %v8252 = vpop.f32.mrb[0].mxu0
        %8253 = vmatprep.mubr.f32.mxu0 0.0
        %8254 = vmatmul.mubr.f32.gmra.mrb[0].mxu0 %v8087
        %v8255 = vpop.f32.mrb[0].mxu0
        %v8256 = vadd.f32 0.0, %v8255
        %v8257 = vpop.f32.mrb[0].mxu0
        %8258 = vdwg.mxu0
        %s8259 = scalar_lea.vmem %s7, 3072
        %v8260 = vld [vmem:[%s8259] sm:$0xff]
        %v8261 = vld [vmem:[%s8259 + $0x8] sm:$0xff]
        %v8262 = vld [vmem:[%s8259 + $0x10] sm:$0xff]
        %v8263 = vld [vmem:[%s8259 + $0x18] sm:$0xff]
        %v8264 = vld [vmem:[%s8259 + $0x20] sm:$0xff]
        %v8265 = vld [vmem:[%s8259 + $0x28] sm:$0xff]
        %v8266 = vld [vmem:[%s8259 + $0x30] sm:$0xff]
        %v8267 = vld [vmem:[%s8259 + $0x38] sm:$0xff]
        %v8268 = vld [vmem:[%s8259 + $0x40] sm:$0xff]
        %v8269 = vld [vmem:[%s8259 + $0x48] sm:$0xff]
        %v8270 = vld [vmem:[%s8259 + $0x50] sm:$0xff]
        %v8271 = vld [vmem:[%s8259 + $0x58] sm:$0xff]
        %v8272 = vld [vmem:[%s8259 + $0x60] sm:$0xff]
        %v8273 = vld [vmem:[%s8259 + $0x68] sm:$0xff]
        %v8274 = vld [vmem:[%s8259 + $0x70] sm:$0xff]
        %v8275 = vld [vmem:[%s8259 + $0x78] sm:$0xff]
        %v8276 = vld [vmem:[%s8259 + $0x80] sm:$0xff]
        %v8277 = vld [vmem:[%s8259 + $0x88] sm:$0xff]
        %v8278 = vld [vmem:[%s8259 + $0x90] sm:$0xff]
        %v8279 = vld [vmem:[%s8259 + $0x98] sm:$0xff]
        %v8280 = vld [vmem:[%s8259 + $0xa0] sm:$0xff]
        %v8281 = vld [vmem:[%s8259 + $0xa8] sm:$0xff]
        %v8282 = vld [vmem:[%s8259 + $0xb0] sm:$0xff]
        %v8283 = vld [vmem:[%s8259 + $0xb8] sm:$0xff]
        %v8284 = vld [vmem:[%s8259 + $0xc0] sm:$0xff]
        %v8285 = vld [vmem:[%s8259 + $0xc8] sm:$0xff]
        %v8286 = vld [vmem:[%s8259 + $0xd0] sm:$0xff]
        %v8287 = vld [vmem:[%s8259 + $0xd8] sm:$0xff]
        %v8288 = vld [vmem:[%s8259 + $0xe0] sm:$0xff]
        %v8289 = vld [vmem:[%s8259 + $0xe8] sm:$0xff]
        %v8290 = vld [vmem:[%s8259 + $0xf0] sm:$0xff]
        %v8291 = vld [vmem:[%s8259 + $0xf8] sm:$0xff]
        %v8292 = vld [vmem:[%s8259 + $0x100] sm:$0xff]
        %v8293 = vld [vmem:[%s8259 + $0x108] sm:$0xff]
        %v8294 = vld [vmem:[%s8259 + $0x110] sm:$0xff]
        %v8295 = vld [vmem:[%s8259 + $0x118] sm:$0xff]
        %v8296 = vld [vmem:[%s8259 + $0x120] sm:$0xff]
        %v8297 = vld [vmem:[%s8259 + $0x128] sm:$0xff]
        %v8298 = vld [vmem:[%s8259 + $0x130] sm:$0xff]
        %v8299 = vld [vmem:[%s8259 + $0x138] sm:$0xff]
        %v8300 = vld [vmem:[%s8259 + $0x140] sm:$0xff]
        %v8301 = vld [vmem:[%s8259 + $0x148] sm:$0xff]
        %v8302 = vld [vmem:[%s8259 + $0x150] sm:$0xff]
        %v8303 = vld [vmem:[%s8259 + $0x158] sm:$0xff]
        %v8304 = vld [vmem:[%s8259 + $0x160] sm:$0xff]
        %v8305 = vld [vmem:[%s8259 + $0x168] sm:$0xff]
        %v8306 = vld [vmem:[%s8259 + $0x170] sm:$0xff]
        %v8307 = vld [vmem:[%s8259 + $0x178] sm:$0xff]
        %v8308 = vld [vmem:[%s8259 + $0x180] sm:$0xff]
        %v8309 = vld [vmem:[%s8259 + $0x188] sm:$0xff]
        %v8310 = vld [vmem:[%s8259 + $0x190] sm:$0xff]
        %v8311 = vld [vmem:[%s8259 + $0x198] sm:$0xff]
        %v8312 = vld [vmem:[%s8259 + $0x1a0] sm:$0xff]
        %v8313 = vld [vmem:[%s8259 + $0x1a8] sm:$0xff]
        %v8314 = vld [vmem:[%s8259 + $0x1b0] sm:$0xff]
        %v8315 = vld [vmem:[%s8259 + $0x1b8] sm:$0xff]
        %v8316 = vld [vmem:[%s8259 + $0x1c0] sm:$0xff]
        %v8317 = vld [vmem:[%s8259 + $0x1c8] sm:$0xff]
        %v8318 = vld [vmem:[%s8259 + $0x1d0] sm:$0xff]
        %v8319 = vld [vmem:[%s8259 + $0x1d8] sm:$0xff]
        %v8320 = vld [vmem:[%s8259 + $0x1e0] sm:$0xff]
        %v8321 = vld [vmem:[%s8259 + $0x1e8] sm:$0xff]
        %v8322 = vld [vmem:[%s8259 + $0x1f0] sm:$0xff]
        %v8323 = vld [vmem:[%s8259 + $0x1f8] sm:$0xff]
        %v8324 = vld [vmem:[%s8259 + $0x200] sm:$0xff]
        %v8325 = vld [vmem:[%s8259 + $0x208] sm:$0xff]
        %v8326 = vld [vmem:[%s8259 + $0x210] sm:$0xff]
        %v8327 = vld [vmem:[%s8259 + $0x218] sm:$0xff]
        %v8328 = vld [vmem:[%s8259 + $0x220] sm:$0xff]
        %v8329 = vld [vmem:[%s8259 + $0x228] sm:$0xff]
        %v8330 = vld [vmem:[%s8259 + $0x230] sm:$0xff]
        %v8331 = vld [vmem:[%s8259 + $0x238] sm:$0xff]
        %v8332 = vld [vmem:[%s8259 + $0x240] sm:$0xff]
        %v8333 = vld [vmem:[%s8259 + $0x248] sm:$0xff]
        %v8334 = vld [vmem:[%s8259 + $0x250] sm:$0xff]
        %v8335 = vld [vmem:[%s8259 + $0x258] sm:$0xff]
        %v8336 = vld [vmem:[%s8259 + $0x260] sm:$0xff]
        %v8337 = vld [vmem:[%s8259 + $0x268] sm:$0xff]
        %v8338 = vld [vmem:[%s8259 + $0x270] sm:$0xff]
        %v8339 = vld [vmem:[%s8259 + $0x278] sm:$0xff]
        %v8340 = vld [vmem:[%s8259 + $0x280] sm:$0xff]
        %v8341 = vld [vmem:[%s8259 + $0x288] sm:$0xff]
        %v8342 = vld [vmem:[%s8259 + $0x290] sm:$0xff]
        %v8343 = vld [vmem:[%s8259 + $0x298] sm:$0xff]
        %v8344 = vld [vmem:[%s8259 + $0x2a0] sm:$0xff]
        %v8345 = vld [vmem:[%s8259 + $0x2a8] sm:$0xff]
        %v8346 = vld [vmem:[%s8259 + $0x2b0] sm:$0xff]
        %v8347 = vld [vmem:[%s8259 + $0x2b8] sm:$0xff]
        %v8348 = vld [vmem:[%s8259 + $0x2c0] sm:$0xff]
        %v8349 = vld [vmem:[%s8259 + $0x2c8] sm:$0xff]
        %v8350 = vld [vmem:[%s8259 + $0x2d0] sm:$0xff]
        %v8351 = vld [vmem:[%s8259 + $0x2d8] sm:$0xff]
        %v8352 = vld [vmem:[%s8259 + $0x2e0] sm:$0xff]
        %v8353 = vld [vmem:[%s8259 + $0x2e8] sm:$0xff]
        %v8354 = vld [vmem:[%s8259 + $0x2f0] sm:$0xff]
        %v8355 = vld [vmem:[%s8259 + $0x2f8] sm:$0xff]
        %v8356 = vld [vmem:[%s8259 + $0x300] sm:$0xff]
        %v8357 = vld [vmem:[%s8259 + $0x308] sm:$0xff]
        %v8358 = vld [vmem:[%s8259 + $0x310] sm:$0xff]
        %v8359 = vld [vmem:[%s8259 + $0x318] sm:$0xff]
        %v8360 = vld [vmem:[%s8259 + $0x320] sm:$0xff]
        %v8361 = vld [vmem:[%s8259 + $0x328] sm:$0xff]
        %v8362 = vld [vmem:[%s8259 + $0x330] sm:$0xff]
        %v8363 = vld [vmem:[%s8259 + $0x338] sm:$0xff]
        %v8364 = vld [vmem:[%s8259 + $0x340] sm:$0xff]
        %v8365 = vld [vmem:[%s8259 + $0x348] sm:$0xff]
        %v8366 = vld [vmem:[%s8259 + $0x350] sm:$0xff]
        %v8367 = vld [vmem:[%s8259 + $0x358] sm:$0xff]
        %v8368 = vld [vmem:[%s8259 + $0x360] sm:$0xff]
        %v8369 = vld [vmem:[%s8259 + $0x368] sm:$0xff]
        %v8370 = vld [vmem:[%s8259 + $0x370] sm:$0xff]
        %v8371 = vld [vmem:[%s8259 + $0x378] sm:$0xff]
        %v8372 = vld [vmem:[%s8259 + $0x380] sm:$0xff]
        %v8373 = vld [vmem:[%s8259 + $0x388] sm:$0xff]
        %v8374 = vld [vmem:[%s8259 + $0x390] sm:$0xff]
        %v8375 = vld [vmem:[%s8259 + $0x398] sm:$0xff]
        %v8376 = vld [vmem:[%s8259 + $0x3a0] sm:$0xff]
        %v8377 = vld [vmem:[%s8259 + $0x3a8] sm:$0xff]
        %v8378 = vld [vmem:[%s8259 + $0x3b0] sm:$0xff]
        %v8379 = vld [vmem:[%s8259 + $0x3b8] sm:$0xff]
        %v8380 = vld [vmem:[%s8259 + $0x3c0] sm:$0xff]
        %v8381 = vld [vmem:[%s8259 + $0x3c8] sm:$0xff]
        %v8382 = vld [vmem:[%s8259 + $0x3d0] sm:$0xff]
        %v8383 = vld [vmem:[%s8259 + $0x3d8] sm:$0xff]
        %v8384 = vld [vmem:[%s8259 + $0x3e0] sm:$0xff]
        %v8385 = vld [vmem:[%s8259 + $0x3e8] sm:$0xff]
        %v8386 = vld [vmem:[%s8259 + $0x3f0] sm:$0xff]
        %v8387 = vld [vmem:[%s8259 + $0x3f8] sm:$0xff]
        %s8388 = scalar_lea.vmem %s8, 3072
        %v8389 = vld [vmem:[%s8388] sm:$0xff]
        %v8390 = vld [vmem:[%s8388 + $0x8] sm:$0xff]
        %v8391 = vld [vmem:[%s8388 + $0x10] sm:$0xff]
        %v8392 = vld [vmem:[%s8388 + $0x18] sm:$0xff]
        %v8393 = vld [vmem:[%s8388 + $0x20] sm:$0xff]
        %v8394 = vld [vmem:[%s8388 + $0x28] sm:$0xff]
        %v8395 = vld [vmem:[%s8388 + $0x30] sm:$0xff]
        %v8396 = vld [vmem:[%s8388 + $0x38] sm:$0xff]
        %v8397 = vld [vmem:[%s8388 + $0x40] sm:$0xff]
        %v8398 = vld [vmem:[%s8388 + $0x48] sm:$0xff]
        %v8399 = vld [vmem:[%s8388 + $0x50] sm:$0xff]
        %v8400 = vld [vmem:[%s8388 + $0x58] sm:$0xff]
        %v8401 = vld [vmem:[%s8388 + $0x60] sm:$0xff]
        %v8402 = vld [vmem:[%s8388 + $0x68] sm:$0xff]
        %v8403 = vld [vmem:[%s8388 + $0x70] sm:$0xff]
        %v8404 = vld [vmem:[%s8388 + $0x78] sm:$0xff]
        %v8405 = vld [vmem:[%s8388 + $0x80] sm:$0xff]
        %v8406 = vld [vmem:[%s8388 + $0x88] sm:$0xff]
        %v8407 = vld [vmem:[%s8388 + $0x90] sm:$0xff]
        %v8408 = vld [vmem:[%s8388 + $0x98] sm:$0xff]
        %v8409 = vld [vmem:[%s8388 + $0xa0] sm:$0xff]
        %v8410 = vld [vmem:[%s8388 + $0xa8] sm:$0xff]
        %v8411 = vld [vmem:[%s8388 + $0xb0] sm:$0xff]
        %v8412 = vld [vmem:[%s8388 + $0xb8] sm:$0xff]
        %v8413 = vld [vmem:[%s8388 + $0xc0] sm:$0xff]
        %v8414 = vld [vmem:[%s8388 + $0xc8] sm:$0xff]
        %v8415 = vld [vmem:[%s8388 + $0xd0] sm:$0xff]
        %v8416 = vld [vmem:[%s8388 + $0xd8] sm:$0xff]
        %v8417 = vld [vmem:[%s8388 + $0xe0] sm:$0xff]
        %v8418 = vld [vmem:[%s8388 + $0xe8] sm:$0xff]
        %v8419 = vld [vmem:[%s8388 + $0xf0] sm:$0xff]
        %v8420 = vld [vmem:[%s8388 + $0xf8] sm:$0xff]
        %v8421 = vld [vmem:[%s8388 + $0x100] sm:$0xff]
        %v8422 = vld [vmem:[%s8388 + $0x108] sm:$0xff]
        %v8423 = vld [vmem:[%s8388 + $0x110] sm:$0xff]
        %v8424 = vld [vmem:[%s8388 + $0x118] sm:$0xff]
        %v8425 = vld [vmem:[%s8388 + $0x120] sm:$0xff]
        %v8426 = vld [vmem:[%s8388 + $0x128] sm:$0xff]
        %v8427 = vld [vmem:[%s8388 + $0x130] sm:$0xff]
        %v8428 = vld [vmem:[%s8388 + $0x138] sm:$0xff]
        %v8429 = vld [vmem:[%s8388 + $0x140] sm:$0xff]
        %v8430 = vld [vmem:[%s8388 + $0x148] sm:$0xff]
        %v8431 = vld [vmem:[%s8388 + $0x150] sm:$0xff]
        %v8432 = vld [vmem:[%s8388 + $0x158] sm:$0xff]
        %v8433 = vld [vmem:[%s8388 + $0x160] sm:$0xff]
        %v8434 = vld [vmem:[%s8388 + $0x168] sm:$0xff]
        %v8435 = vld [vmem:[%s8388 + $0x170] sm:$0xff]
        %v8436 = vld [vmem:[%s8388 + $0x178] sm:$0xff]
        %v8437 = vld [vmem:[%s8388 + $0x180] sm:$0xff]
        %v8438 = vld [vmem:[%s8388 + $0x188] sm:$0xff]
        %v8439 = vld [vmem:[%s8388 + $0x190] sm:$0xff]
        %v8440 = vld [vmem:[%s8388 + $0x198] sm:$0xff]
        %v8441 = vld [vmem:[%s8388 + $0x1a0] sm:$0xff]
        %v8442 = vld [vmem:[%s8388 + $0x1a8] sm:$0xff]
        %v8443 = vld [vmem:[%s8388 + $0x1b0] sm:$0xff]
        %v8444 = vld [vmem:[%s8388 + $0x1b8] sm:$0xff]
        %v8445 = vld [vmem:[%s8388 + $0x1c0] sm:$0xff]
        %v8446 = vld [vmem:[%s8388 + $0x1c8] sm:$0xff]
        %v8447 = vld [vmem:[%s8388 + $0x1d0] sm:$0xff]
        %v8448 = vld [vmem:[%s8388 + $0x1d8] sm:$0xff]
        %v8449 = vld [vmem:[%s8388 + $0x1e0] sm:$0xff]
        %v8450 = vld [vmem:[%s8388 + $0x1e8] sm:$0xff]
        %v8451 = vld [vmem:[%s8388 + $0x1f0] sm:$0xff]
        %v8452 = vld [vmem:[%s8388 + $0x1f8] sm:$0xff]
        %v8453 = vld [vmem:[%s8388 + $0x200] sm:$0xff]
        %v8454 = vld [vmem:[%s8388 + $0x208] sm:$0xff]
        %v8455 = vld [vmem:[%s8388 + $0x210] sm:$0xff]
        %v8456 = vld [vmem:[%s8388 + $0x218] sm:$0xff]
        %v8457 = vld [vmem:[%s8388 + $0x220] sm:$0xff]
        %v8458 = vld [vmem:[%s8388 + $0x228] sm:$0xff]
        %v8459 = vld [vmem:[%s8388 + $0x230] sm:$0xff]
        %v8460 = vld [vmem:[%s8388 + $0x238] sm:$0xff]
        %v8461 = vld [vmem:[%s8388 + $0x240] sm:$0xff]
        %v8462 = vld [vmem:[%s8388 + $0x248] sm:$0xff]
        %v8463 = vld [vmem:[%s8388 + $0x250] sm:$0xff]
        %v8464 = vld [vmem:[%s8388 + $0x258] sm:$0xff]
        %v8465 = vld [vmem:[%s8388 + $0x260] sm:$0xff]
        %v8466 = vld [vmem:[%s8388 + $0x268] sm:$0xff]
        %v8467 = vld [vmem:[%s8388 + $0x270] sm:$0xff]
        %v8468 = vld [vmem:[%s8388 + $0x278] sm:$0xff]
        %v8469 = vld [vmem:[%s8388 + $0x280] sm:$0xff]
        %v8470 = vld [vmem:[%s8388 + $0x288] sm:$0xff]
        %v8471 = vld [vmem:[%s8388 + $0x290] sm:$0xff]
        %v8472 = vld [vmem:[%s8388 + $0x298] sm:$0xff]
        %v8473 = vld [vmem:[%s8388 + $0x2a0] sm:$0xff]
        %v8474 = vld [vmem:[%s8388 + $0x2a8] sm:$0xff]
        %v8475 = vld [vmem:[%s8388 + $0x2b0] sm:$0xff]
        %v8476 = vld [vmem:[%s8388 + $0x2b8] sm:$0xff]
        %v8477 = vld [vmem:[%s8388 + $0x2c0] sm:$0xff]
        %v8478 = vld [vmem:[%s8388 + $0x2c8] sm:$0xff]
        %v8479 = vld [vmem:[%s8388 + $0x2d0] sm:$0xff]
        %v8480 = vld [vmem:[%s8388 + $0x2d8] sm:$0xff]
        %v8481 = vld [vmem:[%s8388 + $0x2e0] sm:$0xff]
        %v8482 = vld [vmem:[%s8388 + $0x2e8] sm:$0xff]
        %v8483 = vld [vmem:[%s8388 + $0x2f0] sm:$0xff]
        %v8484 = vld [vmem:[%s8388 + $0x2f8] sm:$0xff]
        %v8485 = vld [vmem:[%s8388 + $0x300] sm:$0xff]
        %v8486 = vld [vmem:[%s8388 + $0x308] sm:$0xff]
        %v8487 = vld [vmem:[%s8388 + $0x310] sm:$0xff]
        %v8488 = vld [vmem:[%s8388 + $0x318] sm:$0xff]
        %v8489 = vld [vmem:[%s8388 + $0x320] sm:$0xff]
        %v8490 = vld [vmem:[%s8388 + $0x328] sm:$0xff]
        %v8491 = vld [vmem:[%s8388 + $0x330] sm:$0xff]
        %v8492 = vld [vmem:[%s8388 + $0x338] sm:$0xff]
        %v8493 = vld [vmem:[%s8388 + $0x340] sm:$0xff]
        %v8494 = vld [vmem:[%s8388 + $0x348] sm:$0xff]
        %v8495 = vld [vmem:[%s8388 + $0x350] sm:$0xff]
        %v8496 = vld [vmem:[%s8388 + $0x358] sm:$0xff]
        %v8497 = vld [vmem:[%s8388 + $0x360] sm:$0xff]
        %v8498 = vld [vmem:[%s8388 + $0x368] sm:$0xff]
        %v8499 = vld [vmem:[%s8388 + $0x370] sm:$0xff]
        %v8500 = vld [vmem:[%s8388 + $0x378] sm:$0xff]
        %v8501 = vld [vmem:[%s8388 + $0x380] sm:$0xff]
        %v8502 = vld [vmem:[%s8388 + $0x388] sm:$0xff]
        %v8503 = vld [vmem:[%s8388 + $0x390] sm:$0xff]
        %v8504 = vld [vmem:[%s8388 + $0x398] sm:$0xff]
        %v8505 = vld [vmem:[%s8388 + $0x3a0] sm:$0xff]
        %v8506 = vld [vmem:[%s8388 + $0x3a8] sm:$0xff]
        %v8507 = vld [vmem:[%s8388 + $0x3b0] sm:$0xff]
        %v8508 = vld [vmem:[%s8388 + $0x3b8] sm:$0xff]
        %v8509 = vld [vmem:[%s8388 + $0x3c0] sm:$0xff]
        %v8510 = vld [vmem:[%s8388 + $0x3c8] sm:$0xff]
        %v8511 = vld [vmem:[%s8388 + $0x3d0] sm:$0xff]
        %v8512 = vld [vmem:[%s8388 + $0x3d8] sm:$0xff]
        %v8513 = vld [vmem:[%s8388 + $0x3e0] sm:$0xff]
        %v8514 = vld [vmem:[%s8388 + $0x3e8] sm:$0xff]
        %v8515 = vld [vmem:[%s8388 + $0x3f0] sm:$0xff]
        %v8516 = vld [vmem:[%s8388 + $0x3f8] sm:$0xff]
        %v8517 = vmul.f32 %v8260, %v8156
        %v8518 = vmul.f32 %v8261, %v8161
        %v8519 = vmul.f32 %v8262, %v8166
        %v8520 = vmul.f32 %v8263, %v8171
        %v8521 = vmul.f32 %v8264, %v8156
        %v8522 = vmul.f32 %v8265, %v8161
        %v8523 = vmul.f32 %v8266, %v8166
        %v8524 = vmul.f32 %v8267, %v8171
        %v8525 = vmul.f32 %v8268, %v8156
        %v8526 = vmul.f32 %v8269, %v8161
        %v8527 = vmul.f32 %v8270, %v8166
        %v8528 = vmul.f32 %v8271, %v8171
        %v8529 = vmul.f32 %v8272, %v8156
        %v8530 = vmul.f32 %v8273, %v8161
        %v8531 = vmul.f32 %v8274, %v8166
        %v8532 = vmul.f32 %v8275, %v8171
        %v8533 = vmul.f32 %v8276, %v8156
        %v8534 = vmul.f32 %v8277, %v8161
        %v8535 = vmul.f32 %v8278, %v8166
        %v8536 = vmul.f32 %v8279, %v8171
        %v8537 = vmul.f32 %v8280, %v8156
        %v8538 = vmul.f32 %v8281, %v8161
        %v8539 = vmul.f32 %v8282, %v8166
        %v8540 = vmul.f32 %v8283, %v8171
        %v8541 = vmul.f32 %v8284, %v8156
        %v8542 = vmul.f32 %v8285, %v8161
        %v8543 = vmul.f32 %v8286, %v8166
        %v8544 = vmul.f32 %v8287, %v8171
        %v8545 = vmul.f32 %v8288, %v8156
        %v8546 = vmul.f32 %v8289, %v8161
        %v8547 = vmul.f32 %v8290, %v8166
        %v8548 = vmul.f32 %v8291, %v8171
        %v8549 = vmul.f32 %v8292, %v8156
        %v8550 = vmul.f32 %v8293, %v8161
        %v8551 = vmul.f32 %v8294, %v8166
        %v8552 = vmul.f32 %v8295, %v8171
        %v8553 = vmul.f32 %v8296, %v8156
        %v8554 = vmul.f32 %v8297, %v8161
        %v8555 = vmul.f32 %v8298, %v8166
        %v8556 = vmul.f32 %v8299, %v8171
        %v8557 = vmul.f32 %v8300, %v8156
        %v8558 = vmul.f32 %v8301, %v8161
        %v8559 = vmul.f32 %v8302, %v8166
        %v8560 = vmul.f32 %v8303, %v8171
        %v8561 = vmul.f32 %v8304, %v8156
        %v8562 = vmul.f32 %v8305, %v8161
        %v8563 = vmul.f32 %v8306, %v8166
        %v8564 = vmul.f32 %v8307, %v8171
        %v8565 = vmul.f32 %v8308, %v8156
        %v8566 = vmul.f32 %v8309, %v8161
        %v8567 = vmul.f32 %v8310, %v8166
        %v8568 = vmul.f32 %v8311, %v8171
        %v8569 = vmul.f32 %v8312, %v8156
        %v8570 = vmul.f32 %v8313, %v8161
        %v8571 = vmul.f32 %v8314, %v8166
        %v8572 = vmul.f32 %v8315, %v8171
        %v8573 = vmul.f32 %v8316, %v8156
        %v8574 = vmul.f32 %v8317, %v8161
        %v8575 = vmul.f32 %v8318, %v8166
        %v8576 = vmul.f32 %v8319, %v8171
        %v8577 = vmul.f32 %v8320, %v8156
        %v8578 = vmul.f32 %v8321, %v8161
        %v8579 = vmul.f32 %v8322, %v8166
        %v8580 = vmul.f32 %v8323, %v8171
        %v8581 = vmul.f32 %v8324, %v8156
        %v8582 = vmul.f32 %v8325, %v8161
        %v8583 = vmul.f32 %v8326, %v8166
        %v8584 = vmul.f32 %v8327, %v8171
        %v8585 = vmul.f32 %v8328, %v8156
        %v8586 = vmul.f32 %v8329, %v8161
        %v8587 = vmul.f32 %v8330, %v8166
        %v8588 = vmul.f32 %v8331, %v8171
        %v8589 = vmul.f32 %v8332, %v8156
        %v8590 = vmul.f32 %v8333, %v8161
        %v8591 = vmul.f32 %v8334, %v8166
        %v8592 = vmul.f32 %v8335, %v8171
        %v8593 = vmul.f32 %v8336, %v8156
        %v8594 = vmul.f32 %v8337, %v8161
        %v8595 = vmul.f32 %v8338, %v8166
        %v8596 = vmul.f32 %v8339, %v8171
        %v8597 = vmul.f32 %v8340, %v8156
        %v8598 = vmul.f32 %v8341, %v8161
        %v8599 = vmul.f32 %v8342, %v8166
        %v8600 = vmul.f32 %v8343, %v8171
        %v8601 = vmul.f32 %v8344, %v8156
        %v8602 = vmul.f32 %v8345, %v8161
        %v8603 = vmul.f32 %v8346, %v8166
        %v8604 = vmul.f32 %v8347, %v8171
        %v8605 = vmul.f32 %v8348, %v8156
        %v8606 = vmul.f32 %v8349, %v8161
        %v8607 = vmul.f32 %v8350, %v8166
        %v8608 = vmul.f32 %v8351, %v8171
        %v8609 = vmul.f32 %v8352, %v8156
        %v8610 = vmul.f32 %v8353, %v8161
        %v8611 = vmul.f32 %v8354, %v8166
        %v8612 = vmul.f32 %v8355, %v8171
        %v8613 = vmul.f32 %v8356, %v8156
        %v8614 = vmul.f32 %v8357, %v8161
        %v8615 = vmul.f32 %v8358, %v8166
        %v8616 = vmul.f32 %v8359, %v8171
        %v8617 = vmul.f32 %v8360, %v8156
        %v8618 = vmul.f32 %v8361, %v8161
        %v8619 = vmul.f32 %v8362, %v8166
        %v8620 = vmul.f32 %v8363, %v8171
        %v8621 = vmul.f32 %v8364, %v8156
        %v8622 = vmul.f32 %v8365, %v8161
        %v8623 = vmul.f32 %v8366, %v8166
        %v8624 = vmul.f32 %v8367, %v8171
        %v8625 = vmul.f32 %v8368, %v8156
        %v8626 = vmul.f32 %v8369, %v8161
        %v8627 = vmul.f32 %v8370, %v8166
        %v8628 = vmul.f32 %v8371, %v8171
        %v8629 = vmul.f32 %v8372, %v8156
        %v8630 = vmul.f32 %v8373, %v8161
        %v8631 = vmul.f32 %v8374, %v8166
        %v8632 = vmul.f32 %v8375, %v8171
        %v8633 = vmul.f32 %v8376, %v8156
        %v8634 = vmul.f32 %v8377, %v8161
        %v8635 = vmul.f32 %v8378, %v8166
        %v8636 = vmul.f32 %v8379, %v8171
        %v8637 = vmul.f32 %v8380, %v8156
        %v8638 = vmul.f32 %v8381, %v8161
        %v8639 = vmul.f32 %v8382, %v8166
        %v8640 = vmul.f32 %v8383, %v8171
        %v8641 = vmul.f32 %v8384, %v8156
        %v8642 = vmul.f32 %v8385, %v8161
        %v8643 = vmul.f32 %v8386, %v8166
        %v8644 = vmul.f32 %v8387, %v8171
        %v8645 = vmul.f32 %v8389, %v8241
        %v8646 = vmul.f32 %v8390, %v8246
        %v8647 = vmul.f32 %v8391, %v8251
        %v8648 = vmul.f32 %v8392, %v8256
        %v8649 = vmul.f32 %v8393, %v8241
        %v8650 = vmul.f32 %v8394, %v8246
        %v8651 = vmul.f32 %v8395, %v8251
        %v8652 = vmul.f32 %v8396, %v8256
        %v8653 = vmul.f32 %v8397, %v8241
        %v8654 = vmul.f32 %v8398, %v8246
        %v8655 = vmul.f32 %v8399, %v8251
        %v8656 = vmul.f32 %v8400, %v8256
        %v8657 = vmul.f32 %v8401, %v8241
        %v8658 = vmul.f32 %v8402, %v8246
        %v8659 = vmul.f32 %v8403, %v8251
        %v8660 = vmul.f32 %v8404, %v8256
        %v8661 = vmul.f32 %v8405, %v8241
        %v8662 = vmul.f32 %v8406, %v8246
        %v8663 = vmul.f32 %v8407, %v8251
        %v8664 = vmul.f32 %v8408, %v8256
        %v8665 = vmul.f32 %v8409, %v8241
        %v8666 = vmul.f32 %v8410, %v8246
        %v8667 = vmul.f32 %v8411, %v8251
        %v8668 = vmul.f32 %v8412, %v8256
        %v8669 = vmul.f32 %v8413, %v8241
        %v8670 = vmul.f32 %v8414, %v8246
        %v8671 = vmul.f32 %v8415, %v8251
        %v8672 = vmul.f32 %v8416, %v8256
        %v8673 = vmul.f32 %v8417, %v8241
        %v8674 = vmul.f32 %v8418, %v8246
        %v8675 = vmul.f32 %v8419, %v8251
        %v8676 = vmul.f32 %v8420, %v8256
        %v8677 = vmul.f32 %v8421, %v8241
        %v8678 = vmul.f32 %v8422, %v8246
        %v8679 = vmul.f32 %v8423, %v8251
        %v8680 = vmul.f32 %v8424, %v8256
        %v8681 = vmul.f32 %v8425, %v8241
        %v8682 = vmul.f32 %v8426, %v8246
        %v8683 = vmul.f32 %v8427, %v8251
        %v8684 = vmul.f32 %v8428, %v8256
        %v8685 = vmul.f32 %v8429, %v8241
        %v8686 = vmul.f32 %v8430, %v8246
        %v8687 = vmul.f32 %v8431, %v8251
        %v8688 = vmul.f32 %v8432, %v8256
        %v8689 = vmul.f32 %v8433, %v8241
        %v8690 = vmul.f32 %v8434, %v8246
        %v8691 = vmul.f32 %v8435, %v8251
        %v8692 = vmul.f32 %v8436, %v8256
        %v8693 = vmul.f32 %v8437, %v8241
        %v8694 = vmul.f32 %v8438, %v8246
        %v8695 = vmul.f32 %v8439, %v8251
        %v8696 = vmul.f32 %v8440, %v8256
        %v8697 = vmul.f32 %v8441, %v8241
        %v8698 = vmul.f32 %v8442, %v8246
        %v8699 = vmul.f32 %v8443, %v8251
        %v8700 = vmul.f32 %v8444, %v8256
        %v8701 = vmul.f32 %v8445, %v8241
        %v8702 = vmul.f32 %v8446, %v8246
        %v8703 = vmul.f32 %v8447, %v8251
        %v8704 = vmul.f32 %v8448, %v8256
        %v8705 = vmul.f32 %v8449, %v8241
        %v8706 = vmul.f32 %v8450, %v8246
        %v8707 = vmul.f32 %v8451, %v8251
        %v8708 = vmul.f32 %v8452, %v8256
        %v8709 = vmul.f32 %v8453, %v8241
        %v8710 = vmul.f32 %v8454, %v8246
        %v8711 = vmul.f32 %v8455, %v8251
        %v8712 = vmul.f32 %v8456, %v8256
        %v8713 = vmul.f32 %v8457, %v8241
        %v8714 = vmul.f32 %v8458, %v8246
        %v8715 = vmul.f32 %v8459, %v8251
        %v8716 = vmul.f32 %v8460, %v8256
        %v8717 = vmul.f32 %v8461, %v8241
        %v8718 = vmul.f32 %v8462, %v8246
        %v8719 = vmul.f32 %v8463, %v8251
        %v8720 = vmul.f32 %v8464, %v8256
        %v8721 = vmul.f32 %v8465, %v8241
        %v8722 = vmul.f32 %v8466, %v8246
        %v8723 = vmul.f32 %v8467, %v8251
        %v8724 = vmul.f32 %v8468, %v8256
        %v8725 = vmul.f32 %v8469, %v8241
        %v8726 = vmul.f32 %v8470, %v8246
        %v8727 = vmul.f32 %v8471, %v8251
        %v8728 = vmul.f32 %v8472, %v8256
        %v8729 = vmul.f32 %v8473, %v8241
        %v8730 = vmul.f32 %v8474, %v8246
        %v8731 = vmul.f32 %v8475, %v8251
        %v8732 = vmul.f32 %v8476, %v8256
        %v8733 = vmul.f32 %v8477, %v8241
        %v8734 = vmul.f32 %v8478, %v8246
        %v8735 = vmul.f32 %v8479, %v8251
        %v8736 = vmul.f32 %v8480, %v8256
        %v8737 = vmul.f32 %v8481, %v8241
        %v8738 = vmul.f32 %v8482, %v8246
        %v8739 = vmul.f32 %v8483, %v8251
        %v8740 = vmul.f32 %v8484, %v8256
        %v8741 = vmul.f32 %v8485, %v8241
        %v8742 = vmul.f32 %v8486, %v8246
        %v8743 = vmul.f32 %v8487, %v8251
        %v8744 = vmul.f32 %v8488, %v8256
        %v8745 = vmul.f32 %v8489, %v8241
        %v8746 = vmul.f32 %v8490, %v8246
        %v8747 = vmul.f32 %v8491, %v8251
        %v8748 = vmul.f32 %v8492, %v8256
        %v8749 = vmul.f32 %v8493, %v8241
        %v8750 = vmul.f32 %v8494, %v8246
        %v8751 = vmul.f32 %v8495, %v8251
        %v8752 = vmul.f32 %v8496, %v8256
        %v8753 = vmul.f32 %v8497, %v8241
        %v8754 = vmul.f32 %v8498, %v8246
        %v8755 = vmul.f32 %v8499, %v8251
        %v8756 = vmul.f32 %v8500, %v8256
        %v8757 = vmul.f32 %v8501, %v8241
        %v8758 = vmul.f32 %v8502, %v8246
        %v8759 = vmul.f32 %v8503, %v8251
        %v8760 = vmul.f32 %v8504, %v8256
        %v8761 = vmul.f32 %v8505, %v8241
        %v8762 = vmul.f32 %v8506, %v8246
        %v8763 = vmul.f32 %v8507, %v8251
        %v8764 = vmul.f32 %v8508, %v8256
        %v8765 = vmul.f32 %v8509, %v8241
        %v8766 = vmul.f32 %v8510, %v8246
        %v8767 = vmul.f32 %v8511, %v8251
        %v8768 = vmul.f32 %v8512, %v8256
        %v8769 = vmul.f32 %v8513, %v8241
        %v8770 = vmul.f32 %v8514, %v8246
        %v8771 = vmul.f32 %v8515, %v8251
        %v8772 = vmul.f32 %v8516, %v8256
        %v8773 = vsub.f32 %v8517, %v8645
        %v8774 = vsub.f32 %v8518, %v8646
        %v8775 = vsub.f32 %v8519, %v8647
        %v8776 = vsub.f32 %v8520, %v8648
        %v8777 = vsub.f32 %v8521, %v8649
        %v8778 = vsub.f32 %v8522, %v8650
        %v8779 = vsub.f32 %v8523, %v8651
        %v8780 = vsub.f32 %v8524, %v8652
        %v8781 = vsub.f32 %v8525, %v8653
        %v8782 = vsub.f32 %v8526, %v8654
        %v8783 = vsub.f32 %v8527, %v8655
        %v8784 = vsub.f32 %v8528, %v8656
        %v8785 = vsub.f32 %v8529, %v8657
        %v8786 = vsub.f32 %v8530, %v8658
        %v8787 = vsub.f32 %v8531, %v8659
        %v8788 = vsub.f32 %v8532, %v8660
        %v8789 = vsub.f32 %v8533, %v8661
        %v8790 = vsub.f32 %v8534, %v8662
        %v8791 = vsub.f32 %v8535, %v8663
        %v8792 = vsub.f32 %v8536, %v8664
        %v8793 = vsub.f32 %v8537, %v8665
        %v8794 = vsub.f32 %v8538, %v8666
        %v8795 = vsub.f32 %v8539, %v8667
        %v8796 = vsub.f32 %v8540, %v8668
        %v8797 = vsub.f32 %v8541, %v8669
        %v8798 = vsub.f32 %v8542, %v8670
        %v8799 = vsub.f32 %v8543, %v8671
        %v8800 = vsub.f32 %v8544, %v8672
        %v8801 = vsub.f32 %v8545, %v8673
        %v8802 = vsub.f32 %v8546, %v8674
        %v8803 = vsub.f32 %v8547, %v8675
        %v8804 = vsub.f32 %v8548, %v8676
        %v8805 = vsub.f32 %v8549, %v8677
        %v8806 = vsub.f32 %v8550, %v8678
        %v8807 = vsub.f32 %v8551, %v8679
        %v8808 = vsub.f32 %v8552, %v8680
        %v8809 = vsub.f32 %v8553, %v8681
        %v8810 = vsub.f32 %v8554, %v8682
        %v8811 = vsub.f32 %v8555, %v8683
        %v8812 = vsub.f32 %v8556, %v8684
        %v8813 = vsub.f32 %v8557, %v8685
        %v8814 = vsub.f32 %v8558, %v8686
        %v8815 = vsub.f32 %v8559, %v8687
        %v8816 = vsub.f32 %v8560, %v8688
        %v8817 = vsub.f32 %v8561, %v8689
        %v8818 = vsub.f32 %v8562, %v8690
        %v8819 = vsub.f32 %v8563, %v8691
        %v8820 = vsub.f32 %v8564, %v8692
        %v8821 = vsub.f32 %v8565, %v8693
        %v8822 = vsub.f32 %v8566, %v8694
        %v8823 = vsub.f32 %v8567, %v8695
        %v8824 = vsub.f32 %v8568, %v8696
        %v8825 = vsub.f32 %v8569, %v8697
        %v8826 = vsub.f32 %v8570, %v8698
        %v8827 = vsub.f32 %v8571, %v8699
        %v8828 = vsub.f32 %v8572, %v8700
        %v8829 = vsub.f32 %v8573, %v8701
        %v8830 = vsub.f32 %v8574, %v8702
        %v8831 = vsub.f32 %v8575, %v8703
        %v8832 = vsub.f32 %v8576, %v8704
        %v8833 = vsub.f32 %v8577, %v8705
        %v8834 = vsub.f32 %v8578, %v8706
        %v8835 = vsub.f32 %v8579, %v8707
        %v8836 = vsub.f32 %v8580, %v8708
        %v8837 = vsub.f32 %v8581, %v8709
        %v8838 = vsub.f32 %v8582, %v8710
        %v8839 = vsub.f32 %v8583, %v8711
        %v8840 = vsub.f32 %v8584, %v8712
        %v8841 = vsub.f32 %v8585, %v8713
        %v8842 = vsub.f32 %v8586, %v8714
        %v8843 = vsub.f32 %v8587, %v8715
        %v8844 = vsub.f32 %v8588, %v8716
        %v8845 = vsub.f32 %v8589, %v8717
        %v8846 = vsub.f32 %v8590, %v8718
        %v8847 = vsub.f32 %v8591, %v8719
        %v8848 = vsub.f32 %v8592, %v8720
        %v8849 = vsub.f32 %v8593, %v8721
        %v8850 = vsub.f32 %v8594, %v8722
        %v8851 = vsub.f32 %v8595, %v8723
        %v8852 = vsub.f32 %v8596, %v8724
        %v8853 = vsub.f32 %v8597, %v8725
        %v8854 = vsub.f32 %v8598, %v8726
        %v8855 = vsub.f32 %v8599, %v8727
        %v8856 = vsub.f32 %v8600, %v8728
        %v8857 = vsub.f32 %v8601, %v8729
        %v8858 = vsub.f32 %v8602, %v8730
        %v8859 = vsub.f32 %v8603, %v8731
        %v8860 = vsub.f32 %v8604, %v8732
        %v8861 = vsub.f32 %v8605, %v8733
        %v8862 = vsub.f32 %v8606, %v8734
        %v8863 = vsub.f32 %v8607, %v8735
        %v8864 = vsub.f32 %v8608, %v8736
        %v8865 = vsub.f32 %v8609, %v8737
        %v8866 = vsub.f32 %v8610, %v8738
        %v8867 = vsub.f32 %v8611, %v8739
        %v8868 = vsub.f32 %v8612, %v8740
        %v8869 = vsub.f32 %v8613, %v8741
        %v8870 = vsub.f32 %v8614, %v8742
        %v8871 = vsub.f32 %v8615, %v8743
        %v8872 = vsub.f32 %v8616, %v8744
        %v8873 = vsub.f32 %v8617, %v8745
        %v8874 = vsub.f32 %v8618, %v8746
        %v8875 = vsub.f32 %v8619, %v8747
        %v8876 = vsub.f32 %v8620, %v8748
        %v8877 = vsub.f32 %v8621, %v8749
        %v8878 = vsub.f32 %v8622, %v8750
        %v8879 = vsub.f32 %v8623, %v8751
        %v8880 = vsub.f32 %v8624, %v8752
        %v8881 = vsub.f32 %v8625, %v8753
        %v8882 = vsub.f32 %v8626, %v8754
        %v8883 = vsub.f32 %v8627, %v8755
        %v8884 = vsub.f32 %v8628, %v8756
        %v8885 = vsub.f32 %v8629, %v8757
        %v8886 = vsub.f32 %v8630, %v8758
        %v8887 = vsub.f32 %v8631, %v8759
        %v8888 = vsub.f32 %v8632, %v8760
        %v8889 = vsub.f32 %v8633, %v8761
        %v8890 = vsub.f32 %v8634, %v8762
        %v8891 = vsub.f32 %v8635, %v8763
        %v8892 = vsub.f32 %v8636, %v8764
        %v8893 = vsub.f32 %v8637, %v8765
        %v8894 = vsub.f32 %v8638, %v8766
        %v8895 = vsub.f32 %v8639, %v8767
        %v8896 = vsub.f32 %v8640, %v8768
        %v8897 = vsub.f32 %v8641, %v8769
        %v8898 = vsub.f32 %v8642, %v8770
        %v8899 = vsub.f32 %v8643, %v8771
        %v8900 = vsub.f32 %v8644, %v8772
        %v8901 = vsel %vm1451, %v8773, 0.0
        %v8902 = vsel %vm1451, %v8774, 0.0
        %v8903 = vadd.f32 %v8901, %v8902
        %v8904 = vsel %vm1451, %v8775, 0.0
        %v8905 = vadd.f32 %v8903, %v8904
        %v8906 = vsel %vm1451, %v8776, 0.0
        %v8907 = vadd.f32 %v8905, %v8906
        %v8908 = vrot.slane %v8907, 4
        %v8909 = vadd.f32 %v8907, %v8908
        %v8910 = vrot.slane %v8909, 2
        %v8911 = vadd.f32 %v8909, %v8910
        %v8912 = vrot.slane %v8911, 1
        %v8913 = vadd.f32 %v8911, %v8912
        %v8914 = vsel %vm1451, %v8777, 0.0
        %v8915 = vsel %vm1451, %v8778, 0.0
        %v8916 = vadd.f32 %v8914, %v8915
        %v8917 = vsel %vm1451, %v8779, 0.0
        %v8918 = vadd.f32 %v8916, %v8917
        %v8919 = vsel %vm1451, %v8780, 0.0
        %v8920 = vadd.f32 %v8918, %v8919
        %v8921 = vrot.slane %v8920, 4
        %v8922 = vadd.f32 %v8920, %v8921
        %v8923 = vrot.slane %v8922, 2
        %v8924 = vadd.f32 %v8922, %v8923
        %v8925 = vrot.slane %v8924, 1
        %v8926 = vadd.f32 %v8924, %v8925
        %v8927 = vsel %vm1451, %v8781, 0.0
        %v8928 = vsel %vm1451, %v8782, 0.0
        %v8929 = vadd.f32 %v8927, %v8928
        %v8930 = vsel %vm1451, %v8783, 0.0
        %v8931 = vadd.f32 %v8929, %v8930
        %v8932 = vsel %vm1451, %v8784, 0.0
        %v8933 = vadd.f32 %v8931, %v8932
        %v8934 = vrot.slane %v8933, 4
        %v8935 = vadd.f32 %v8933, %v8934
        %v8936 = vrot.slane %v8935, 2
        %v8937 = vadd.f32 %v8935, %v8936
        %v8938 = vrot.slane %v8937, 1
        %v8939 = vadd.f32 %v8937, %v8938
        %v8940 = vsel %vm1451, %v8785, 0.0
        %v8941 = vsel %vm1451, %v8786, 0.0
        %v8942 = vadd.f32 %v8940, %v8941
        %v8943 = vsel %vm1451, %v8787, 0.0
        %v8944 = vadd.f32 %v8942, %v8943
        %v8945 = vsel %vm1451, %v8788, 0.0
        %v8946 = vadd.f32 %v8944, %v8945
        %v8947 = vrot.slane %v8946, 4
        %v8948 = vadd.f32 %v8946, %v8947
        %v8949 = vrot.slane %v8948, 2
        %v8950 = vadd.f32 %v8948, %v8949
        %v8951 = vrot.slane %v8950, 1
        %v8952 = vadd.f32 %v8950, %v8951
        %v8953 = vsel %vm1451, %v8789, 0.0
        %v8954 = vsel %vm1451, %v8790, 0.0
        %v8955 = vadd.f32 %v8953, %v8954
        %v8956 = vsel %vm1451, %v8791, 0.0
        %v8957 = vadd.f32 %v8955, %v8956
        %v8958 = vsel %vm1451, %v8792, 0.0
        %v8959 = vadd.f32 %v8957, %v8958
        %v8960 = vrot.slane %v8959, 4
        %v8961 = vadd.f32 %v8959, %v8960
        %v8962 = vrot.slane %v8961, 2
        %v8963 = vadd.f32 %v8961, %v8962
        %v8964 = vrot.slane %v8963, 1
        %v8965 = vadd.f32 %v8963, %v8964
        %v8966 = vsel %vm1451, %v8793, 0.0
        %v8967 = vsel %vm1451, %v8794, 0.0
        %v8968 = vadd.f32 %v8966, %v8967
        %v8969 = vsel %vm1451, %v8795, 0.0
        %v8970 = vadd.f32 %v8968, %v8969
        %v8971 = vsel %vm1451, %v8796, 0.0
        %v8972 = vadd.f32 %v8970, %v8971
        %v8973 = vrot.slane %v8972, 4
        %v8974 = vadd.f32 %v8972, %v8973
        %v8975 = vrot.slane %v8974, 2
        %v8976 = vadd.f32 %v8974, %v8975
        %v8977 = vrot.slane %v8976, 1
        %v8978 = vadd.f32 %v8976, %v8977
        %v8979 = vsel %vm1451, %v8797, 0.0
        %v8980 = vsel %vm1451, %v8798, 0.0
        %v8981 = vadd.f32 %v8979, %v8980
        %v8982 = vsel %vm1451, %v8799, 0.0
        %v8983 = vadd.f32 %v8981, %v8982
        %v8984 = vsel %vm1451, %v8800, 0.0
        %v8985 = vadd.f32 %v8983, %v8984
        %v8986 = vrot.slane %v8985, 4
        %v8987 = vadd.f32 %v8985, %v8986
        %v8988 = vrot.slane %v8987, 2
        %v8989 = vadd.f32 %v8987, %v8988
        %v8990 = vrot.slane %v8989, 1
        %v8991 = vadd.f32 %v8989, %v8990
        %v8992 = vsel %vm1451, %v8801, 0.0
        %v8993 = vsel %vm1451, %v8802, 0.0
        %v8994 = vadd.f32 %v8992, %v8993
        %v8995 = vsel %vm1451, %v8803, 0.0
        %v8996 = vadd.f32 %v8994, %v8995
        %v8997 = vsel %vm1451, %v8804, 0.0
        %v8998 = vadd.f32 %v8996, %v8997
        %v8999 = vrot.slane %v8998, 4
        %v9000 = vadd.f32 %v8998, %v8999
        %v9001 = vrot.slane %v9000, 2
        %v9002 = vadd.f32 %v9000, %v9001
        %v9003 = vrot.slane %v9002, 1
        %v9004 = vadd.f32 %v9002, %v9003
        %v9005 = vsel %vm1451, %v8805, 0.0
        %v9006 = vsel %vm1451, %v8806, 0.0
        %v9007 = vadd.f32 %v9005, %v9006
        %v9008 = vsel %vm1451, %v8807, 0.0
        %v9009 = vadd.f32 %v9007, %v9008
        %v9010 = vsel %vm1451, %v8808, 0.0
        %v9011 = vadd.f32 %v9009, %v9010
        %v9012 = vrot.slane %v9011, 4
        %v9013 = vadd.f32 %v9011, %v9012
        %v9014 = vrot.slane %v9013, 2
        %v9015 = vadd.f32 %v9013, %v9014
        %v9016 = vrot.slane %v9015, 1
        %v9017 = vadd.f32 %v9015, %v9016
        %v9018 = vsel %vm1451, %v8809, 0.0
        %v9019 = vsel %vm1451, %v8810, 0.0
        %v9020 = vadd.f32 %v9018, %v9019
        %v9021 = vsel %vm1451, %v8811, 0.0
        %v9022 = vadd.f32 %v9020, %v9021
        %v9023 = vsel %vm1451, %v8812, 0.0
        %v9024 = vadd.f32 %v9022, %v9023
        %v9025 = vrot.slane %v9024, 4
        %v9026 = vadd.f32 %v9024, %v9025
        %v9027 = vrot.slane %v9026, 2
        %v9028 = vadd.f32 %v9026, %v9027
        %v9029 = vrot.slane %v9028, 1
        %v9030 = vadd.f32 %v9028, %v9029
        %v9031 = vsel %vm1451, %v8813, 0.0
        %v9032 = vsel %vm1451, %v8814, 0.0
        %v9033 = vadd.f32 %v9031, %v9032
        %v9034 = vsel %vm1451, %v8815, 0.0
        %v9035 = vadd.f32 %v9033, %v9034
        %v9036 = vsel %vm1451, %v8816, 0.0
        %v9037 = vadd.f32 %v9035, %v9036
        %v9038 = vrot.slane %v9037, 4
        %v9039 = vadd.f32 %v9037, %v9038
        %v9040 = vrot.slane %v9039, 2
        %v9041 = vadd.f32 %v9039, %v9040
        %v9042 = vrot.slane %v9041, 1
        %v9043 = vadd.f32 %v9041, %v9042
        %v9044 = vsel %vm1451, %v8817, 0.0
        %v9045 = vsel %vm1451, %v8818, 0.0
        %v9046 = vadd.f32 %v9044, %v9045
        %v9047 = vsel %vm1451, %v8819, 0.0
        %v9048 = vadd.f32 %v9046, %v9047
        %v9049 = vsel %vm1451, %v8820, 0.0
        %v9050 = vadd.f32 %v9048, %v9049
        %v9051 = vrot.slane %v9050, 4
        %v9052 = vadd.f32 %v9050, %v9051
        %v9053 = vrot.slane %v9052, 2
        %v9054 = vadd.f32 %v9052, %v9053
        %v9055 = vrot.slane %v9054, 1
        %v9056 = vadd.f32 %v9054, %v9055
        %v9057 = vsel %vm1451, %v8821, 0.0
        %v9058 = vsel %vm1451, %v8822, 0.0
        %v9059 = vadd.f32 %v9057, %v9058
        %v9060 = vsel %vm1451, %v8823, 0.0
        %v9061 = vadd.f32 %v9059, %v9060
        %v9062 = vsel %vm1451, %v8824, 0.0
        %v9063 = vadd.f32 %v9061, %v9062
        %v9064 = vrot.slane %v9063, 4
        %v9065 = vadd.f32 %v9063, %v9064
        %v9066 = vrot.slane %v9065, 2
        %v9067 = vadd.f32 %v9065, %v9066
        %v9068 = vrot.slane %v9067, 1
        %v9069 = vadd.f32 %v9067, %v9068
        %v9070 = vsel %vm1451, %v8825, 0.0
        %v9071 = vsel %vm1451, %v8826, 0.0
        %v9072 = vadd.f32 %v9070, %v9071
        %v9073 = vsel %vm1451, %v8827, 0.0
        %v9074 = vadd.f32 %v9072, %v9073
        %v9075 = vsel %vm1451, %v8828, 0.0
        %v9076 = vadd.f32 %v9074, %v9075
        %v9077 = vrot.slane %v9076, 4
        %v9078 = vadd.f32 %v9076, %v9077
        %v9079 = vrot.slane %v9078, 2
        %v9080 = vadd.f32 %v9078, %v9079
        %v9081 = vrot.slane %v9080, 1
        %v9082 = vadd.f32 %v9080, %v9081
        %v9083 = vsel %vm1451, %v8829, 0.0
        %v9084 = vsel %vm1451, %v8830, 0.0
        %v9085 = vadd.f32 %v9083, %v9084
        %v9086 = vsel %vm1451, %v8831, 0.0
        %v9087 = vadd.f32 %v9085, %v9086
        %v9088 = vsel %vm1451, %v8832, 0.0
        %v9089 = vadd.f32 %v9087, %v9088
        %v9090 = vrot.slane %v9089, 4
        %v9091 = vadd.f32 %v9089, %v9090
        %v9092 = vrot.slane %v9091, 2
        %v9093 = vadd.f32 %v9091, %v9092
        %v9094 = vrot.slane %v9093, 1
        %v9095 = vadd.f32 %v9093, %v9094
        %v9096 = vsel %vm1451, %v8833, 0.0
        %v9097 = vsel %vm1451, %v8834, 0.0
        %v9098 = vadd.f32 %v9096, %v9097
        %v9099 = vsel %vm1451, %v8835, 0.0
        %v9100 = vadd.f32 %v9098, %v9099
        %v9101 = vsel %vm1451, %v8836, 0.0
        %v9102 = vadd.f32 %v9100, %v9101
        %v9103 = vrot.slane %v9102, 4
        %v9104 = vadd.f32 %v9102, %v9103
        %v9105 = vrot.slane %v9104, 2
        %v9106 = vadd.f32 %v9104, %v9105
        %v9107 = vrot.slane %v9106, 1
        %v9108 = vadd.f32 %v9106, %v9107
        %v9109 = vsel %vm1451, %v8837, 0.0
        %v9110 = vsel %vm1451, %v8838, 0.0
        %v9111 = vadd.f32 %v9109, %v9110
        %v9112 = vsel %vm1451, %v8839, 0.0
        %v9113 = vadd.f32 %v9111, %v9112
        %v9114 = vsel %vm1451, %v8840, 0.0
        %v9115 = vadd.f32 %v9113, %v9114
        %v9116 = vrot.slane %v9115, 4
        %v9117 = vadd.f32 %v9115, %v9116
        %v9118 = vrot.slane %v9117, 2
        %v9119 = vadd.f32 %v9117, %v9118
        %v9120 = vrot.slane %v9119, 1
        %v9121 = vadd.f32 %v9119, %v9120
        %v9122 = vsel %vm1451, %v8841, 0.0
        %v9123 = vsel %vm1451, %v8842, 0.0
        %v9124 = vadd.f32 %v9122, %v9123
        %v9125 = vsel %vm1451, %v8843, 0.0
        %v9126 = vadd.f32 %v9124, %v9125
        %v9127 = vsel %vm1451, %v8844, 0.0
        %v9128 = vadd.f32 %v9126, %v9127
        %v9129 = vrot.slane %v9128, 4
        %v9130 = vadd.f32 %v9128, %v9129
        %v9131 = vrot.slane %v9130, 2
        %v9132 = vadd.f32 %v9130, %v9131
        %v9133 = vrot.slane %v9132, 1
        %v9134 = vadd.f32 %v9132, %v9133
        %v9135 = vsel %vm1451, %v8845, 0.0
        %v9136 = vsel %vm1451, %v8846, 0.0
        %v9137 = vadd.f32 %v9135, %v9136
        %v9138 = vsel %vm1451, %v8847, 0.0
        %v9139 = vadd.f32 %v9137, %v9138
        %v9140 = vsel %vm1451, %v8848, 0.0
        %v9141 = vadd.f32 %v9139, %v9140
        %v9142 = vrot.slane %v9141, 4
        %v9143 = vadd.f32 %v9141, %v9142
        %v9144 = vrot.slane %v9143, 2
        %v9145 = vadd.f32 %v9143, %v9144
        %v9146 = vrot.slane %v9145, 1
        %v9147 = vadd.f32 %v9145, %v9146
        %v9148 = vsel %vm1451, %v8849, 0.0
        %v9149 = vsel %vm1451, %v8850, 0.0
        %v9150 = vadd.f32 %v9148, %v9149
        %v9151 = vsel %vm1451, %v8851, 0.0
        %v9152 = vadd.f32 %v9150, %v9151
        %v9153 = vsel %vm1451, %v8852, 0.0
        %v9154 = vadd.f32 %v9152, %v9153
        %v9155 = vrot.slane %v9154, 4
        %v9156 = vadd.f32 %v9154, %v9155
        %v9157 = vrot.slane %v9156, 2
        %v9158 = vadd.f32 %v9156, %v9157
        %v9159 = vrot.slane %v9158, 1
        %v9160 = vadd.f32 %v9158, %v9159
        %v9161 = vsel %vm1451, %v8853, 0.0
        %v9162 = vsel %vm1451, %v8854, 0.0
        %v9163 = vadd.f32 %v9161, %v9162
        %v9164 = vsel %vm1451, %v8855, 0.0
        %v9165 = vadd.f32 %v9163, %v9164
        %v9166 = vsel %vm1451, %v8856, 0.0
        %v9167 = vadd.f32 %v9165, %v9166
        %v9168 = vrot.slane %v9167, 4
        %v9169 = vadd.f32 %v9167, %v9168
        %v9170 = vrot.slane %v9169, 2
        %v9171 = vadd.f32 %v9169, %v9170
        %v9172 = vrot.slane %v9171, 1
        %v9173 = vadd.f32 %v9171, %v9172
        %v9174 = vsel %vm1451, %v8857, 0.0
        %v9175 = vsel %vm1451, %v8858, 0.0
        %v9176 = vadd.f32 %v9174, %v9175
        %v9177 = vsel %vm1451, %v8859, 0.0
        %v9178 = vadd.f32 %v9176, %v9177
        %v9179 = vsel %vm1451, %v8860, 0.0
        %v9180 = vadd.f32 %v9178, %v9179
        %v9181 = vrot.slane %v9180, 4
        %v9182 = vadd.f32 %v9180, %v9181
        %v9183 = vrot.slane %v9182, 2
        %v9184 = vadd.f32 %v9182, %v9183
        %v9185 = vrot.slane %v9184, 1
        %v9186 = vadd.f32 %v9184, %v9185
        %v9187 = vsel %vm1451, %v8861, 0.0
        %v9188 = vsel %vm1451, %v8862, 0.0
        %v9189 = vadd.f32 %v9187, %v9188
        %v9190 = vsel %vm1451, %v8863, 0.0
        %v9191 = vadd.f32 %v9189, %v9190
        %v9192 = vsel %vm1451, %v8864, 0.0
        %v9193 = vadd.f32 %v9191, %v9192
        %v9194 = vrot.slane %v9193, 4
        %v9195 = vadd.f32 %v9193, %v9194
        %v9196 = vrot.slane %v9195, 2
        %v9197 = vadd.f32 %v9195, %v9196
        %v9198 = vrot.slane %v9197, 1
        %v9199 = vadd.f32 %v9197, %v9198
        %v9200 = vsel %vm1451, %v8865, 0.0
        %v9201 = vsel %vm1451, %v8866, 0.0
        %v9202 = vadd.f32 %v9200, %v9201
        %v9203 = vsel %vm1451, %v8867, 0.0
        %v9204 = vadd.f32 %v9202, %v9203
        %v9205 = vsel %vm1451, %v8868, 0.0
        %v9206 = vadd.f32 %v9204, %v9205
        %v9207 = vrot.slane %v9206, 4
        %v9208 = vadd.f32 %v9206, %v9207
        %v9209 = vrot.slane %v9208, 2
        %v9210 = vadd.f32 %v9208, %v9209
        %v9211 = vrot.slane %v9210, 1
        %v9212 = vadd.f32 %v9210, %v9211
        %v9213 = vsel %vm1451, %v8869, 0.0
        %v9214 = vsel %vm1451, %v8870, 0.0
        %v9215 = vadd.f32 %v9213, %v9214
        %v9216 = vsel %vm1451, %v8871, 0.0
        %v9217 = vadd.f32 %v9215, %v9216
        %v9218 = vsel %vm1451, %v8872, 0.0
        %v9219 = vadd.f32 %v9217, %v9218
        %v9220 = vrot.slane %v9219, 4
        %v9221 = vadd.f32 %v9219, %v9220
        %v9222 = vrot.slane %v9221, 2
        %v9223 = vadd.f32 %v9221, %v9222
        %v9224 = vrot.slane %v9223, 1
        %v9225 = vadd.f32 %v9223, %v9224
        %v9226 = vsel %vm1451, %v8873, 0.0
        %v9227 = vsel %vm1451, %v8874, 0.0
        %v9228 = vadd.f32 %v9226, %v9227
        %v9229 = vsel %vm1451, %v8875, 0.0
        %v9230 = vadd.f32 %v9228, %v9229
        %v9231 = vsel %vm1451, %v8876, 0.0
        %v9232 = vadd.f32 %v9230, %v9231
        %v9233 = vrot.slane %v9232, 4
        %v9234 = vadd.f32 %v9232, %v9233
        %v9235 = vrot.slane %v9234, 2
        %v9236 = vadd.f32 %v9234, %v9235
        %v9237 = vrot.slane %v9236, 1
        %v9238 = vadd.f32 %v9236, %v9237
        %v9239 = vsel %vm1451, %v8877, 0.0
        %v9240 = vsel %vm1451, %v8878, 0.0
        %v9241 = vadd.f32 %v9239, %v9240
        %v9242 = vsel %vm1451, %v8879, 0.0
        %v9243 = vadd.f32 %v9241, %v9242
        %v9244 = vsel %vm1451, %v8880, 0.0
        %v9245 = vadd.f32 %v9243, %v9244
        %v9246 = vrot.slane %v9245, 4
        %v9247 = vadd.f32 %v9245, %v9246
        %v9248 = vrot.slane %v9247, 2
        %v9249 = vadd.f32 %v9247, %v9248
        %v9250 = vrot.slane %v9249, 1
        %v9251 = vadd.f32 %v9249, %v9250
        %v9252 = vsel %vm1451, %v8881, 0.0
        %v9253 = vsel %vm1451, %v8882, 0.0
        %v9254 = vadd.f32 %v9252, %v9253
        %v9255 = vsel %vm1451, %v8883, 0.0
        %v9256 = vadd.f32 %v9254, %v9255
        %v9257 = vsel %vm1451, %v8884, 0.0
        %v9258 = vadd.f32 %v9256, %v9257
        %v9259 = vrot.slane %v9258, 4
        %v9260 = vadd.f32 %v9258, %v9259
        %v9261 = vrot.slane %v9260, 2
        %v9262 = vadd.f32 %v9260, %v9261
        %v9263 = vrot.slane %v9262, 1
        %v9264 = vadd.f32 %v9262, %v9263
        %v9265 = vsel %vm1451, %v8885, 0.0
        %v9266 = vsel %vm1451, %v8886, 0.0
        %v9267 = vadd.f32 %v9265, %v9266
        %v9268 = vsel %vm1451, %v8887, 0.0
        %v9269 = vadd.f32 %v9267, %v9268
        %v9270 = vsel %vm1451, %v8888, 0.0
        %v9271 = vadd.f32 %v9269, %v9270
        %v9272 = vrot.slane %v9271, 4
        %v9273 = vadd.f32 %v9271, %v9272
        %v9274 = vrot.slane %v9273, 2
        %v9275 = vadd.f32 %v9273, %v9274
        %v9276 = vrot.slane %v9275, 1
        %v9277 = vadd.f32 %v9275, %v9276
        %v9278 = vsel %vm1451, %v8889, 0.0
        %v9279 = vsel %vm1451, %v8890, 0.0
        %v9280 = vadd.f32 %v9278, %v9279
        %v9281 = vsel %vm1451, %v8891, 0.0
        %v9282 = vadd.f32 %v9280, %v9281
        %v9283 = vsel %vm1451, %v8892, 0.0
        %v9284 = vadd.f32 %v9282, %v9283
        %v9285 = vrot.slane %v9284, 4
        %v9286 = vadd.f32 %v9284, %v9285
        %v9287 = vrot.slane %v9286, 2
        %v9288 = vadd.f32 %v9286, %v9287
        %v9289 = vrot.slane %v9288, 1
        %v9290 = vadd.f32 %v9288, %v9289
        %v9291 = vsel %vm1451, %v8893, 0.0
        %v9292 = vsel %vm1451, %v8894, 0.0
        %v9293 = vadd.f32 %v9291, %v9292
        %v9294 = vsel %vm1451, %v8895, 0.0
        %v9295 = vadd.f32 %v9293, %v9294
        %v9296 = vsel %vm1451, %v8896, 0.0
        %v9297 = vadd.f32 %v9295, %v9296
        %v9298 = vrot.slane %v9297, 4
        %v9299 = vadd.f32 %v9297, %v9298
        %v9300 = vrot.slane %v9299, 2
        %v9301 = vadd.f32 %v9299, %v9300
        %v9302 = vrot.slane %v9301, 1
        %v9303 = vadd.f32 %v9301, %v9302
        %v9304 = vsel %vm1451, %v8897, 0.0
        %v9305 = vsel %vm1451, %v8898, 0.0
        %v9306 = vadd.f32 %v9304, %v9305
        %v9307 = vsel %vm1451, %v8899, 0.0
        %v9308 = vadd.f32 %v9306, %v9307
        %v9309 = vsel %vm1451, %v8900, 0.0
        %v9310 = vadd.f32 %v9308, %v9309
        %v9311 = vrot.slane %v9310, 4
        %v9312 = vadd.f32 %v9310, %v9311
        %v9313 = vrot.slane %v9312, 2
        %v9314 = vadd.f32 %v9312, %v9313
        %v9315 = vrot.slane %v9314, 1
        %v9316 = vadd.f32 %v9314, %v9315
        %v9317 = vmul.f32 %v8389, %v8156
        %v9318 = vmul.f32 %v8390, %v8161
        %v9319 = vmul.f32 %v8391, %v8166
        %v9320 = vmul.f32 %v8392, %v8171
        %v9321 = vmul.f32 %v8393, %v8156
        %v9322 = vmul.f32 %v8394, %v8161
        %v9323 = vmul.f32 %v8395, %v8166
        %v9324 = vmul.f32 %v8396, %v8171
        %v9325 = vmul.f32 %v8397, %v8156
        %v9326 = vmul.f32 %v8398, %v8161
        %v9327 = vmul.f32 %v8399, %v8166
        %v9328 = vmul.f32 %v8400, %v8171
        %v9329 = vmul.f32 %v8401, %v8156
        %v9330 = vmul.f32 %v8402, %v8161
        %v9331 = vmul.f32 %v8403, %v8166
        %v9332 = vmul.f32 %v8404, %v8171
        %v9333 = vmul.f32 %v8405, %v8156
        %v9334 = vmul.f32 %v8406, %v8161
        %v9335 = vmul.f32 %v8407, %v8166
        %v9336 = vmul.f32 %v8408, %v8171
        %v9337 = vmul.f32 %v8409, %v8156
        %v9338 = vmul.f32 %v8410, %v8161
        %v9339 = vmul.f32 %v8411, %v8166
        %v9340 = vmul.f32 %v8412, %v8171
        %v9341 = vmul.f32 %v8413, %v8156
        %v9342 = vmul.f32 %v8414, %v8161
        %v9343 = vmul.f32 %v8415, %v8166
        %v9344 = vmul.f32 %v8416, %v8171
        %v9345 = vmul.f32 %v8417, %v8156
        %v9346 = vmul.f32 %v8418, %v8161
        %v9347 = vmul.f32 %v8419, %v8166
        %v9348 = vmul.f32 %v8420, %v8171
        %v9349 = vmul.f32 %v8421, %v8156
        %v9350 = vmul.f32 %v8422, %v8161
        %v9351 = vmul.f32 %v8423, %v8166
        %v9352 = vmul.f32 %v8424, %v8171
        %v9353 = vmul.f32 %v8425, %v8156
        %v9354 = vmul.f32 %v8426, %v8161
        %v9355 = vmul.f32 %v8427, %v8166
        %v9356 = vmul.f32 %v8428, %v8171
        %v9357 = vmul.f32 %v8429, %v8156
        %v9358 = vmul.f32 %v8430, %v8161
        %v9359 = vmul.f32 %v8431, %v8166
        %v9360 = vmul.f32 %v8432, %v8171
        %v9361 = vmul.f32 %v8433, %v8156
        %v9362 = vmul.f32 %v8434, %v8161
        %v9363 = vmul.f32 %v8435, %v8166
        %v9364 = vmul.f32 %v8436, %v8171
        %v9365 = vmul.f32 %v8437, %v8156
        %v9366 = vmul.f32 %v8438, %v8161
        %v9367 = vmul.f32 %v8439, %v8166
        %v9368 = vmul.f32 %v8440, %v8171
        %v9369 = vmul.f32 %v8441, %v8156
        %v9370 = vmul.f32 %v8442, %v8161
        %v9371 = vmul.f32 %v8443, %v8166
        %v9372 = vmul.f32 %v8444, %v8171
        %v9373 = vmul.f32 %v8445, %v8156
        %v9374 = vmul.f32 %v8446, %v8161
        %v9375 = vmul.f32 %v8447, %v8166
        %v9376 = vmul.f32 %v8448, %v8171
        %v9377 = vmul.f32 %v8449, %v8156
        %v9378 = vmul.f32 %v8450, %v8161
        %v9379 = vmul.f32 %v8451, %v8166
        %v9380 = vmul.f32 %v8452, %v8171
        %v9381 = vmul.f32 %v8453, %v8156
        %v9382 = vmul.f32 %v8454, %v8161
        %v9383 = vmul.f32 %v8455, %v8166
        %v9384 = vmul.f32 %v8456, %v8171
        %v9385 = vmul.f32 %v8457, %v8156
        %v9386 = vmul.f32 %v8458, %v8161
        %v9387 = vmul.f32 %v8459, %v8166
        %v9388 = vmul.f32 %v8460, %v8171
        %v9389 = vmul.f32 %v8461, %v8156
        %v9390 = vmul.f32 %v8462, %v8161
        %v9391 = vmul.f32 %v8463, %v8166
        %v9392 = vmul.f32 %v8464, %v8171
        %v9393 = vmul.f32 %v8465, %v8156
        %v9394 = vmul.f32 %v8466, %v8161
        %v9395 = vmul.f32 %v8467, %v8166
        %v9396 = vmul.f32 %v8468, %v8171
        %v9397 = vmul.f32 %v8469, %v8156
        %v9398 = vmul.f32 %v8470, %v8161
        %v9399 = vmul.f32 %v8471, %v8166
        %v9400 = vmul.f32 %v8472, %v8171
        %v9401 = vmul.f32 %v8473, %v8156
        %v9402 = vmul.f32 %v8474, %v8161
        %v9403 = vmul.f32 %v8475, %v8166
        %v9404 = vmul.f32 %v8476, %v8171
        %v9405 = vmul.f32 %v8477, %v8156
        %v9406 = vmul.f32 %v8478, %v8161
        %v9407 = vmul.f32 %v8479, %v8166
        %v9408 = vmul.f32 %v8480, %v8171
        %v9409 = vmul.f32 %v8481, %v8156
        %v9410 = vmul.f32 %v8482, %v8161
        %v9411 = vmul.f32 %v8483, %v8166
        %v9412 = vmul.f32 %v8484, %v8171
        %v9413 = vmul.f32 %v8485, %v8156
        %v9414 = vmul.f32 %v8486, %v8161
        %v9415 = vmul.f32 %v8487, %v8166
        %v9416 = vmul.f32 %v8488, %v8171
        %v9417 = vmul.f32 %v8489, %v8156
        %v9418 = vmul.f32 %v8490, %v8161
        %v9419 = vmul.f32 %v8491, %v8166
        %v9420 = vmul.f32 %v8492, %v8171
        %v9421 = vmul.f32 %v8493, %v8156
        %v9422 = vmul.f32 %v8494, %v8161
        %v9423 = vmul.f32 %v8495, %v8166
        %v9424 = vmul.f32 %v8496, %v8171
        %v9425 = vmul.f32 %v8497, %v8156
        %v9426 = vmul.f32 %v8498, %v8161
        %v9427 = vmul.f32 %v8499, %v8166
        %v9428 = vmul.f32 %v8500, %v8171
        %v9429 = vmul.f32 %v8501, %v8156
        %v9430 = vmul.f32 %v8502, %v8161
        %v9431 = vmul.f32 %v8503, %v8166
        %v9432 = vmul.f32 %v8504, %v8171
        %v9433 = vmul.f32 %v8505, %v8156
        %v9434 = vmul.f32 %v8506, %v8161
        %v9435 = vmul.f32 %v8507, %v8166
        %v9436 = vmul.f32 %v8508, %v8171
        %v9437 = vmul.f32 %v8509, %v8156
        %v9438 = vmul.f32 %v8510, %v8161
        %v9439 = vmul.f32 %v8511, %v8166
        %v9440 = vmul.f32 %v8512, %v8171
        %v9441 = vmul.f32 %v8513, %v8156
        %v9442 = vmul.f32 %v8514, %v8161
        %v9443 = vmul.f32 %v8515, %v8166
        %v9444 = vmul.f32 %v8516, %v8171
        %v9445 = vmul.f32 %v8260, %v8241
        %v9446 = vmul.f32 %v8261, %v8246
        %v9447 = vmul.f32 %v8262, %v8251
        %v9448 = vmul.f32 %v8263, %v8256
        %v9449 = vmul.f32 %v8264, %v8241
        %v9450 = vmul.f32 %v8265, %v8246
        %v9451 = vmul.f32 %v8266, %v8251
        %v9452 = vmul.f32 %v8267, %v8256
        %v9453 = vmul.f32 %v8268, %v8241
        %v9454 = vmul.f32 %v8269, %v8246
        %v9455 = vmul.f32 %v8270, %v8251
        %v9456 = vmul.f32 %v8271, %v8256
        %v9457 = vmul.f32 %v8272, %v8241
        %v9458 = vmul.f32 %v8273, %v8246
        %v9459 = vmul.f32 %v8274, %v8251
        %v9460 = vmul.f32 %v8275, %v8256
        %v9461 = vmul.f32 %v8276, %v8241
        %v9462 = vmul.f32 %v8277, %v8246
        %v9463 = vmul.f32 %v8278, %v8251
        %v9464 = vmul.f32 %v8279, %v8256
        %v9465 = vmul.f32 %v8280, %v8241
        %v9466 = vmul.f32 %v8281, %v8246
        %v9467 = vmul.f32 %v8282, %v8251
        %v9468 = vmul.f32 %v8283, %v8256
        %v9469 = vmul.f32 %v8284, %v8241
        %v9470 = vmul.f32 %v8285, %v8246
        %v9471 = vmul.f32 %v8286, %v8251
        %v9472 = vmul.f32 %v8287, %v8256
        %v9473 = vmul.f32 %v8288, %v8241
        %v9474 = vmul.f32 %v8289, %v8246
        %v9475 = vmul.f32 %v8290, %v8251
        %v9476 = vmul.f32 %v8291, %v8256
        %v9477 = vmul.f32 %v8292, %v8241
        %v9478 = vmul.f32 %v8293, %v8246
        %v9479 = vmul.f32 %v8294, %v8251
        %v9480 = vmul.f32 %v8295, %v8256
        %v9481 = vmul.f32 %v8296, %v8241
        %v9482 = vmul.f32 %v8297, %v8246
        %v9483 = vmul.f32 %v8298, %v8251
        %v9484 = vmul.f32 %v8299, %v8256
        %v9485 = vmul.f32 %v8300, %v8241
        %v9486 = vmul.f32 %v8301, %v8246
        %v9487 = vmul.f32 %v8302, %v8251
        %v9488 = vmul.f32 %v8303, %v8256
        %v9489 = vmul.f32 %v8304, %v8241
        %v9490 = vmul.f32 %v8305, %v8246
        %v9491 = vmul.f32 %v8306, %v8251
        %v9492 = vmul.f32 %v8307, %v8256
        %v9493 = vmul.f32 %v8308, %v8241
        %v9494 = vmul.f32 %v8309, %v8246
        %v9495 = vmul.f32 %v8310, %v8251
        %v9496 = vmul.f32 %v8311, %v8256
        %v9497 = vmul.f32 %v8312, %v8241
        %v9498 = vmul.f32 %v8313, %v8246
        %v9499 = vmul.f32 %v8314, %v8251
        %v9500 = vmul.f32 %v8315, %v8256
        %v9501 = vmul.f32 %v8316, %v8241
        %v9502 = vmul.f32 %v8317, %v8246
        %v9503 = vmul.f32 %v8318, %v8251
        %v9504 = vmul.f32 %v8319, %v8256
        %v9505 = vmul.f32 %v8320, %v8241
        %v9506 = vmul.f32 %v8321, %v8246
        %v9507 = vmul.f32 %v8322, %v8251
        %v9508 = vmul.f32 %v8323, %v8256
        %v9509 = vmul.f32 %v8324, %v8241
        %v9510 = vmul.f32 %v8325, %v8246
        %v9511 = vmul.f32 %v8326, %v8251
        %v9512 = vmul.f32 %v8327, %v8256
        %v9513 = vmul.f32 %v8328, %v8241
        %v9514 = vmul.f32 %v8329, %v8246
        %v9515 = vmul.f32 %v8330, %v8251
        %v9516 = vmul.f32 %v8331, %v8256
        %v9517 = vmul.f32 %v8332, %v8241
        %v9518 = vmul.f32 %v8333, %v8246
        %v9519 = vmul.f32 %v8334, %v8251
        %v9520 = vmul.f32 %v8335, %v8256
        %v9521 = vmul.f32 %v8336, %v8241
        %v9522 = vmul.f32 %v8337, %v8246
        %v9523 = vmul.f32 %v8338, %v8251
        %v9524 = vmul.f32 %v8339, %v8256
        %v9525 = vmul.f32 %v8340, %v8241
        %v9526 = vmul.f32 %v8341, %v8246
        %v9527 = vmul.f32 %v8342, %v8251
        %v9528 = vmul.f32 %v8343, %v8256
        %v9529 = vmul.f32 %v8344, %v8241
        %v9530 = vmul.f32 %v8345, %v8246
        %v9531 = vmul.f32 %v8346, %v8251
        %v9532 = vmul.f32 %v8347, %v8256
        %v9533 = vmul.f32 %v8348, %v8241
        %v9534 = vmul.f32 %v8349, %v8246
        %v9535 = vmul.f32 %v8350, %v8251
        %v9536 = vmul.f32 %v8351, %v8256
        %v9537 = vmul.f32 %v8352, %v8241
        %v9538 = vmul.f32 %v8353, %v8246
        %v9539 = vmul.f32 %v8354, %v8251
        %v9540 = vmul.f32 %v8355, %v8256
        %v9541 = vmul.f32 %v8356, %v8241
        %v9542 = vmul.f32 %v8357, %v8246
        %v9543 = vmul.f32 %v8358, %v8251
        %v9544 = vmul.f32 %v8359, %v8256
        %v9545 = vmul.f32 %v8360, %v8241
        %v9546 = vmul.f32 %v8361, %v8246
        %v9547 = vmul.f32 %v8362, %v8251
        %v9548 = vmul.f32 %v8363, %v8256
        %v9549 = vmul.f32 %v8364, %v8241
        %v9550 = vmul.f32 %v8365, %v8246
        %v9551 = vmul.f32 %v8366, %v8251
        %v9552 = vmul.f32 %v8367, %v8256
        %v9553 = vmul.f32 %v8368, %v8241
        %v9554 = vmul.f32 %v8369, %v8246
        %v9555 = vmul.f32 %v8370, %v8251
        %v9556 = vmul.f32 %v8371, %v8256
        %v9557 = vmul.f32 %v8372, %v8241
        %v9558 = vmul.f32 %v8373, %v8246
        %v9559 = vmul.f32 %v8374, %v8251
        %v9560 = vmul.f32 %v8375, %v8256
        %v9561 = vmul.f32 %v8376, %v8241
        %v9562 = vmul.f32 %v8377, %v8246
        %v9563 = vmul.f32 %v8378, %v8251
        %v9564 = vmul.f32 %v8379, %v8256
        %v9565 = vmul.f32 %v8380, %v8241
        %v9566 = vmul.f32 %v8381, %v8246
        %v9567 = vmul.f32 %v8382, %v8251
        %v9568 = vmul.f32 %v8383, %v8256
        %v9569 = vmul.f32 %v8384, %v8241
        %v9570 = vmul.f32 %v8385, %v8246
        %v9571 = vmul.f32 %v8386, %v8251
        %v9572 = vmul.f32 %v8387, %v8256
        %v9573 = vadd.f32 %v9317, %v9445
        %v9574 = vadd.f32 %v9318, %v9446
        %v9575 = vadd.f32 %v9319, %v9447
        %v9576 = vadd.f32 %v9320, %v9448
        %v9577 = vadd.f32 %v9321, %v9449
        %v9578 = vadd.f32 %v9322, %v9450
        %v9579 = vadd.f32 %v9323, %v9451
        %v9580 = vadd.f32 %v9324, %v9452
        %v9581 = vadd.f32 %v9325, %v9453
        %v9582 = vadd.f32 %v9326, %v9454
        %v9583 = vadd.f32 %v9327, %v9455
        %v9584 = vadd.f32 %v9328, %v9456
        %v9585 = vadd.f32 %v9329, %v9457
        %v9586 = vadd.f32 %v9330, %v9458
        %v9587 = vadd.f32 %v9331, %v9459
        %v9588 = vadd.f32 %v9332, %v9460
        %v9589 = vadd.f32 %v9333, %v9461
        %v9590 = vadd.f32 %v9334, %v9462
        %v9591 = vadd.f32 %v9335, %v9463
        %v9592 = vadd.f32 %v9336, %v9464
        %v9593 = vadd.f32 %v9337, %v9465
        %v9594 = vadd.f32 %v9338, %v9466
        %v9595 = vadd.f32 %v9339, %v9467
        %v9596 = vadd.f32 %v9340, %v9468
        %v9597 = vadd.f32 %v9341, %v9469
        %v9598 = vadd.f32 %v9342, %v9470
        %v9599 = vadd.f32 %v9343, %v9471
        %v9600 = vadd.f32 %v9344, %v9472
        %v9601 = vadd.f32 %v9345, %v9473
        %v9602 = vadd.f32 %v9346, %v9474
        %v9603 = vadd.f32 %v9347, %v9475
        %v9604 = vadd.f32 %v9348, %v9476
        %v9605 = vadd.f32 %v9349, %v9477
        %v9606 = vadd.f32 %v9350, %v9478
        %v9607 = vadd.f32 %v9351, %v9479
        %v9608 = vadd.f32 %v9352, %v9480
        %v9609 = vadd.f32 %v9353, %v9481
        %v9610 = vadd.f32 %v9354, %v9482
        %v9611 = vadd.f32 %v9355, %v9483
        %v9612 = vadd.f32 %v9356, %v9484
        %v9613 = vadd.f32 %v9357, %v9485
        %v9614 = vadd.f32 %v9358, %v9486
        %v9615 = vadd.f32 %v9359, %v9487
        %v9616 = vadd.f32 %v9360, %v9488
        %v9617 = vadd.f32 %v9361, %v9489
        %v9618 = vadd.f32 %v9362, %v9490
        %v9619 = vadd.f32 %v9363, %v9491
        %v9620 = vadd.f32 %v9364, %v9492
        %v9621 = vadd.f32 %v9365, %v9493
        %v9622 = vadd.f32 %v9366, %v9494
        %v9623 = vadd.f32 %v9367, %v9495
        %v9624 = vadd.f32 %v9368, %v9496
        %v9625 = vadd.f32 %v9369, %v9497
        %v9626 = vadd.f32 %v9370, %v9498
        %v9627 = vadd.f32 %v9371, %v9499
        %v9628 = vadd.f32 %v9372, %v9500
        %v9629 = vadd.f32 %v9373, %v9501
        %v9630 = vadd.f32 %v9374, %v9502
        %v9631 = vadd.f32 %v9375, %v9503
        %v9632 = vadd.f32 %v9376, %v9504
        %v9633 = vadd.f32 %v9377, %v9505
        %v9634 = vadd.f32 %v9378, %v9506
        %v9635 = vadd.f32 %v9379, %v9507
        %v9636 = vadd.f32 %v9380, %v9508
        %v9637 = vadd.f32 %v9381, %v9509
        %v9638 = vadd.f32 %v9382, %v9510
        %v9639 = vadd.f32 %v9383, %v9511
        %v9640 = vadd.f32 %v9384, %v9512
        %v9641 = vadd.f32 %v9385, %v9513
        %v9642 = vadd.f32 %v9386, %v9514
        %v9643 = vadd.f32 %v9387, %v9515
        %v9644 = vadd.f32 %v9388, %v9516
        %v9645 = vadd.f32 %v9389, %v9517
        %v9646 = vadd.f32 %v9390, %v9518
        %v9647 = vadd.f32 %v9391, %v9519
        %v9648 = vadd.f32 %v9392, %v9520
        %v9649 = vadd.f32 %v9393, %v9521
        %v9650 = vadd.f32 %v9394, %v9522
        %v9651 = vadd.f32 %v9395, %v9523
        %v9652 = vadd.f32 %v9396, %v9524
        %v9653 = vadd.f32 %v9397, %v9525
        %v9654 = vadd.f32 %v9398, %v9526
        %v9655 = vadd.f32 %v9399, %v9527
        %v9656 = vadd.f32 %v9400, %v9528
        %v9657 = vadd.f32 %v9401, %v9529
        %v9658 = vadd.f32 %v9402, %v9530
        %v9659 = vadd.f32 %v9403, %v9531
        %v9660 = vadd.f32 %v9404, %v9532
        %v9661 = vadd.f32 %v9405, %v9533
        %v9662 = vadd.f32 %v9406, %v9534
        %v9663 = vadd.f32 %v9407, %v9535
        %v9664 = vadd.f32 %v9408, %v9536
        %v9665 = vadd.f32 %v9409, %v9537
        %v9666 = vadd.f32 %v9410, %v9538
        %v9667 = vadd.f32 %v9411, %v9539
        %v9668 = vadd.f32 %v9412, %v9540
        %v9669 = vadd.f32 %v9413, %v9541
        %v9670 = vadd.f32 %v9414, %v9542
        %v9671 = vadd.f32 %v9415, %v9543
        %v9672 = vadd.f32 %v9416, %v9544
        %v9673 = vadd.f32 %v9417, %v9545
        %v9674 = vadd.f32 %v9418, %v9546
        %v9675 = vadd.f32 %v9419, %v9547
        %v9676 = vadd.f32 %v9420, %v9548
        %v9677 = vadd.f32 %v9421, %v9549
        %v9678 = vadd.f32 %v9422, %v9550
        %v9679 = vadd.f32 %v9423, %v9551
        %v9680 = vadd.f32 %v9424, %v9552
        %v9681 = vadd.f32 %v9425, %v9553
        %v9682 = vadd.f32 %v9426, %v9554
        %v9683 = vadd.f32 %v9427, %v9555
        %v9684 = vadd.f32 %v9428, %v9556
        %v9685 = vadd.f32 %v9429, %v9557
        %v9686 = vadd.f32 %v9430, %v9558
        %v9687 = vadd.f32 %v9431, %v9559
        %v9688 = vadd.f32 %v9432, %v9560
        %v9689 = vadd.f32 %v9433, %v9561
        %v9690 = vadd.f32 %v9434, %v9562
        %v9691 = vadd.f32 %v9435, %v9563
        %v9692 = vadd.f32 %v9436, %v9564
        %v9693 = vadd.f32 %v9437, %v9565
        %v9694 = vadd.f32 %v9438, %v9566
        %v9695 = vadd.f32 %v9439, %v9567
        %v9696 = vadd.f32 %v9440, %v9568
        %v9697 = vadd.f32 %v9441, %v9569
        %v9698 = vadd.f32 %v9442, %v9570
        %v9699 = vadd.f32 %v9443, %v9571
        %v9700 = vadd.f32 %v9444, %v9572
        %v9701 = vsel %vm1451, %v9573, 0.0
        %v9702 = vsel %vm1451, %v9574, 0.0
        %v9703 = vadd.f32 %v9701, %v9702
        %v9704 = vsel %vm1451, %v9575, 0.0
        %v9705 = vadd.f32 %v9703, %v9704
        %v9706 = vsel %vm1451, %v9576, 0.0
        %v9707 = vadd.f32 %v9705, %v9706
        %v9708 = vrot.slane %v9707, 4
        %v9709 = vadd.f32 %v9707, %v9708
        %v9710 = vrot.slane %v9709, 2
        %v9711 = vadd.f32 %v9709, %v9710
        %v9712 = vrot.slane %v9711, 1
        %v9713 = vadd.f32 %v9711, %v9712
        %v9714 = vsel %vm1451, %v9577, 0.0
        %v9715 = vsel %vm1451, %v9578, 0.0
        %v9716 = vadd.f32 %v9714, %v9715
        %v9717 = vsel %vm1451, %v9579, 0.0
        %v9718 = vadd.f32 %v9716, %v9717
        %v9719 = vsel %vm1451, %v9580, 0.0
        %v9720 = vadd.f32 %v9718, %v9719
        %v9721 = vrot.slane %v9720, 4
        %v9722 = vadd.f32 %v9720, %v9721
        %v9723 = vrot.slane %v9722, 2
        %v9724 = vadd.f32 %v9722, %v9723
        %v9725 = vrot.slane %v9724, 1
        %v9726 = vadd.f32 %v9724, %v9725
        %v9727 = vsel %vm1451, %v9581, 0.0
        %v9728 = vsel %vm1451, %v9582, 0.0
        %v9729 = vadd.f32 %v9727, %v9728
        %v9730 = vsel %vm1451, %v9583, 0.0
        %v9731 = vadd.f32 %v9729, %v9730
        %v9732 = vsel %vm1451, %v9584, 0.0
        %v9733 = vadd.f32 %v9731, %v9732
        %v9734 = vrot.slane %v9733, 4
        %v9735 = vadd.f32 %v9733, %v9734
        %v9736 = vrot.slane %v9735, 2
        %v9737 = vadd.f32 %v9735, %v9736
        %v9738 = vrot.slane %v9737, 1
        %v9739 = vadd.f32 %v9737, %v9738
        %v9740 = vsel %vm1451, %v9585, 0.0
        %v9741 = vsel %vm1451, %v9586, 0.0
        %v9742 = vadd.f32 %v9740, %v9741
        %v9743 = vsel %vm1451, %v9587, 0.0
        %v9744 = vadd.f32 %v9742, %v9743
        %v9745 = vsel %vm1451, %v9588, 0.0
        %v9746 = vadd.f32 %v9744, %v9745
        %v9747 = vrot.slane %v9746, 4
        %v9748 = vadd.f32 %v9746, %v9747
        %v9749 = vrot.slane %v9748, 2
        %v9750 = vadd.f32 %v9748, %v9749
        %v9751 = vrot.slane %v9750, 1
        %v9752 = vadd.f32 %v9750, %v9751
        %v9753 = vsel %vm1451, %v9589, 0.0
        %v9754 = vsel %vm1451, %v9590, 0.0
        %v9755 = vadd.f32 %v9753, %v9754
        %v9756 = vsel %vm1451, %v9591, 0.0
        %v9757 = vadd.f32 %v9755, %v9756
        %v9758 = vsel %vm1451, %v9592, 0.0
        %v9759 = vadd.f32 %v9757, %v9758
        %v9760 = vrot.slane %v9759, 4
        %v9761 = vadd.f32 %v9759, %v9760
        %v9762 = vrot.slane %v9761, 2
        %v9763 = vadd.f32 %v9761, %v9762
        %v9764 = vrot.slane %v9763, 1
        %v9765 = vadd.f32 %v9763, %v9764
        %v9766 = vsel %vm1451, %v9593, 0.0
        %v9767 = vsel %vm1451, %v9594, 0.0
        %v9768 = vadd.f32 %v9766, %v9767
        %v9769 = vsel %vm1451, %v9595, 0.0
        %v9770 = vadd.f32 %v9768, %v9769
        %v9771 = vsel %vm1451, %v9596, 0.0
        %v9772 = vadd.f32 %v9770, %v9771
        %v9773 = vrot.slane %v9772, 4
        %v9774 = vadd.f32 %v9772, %v9773
        %v9775 = vrot.slane %v9774, 2
        %v9776 = vadd.f32 %v9774, %v9775
        %v9777 = vrot.slane %v9776, 1
        %v9778 = vadd.f32 %v9776, %v9777
        %v9779 = vsel %vm1451, %v9597, 0.0
        %v9780 = vsel %vm1451, %v9598, 0.0
        %v9781 = vadd.f32 %v9779, %v9780
        %v9782 = vsel %vm1451, %v9599, 0.0
        %v9783 = vadd.f32 %v9781, %v9782
        %v9784 = vsel %vm1451, %v9600, 0.0
        %v9785 = vadd.f32 %v9783, %v9784
        %v9786 = vrot.slane %v9785, 4
        %v9787 = vadd.f32 %v9785, %v9786
        %v9788 = vrot.slane %v9787, 2
        %v9789 = vadd.f32 %v9787, %v9788
        %v9790 = vrot.slane %v9789, 1
        %v9791 = vadd.f32 %v9789, %v9790
        %v9792 = vsel %vm1451, %v9601, 0.0
        %v9793 = vsel %vm1451, %v9602, 0.0
        %v9794 = vadd.f32 %v9792, %v9793
        %v9795 = vsel %vm1451, %v9603, 0.0
        %v9796 = vadd.f32 %v9794, %v9795
        %v9797 = vsel %vm1451, %v9604, 0.0
        %v9798 = vadd.f32 %v9796, %v9797
        %v9799 = vrot.slane %v9798, 4
        %v9800 = vadd.f32 %v9798, %v9799
        %v9801 = vrot.slane %v9800, 2
        %v9802 = vadd.f32 %v9800, %v9801
        %v9803 = vrot.slane %v9802, 1
        %v9804 = vadd.f32 %v9802, %v9803
        %v9805 = vsel %vm1451, %v9605, 0.0
        %v9806 = vsel %vm1451, %v9606, 0.0
        %v9807 = vadd.f32 %v9805, %v9806
        %v9808 = vsel %vm1451, %v9607, 0.0
        %v9809 = vadd.f32 %v9807, %v9808
        %v9810 = vsel %vm1451, %v9608, 0.0
        %v9811 = vadd.f32 %v9809, %v9810
        %v9812 = vrot.slane %v9811, 4
        %v9813 = vadd.f32 %v9811, %v9812
        %v9814 = vrot.slane %v9813, 2
        %v9815 = vadd.f32 %v9813, %v9814
        %v9816 = vrot.slane %v9815, 1
        %v9817 = vadd.f32 %v9815, %v9816
        %v9818 = vsel %vm1451, %v9609, 0.0
        %v9819 = vsel %vm1451, %v9610, 0.0
        %v9820 = vadd.f32 %v9818, %v9819
        %v9821 = vsel %vm1451, %v9611, 0.0
        %v9822 = vadd.f32 %v9820, %v9821
        %v9823 = vsel %vm1451, %v9612, 0.0
        %v9824 = vadd.f32 %v9822, %v9823
        %v9825 = vrot.slane %v9824, 4
        %v9826 = vadd.f32 %v9824, %v9825
        %v9827 = vrot.slane %v9826, 2
        %v9828 = vadd.f32 %v9826, %v9827
        %v9829 = vrot.slane %v9828, 1
        %v9830 = vadd.f32 %v9828, %v9829
        %v9831 = vsel %vm1451, %v9613, 0.0
        %v9832 = vsel %vm1451, %v9614, 0.0
        %v9833 = vadd.f32 %v9831, %v9832
        %v9834 = vsel %vm1451, %v9615, 0.0
        %v9835 = vadd.f32 %v9833, %v9834
        %v9836 = vsel %vm1451, %v9616, 0.0
        %v9837 = vadd.f32 %v9835, %v9836
        %v9838 = vrot.slane %v9837, 4
        %v9839 = vadd.f32 %v9837, %v9838
        %v9840 = vrot.slane %v9839, 2
        %v9841 = vadd.f32 %v9839, %v9840
        %v9842 = vrot.slane %v9841, 1
        %v9843 = vadd.f32 %v9841, %v9842
        %v9844 = vsel %vm1451, %v9617, 0.0
        %v9845 = vsel %vm1451, %v9618, 0.0
        %v9846 = vadd.f32 %v9844, %v9845
        %v9847 = vsel %vm1451, %v9619, 0.0
        %v9848 = vadd.f32 %v9846, %v9847
        %v9849 = vsel %vm1451, %v9620, 0.0
        %v9850 = vadd.f32 %v9848, %v9849
        %v9851 = vrot.slane %v9850, 4
        %v9852 = vadd.f32 %v9850, %v9851
        %v9853 = vrot.slane %v9852, 2
        %v9854 = vadd.f32 %v9852, %v9853
        %v9855 = vrot.slane %v9854, 1
        %v9856 = vadd.f32 %v9854, %v9855
        %v9857 = vsel %vm1451, %v9621, 0.0
        %v9858 = vsel %vm1451, %v9622, 0.0
        %v9859 = vadd.f32 %v9857, %v9858
        %v9860 = vsel %vm1451, %v9623, 0.0
        %v9861 = vadd.f32 %v9859, %v9860
        %v9862 = vsel %vm1451, %v9624, 0.0
        %v9863 = vadd.f32 %v9861, %v9862
        %v9864 = vrot.slane %v9863, 4
        %v9865 = vadd.f32 %v9863, %v9864
        %v9866 = vrot.slane %v9865, 2
        %v9867 = vadd.f32 %v9865, %v9866
        %v9868 = vrot.slane %v9867, 1
        %v9869 = vadd.f32 %v9867, %v9868
        %v9870 = vsel %vm1451, %v9625, 0.0
        %v9871 = vsel %vm1451, %v9626, 0.0
        %v9872 = vadd.f32 %v9870, %v9871
        %v9873 = vsel %vm1451, %v9627, 0.0
        %v9874 = vadd.f32 %v9872, %v9873
        %v9875 = vsel %vm1451, %v9628, 0.0
        %v9876 = vadd.f32 %v9874, %v9875
        %v9877 = vrot.slane %v9876, 4
        %v9878 = vadd.f32 %v9876, %v9877
        %v9879 = vrot.slane %v9878, 2
        %v9880 = vadd.f32 %v9878, %v9879
        %v9881 = vrot.slane %v9880, 1
        %v9882 = vadd.f32 %v9880, %v9881
        %v9883 = vsel %vm1451, %v9629, 0.0
        %v9884 = vsel %vm1451, %v9630, 0.0
        %v9885 = vadd.f32 %v9883, %v9884
        %v9886 = vsel %vm1451, %v9631, 0.0
        %v9887 = vadd.f32 %v9885, %v9886
        %v9888 = vsel %vm1451, %v9632, 0.0
        %v9889 = vadd.f32 %v9887, %v9888
        %v9890 = vrot.slane %v9889, 4
        %v9891 = vadd.f32 %v9889, %v9890
        %v9892 = vrot.slane %v9891, 2
        %v9893 = vadd.f32 %v9891, %v9892
        %v9894 = vrot.slane %v9893, 1
        %v9895 = vadd.f32 %v9893, %v9894
        %v9896 = vsel %vm1451, %v9633, 0.0
        %v9897 = vsel %vm1451, %v9634, 0.0
        %v9898 = vadd.f32 %v9896, %v9897
        %v9899 = vsel %vm1451, %v9635, 0.0
        %v9900 = vadd.f32 %v9898, %v9899
        %v9901 = vsel %vm1451, %v9636, 0.0
        %v9902 = vadd.f32 %v9900, %v9901
        %v9903 = vrot.slane %v9902, 4
        %v9904 = vadd.f32 %v9902, %v9903
        %v9905 = vrot.slane %v9904, 2
        %v9906 = vadd.f32 %v9904, %v9905
        %v9907 = vrot.slane %v9906, 1
        %v9908 = vadd.f32 %v9906, %v9907
        %v9909 = vsel %vm1451, %v9637, 0.0
        %v9910 = vsel %vm1451, %v9638, 0.0
        %v9911 = vadd.f32 %v9909, %v9910
        %v9912 = vsel %vm1451, %v9639, 0.0
        %v9913 = vadd.f32 %v9911, %v9912
        %v9914 = vsel %vm1451, %v9640, 0.0
        %v9915 = vadd.f32 %v9913, %v9914
        %v9916 = vrot.slane %v9915, 4
        %v9917 = vadd.f32 %v9915, %v9916
        %v9918 = vrot.slane %v9917, 2
        %v9919 = vadd.f32 %v9917, %v9918
        %v9920 = vrot.slane %v9919, 1
        %v9921 = vadd.f32 %v9919, %v9920
        %v9922 = vsel %vm1451, %v9641, 0.0
        %v9923 = vsel %vm1451, %v9642, 0.0
        %v9924 = vadd.f32 %v9922, %v9923
        %v9925 = vsel %vm1451, %v9643, 0.0
        %v9926 = vadd.f32 %v9924, %v9925
        %v9927 = vsel %vm1451, %v9644, 0.0
        %v9928 = vadd.f32 %v9926, %v9927
        %v9929 = vrot.slane %v9928, 4
        %v9930 = vadd.f32 %v9928, %v9929
        %v9931 = vrot.slane %v9930, 2
        %v9932 = vadd.f32 %v9930, %v9931
        %v9933 = vrot.slane %v9932, 1
        %v9934 = vadd.f32 %v9932, %v9933
        %v9935 = vsel %vm1451, %v9645, 0.0
        %v9936 = vsel %vm1451, %v9646, 0.0
        %v9937 = vadd.f32 %v9935, %v9936
        %v9938 = vsel %vm1451, %v9647, 0.0
        %v9939 = vadd.f32 %v9937, %v9938
        %v9940 = vsel %vm1451, %v9648, 0.0
        %v9941 = vadd.f32 %v9939, %v9940
        %v9942 = vrot.slane %v9941, 4
        %v9943 = vadd.f32 %v9941, %v9942
        %v9944 = vrot.slane %v9943, 2
        %v9945 = vadd.f32 %v9943, %v9944
        %v9946 = vrot.slane %v9945, 1
        %v9947 = vadd.f32 %v9945, %v9946
        %v9948 = vsel %vm1451, %v9649, 0.0
        %v9949 = vsel %vm1451, %v9650, 0.0
        %v9950 = vadd.f32 %v9948, %v9949
        %v9951 = vsel %vm1451, %v9651, 0.0
        %v9952 = vadd.f32 %v9950, %v9951
        %v9953 = vsel %vm1451, %v9652, 0.0
        %v9954 = vadd.f32 %v9952, %v9953
        %v9955 = vrot.slane %v9954, 4
        %v9956 = vadd.f32 %v9954, %v9955
        %v9957 = vrot.slane %v9956, 2
        %v9958 = vadd.f32 %v9956, %v9957
        %v9959 = vrot.slane %v9958, 1
        %v9960 = vadd.f32 %v9958, %v9959
        %v9961 = vsel %vm1451, %v9653, 0.0
        %v9962 = vsel %vm1451, %v9654, 0.0
        %v9963 = vadd.f32 %v9961, %v9962
        %v9964 = vsel %vm1451, %v9655, 0.0
        %v9965 = vadd.f32 %v9963, %v9964
        %v9966 = vsel %vm1451, %v9656, 0.0
        %v9967 = vadd.f32 %v9965, %v9966
        %v9968 = vrot.slane %v9967, 4
        %v9969 = vadd.f32 %v9967, %v9968
        %v9970 = vrot.slane %v9969, 2
        %v9971 = vadd.f32 %v9969, %v9970
        %v9972 = vrot.slane %v9971, 1
        %v9973 = vadd.f32 %v9971, %v9972
        %v9974 = vsel %vm1451, %v9657, 0.0
        %v9975 = vsel %vm1451, %v9658, 0.0
        %v9976 = vadd.f32 %v9974, %v9975
        %v9977 = vsel %vm1451, %v9659, 0.0
        %v9978 = vadd.f32 %v9976, %v9977
        %v9979 = vsel %vm1451, %v9660, 0.0
        %v9980 = vadd.f32 %v9978, %v9979
        %v9981 = vrot.slane %v9980, 4
        %v9982 = vadd.f32 %v9980, %v9981
        %v9983 = vrot.slane %v9982, 2
        %v9984 = vadd.f32 %v9982, %v9983
        %v9985 = vrot.slane %v9984, 1
        %v9986 = vadd.f32 %v9984, %v9985
        %v9987 = vsel %vm1451, %v9661, 0.0
        %v9988 = vsel %vm1451, %v9662, 0.0
        %v9989 = vadd.f32 %v9987, %v9988
        %v9990 = vsel %vm1451, %v9663, 0.0
        %v9991 = vadd.f32 %v9989, %v9990
        %v9992 = vsel %vm1451, %v9664, 0.0
        %v9993 = vadd.f32 %v9991, %v9992
        %v9994 = vrot.slane %v9993, 4
        %v9995 = vadd.f32 %v9993, %v9994
        %v9996 = vrot.slane %v9995, 2
        %v9997 = vadd.f32 %v9995, %v9996
        %v9998 = vrot.slane %v9997, 1
        %v9999 = vadd.f32 %v9997, %v9998
        %v10000 = vsel %vm1451, %v9665, 0.0
        %v10001 = vsel %vm1451, %v9666, 0.0
        %v10002 = vadd.f32 %v10000, %v10001
        %v10003 = vsel %vm1451, %v9667, 0.0
        %v10004 = vadd.f32 %v10002, %v10003
        %v10005 = vsel %vm1451, %v9668, 0.0
        %v10006 = vadd.f32 %v10004, %v10005
        %v10007 = vrot.slane %v10006, 4
        %v10008 = vadd.f32 %v10006, %v10007
        %v10009 = vrot.slane %v10008, 2
        %v10010 = vadd.f32 %v10008, %v10009
        %v10011 = vrot.slane %v10010, 1
        %v10012 = vadd.f32 %v10010, %v10011
        %v10013 = vsel %vm1451, %v9669, 0.0
        %v10014 = vsel %vm1451, %v9670, 0.0
        %v10015 = vadd.f32 %v10013, %v10014
        %v10016 = vsel %vm1451, %v9671, 0.0
        %v10017 = vadd.f32 %v10015, %v10016
        %v10018 = vsel %vm1451, %v9672, 0.0
        %v10019 = vadd.f32 %v10017, %v10018
        %v10020 = vrot.slane %v10019, 4
        %v10021 = vadd.f32 %v10019, %v10020
        %v10022 = vrot.slane %v10021, 2
        %v10023 = vadd.f32 %v10021, %v10022
        %v10024 = vrot.slane %v10023, 1
        %v10025 = vadd.f32 %v10023, %v10024
        %v10026 = vsel %vm1451, %v9673, 0.0
        %v10027 = vsel %vm1451, %v9674, 0.0
        %v10028 = vadd.f32 %v10026, %v10027
        %v10029 = vsel %vm1451, %v9675, 0.0
        %v10030 = vadd.f32 %v10028, %v10029
        %v10031 = vsel %vm1451, %v9676, 0.0
        %v10032 = vadd.f32 %v10030, %v10031
        %v10033 = vrot.slane %v10032, 4
        %v10034 = vadd.f32 %v10032, %v10033
        %v10035 = vrot.slane %v10034, 2
        %v10036 = vadd.f32 %v10034, %v10035
        %v10037 = vrot.slane %v10036, 1
        %v10038 = vadd.f32 %v10036, %v10037
        %v10039 = vsel %vm1451, %v9677, 0.0
        %v10040 = vsel %vm1451, %v9678, 0.0
        %v10041 = vadd.f32 %v10039, %v10040
        %v10042 = vsel %vm1451, %v9679, 0.0
        %v10043 = vadd.f32 %v10041, %v10042
        %v10044 = vsel %vm1451, %v9680, 0.0
        %v10045 = vadd.f32 %v10043, %v10044
        %v10046 = vrot.slane %v10045, 4
        %v10047 = vadd.f32 %v10045, %v10046
        %v10048 = vrot.slane %v10047, 2
        %v10049 = vadd.f32 %v10047, %v10048
        %v10050 = vrot.slane %v10049, 1
        %v10051 = vadd.f32 %v10049, %v10050
        %v10052 = vsel %vm1451, %v9681, 0.0
        %v10053 = vsel %vm1451, %v9682, 0.0
        %v10054 = vadd.f32 %v10052, %v10053
        %v10055 = vsel %vm1451, %v9683, 0.0
        %v10056 = vadd.f32 %v10054, %v10055
        %v10057 = vsel %vm1451, %v9684, 0.0
        %v10058 = vadd.f32 %v10056, %v10057
        %v10059 = vrot.slane %v10058, 4
        %v10060 = vadd.f32 %v10058, %v10059
        %v10061 = vrot.slane %v10060, 2
        %v10062 = vadd.f32 %v10060, %v10061
        %v10063 = vrot.slane %v10062, 1
        %v10064 = vadd.f32 %v10062, %v10063
        %v10065 = vsel %vm1451, %v9685, 0.0
        %v10066 = vsel %vm1451, %v9686, 0.0
        %v10067 = vadd.f32 %v10065, %v10066
        %v10068 = vsel %vm1451, %v9687, 0.0
        %v10069 = vadd.f32 %v10067, %v10068
        %v10070 = vsel %vm1451, %v9688, 0.0
        %v10071 = vadd.f32 %v10069, %v10070
        %v10072 = vrot.slane %v10071, 4
        %v10073 = vadd.f32 %v10071, %v10072
        %v10074 = vrot.slane %v10073, 2
        %v10075 = vadd.f32 %v10073, %v10074
        %v10076 = vrot.slane %v10075, 1
        %v10077 = vadd.f32 %v10075, %v10076
        %v10078 = vsel %vm1451, %v9689, 0.0
        %v10079 = vsel %vm1451, %v9690, 0.0
        %v10080 = vadd.f32 %v10078, %v10079
        %v10081 = vsel %vm1451, %v9691, 0.0
        %v10082 = vadd.f32 %v10080, %v10081
        %v10083 = vsel %vm1451, %v9692, 0.0
        %v10084 = vadd.f32 %v10082, %v10083
        %v10085 = vrot.slane %v10084, 4
        %v10086 = vadd.f32 %v10084, %v10085
        %v10087 = vrot.slane %v10086, 2
        %v10088 = vadd.f32 %v10086, %v10087
        %v10089 = vrot.slane %v10088, 1
        %v10090 = vadd.f32 %v10088, %v10089
        %v10091 = vsel %vm1451, %v9693, 0.0
        %v10092 = vsel %vm1451, %v9694, 0.0
        %v10093 = vadd.f32 %v10091, %v10092
        %v10094 = vsel %vm1451, %v9695, 0.0
        %v10095 = vadd.f32 %v10093, %v10094
        %v10096 = vsel %vm1451, %v9696, 0.0
        %v10097 = vadd.f32 %v10095, %v10096
        %v10098 = vrot.slane %v10097, 4
        %v10099 = vadd.f32 %v10097, %v10098
        %v10100 = vrot.slane %v10099, 2
        %v10101 = vadd.f32 %v10099, %v10100
        %v10102 = vrot.slane %v10101, 1
        %v10103 = vadd.f32 %v10101, %v10102
        %v10104 = vsel %vm1451, %v9697, 0.0
        %v10105 = vsel %vm1451, %v9698, 0.0
        %v10106 = vadd.f32 %v10104, %v10105
        %v10107 = vsel %vm1451, %v9699, 0.0
        %v10108 = vadd.f32 %v10106, %v10107
        %v10109 = vsel %vm1451, %v9700, 0.0
        %v10110 = vadd.f32 %v10108, %v10109
        %v10111 = vrot.slane %v10110, 4
        %v10112 = vadd.f32 %v10110, %v10111
        %v10113 = vrot.slane %v10112, 2
        %v10114 = vadd.f32 %v10112, %v10113
        %v10115 = vrot.slane %v10114, 1
        %v10116 = vadd.f32 %v10114, %v10115
        %v10149 = vsel %vm2700, %v9726, %v9713
        %v10150 = vsel %vm2702, %v9739, %v10149
        %v10151 = vsel %vm2704, %v9752, %v10150
        %v10152 = vsel %vm2706, %v9765, %v10151
        %v10153 = vsel %vm2708, %v9778, %v10152
        %v10154 = vsel %vm2710, %v9791, %v10153
        %v10155 = vsel %vm2712, %v9804, %v10154
        %v10156 = vsel %vm2700, %v9830, %v9817
        %v10157 = vsel %vm2702, %v9843, %v10156
        %v10158 = vsel %vm2704, %v9856, %v10157
        %v10159 = vsel %vm2706, %v9869, %v10158
        %v10160 = vsel %vm2708, %v9882, %v10159
        %v10161 = vsel %vm2710, %v9895, %v10160
        %v10162 = vsel %vm2712, %v9908, %v10161
        %v10163 = vsel %vm2700, %v9934, %v9921
        %v10164 = vsel %vm2702, %v9947, %v10163
        %v10165 = vsel %vm2704, %v9960, %v10164
        %v10166 = vsel %vm2706, %v9973, %v10165
        %v10167 = vsel %vm2708, %v9986, %v10166
        %v10168 = vsel %vm2710, %v9999, %v10167
        %v10169 = vsel %vm2712, %v10012, %v10168
        %v10170 = vsel %vm2700, %v10038, %v10025
        %v10171 = vsel %vm2702, %v10051, %v10170
        %v10172 = vsel %vm2704, %v10064, %v10171
        %v10173 = vsel %vm2706, %v10077, %v10172
        %v10174 = vsel %vm2708, %v10090, %v10173
        %v10175 = vsel %vm2710, %v10103, %v10174
        %v10176 = vsel %vm2712, %v10116, %v10175
        %v10177 = vsel %vm1451, %v10155, 0
        %v10179 = vsel %vm1451, %v10162, 0
        %v10181 = vsel %vm1451, %v10169, 0
        %v10183 = vsel %vm1451, %v10176, 0
        %10185 = vmatprep.subr.mxu0 0.0
        %10186 = vmatpush1.msra.mxu0 %v627
        %10187 = vmatprep.subr.mxu0 0.0
        %10188 = vmatpush1.msra.mxu0 0.0
        %10189 = vmatprep.subr.mxu0 0.0
        %10190 = vmatpush1.msra.mxu0 0.0
        %10191 = vmatprep.subr.mxu0 0.0
        %10192 = vmatpush1.msra.mxu0 0.0
        %10193 = vmatprep.subr.mxu0 0.0
        %10194 = vmatpush1.msra.mxu0 0.0
        %10195 = vmatprep.subr.mxu0 0.0
        %10196 = vmatpush1.msra.mxu0 0.0
        %10197 = vmatprep.subr.mxu0 0.0
        %10198 = vmatpush1.msra.mxu0 0.0
        %10199 = vmatprep.subr.mxu0 0.0
        %10200 = vmatpush1.msra.mxu0 0.0
        %10201 = vmatprep.subr.mxu0 0.0
        %10202 = vmatpush1.msra.mxu0 0.0
        %10203 = vmatprep.subr.mxu0 0.0
        %10204 = vmatpush1.msra.mxu0 0.0
        %10205 = vmatprep.subr.mxu0 0.0
        %10206 = vmatpush1.msra.mxu0 0.0
        %10207 = vmatprep.subr.mxu0 0.0
        %10208 = vmatpush1.msra.mxu0 0.0
        %10209 = vmatprep.subr.mxu0 0.0
        %10210 = vmatpush1.msra.mxu0 0.0
        %10211 = vmatprep.subr.mxu0 0.0
        %10212 = vmatpush1.msra.mxu0 0.0
        %10213 = vmatprep.subr.mxu0 0.0
        %10214 = vmatpush1.msra.mxu0 0.0
        %10215 = vmatprep.subr.mxu0 0.0
        %10216 = vmatpush1.msra.mxu0 0.0
        %10217 = vmatprep.subr.mxu0 0.0
        %10218 = vmatpush1.msra.mxu0 0.0
        %10219 = vmatprep.subr.mxu0 0.0
        %10220 = vmatpush1.msra.mxu0 0.0
        %10221 = vmatprep.subr.mxu0 0.0
        %10222 = vmatpush1.msra.mxu0 0.0
        %10223 = vmatprep.subr.mxu0 0.0
        %10224 = vmatpush1.msra.mxu0 0.0
        %10225 = vmatprep.subr.mxu0 0.0
        %10226 = vmatpush1.msra.mxu0 0.0
        %10227 = vmatprep.subr.mxu0 0.0
        %10228 = vmatpush1.msra.mxu0 0.0
        %10229 = vmatprep.subr.mxu0 0.0
        %10230 = vmatpush1.msra.mxu0 0.0
        %10231 = vmatprep.subr.mxu0 0.0
        %10232 = vmatpush1.msra.mxu0 0.0
        %10233 = vmatprep.subr.mxu0 0.0
        %10234 = vmatpush1.msra.mxu0 0.0
        %10235 = vmatprep.subr.mxu0 0.0
        %10236 = vmatpush1.msra.mxu0 0.0
        %10237 = vmatprep.subr.mxu0 0.0
        %10238 = vmatpush1.msra.mxu0 0.0
        %10239 = vmatprep.subr.mxu0 0.0
        %10240 = vmatpush1.msra.mxu0 0.0
        %10241 = vmatprep.subr.mxu0 0.0
        %10242 = vmatpush1.msra.mxu0 0.0
        %10243 = vmatprep.subr.mxu0 0.0
        %10244 = vmatpush1.msra.mxu0 0.0
        %10245 = vmatprep.subr.mxu0 0.0
        %10246 = vmatpush1.msra.mxu0 0.0
        %10247 = vmatprep.subr.mxu0 0.0
        %10248 = vmatpush1.msra.mxu0 0.0
        %10249 = vmatprep.mubr.f32.mxu0 0.0
        %10250 = vmatmul.mubr.f32.gmra.mrb[0].mxu0 %v10177
        %v10251 = vpop.f32.mrb[0].mxu0
        %v10252 = vadd.f32 0.0, %v10251
        %v10253 = vpop.f32.mrb[0].mxu0
        %10254 = vmatprep.mubr.f32.mxu0 0.0
        %10255 = vmatmul.mubr.f32.gmra.mrb[0].mxu0 %v10179
        %v10256 = vpop.f32.mrb[0].mxu0
        %v10257 = vadd.f32 0.0, %v10256
        %v10258 = vpop.f32.mrb[0].mxu0
        %10259 = vmatprep.mubr.f32.mxu0 0.0
        %10260 = vmatmul.mubr.f32.gmra.mrb[0].mxu0 %v10181
        %v10261 = vpop.f32.mrb[0].mxu0
        %v10262 = vadd.f32 0.0, %v10261
        %v10263 = vpop.f32.mrb[0].mxu0
        %10264 = vmatprep.mubr.f32.mxu0 0.0
        %10265 = vmatmul.mubr.f32.gmra.mrb[0].mxu0 %v10183
        %v10266 = vpop.f32.mrb[0].mxu0
        %v10267 = vadd.f32 0.0, %v10266
        %v10268 = vpop.f32.mrb[0].mxu0
        %10269 = vdwg.mxu0
        %v10302 = vsel %vm2700, %v8926, %v8913
        %v10303 = vsel %vm2702, %v8939, %v10302
        %v10304 = vsel %vm2704, %v8952, %v10303
        %v10305 = vsel %vm2706, %v8965, %v10304
        %v10306 = vsel %vm2708, %v8978, %v10305
        %v10307 = vsel %vm2710, %v8991, %v10306
        %v10308 = vsel %vm2712, %v9004, %v10307
        %v10309 = vsel %vm2700, %v9030, %v9017
        %v10310 = vsel %vm2702, %v9043, %v10309
        %v10311 = vsel %vm2704, %v9056, %v10310
        %v10312 = vsel %vm2706, %v9069, %v10311
        %v10313 = vsel %vm2708, %v9082, %v10312
        %v10314 = vsel %vm2710, %v9095, %v10313
        %v10315 = vsel %vm2712, %v9108, %v10314
        %v10316 = vsel %vm2700, %v9134, %v9121
        %v10317 = vsel %vm2702, %v9147, %v10316
        %v10318 = vsel %vm2704, %v9160, %v10317
        %v10319 = vsel %vm2706, %v9173, %v10318
        %v10320 = vsel %vm2708, %v9186, %v10319
        %v10321 = vsel %vm2710, %v9199, %v10320
        %v10322 = vsel %vm2712, %v9212, %v10321
        %v10323 = vsel %vm2700, %v9238, %v9225
        %v10324 = vsel %vm2702, %v9251, %v10323
        %v10325 = vsel %vm2704, %v9264, %v10324
        %v10326 = vsel %vm2706, %v9277, %v10325
        %v10327 = vsel %vm2708, %v9290, %v10326
        %v10328 = vsel %vm2710, %v9303, %v10327
        %v10329 = vsel %vm2712, %v9316, %v10328
        %v10330 = vsel %vm1451, %v10308, 0
        %v10332 = vsel %vm1451, %v10315, 0
        %v10334 = vsel %vm1451, %v10322, 0
        %v10336 = vsel %vm1451, %v10329, 0
        %10338 = vmatprep.subr.mxu0 0.0
        %10339 = vmatpush1.msra.mxu0 %v626
        %10340 = vmatprep.subr.mxu0 0.0
        %10341 = vmatpush1.msra.mxu0 0.0
        %10342 = vmatprep.subr.mxu0 0.0
        %10343 = vmatpush1.msra.mxu0 0.0
        %10344 = vmatprep.subr.mxu0 0.0
        %10345 = vmatpush1.msra.mxu0 0.0
        %10346 = vmatprep.subr.mxu0 0.0
        %10347 = vmatpush1.msra.mxu0 0.0
        %10348 = vmatprep.subr.mxu0 0.0
        %10349 = vmatpush1.msra.mxu0 0.0
        %10350 = vmatprep.subr.mxu0 0.0
        %10351 = vmatpush1.msra.mxu0 0.0
        %10352 = vmatprep.subr.mxu0 0.0
        %10353 = vmatpush1.msra.mxu0 0.0
        %10354 = vmatprep.subr.mxu0 0.0
        %10355 = vmatpush1.msra.mxu0 0.0
        %10356 = vmatprep.subr.mxu0 0.0
        %10357 = vmatpush1.msra.mxu0 0.0
        %10358 = vmatprep.subr.mxu0 0.0
        %10359 = vmatpush1.msra.mxu0 0.0
        %10360 = vmatprep.subr.mxu0 0.0
        %10361 = vmatpush1.msra.mxu0 0.0
        %10362 = vmatprep.subr.mxu0 0.0
        %10363 = vmatpush1.msra.mxu0 0.0
        %10364 = vmatprep.subr.mxu0 0.0
        %10365 = vmatpush1.msra.mxu0 0.0
        %10366 = vmatprep.subr.mxu0 0.0
        %10367 = vmatpush1.msra.mxu0 0.0
        %10368 = vmatprep.subr.mxu0 0.0
        %10369 = vmatpush1.msra.mxu0 0.0
        %10370 = vmatprep.subr.mxu0 0.0
        %10371 = vmatpush1.msra.mxu0 0.0
        %10372 = vmatprep.subr.mxu0 0.0
        %10373 = vmatpush1.msra.mxu0 0.0
        %10374 = vmatprep.subr.mxu0 0.0
        %10375 = vmatpush1.msra.mxu0 0.0
        %10376 = vmatprep.subr.mxu0 0.0
        %10377 = vmatpush1.msra.mxu0 0.0
        %10378 = vmatprep.subr.mxu0 0.0
        %10379 = vmatpush1.msra.mxu0 0.0
        %10380 = vmatprep.subr.mxu0 0.0
        %10381 = vmatpush1.msra.mxu0 0.0
        %10382 = vmatprep.subr.mxu0 0.0
        %10383 = vmatpush1.msra.mxu0 0.0
        %10384 = vmatprep.subr.mxu0 0.0
        %10385 = vmatpush1.msra.mxu0 0.0
        %10386 = vmatprep.subr.mxu0 0.0
        %10387 = vmatpush1.msra.mxu0 0.0
        %10388 = vmatprep.subr.mxu0 0.0
        %10389 = vmatpush1.msra.mxu0 0.0
        %10390 = vmatprep.subr.mxu0 0.0
        %10391 = vmatpush1.msra.mxu0 0.0
        %10392 = vmatprep.subr.mxu0 0.0
        %10393 = vmatpush1.msra.mxu0 0.0
        %10394 = vmatprep.subr.mxu0 0.0
        %10395 = vmatpush1.msra.mxu0 0.0
        %10396 = vmatprep.subr.mxu0 0.0
        %10397 = vmatpush1.msra.mxu0 0.0
        %10398 = vmatprep.subr.mxu0 0.0
        %10399 = vmatpush1.msra.mxu0 0.0
        %10400 = vmatprep.subr.mxu0 0.0
        %10401 = vmatpush1.msra.mxu0 0.0
        %10402 = vmatprep.mubr.f32.mxu0 0.0
        %10403 = vmatmul.mubr.f32.gmra.mrb[0].mxu0 %v10330
        %v10404 = vpop.f32.mrb[0].mxu0
        %v10405 = vadd.f32 %v10252, %v10404
        %v10406 = vpop.f32.mrb[0].mxu0
        %10407 = vmatprep.mubr.f32.mxu0 0.0
        %10408 = vmatmul.mubr.f32.gmra.mrb[0].mxu0 %v10332
        %v10409 = vpop.f32.mrb[0].mxu0
        %v10410 = vadd.f32 %v10257, %v10409
        %v10411 = vpop.f32.mrb[0].mxu0
        %10412 = vmatprep.mubr.f32.mxu0 0.0
        %10413 = vmatmul.mubr.f32.gmra.mrb[0].mxu0 %v10334
        %v10414 = vpop.f32.mrb[0].mxu0
        %v10415 = vadd.f32 %v10262, %v10414
        %v10416 = vpop.f32.mrb[0].mxu0
        %10417 = vmatprep.mubr.f32.mxu0 0.0
        %10418 = vmatmul.mubr.f32.gmra.mrb[0].mxu0 %v10336
        %v10419 = vpop.f32.mrb[0].mxu0
        %v10420 = vadd.f32 %v10267, %v10419
        %v10421 = vpop.f32.mrb[0].mxu0
        %10422 = vdwg.mxu0
        %s10423 = scalar_lea.vmem %s9, 96
        %v10424 = vld [vmem:[%s10423] sm:$0xff]
        %v10425 = vld [vmem:[%s10423 + $0x8] sm:$0xff]
        %v10426 = vld [vmem:[%s10423 + $0x10] sm:$0xff]
        %v10427 = vld [vmem:[%s10423 + $0x18] sm:$0xff]
        %s10428 = scalar_lea.vmem %s10, 96
        %v10429 = vld [vmem:[%s10428] sm:$0xff]
        %v10430 = vld [vmem:[%s10428 + $0x8] sm:$0xff]
        %v10431 = vld [vmem:[%s10428 + $0x10] sm:$0xff]
        %v10432 = vld [vmem:[%s10428 + $0x18] sm:$0xff]
        %10434 = vset.pattern.permute.xlu0 0
        %10435 = vperm.xlu0 %10434, %v10429
        %v10436 = vpop.permute.xlu0 %10435
        %10439 = vset.pattern.permute.xlu0 0
        %10440 = vperm.xlu0 %10439, %v10430
        %v10441 = vpop.permute.xlu0 %10440
        %10444 = vset.pattern.permute.xlu0 0
        %10445 = vperm.xlu0 %10444, %v10431
        %v10446 = vpop.permute.xlu0 %10445
        %10449 = vset.pattern.permute.xlu0 0
        %10450 = vperm.xlu0 %10449, %v10432
        %v10451 = vpop.permute.xlu0 %10450
        %v10454 = vsel %vm3009, %v10424, 0
        %v10457 = vsel %vm3009, %v10425, 0
        %v10460 = vsel %vm3009, %v10426, 0
        %v10463 = vsel %vm3009, %v10427, 0
        %10465 = vmatprep.subr.mxu0 0.0
        %10466 = vmatpush1.msra.mxu0 %v8073
        %10467 = vmatprep.subr.mxu0 0.0
        %10468 = vmatpush1.msra.mxu0 %v8074
        %10469 = vmatprep.subr.mxu0 0.0
        %10470 = vmatpush1.msra.mxu0 %v8075
        %10471 = vmatprep.subr.mxu0 0.0
        %10472 = vmatpush1.msra.mxu0 %v8076
        %10473 = vmatprep.subr.mxu0 0.0
        %10474 = vmatpush1.msra.mxu0 0.0
        %10475 = vmatprep.subr.mxu0 0.0
        %10476 = vmatpush1.msra.mxu0 0.0
        %10477 = vmatprep.subr.mxu0 0.0
        %10478 = vmatpush1.msra.mxu0 0.0
        %10479 = vmatprep.subr.mxu0 0.0
        %10480 = vmatpush1.msra.mxu0 0.0
        %10481 = vmatprep.subr.mxu0 0.0
        %10482 = vmatpush1.msra.mxu0 0.0
        %10483 = vmatprep.subr.mxu0 0.0
        %10484 = vmatpush1.msra.mxu0 0.0
        %10485 = vmatprep.subr.mxu0 0.0
        %10486 = vmatpush1.msra.mxu0 0.0
        %10487 = vmatprep.subr.mxu0 0.0
        %10488 = vmatpush1.msra.mxu0 0.0
        %10489 = vmatprep.subr.mxu0 0.0
        %10490 = vmatpush1.msra.mxu0 0.0
        %10491 = vmatprep.subr.mxu0 0.0
        %10492 = vmatpush1.msra.mxu0 0.0
        %10493 = vmatprep.subr.mxu0 0.0
        %10494 = vmatpush1.msra.mxu0 0.0
        %10495 = vmatprep.subr.mxu0 0.0
        %10496 = vmatpush1.msra.mxu0 0.0
        %10497 = vmatprep.subr.mxu0 0.0
        %10498 = vmatpush1.msra.mxu0 0.0
        %10499 = vmatprep.subr.mxu0 0.0
        %10500 = vmatpush1.msra.mxu0 0.0
        %10501 = vmatprep.subr.mxu0 0.0
        %10502 = vmatpush1.msra.mxu0 0.0
        %10503 = vmatprep.subr.mxu0 0.0
        %10504 = vmatpush1.msra.mxu0 0.0
        %10505 = vmatprep.subr.mxu0 0.0
        %10506 = vmatpush1.msra.mxu0 0.0
        %10507 = vmatprep.subr.mxu0 0.0
        %10508 = vmatpush1.msra.mxu0 0.0
        %10509 = vmatprep.subr.mxu0 0.0
        %10510 = vmatpush1.msra.mxu0 0.0
        %10511 = vmatprep.subr.mxu0 0.0
        %10512 = vmatpush1.msra.mxu0 0.0
        %10513 = vmatprep.subr.mxu0 0.0
        %10514 = vmatpush1.msra.mxu0 0.0
        %10515 = vmatprep.subr.mxu0 0.0
        %10516 = vmatpush1.msra.mxu0 0.0
        %10517 = vmatprep.subr.mxu0 0.0
        %10518 = vmatpush1.msra.mxu0 0.0
        %10519 = vmatprep.subr.mxu0 0.0
        %10520 = vmatpush1.msra.mxu0 0.0
        %10521 = vmatprep.subr.mxu0 0.0
        %10522 = vmatpush1.msra.mxu0 0.0
        %10523 = vmatprep.subr.mxu0 0.0
        %10524 = vmatpush1.msra.mxu0 0.0
        %10525 = vmatprep.subr.mxu0 0.0
        %10526 = vmatpush1.msra.mxu0 0.0
        %10527 = vmatprep.subr.mxu0 0.0
        %10528 = vmatpush1.msra.mxu0 0.0
        %10529 = vmatprep.mubr.f32.mxu0 0.0
        %10530 = vmatmul.mubr.f32.gmra.mrb[0].mxu0 %v10454
        %v10531 = vpop.f32.mrb[0].mxu0
        %v10532 = vadd.f32 %v10436, %v10531
        %v10533 = vpop.f32.mrb[0].mxu0
        %10534 = vmatprep.mubr.f32.mxu0 0.0
        %10535 = vmatmul.mubr.f32.gmra.mrb[0].mxu0 %v10457
        %v10536 = vpop.f32.mrb[0].mxu0
        %v10537 = vadd.f32 %v10441, %v10536
        %v10538 = vpop.f32.mrb[0].mxu0
        %10539 = vmatprep.mubr.f32.mxu0 0.0
        %10540 = vmatmul.mubr.f32.gmra.mrb[0].mxu0 %v10460
        %v10541 = vpop.f32.mrb[0].mxu0
        %v10542 = vadd.f32 %v10446, %v10541
        %v10543 = vpop.f32.mrb[0].mxu0
        %10544 = vmatprep.mubr.f32.mxu0 0.0
        %10545 = vmatmul.mubr.f32.gmra.mrb[0].mxu0 %v10463
        %v10546 = vpop.f32.mrb[0].mxu0
        %v10547 = vadd.f32 %v10451, %v10546
        %v10548 = vpop.f32.mrb[0].mxu0
        %10549 = vdwg.mxu0
        %v10550 = vadd.f32 %v10405, %v10532
        %v10551 = vadd.f32 %v10410, %v10537
        %v10552 = vadd.f32 %v10415, %v10542
        %v10553 = vadd.f32 %v10420, %v10547
        %v10554 = vld [vmem:[%s11] sm:$0xff]
        %v10555 = vld [vmem:[%s11 + $0x8] sm:$0xff]
        %v10556 = vld [vmem:[%s11 + $0x10] sm:$0xff]
        %v10557 = vld [vmem:[%s11 + $0x18] sm:$0xff]
        %v10558 = vld [vmem:[%s11 + $0x20] sm:$0xff]
        %v10559 = vld [vmem:[%s11 + $0x28] sm:$0xff]
        %v10560 = vld [vmem:[%s11 + $0x30] sm:$0xff]
        %v10561 = vld [vmem:[%s11 + $0x38] sm:$0xff]
        %v10562 = vld [vmem:[%s11 + $0x40] sm:$0xff]
        %v10563 = vld [vmem:[%s11 + $0x48] sm:$0xff]
        %v10564 = vld [vmem:[%s11 + $0x50] sm:$0xff]
        %v10565 = vld [vmem:[%s11 + $0x58] sm:$0xff]
        %v10566 = vld [vmem:[%s11 + $0x60] sm:$0xff]
        %v10567 = vld [vmem:[%s11 + $0x68] sm:$0xff]
        %v10568 = vld [vmem:[%s11 + $0x70] sm:$0xff]
        %v10569 = vld [vmem:[%s11 + $0x78] sm:$0xff]
        %v10570 = vld [vmem:[%s12] sm:$0xff]
        %v10571 = vld [vmem:[%s12 + $0x8] sm:$0xff]
        %v10572 = vld [vmem:[%s12 + $0x10] sm:$0xff]
        %v10573 = vld [vmem:[%s12 + $0x18] sm:$0xff]
        %v10574 = vld [vmem:[%s12 + $0x20] sm:$0xff]
        %v10575 = vld [vmem:[%s12 + $0x28] sm:$0xff]
        %v10576 = vld [vmem:[%s12 + $0x30] sm:$0xff]
        %v10577 = vld [vmem:[%s12 + $0x38] sm:$0xff]
        %v10578 = vld [vmem:[%s12 + $0x40] sm:$0xff]
        %v10579 = vld [vmem:[%s12 + $0x48] sm:$0xff]
        %v10580 = vld [vmem:[%s12 + $0x50] sm:$0xff]
        %v10581 = vld [vmem:[%s12 + $0x58] sm:$0xff]
        %v10582 = vld [vmem:[%s12 + $0x60] sm:$0xff]
        %v10583 = vld [vmem:[%s12 + $0x68] sm:$0xff]
        %v10584 = vld [vmem:[%s12 + $0x70] sm:$0xff]
        %v10585 = vld [vmem:[%s12 + $0x78] sm:$0xff]
        %10587 = vset.pattern.permute.xlu0 0
        %10588 = vperm.xlu0 %10587, %v10570
        %v10589 = vpop.permute.xlu0 %10588
        %10592 = vset.pattern.permute.xlu0 0
        %10593 = vperm.xlu0 %10592, %v10571
        %v10594 = vpop.permute.xlu0 %10593
        %10597 = vset.pattern.permute.xlu0 0
        %10598 = vperm.xlu0 %10597, %v10572
        %v10599 = vpop.permute.xlu0 %10598
        %10602 = vset.pattern.permute.xlu0 0
        %10603 = vperm.xlu0 %10602, %v10573
        %v10604 = vpop.permute.xlu0 %10603
        %10607 = vset.pattern.permute.xlu0 0
        %10608 = vperm.xlu0 %10607, %v10574
        %v10609 = vpop.permute.xlu0 %10608
        %10612 = vset.pattern.permute.xlu0 0
        %10613 = vperm.xlu0 %10612, %v10575
        %v10614 = vpop.permute.xlu0 %10613
        %10617 = vset.pattern.permute.xlu0 0
        %10618 = vperm.xlu0 %10617, %v10576
        %v10619 = vpop.permute.xlu0 %10618
        %10622 = vset.pattern.permute.xlu0 0
        %10623 = vperm.xlu0 %10622, %v10577
        %v10624 = vpop.permute.xlu0 %10623
        %10627 = vset.pattern.permute.xlu0 0
        %10628 = vperm.xlu0 %10627, %v10578
        %v10629 = vpop.permute.xlu0 %10628
        %10632 = vset.pattern.permute.xlu0 0
        %10633 = vperm.xlu0 %10632, %v10579
        %v10634 = vpop.permute.xlu0 %10633
        %10637 = vset.pattern.permute.xlu0 0
        %10638 = vperm.xlu0 %10637, %v10580
        %v10639 = vpop.permute.xlu0 %10638
        %10642 = vset.pattern.permute.xlu0 0
        %10643 = vperm.xlu0 %10642, %v10581
        %v10644 = vpop.permute.xlu0 %10643
        %10647 = vset.pattern.permute.xlu0 0
        %10648 = vperm.xlu0 %10647, %v10582
        %v10649 = vpop.permute.xlu0 %10648
        %10652 = vset.pattern.permute.xlu0 0
        %10653 = vperm.xlu0 %10652, %v10583
        %v10654 = vpop.permute.xlu0 %10653
        %10657 = vset.pattern.permute.xlu0 0
        %10658 = vperm.xlu0 %10657, %v10584
        %v10659 = vpop.permute.xlu0 %10658
        %10662 = vset.pattern.permute.xlu0 0
        %10663 = vperm.xlu0 %10662, %v10585
        %v10664 = vpop.permute.xlu0 %10663
        %v10667 = vsel %vm3009, %v10554, 0
        %v10670 = vsel %vm3009, %v10555, 0
        %v10673 = vsel %vm3009, %v10556, 0
        %v10676 = vsel %vm3009, %v10557, 0
        %v10679 = vsel %vm3009, %v10558, 0
        %v10682 = vsel %vm3009, %v10559, 0
        %v10685 = vsel %vm3009, %v10560, 0
        %v10688 = vsel %vm3009, %v10561, 0
        %v10691 = vsel %vm3009, %v10562, 0
        %v10694 = vsel %vm3009, %v10563, 0
        %v10697 = vsel %vm3009, %v10564, 0
        %v10700 = vsel %vm3009, %v10565, 0
        %v10703 = vsel %vm3009, %v10566, 0
        %v10706 = vsel %vm3009, %v10567, 0
        %v10709 = vsel %vm3009, %v10568, 0
        %v10712 = vsel %vm3009, %v10569, 0
        %10714 = vmatprep.subr.mxu0 0.0
        %10715 = vmatpush1.msra.mxu0 %v10550
        %10716 = vmatprep.subr.mxu0 0.0
        %10717 = vmatpush1.msra.mxu0 %v10551
        %10718 = vmatprep.subr.mxu0 0.0
        %10719 = vmatpush1.msra.mxu0 %v10552
        %10720 = vmatprep.subr.mxu0 0.0
        %10721 = vmatpush1.msra.mxu0 %v10553
        %10722 = vmatprep.subr.mxu0 0.0
        %10723 = vmatpush1.msra.mxu0 0.0
        %10724 = vmatprep.subr.mxu0 0.0
        %10725 = vmatpush1.msra.mxu0 0.0
        %10726 = vmatprep.subr.mxu0 0.0
        %10727 = vmatpush1.msra.mxu0 0.0
        %10728 = vmatprep.subr.mxu0 0.0
        %10729 = vmatpush1.msra.mxu0 0.0
        %10730 = vmatprep.subr.mxu0 0.0
        %10731 = vmatpush1.msra.mxu0 0.0
        %10732 = vmatprep.subr.mxu0 0.0
        %10733 = vmatpush1.msra.mxu0 0.0
        %10734 = vmatprep.subr.mxu0 0.0
        %10735 = vmatpush1.msra.mxu0 0.0
        %10736 = vmatprep.subr.mxu0 0.0
        %10737 = vmatpush1.msra.mxu0 0.0
        %10738 = vmatprep.subr.mxu0 0.0
        %10739 = vmatpush1.msra.mxu0 0.0
        %10740 = vmatprep.subr.mxu0 0.0
        %10741 = vmatpush1.msra.mxu0 0.0
        %10742 = vmatprep.subr.mxu0 0.0
        %10743 = vmatpush1.msra.mxu0 0.0
        %10744 = vmatprep.subr.mxu0 0.0
        %10745 = vmatpush1.msra.mxu0 0.0
        %10746 = vmatprep.subr.mxu0 0.0
        %10747 = vmatpush1.msra.mxu0 0.0
        %10748 = vmatprep.subr.mxu0 0.0
        %10749 = vmatpush1.msra.mxu0 0.0
        %10750 = vmatprep.subr.mxu0 0.0
        %10751 = vmatpush1.msra.mxu0 0.0
        %10752 = vmatprep.subr.mxu0 0.0
        %10753 = vmatpush1.msra.mxu0 0.0
        %10754 = vmatprep.subr.mxu0 0.0
        %10755 = vmatpush1.msra.mxu0 0.0
        %10756 = vmatprep.subr.mxu0 0.0
        %10757 = vmatpush1.msra.mxu0 0.0
        %10758 = vmatprep.subr.mxu0 0.0
        %10759 = vmatpush1.msra.mxu0 0.0
        %10760 = vmatprep.subr.mxu0 0.0
        %10761 = vmatpush1.msra.mxu0 0.0
        %10762 = vmatprep.subr.mxu0 0.0
        %10763 = vmatpush1.msra.mxu0 0.0
        %10764 = vmatprep.subr.mxu0 0.0
        %10765 = vmatpush1.msra.mxu0 0.0
        %10766 = vmatprep.subr.mxu0 0.0
        %10767 = vmatpush1.msra.mxu0 0.0
        %10768 = vmatprep.subr.mxu0 0.0
        %10769 = vmatpush1.msra.mxu0 0.0
        %10770 = vmatprep.subr.mxu0 0.0
        %10771 = vmatpush1.msra.mxu0 0.0
        %10772 = vmatprep.subr.mxu0 0.0
        %10773 = vmatpush1.msra.mxu0 0.0
        %10774 = vmatprep.subr.mxu0 0.0
        %10775 = vmatpush1.msra.mxu0 0.0
        %10776 = vmatprep.subr.mxu0 0.0
        %10777 = vmatpush1.msra.mxu0 0.0
        %10778 = vmatprep.mubr.f32.mxu0 0.0
        %10779 = vmatmul.mubr.f32.gmra.mrb[0].mxu0 %v10667
        %v10780 = vpop.f32.mrb[0].mxu0
        %v10781 = vadd.f32 %v10589, %v10780
        %v10782 = vpop.f32.mrb[0].mxu0
        %10783 = vmatprep.mubr.f32.mxu0 0.0
        %10784 = vmatmul.mubr.f32.gmra.mrb[0].mxu0 %v10670
        %v10785 = vpop.f32.mrb[0].mxu0
        %v10786 = vadd.f32 %v10594, %v10785
        %v10787 = vpop.f32.mrb[0].mxu0
        %10788 = vmatprep.mubr.f32.mxu0 0.0
        %10789 = vmatmul.mubr.f32.gmra.mrb[0].mxu0 %v10673
        %v10790 = vpop.f32.mrb[0].mxu0
        %v10791 = vadd.f32 %v10599, %v10790
        %v10792 = vpop.f32.mrb[0].mxu0
        %10793 = vmatprep.mubr.f32.mxu0 0.0
        %10794 = vmatmul.mubr.f32.gmra.mrb[0].mxu0 %v10676
        %v10795 = vpop.f32.mrb[0].mxu0
        %v10796 = vadd.f32 %v10604, %v10795
        %v10797 = vpop.f32.mrb[0].mxu0
        %10798 = vmatprep.mubr.f32.mxu0 0.0
        %10799 = vmatmul.mubr.f32.gmra.mrb[0].mxu0 %v10679
        %v10800 = vpop.f32.mrb[0].mxu0
        %v10801 = vadd.f32 %v10609, %v10800
        %v10802 = vpop.f32.mrb[0].mxu0
        %10803 = vmatprep.mubr.f32.mxu0 0.0
        %10804 = vmatmul.mubr.f32.gmra.mrb[0].mxu0 %v10682
        %v10805 = vpop.f32.mrb[0].mxu0
        %v10806 = vadd.f32 %v10614, %v10805
        %v10807 = vpop.f32.mrb[0].mxu0
        %10808 = vmatprep.mubr.f32.mxu0 0.0
        %10809 = vmatmul.mubr.f32.gmra.mrb[0].mxu0 %v10685
        %v10810 = vpop.f32.mrb[0].mxu0
        %v10811 = vadd.f32 %v10619, %v10810
        %v10812 = vpop.f32.mrb[0].mxu0
        %10813 = vmatprep.mubr.f32.mxu0 0.0
        %10814 = vmatmul.mubr.f32.gmra.mrb[0].mxu0 %v10688
        %v10815 = vpop.f32.mrb[0].mxu0
        %v10816 = vadd.f32 %v10624, %v10815
        %v10817 = vpop.f32.mrb[0].mxu0
        %10818 = vmatprep.mubr.f32.mxu0 0.0
        %10819 = vmatmul.mubr.f32.gmra.mrb[0].mxu0 %v10691
        %v10820 = vpop.f32.mrb[0].mxu0
        %v10821 = vadd.f32 %v10629, %v10820
        %v10822 = vpop.f32.mrb[0].mxu0
        %10823 = vmatprep.mubr.f32.mxu0 0.0
        %10824 = vmatmul.mubr.f32.gmra.mrb[0].mxu0 %v10694
        %v10825 = vpop.f32.mrb[0].mxu0
        %v10826 = vadd.f32 %v10634, %v10825
        %v10827 = vpop.f32.mrb[0].mxu0
        %10828 = vmatprep.mubr.f32.mxu0 0.0
        %10829 = vmatmul.mubr.f32.gmra.mrb[0].mxu0 %v10697
        %v10830 = vpop.f32.mrb[0].mxu0
        %v10831 = vadd.f32 %v10639, %v10830
        %v10832 = vpop.f32.mrb[0].mxu0
        %10833 = vmatprep.mubr.f32.mxu0 0.0
        %10834 = vmatmul.mubr.f32.gmra.mrb[0].mxu0 %v10700
        %v10835 = vpop.f32.mrb[0].mxu0
        %v10836 = vadd.f32 %v10644, %v10835
        %v10837 = vpop.f32.mrb[0].mxu0
        %10838 = vmatprep.mubr.f32.mxu0 0.0
        %10839 = vmatmul.mubr.f32.gmra.mrb[0].mxu0 %v10703
        %v10840 = vpop.f32.mrb[0].mxu0
        %v10841 = vadd.f32 %v10649, %v10840
        %v10842 = vpop.f32.mrb[0].mxu0
        %10843 = vmatprep.mubr.f32.mxu0 0.0
        %10844 = vmatmul.mubr.f32.gmra.mrb[0].mxu0 %v10706
        %v10845 = vpop.f32.mrb[0].mxu0
        %v10846 = vadd.f32 %v10654, %v10845
        %v10847 = vpop.f32.mrb[0].mxu0
        %10848 = vmatprep.mubr.f32.mxu0 0.0
        %10849 = vmatmul.mubr.f32.gmra.mrb[0].mxu0 %v10709
        %v10850 = vpop.f32.mrb[0].mxu0
        %v10851 = vadd.f32 %v10659, %v10850
        %v10852 = vpop.f32.mrb[0].mxu0
        %10853 = vmatprep.mubr.f32.mxu0 0.0
        %10854 = vmatmul.mubr.f32.gmra.mrb[0].mxu0 %v10712
        %v10855 = vpop.f32.mrb[0].mxu0
        %v10856 = vadd.f32 %v10664, %v10855
        %v10857 = vpop.f32.mrb[0].mxu0
        %10858 = vdwg.mxu0
        %v10859 = vmax.f32 %v10781, 0.0
        %v10860 = vmax.f32 %v10786, 0.0
        %v10861 = vmax.f32 %v10791, 0.0
        %v10862 = vmax.f32 %v10796, 0.0
        %v10863 = vmax.f32 %v10801, 0.0
        %v10864 = vmax.f32 %v10806, 0.0
        %v10865 = vmax.f32 %v10811, 0.0
        %v10866 = vmax.f32 %v10816, 0.0
        %v10867 = vmax.f32 %v10821, 0.0
        %v10868 = vmax.f32 %v10826, 0.0
        %v10869 = vmax.f32 %v10831, 0.0
        %v10870 = vmax.f32 %v10836, 0.0
        %v10871 = vmax.f32 %v10841, 0.0
        %v10872 = vmax.f32 %v10846, 0.0
        %v10873 = vmax.f32 %v10851, 0.0
        %v10874 = vmax.f32 %v10856, 0.0
        %v10875 = vld [vmem:[%s13] sm:$0x1]
        %v10876 = vld [vmem:[#allocation2] sm:$0x1]
        %10878 = vset.pattern.permute.xlu0 0
        %10879 = vperm.xlu0 %10878, %v10876
        %v10880 = vpop.permute.xlu0 %10879
        %v10882 = vlaneseq
        %v10883 = vshrl.u32 %v10882, 7
        %v10884 = vsub.s32 0, %v10883
        %v10885 = vrot.slane %v10880, %v10884
        %10886 = vmatprep.subr.mxu0 0.0
        %10887 = vmatpush1.msra.mxu0 %v10859
        %10888 = vmatprep.subr.mxu0 0.0
        %10889 = vmatpush1.msra.mxu0 %v10860
        %10890 = vmatprep.subr.mxu0 0.0
        %10891 = vmatpush1.msra.mxu0 %v10861
        %10892 = vmatprep.subr.mxu0 0.0
        %10893 = vmatpush1.msra.mxu0 %v10862
        %10894 = vmatprep.subr.mxu0 0.0
        %10895 = vmatpush1.msra.mxu0 %v10863
        %10896 = vmatprep.subr.mxu0 0.0
        %10897 = vmatpush1.msra.mxu0 %v10864
        %10898 = vmatprep.subr.mxu0 0.0
        %10899 = vmatpush1.msra.mxu0 %v10865
        %10900 = vmatprep.subr.mxu0 0.0
        %10901 = vmatpush1.msra.mxu0 %v10866
        %10902 = vmatprep.subr.mxu0 0.0
        %10903 = vmatpush1.msra.mxu0 %v10867
        %10904 = vmatprep.subr.mxu0 0.0
        %10905 = vmatpush1.msra.mxu0 %v10868
        %10906 = vmatprep.subr.mxu0 0.0
        %10907 = vmatpush1.msra.mxu0 %v10869
        %10908 = vmatprep.subr.mxu0 0.0
        %10909 = vmatpush1.msra.mxu0 %v10870
        %10910 = vmatprep.subr.mxu0 0.0
        %10911 = vmatpush1.msra.mxu0 %v10871
        %10912 = vmatprep.subr.mxu0 0.0
        %10913 = vmatpush1.msra.mxu0 %v10872
        %10914 = vmatprep.subr.mxu0 0.0
        %10915 = vmatpush1.msra.mxu0 %v10873
        %10916 = vmatprep.subr.mxu0 0.0
        %10917 = vmatpush1.msra.mxu0 %v10874
        %10918 = vmatprep.subr.mxu0 0.0
        %10919 = vmatpush1.msra.mxu0 0.0
        %10920 = vmatprep.subr.mxu0 0.0
        %10921 = vmatpush1.msra.mxu0 0.0
        %10922 = vmatprep.subr.mxu0 0.0
        %10923 = vmatpush1.msra.mxu0 0.0
        %10924 = vmatprep.subr.mxu0 0.0
        %10925 = vmatpush1.msra.mxu0 0.0
        %10926 = vmatprep.subr.mxu0 0.0
        %10927 = vmatpush1.msra.mxu0 0.0
        %10928 = vmatprep.subr.mxu0 0.0
        %10929 = vmatpush1.msra.mxu0 0.0
        %10930 = vmatprep.subr.mxu0 0.0
        %10931 = vmatpush1.msra.mxu0 0.0
        %10932 = vmatprep.subr.mxu0 0.0
        %10933 = vmatpush1.msra.mxu0 0.0
        %10934 = vmatprep.subr.mxu0 0.0
        %10935 = vmatpush1.msra.mxu0 0.0
        %10936 = vmatprep.subr.mxu0 0.0
        %10937 = vmatpush1.msra.mxu0 0.0
        %10938 = vmatprep.subr.mxu0 0.0
        %10939 = vmatpush1.msra.mxu0 0.0
        %10940 = vmatprep.subr.mxu0 0.0
        %10941 = vmatpush1.msra.mxu0 0.0
        %10942 = vmatprep.subr.mxu0 0.0
        %10943 = vmatpush1.msra.mxu0 0.0
        %10944 = vmatprep.subr.mxu0 0.0
        %10945 = vmatpush1.msra.mxu0 0.0
        %10946 = vmatprep.subr.mxu0 0.0
        %10947 = vmatpush1.msra.mxu0 0.0
        %10948 = vmatprep.subr.mxu0 0.0
        %10949 = vmatpush1.msra.mxu0 0.0
        %10950 = vmatprep.mubr.f32.mxu0 0.0
        %10951 = vmatmul.mubr.f32.gmra.mrb[0].mxu0 %v10875
        %v10952 = vpop.f32.mrb[0].mxu0
        %v10953 = vadd.f32 %v10885, %v10952
        %v10954 = vpop.f32.mrb[0].mxu0
        %10955 = vdwg.mxu0
        %vm10956 = vcmask 122880
        %10957 = vst.msk [vmem:[%s486] sm:$0x1] %vm10956, %v10953
        %s10958 = sand.u32 %s359, 1
        %s10959 = scalar_lea.sflag [#allocation4], %s10958
        %s10960 = sand.u32 %s359, 1
        %s10961 = scalar_lea.vmem [#allocation3], %s10960
        // Predicated region
        $region81: #{fno1d_forward.1} parent=79 // pred_check
          %p10962 = pneg %p369
        $region82: #{fno1d_forward.1} parent=79 // pred_check_branch
          %10964 = sbr.rel (%p10962) target = $region84
        $region83: #{fno1d_forward.1} parent=79 // pred_region
          %s10966 = ssub.s32 16, 16
          %10967 = vsyncadd %s10959, %s10966
          %s10968 = smul.addr %s31, 16
          %s10969 = scalar_lea.hbm %s15, %s10968
          %s10971 = sshll.u32 %s10961, 4
          %s10972 = int_to_ptr.vmem [resolvable:$true] %s10971
          %10974 = dma.vmem_to_hbm [thread:$0]  %s10972, 16, %s10969, %s10959
        $region84: #{fno1d_forward.1} parent=79 // pred_fallthru
          _
      $region80: #{fno1d_forward.1} parent=5 // pred_fallthru
        _
      %p10975 = scmp.le.s32.totalorder 2, %s26
      // Predicated region
      $region85: #{fno1d_forward.1} parent=5 // pred_check
        %p10976 = pneg %p10975
      $region86: #{fno1d_forward.1} parent=5 // pred_check_branch
        %10978 = sbr.rel (%p10976) target = $region88
      $region87: #{fno1d_forward.1} parent=5 // pred_region
        %s10979 = ssub.s32 %s26, 2
        // Predicated region
        $region89: #{fno1d_forward.1} parent=87 // pred_check
          %p10980 = pneg %p375
        $region90: #{fno1d_forward.1} parent=87 // pred_check_branch
          %10982 = sbr.rel (%p10980) target = $region92
        $region91: #{fno1d_forward.1} parent=87 // pred_region
          %s10983 = sand.u32 %s360, 1
          %s10984 = scalar_lea.sflag [#allocation4], %s10983
          %s10985 = sand.u32 %s360, 1
          %s10986 = scalar_lea.vmem [#allocation3], %s10985
          %10987 = dma.done %s10984, 16
        $region92: #{fno1d_forward.1} parent=87 // pred_fallthru
          _
      $region88: #{fno1d_forward.1} parent=5 // pred_fallthru
        _
    $region6: #{fno1d_forward.1} parent=1 // loop_footer
      %s30 = sadd.s32 1, %s26
    $region7: #{fno1d_forward.1} parent=1 // loop_footer_branch
      %25 = sbr.rel target = $region3
    $region8: #{fno1d_forward.1} parent=1 // loop_exit
      _
    %10988 = vsyncpa [#allocation4], 1
    %s10989 = scalar_lea.sflag [#allocation4], 1
    %10990 = vsyncpa %s10989, 1

</llo_original>
